<compile_context>
chip_gen: v5e
topology: v5e:2x2
jax: 0.10.0
libtpu: 0.0.40
codegen_flags: <defaults>
</compile_context>

<pallas_src>
import functools
import math

import jax
import jax.numpy as jnp
from jax.experimental import pallas as pl
from jax.experimental.pallas import tpu as pltpu

# Keep XLA-reference matmuls at full f32 accuracy so the correctness check is tight.
jax.config.update("jax_default_matmul_precision", "highest")

VMEM_TILE_BUDGET = 12 * 1024 * 1024   # conservative: fits v5e's 16 MiB default scoped VMEM
VMEM_LIMIT_BYTES = 32 * 1024 * 1024   # safe everywhere (only raises v5e's 16 MiB default)


def _cparams(*sem):
    return pltpu.CompilerParams(dimension_semantics=tuple(sem),
                                vmem_limit_bytes=VMEM_LIMIT_BYTES)


# ----------------------------------------------------------------------------
# Parameter setup (glue)
# ----------------------------------------------------------------------------
def make_positional_encoding(d_model: int, max_len: int, dtype=jnp.float32):
    position = jnp.arange(max_len, dtype=jnp.float32)[:, None]                 # (max_len, 1)
    div_term = jnp.exp(jnp.arange(0, d_model, 2, dtype=jnp.float32)
                       * (-math.log(10000.0) / d_model))                       # (d_model/2,)
    pe = jnp.zeros((max_len, d_model), dtype=jnp.float32)
    pe = pe.at[:, 0::2].set(jnp.sin(position * div_term))
    pe = pe.at[:, 1::2].set(jnp.cos(position * div_term))
    return pe.astype(dtype)                                                    # (max_len, D)


def init_params(key, ntoken, d_model, nhead, d_hid, nlayers, max_len=5000):
    k_emb, k_layers = jax.random.split(key)
    emb = jax.random.uniform(k_emb, (ntoken, d_model), jnp.float32, -0.1, 0.1)
    pe = make_positional_encoding(d_model, max_len)
    layers = []
    s = 0.05
    for lk in jax.random.split(k_layers, nlayers):
        ks = jax.random.split(lk, 12)
        layers.append(dict(
            w_in=s * jax.random.normal(ks[0], (3 * d_model, d_model), jnp.float32),
            b_in=s * jax.random.normal(ks[1], (3 * d_model,), jnp.float32),
            w_out=s * jax.random.normal(ks[2], (d_model, d_model), jnp.float32),
            b_out=s * jax.random.normal(ks[3], (d_model,), jnp.float32),
            w1=s * jax.random.normal(ks[4], (d_hid, d_model), jnp.float32),
            b1=s * jax.random.normal(ks[5], (d_hid,), jnp.float32),
            w2=s * jax.random.normal(ks[6], (d_model, d_hid), jnp.float32),
            b2=s * jax.random.normal(ks[7], (d_model,), jnp.float32),
            ln1_g=1.0 + 0.1 * jax.random.normal(ks[8], (d_model,), jnp.float32),
            ln1_b=0.1 * jax.random.normal(ks[9], (d_model,), jnp.float32),
            ln2_g=1.0 + 0.1 * jax.random.normal(ks[10], (d_model,), jnp.float32),
            ln2_b=0.1 * jax.random.normal(ks[11], (d_model,), jnp.float32),
        ))
    return dict(emb=emb, pe=pe, layers=layers)


def prepare_kernel_params(params):
    """One-time conversion to kernel-friendly layout (hoists transposes out of the forward)."""
    kl = []
    for p in params["layers"]:
        kl.append(dict(
            w_in_t=p["w_in"].T, b_in=p["b_in"][None, :],
            w_out_t=p["w_out"].T, b_out=p["b_out"][None, :],
            w1_t=p["w1"].T, b1=p["b1"][None, :],
            w2_t=p["w2"].T, b2=p["b2"][None, :],
            ln1_g=p["ln1_g"][None, :], ln1_b=p["ln1_b"][None, :],
            ln2_g=p["ln2_g"][None, :], ln2_b=p["ln2_b"][None, :],
        ))
    return dict(emb=params["emb"], pe=params["pe"], layers=kl)


# ----------------------------------------------------------------------------
# Tiling helpers
# ----------------------------------------------------------------------------
def _round_up(n, m):
    return ((n + m - 1) // m) * m


def _pick_row_tile(n_rows, row_bytes, fixed_bytes=0,
                   budget=VMEM_TILE_BUDGET, max_tile=1024):
    """Largest row tile (multiple of 8) whose pipelined working set fits `budget`.

    row_bytes: bytes per row for the double-buffered row streams.
    fixed_bytes: grid-resident blocks (weights / biases), counted once up front.
    """
    avail = max(budget - fixed_bytes, 8 * row_bytes)
    tile = max(8, (avail // max(row_bytes, 1)) // 8 * 8)
    tile = min(tile, max_tile, _round_up(n_rows, 8))
    if n_rows >= 16:   # leave >= 2 grid steps so both v7x TensorCores get work
        tile = min(tile, max(8, _round_up((n_rows + 1) // 2, 8)))
    return int(tile)


def _pe_seq_tile(seq_len, cap):
    """Largest multiple of 8 that divides seq_len and is <= cap (None if impossible)."""
    best, t = None, 8
    while t <= min(seq_len, cap):
        if seq_len % t == 0:
            best = t
        t += 8
    return best


# ----------------------------------------------------------------------------
# Kernel 1: fused  (embedding * sqrt(d_model)) + positional encoding (+ mask dropout)
#           on the lane-dense (B*S, D) layout, PE fed as a small (S, D) table.
# ----------------------------------------------------------------------------
def _scale_pe_kernel(x_ref, pe_ref, o_ref, *, scale):
    o_ref[...] = x_ref[...] * scale + pe_ref[...]


def _scale_pe_drop_kernel(x_ref, pe_ref, keep_ref, o_ref, *, scale, inv_keep):
    y = x_ref[...] * scale + pe_ref[...]
    o_ref[...] = y * (keep_ref[...] * inv_keep)          # inverted dropout, one multiply


def fused_scale_pe(x2d, pe_sd, seq_len, batch, *, scale, keep_mask=None, keep_prob=1.0):
    """x2d: (B*S, D) rows in (batch, seq) order; pe_sd: (S, D)."""
    n, d = x2d.shape
    itm = x2d.dtype.itemsize
    row_streams = 6 if keep_mask is not None else 4       # double-buffered in/out (+ mask)
    row_bytes = row_streams * d * itm
    tile_cap = _pick_row_tile(n, row_bytes)
    ts = _pe_seq_tile(seq_len, tile_cap)

    if ts is None:
        # Fallback for awkward seq lengths: tile the small PE table over batch in XLA.
        pe_full = jnp.tile(pe_sd, (batch, 1))
        tm = _pick_row_tile(n, row_bytes + 2 * d * itm)
        grid = (pl.cdiv(n, tm),)
        row_spec = pl.BlockSpec((tm, d), lambda i: (i, 0))
        specs = [row_spec, row_spec]
        args = [x2d, pe_full]
    else:
        n_s = seq_len // ts
        grid = (batch, n_s)
        row_spec = pl.BlockSpec((ts, d), lambda b, s: (b * n_s + s, 0))
        pe_spec = pl.BlockSpec((ts, d), lambda b, s: (s, 0))
        specs = [row_spec, pe_spec]
        args = [x2d, pe_sd]

    if keep_mask is None:
        kern = functools.partial(_scale_pe_kernel, scale=float(scale))
    else:
        kern = functools.partial(_scale_pe_drop_kernel, scale=float(scale),
                                 inv_keep=float(1.0 / keep_prob))
        specs = specs + [row_spec]
        args = args + [keep_mask]

    return pl.pallas_call(
        kern,
        out_shape=jax.ShapeDtypeStruct((n, d), x2d.dtype),
        grid=grid,
        in_specs=specs,
        out_specs=row_spec,
        compiler_params=_cparams(*(("parallel",) * len(grid))),
    )(*args)


# ----------------------------------------------------------------------------
# Kernel 2: linear  y = x @ W_t + b   (W_t pre-transposed to (Din, Dout))
# ----------------------------------------------------------------------------
def _linear_kernel(x_ref, w_ref, b_ref, o_ref):
    y = jnp.dot(x_ref[...], w_ref[...], preferred_element_type=jnp.float32) + b_ref[...]
    o_ref[...] = y.astype(o_ref.dtype)


def pallas_linear(x2d, w_t, b_row):
    n, din = x2d.shape
    dout = w_t.shape[1]
    itm = x2d.dtype.itemsize
    fixed = 2 * itm * (din * dout + dout)                 # resident weight + bias blocks
    row_bytes = 2 * itm * (din + dout)
    tm = _pick_row_tile(n, row_bytes, fixed_bytes=fixed, max_tile=512)
    # TODO(synk): K/N tiling with f32 VMEM accumulator for large (din, dout).
    return pl.pallas_call(
        _linear_kernel,
        out_shape=jax.ShapeDtypeStruct((n, dout), x2d.dtype),
        grid=(pl.cdiv(n, tm),),
        in_specs=[pl.BlockSpec((tm, din), lambda i: (i, 0)),
                  pl.BlockSpec((din, dout), lambda i: (0, 0)),
                  pl.BlockSpec((1, dout), lambda i: (0, 0))],
        out_specs=pl.BlockSpec((tm, dout), lambda i: (i, 0)),
        compiler_params=_cparams("parallel"),
    )(x2d, w_t, b_row)


# ----------------------------------------------------------------------------
# Kernel 3: all-heads self-attention for one batch element per grid step.
#           Packed (1, S, 3D) qkv block in (lane-dense), (1, S, D) block out.
# ----------------------------------------------------------------------------
def _mha_kernel(qkv_ref, o_ref, *, nhead, dh, scale):
    seq = qkv_ref.shape[1]
    d = nhead * dh
    qkv = qkv_ref[0]                                       # (S, 3D) lane-dense load
    outs = []
    for h in range(nhead):                                 # static unrolled head loop
        qh = qkv[:, h * dh:(h + 1) * dh]                   # (S, dh)
        kh = qkv[:, d + h * dh:d + (h + 1) * dh]
        vh = qkv[:, 2 * d + h * dh:2 * d + (h + 1) * dh]
        s = jax.lax.dot_general(qh, kh, (((1,), (1,)), ((), ())),
                                preferred_element_type=jnp.float32) * scale    # (S, S)
        s = s - jnp.max(s, axis=-1, keepdims=True)
        p = jnp.exp(s)
        p = p * (1.0 / jnp.sum(p, axis=-1, keepdims=True))
        outs.append(jnp.dot(p, vh, preferred_element_type=jnp.float32))
    # TODO(synk): KV-tiled online softmax so the (S, S) scores never exceed v7x VMEM.
    o_ref[0] = jnp.concatenate(outs, axis=-1).astype(o_ref.dtype)


def pallas_mha(qkv3, nhead):
    b, seq, d3 = qkv3.shape
    d = d3 // 3
    dh = d // nhead
    return pl.pallas_call(
        functools.partial(_mha_kernel, nhead=nhead, dh=dh, scale=1.0 / math.sqrt(dh)),
        out_shape=jax.ShapeDtypeStruct((b, seq, d), qkv3.dtype),
        grid=(b,),
        in_specs=[pl.BlockSpec((1, seq, d3), lambda i: (i, 0, 0))],
        out_specs=pl.BlockSpec((1, seq, d), lambda i: (i, 0, 0)),
        compiler_params=_cparams("parallel"),
    )(qkv3)


# ----------------------------------------------------------------------------
# Kernel 4: fused  out-projection + residual add + LayerNorm   (one-pass variance)
# ----------------------------------------------------------------------------
def _proj_add_ln_kernel(a_ref, res_ref, w_ref, b_ref, g_ref, beta_ref, o_ref, *, eps):
    y = jnp.dot(a_ref[...], w_ref[...], preferred_element_type=jnp.float32) + b_ref[...]
    h = res_ref[...] + y
    mu = jnp.mean(h, axis=-1, keepdims=True)
    var = jnp.mean(h * h, axis=-1, keepdims=True) - mu * mu
    o_ref[...] = ((h - mu) * jax.lax.rsqrt(var + eps) * g_ref[...]
                  + beta_ref[...]).astype(o_ref.dtype)


def pallas_proj_add_layernorm(a2d, res2d, w_t, b_row, g_row, beta_row, eps=1e-5):
    n, din = a2d.shape
    dout = w_t.shape[1]
    itm = a2d.dtype.itemsize
    fixed = 2 * itm * (din * dout + 4 * dout)
    row_bytes = 2 * itm * (din + 2 * dout)
    tm = _pick_row_tile(n, row_bytes, fixed_bytes=fixed, max_tile=512)
    vec = lambda dd: pl.BlockSpec((1, dd), lambda i: (0, 0))
    return pl.pallas_call(
        functools.partial(_proj_add_ln_kernel, eps=float(eps)),
        out_shape=jax.ShapeDtypeStruct((n, dout), a2d.dtype),
        grid=(pl.cdiv(n, tm),),
        in_specs=[pl.BlockSpec((tm, din), lambda i: (i, 0)),
                  pl.BlockSpec((tm, dout), lambda i: (i, 0)),
                  pl.BlockSpec((din, dout), lambda i: (0, 0)),
                  vec(dout), vec(dout), vec(dout)],
        out_specs=pl.BlockSpec((tm, dout), lambda i: (i, 0)),
        compiler_params=_cparams("parallel"),
    )(a2d, res2d, w_t, b_row, g_row, beta_row)


# ----------------------------------------------------------------------------
# Kernel 5: fused  FFN (linear1 + ReLU -> linear2) + residual add + LayerNorm
# ----------------------------------------------------------------------------
def _ffn_add_ln_kernel(x_ref, w1_ref, b1_ref, w2_ref, b2_ref, g_ref, beta_ref, o_ref, *, eps):
    x = x_ref[...]
    f = jnp.dot(x, w1_ref[...], preferred_element_type=jnp.float32) + b1_ref[...]
    f = jnp.maximum(f, 0.0)                                # (tile, d_hid) stays on-chip
    y = jnp.dot(f, w2_ref[...], preferred_element_type=jnp.float32) + b2_ref[...]
    h = x + y
    mu = jnp.mean(h, axis=-1, keepdims=True)
    var = jnp.mean(h * h, axis=-1, keepdims=True) - mu * mu
    o_ref[...] = ((h - mu) * jax.lax.rsqrt(var + eps) * g_ref[...]
                  + beta_ref[...]).astype(o_ref.dtype)


def pallas_ffn_add_layernorm(x2d, w1_t, b1_row, w2_t, b2_row, g_row, beta_row, eps=1e-5):
    n, d = x2d.shape
    dh = w1_t.shape[1]
    itm = x2d.dtype.itemsize
    fixed = 2 * itm * (2 * d * dh + dh + 3 * d)
    row_bytes = itm * (2 * d + dh + 2 * d)
    tm = _pick_row_tile(n, row_bytes, fixed_bytes=fixed, max_tile=512)
    vec = lambda dd: pl.BlockSpec((1, dd), lambda i: (0, 0))
    return pl.pallas_call(
        functools.partial(_ffn_add_ln_kernel, eps=float(eps)),
        out_shape=jax.ShapeDtypeStruct((n, d), x2d.dtype),
        grid=(pl.cdiv(n, tm),),
        in_specs=[pl.BlockSpec((tm, d), lambda i: (i, 0)),
                  pl.BlockSpec((d, dh), lambda i: (0, 0)),
                  vec(dh),
                  pl.BlockSpec((dh, d), lambda i: (0, 0)),
                  vec(d), vec(d), vec(d)],
        out_specs=pl.BlockSpec((tm, d), lambda i: (i, 0)),
        compiler_params=_cparams("parallel"),
    )(x2d, w1_t, b1_row, w2_t, b2_row, g_row, beta_row)


# ----------------------------------------------------------------------------
# Full TransformerModel forward (jitted; eval-mode encoder)
# ----------------------------------------------------------------------------
@functools.partial(jax.jit, static_argnames=("nhead", "dropout", "training"))
def transformer_model_forward(src, kparams, rng=None, *, nhead, dropout=0.5, training=False):
    seq, batch = src.shape
    emb, pe = kparams["emb"], kparams["pe"]
    d = emb.shape[1]
    n = seq * batch

    # Rows ordered (batch, seq) so PE tiles are selectable purely via index_map.
    # TODO(synk): the embedding gather stays in XLA (scalar-prefetch DMA gather would fuse it).
    tok = src.T.reshape(-1)                               # (N,) in (b, s) order
    x2d = jnp.take(emb, tok, axis=0)                      # (N, D)
    pe_sd = pe[:seq]                                      # (S, D)

    if training and dropout > 0.0:
        if dropout >= 1.0:
            h = jnp.zeros_like(x2d)                       # torch dropout with p=1
        else:
            keep = jax.random.bernoulli(rng, 1.0 - dropout, (n, d)).astype(x2d.dtype)
            h = fused_scale_pe(x2d, pe_sd, seq, batch, scale=math.sqrt(d),
                               keep_mask=keep, keep_prob=1.0 - dropout)
    else:
        h = fused_scale_pe(x2d, pe_sd, seq, batch, scale=math.sqrt(d))

    for p in kparams["layers"]:
        qkv = pallas_linear(h, p["w_in_t"], p["b_in"])                 # (N, 3D)
        attn = pallas_mha(qkv.reshape(batch, seq, 3 * d), nhead)       # (B, S, D)
        h = pallas_proj_add_layernorm(attn.reshape(n, d), h,
                                      p["w_out_t"], p["b_out"], p["ln1_g"], p["ln1_b"])
        h = pallas_ffn_add_layernorm(h, p["w1_t"], p["b1"], p["w2_t"], p["b2"],
                                     p["ln2_g"], p["ln2_b"])

    return h.reshape(batch, seq, d).transpose(1, 0, 2)                 # (S, B, D)


# ----------------------------------------------------------------------------
# Pure-JAX reference (PyTorch eval-mode semantics)
# ----------------------------------------------------------------------------
def _layer_norm_ref(x, g, b, eps=1e-5):
    mu = jnp.mean(x, axis=-1, keepdims=True)
    var = jnp.mean((x - mu) ** 2, axis=-1, keepdims=True)
    return (x - mu) * jax.lax.rsqrt(var + eps) * g + b


def reference_forward(src, params, nhead):
    seq, batch = src.shape
    emb, pe = params["emb"], params["pe"]
    d = emb.shape[1]
    dh = d // nhead
    h = emb[src] * math.sqrt(d) + pe[:seq][:, None, :]                # (S, B, D)
    for p in params["layers"]:
        qkv = h @ p["w_in"].T + p["b_in"]
        q, k, v = jnp.split(qkv, 3, axis=-1)

        def heads(t):
            return (t.reshape(seq, batch, nhead, dh).transpose(1, 2, 0, 3)
                     .reshape(batch * nhead, seq, dh))

        sc = jnp.einsum("bqd,bkd->bqk", heads(q), heads(k)) / math.sqrt(dh)
        a = jax.nn.softmax(sc, axis=-1)
        oh = jnp.einsum("bqk,bkd->bqd", a, heads(v))
        attn = oh.reshape(batch, nhead, seq, dh).transpose(2, 0, 1, 3).reshape(seq, batch, d)
        attn = attn @ p["w_out"].T + p["b_out"]
        h = _layer_norm_ref(h + attn, p["ln1_g"], p["ln1_b"])
        ff = jax.nn.relu(h @ p["w1"].T + p["b1"]) @ p["w2"].T + p["b2"]
        h = _layer_norm_ref(h + ff, p["ln2_g"], p["ln2_b"])
    return h


# ----------------------------------------------------------------------------
# Main
# ----------------------------------------------------------------------------
if __name__ == "__main__":
    key = jax.random.PRNGKey(0)
    ntoken, d_model, nhead, d_hid, nlayers = 100, 128, 4, 256, 2
    S, B = 8, 2

    k_params, k_tok, k_drop = jax.random.split(key, 3)
    params = init_params(k_params, ntoken, d_model, nhead, d_hid, nlayers, max_len=64)
    kparams = prepare_kernel_params(params)
    src = jax.random.randint(k_tok, (S, B), 0, ntoken, dtype=jnp.int32)

    # Eval-mode forward (all dropouts identity), matching PyTorch module.eval().
    out = transformer_model_forward(src, kparams, nhead=nhead, dropout=0.5, training=False)
    out = jax.block_until_ready(out)

    ref = reference_forward(src, params, nhead)
    assert out.shape == (S, B, d_model)
    max_err = float(jnp.max(jnp.abs(out - ref)))
    assert jnp.allclose(out, ref, atol=2e-3, rtol=2e-3), max_err

    # Exercise the training-mode positional-encoding dropout path (mask-based) once.
    y = transformer_model_forward(src, kparams, k_drop, nhead=nhead, dropout=0.1, training=True)
    y = jax.block_until_ready(y)
    assert y.shape == (S, B, d_model)

    print("KERNEL_OK")
</pallas_src>

<mosaic_0001>
module attributes {stable_mosaic.version = 11 : i64} {
  func.func @_mha_kernel(%arg0: i32, %arg1: memref<1x8x384xf32, #tpu.memory_space<vmem>>, %arg2: memref<1x8x128xf32, #tpu.memory_space<vmem>>) attributes {dimension_semantics = [#tpu.dimension_semantics<parallel>], iteration_bounds = array<i64: 2>, scalar_prefetch = 0 : i64, scratch_operands = 0 : i64, tpu.core_type = #tpu.core_type<tc>, window_params = [{transform_indices = @transform_0, window_bounds = array<i64: 1, 8, 384>}, {transform_indices = @transform_1, window_bounds = array<i64: 1, 8, 128>}]} {
    %c0 = arith.constant 0 : index
    %c0_0 = arith.constant 0 : index
    %c0_1 = arith.constant 0 : index
    %0 = vector.load %arg1[%c0, %c0_0, %c0_1] : memref<1x8x384xf32, #tpu.memory_space<vmem>>, vector<1x8x384xf32>
    %1 = vector.shape_cast %0 : vector<1x8x384xf32> to vector<8x384xf32>
    %2 = vector.extract_strided_slice %1 {offsets = [0, 0], sizes = [8, 32], strides = [1, 1]} : vector<8x384xf32> to vector<8x32xf32>
    %3 = vector.extract_strided_slice %1 {offsets = [0, 128], sizes = [8, 32], strides = [1, 1]} : vector<8x384xf32> to vector<8x32xf32>
    %4 = vector.extract_strided_slice %1 {offsets = [0, 256], sizes = [8, 32], strides = [1, 1]} : vector<8x384xf32> to vector<8x32xf32>
    %cst = arith.constant dense<0.000000e+00> : vector<8x8xf32>
    %5 = tpu.matmul %2, %3, %cst {dimension_numbers = #tpu.dot_dimension_numbers<[1], [1], [0], [0], [0, 0, 1, 0], [], []>, precision = #tpu.contract_precision<fp32>} : vector<8x32xf32>, vector<8x32xf32>, vector<8x8xf32> -> vector<8x8xf32>
    %cst_2 = arith.constant 0.176776692 : f32
    %6 = vector.broadcast %cst_2 : f32 to vector<8x8xf32>
    %7 = arith.mulf %5, %6 : vector<8x8xf32>
    %cst_3 = arith.constant dense<0xFF800000> : vector<8xf32>
    %8 = vector.multi_reduction <maximumf>, %7, %cst_3 [1] : vector<8x8xf32> to vector<8xf32>
    %9 = vector.shape_cast %8 : vector<8xf32> to vector<8x1xf32>
    %10 = vector.broadcast %9 : vector<8x1xf32> to vector<8x8xf32>
    %11 = arith.subf %7, %10 : vector<8x8xf32>
    %12 = math.exp %11 : vector<8x8xf32>
    %cst_4 = arith.constant dense<0.000000e+00> : vector<8xf32>
    %13 = vector.multi_reduction <add>, %12, %cst_4 [1] : vector<8x8xf32> to vector<8xf32>
    %14 = vector.shape_cast %13 : vector<8xf32> to vector<8x1xf32>
    %cst_5 = arith.constant 1.000000e+00 : f32
    %15 = vector.broadcast %cst_5 : f32 to vector<8x1xf32>
    %16 = arith.divf %15, %14 : vector<8x1xf32>
    %17 = vector.broadcast %16 : vector<8x1xf32> to vector<8x8xf32>
    %18 = arith.mulf %12, %17 : vector<8x8xf32>
    %cst_6 = arith.constant dense<0.000000e+00> : vector<8x32xf32>
    %19 = tpu.matmul %18, %4, %cst_6 {dimension_numbers = #tpu.dot_dimension_numbers<[1], [0], [0], [1], [0, 0, 1, 1], [], []>, precision = #tpu.contract_precision<fp32>} : vector<8x8xf32>, vector<8x32xf32>, vector<8x32xf32> -> vector<8x32xf32>
    %20 = vector.extract_strided_slice %1 {offsets = [0, 32], sizes = [8, 32], strides = [1, 1]} : vector<8x384xf32> to vector<8x32xf32>
    %21 = vector.extract_strided_slice %1 {offsets = [0, 160], sizes = [8, 32], strides = [1, 1]} : vector<8x384xf32> to vector<8x32xf32>
    %22 = vector.extract_strided_slice %1 {offsets = [0, 288], sizes = [8, 32], strides = [1, 1]} : vector<8x384xf32> to vector<8x32xf32>
    %cst_7 = arith.constant dense<0.000000e+00> : vector<8x8xf32>
    %23 = tpu.matmul %20, %21, %cst_7 {dimension_numbers = #tpu.dot_dimension_numbers<[1], [1], [0], [0], [0, 0, 1, 0], [], []>, precision = #tpu.contract_precision<fp32>} : vector<8x32xf32>, vector<8x32xf32>, vector<8x8xf32> -> vector<8x8xf32>
    %cst_8 = arith.constant 0.176776692 : f32
    %24 = vector.broadcast %cst_8 : f32 to vector<8x8xf32>
    %25 = arith.mulf %23, %24 : vector<8x8xf32>
    %cst_9 = arith.constant dense<0xFF800000> : vector<8xf32>
    %26 = vector.multi_reduction <maximumf>, %25, %cst_9 [1] : vector<8x8xf32> to vector<8xf32>
    %27 = vector.shape_cast %26 : vector<8xf32> to vector<8x1xf32>
    %28 = vector.broadcast %27 : vector<8x1xf32> to vector<8x8xf32>
    %29 = arith.subf %25, %28 : vector<8x8xf32>
    %30 = math.exp %29 : vector<8x8xf32>
    %cst_10 = arith.constant dense<0.000000e+00> : vector<8xf32>
    %31 = vector.multi_reduction <add>, %30, %cst_10 [1] : vector<8x8xf32> to vector<8xf32>
    %32 = vector.shape_cast %31 : vector<8xf32> to vector<8x1xf32>
    %cst_11 = arith.constant 1.000000e+00 : f32
    %33 = vector.broadcast %cst_11 : f32 to vector<8x1xf32>
    %34 = arith.divf %33, %32 : vector<8x1xf32>
    %35 = vector.broadcast %34 : vector<8x1xf32> to vector<8x8xf32>
    %36 = arith.mulf %30, %35 : vector<8x8xf32>
    %cst_12 = arith.constant dense<0.000000e+00> : vector<8x32xf32>
    %37 = tpu.matmul %36, %22, %cst_12 {dimension_numbers = #tpu.dot_dimension_numbers<[1], [0], [0], [1], [0, 0, 1, 1], [], []>, precision = #tpu.contract_precision<fp32>} : vector<8x8xf32>, vector<8x32xf32>, vector<8x32xf32> -> vector<8x32xf32>
    %38 = vector.extract_strided_slice %1 {offsets = [0, 64], sizes = [8, 32], strides = [1, 1]} : vector<8x384xf32> to vector<8x32xf32>
    %39 = vector.extract_strided_slice %1 {offsets = [0, 192], sizes = [8, 32], strides = [1, 1]} : vector<8x384xf32> to vector<8x32xf32>
    %40 = vector.extract_strided_slice %1 {offsets = [0, 320], sizes = [8, 32], strides = [1, 1]} : vector<8x384xf32> to vector<8x32xf32>
    %cst_13 = arith.constant dense<0.000000e+00> : vector<8x8xf32>
    %41 = tpu.matmul %38, %39, %cst_13 {dimension_numbers = #tpu.dot_dimension_numbers<[1], [1], [0], [0], [0, 0, 1, 0], [], []>, precision = #tpu.contract_precision<fp32>} : vector<8x32xf32>, vector<8x32xf32>, vector<8x8xf32> -> vector<8x8xf32>
    %cst_14 = arith.constant 0.176776692 : f32
    %42 = vector.broadcast %cst_14 : f32 to vector<8x8xf32>
    %43 = arith.mulf %41, %42 : vector<8x8xf32>
    %cst_15 = arith.constant dense<0xFF800000> : vector<8xf32>
    %44 = vector.multi_reduction <maximumf>, %43, %cst_15 [1] : vector<8x8xf32> to vector<8xf32>
    %45 = vector.shape_cast %44 : vector<8xf32> to vector<8x1xf32>
    %46 = vector.broadcast %45 : vector<8x1xf32> to vector<8x8xf32>
    %47 = arith.subf %43, %46 : vector<8x8xf32>
    %48 = math.exp %47 : vector<8x8xf32>
    %cst_16 = arith.constant dense<0.000000e+00> : vector<8xf32>
    %49 = vector.multi_reduction <add>, %48, %cst_16 [1] : vector<8x8xf32> to vector<8xf32>
    %50 = vector.shape_cast %49 : vector<8xf32> to vector<8x1xf32>
    %cst_17 = arith.constant 1.000000e+00 : f32
    %51 = vector.broadcast %cst_17 : f32 to vector<8x1xf32>
    %52 = arith.divf %51, %50 : vector<8x1xf32>
    %53 = vector.broadcast %52 : vector<8x1xf32> to vector<8x8xf32>
    %54 = arith.mulf %48, %53 : vector<8x8xf32>
    %cst_18 = arith.constant dense<0.000000e+00> : vector<8x32xf32>
    %55 = tpu.matmul %54, %40, %cst_18 {dimension_numbers = #tpu.dot_dimension_numbers<[1], [0], [0], [1], [0, 0, 1, 1], [], []>, precision = #tpu.contract_precision<fp32>} : vector<8x8xf32>, vector<8x32xf32>, vector<8x32xf32> -> vector<8x32xf32>
    %56 = vector.extract_strided_slice %1 {offsets = [0, 96], sizes = [8, 32], strides = [1, 1]} : vector<8x384xf32> to vector<8x32xf32>
    %57 = vector.extract_strided_slice %1 {offsets = [0, 224], sizes = [8, 32], strides = [1, 1]} : vector<8x384xf32> to vector<8x32xf32>
    %58 = vector.extract_strided_slice %1 {offsets = [0, 352], sizes = [8, 32], strides = [1, 1]} : vector<8x384xf32> to vector<8x32xf32>
    %cst_19 = arith.constant dense<0.000000e+00> : vector<8x8xf32>
    %59 = tpu.matmul %56, %57, %cst_19 {dimension_numbers = #tpu.dot_dimension_numbers<[1], [1], [0], [0], [0, 0, 1, 0], [], []>, precision = #tpu.contract_precision<fp32>} : vector<8x32xf32>, vector<8x32xf32>, vector<8x8xf32> -> vector<8x8xf32>
    %cst_20 = arith.constant 0.176776692 : f32
    %60 = vector.broadcast %cst_20 : f32 to vector<8x8xf32>
    %61 = arith.mulf %59, %60 : vector<8x8xf32>
    %cst_21 = arith.constant dense<0xFF800000> : vector<8xf32>
    %62 = vector.multi_reduction <maximumf>, %61, %cst_21 [1] : vector<8x8xf32> to vector<8xf32>
    %63 = vector.shape_cast %62 : vector<8xf32> to vector<8x1xf32>
    %64 = vector.broadcast %63 : vector<8x1xf32> to vector<8x8xf32>
    %65 = arith.subf %61, %64 : vector<8x8xf32>
    %66 = math.exp %65 : vector<8x8xf32>
    %cst_22 = arith.constant dense<0.000000e+00> : vector<8xf32>
    %67 = vector.multi_reduction <add>, %66, %cst_22 [1] : vector<8x8xf32> to vector<8xf32>
    %68 = vector.shape_cast %67 : vector<8xf32> to vector<8x1xf32>
    %cst_23 = arith.constant 1.000000e+00 : f32
    %69 = vector.broadcast %cst_23 : f32 to vector<8x1xf32>
    %70 = arith.divf %69, %68 : vector<8x1xf32>
    %71 = vector.broadcast %70 : vector<8x1xf32> to vector<8x8xf32>
    %72 = arith.mulf %66, %71 : vector<8x8xf32>
    %cst_24 = arith.constant dense<0.000000e+00> : vector<8x32xf32>
    %73 = tpu.matmul %72, %58, %cst_24 {dimension_numbers = #tpu.dot_dimension_numbers<[1], [0], [0], [1], [0, 0, 1, 1], [], []>, precision = #tpu.contract_precision<fp32>} : vector<8x8xf32>, vector<8x32xf32>, vector<8x32xf32> -> vector<8x32xf32>
    %74 = tpu.concatenate %19, %37, %55, %73 in 1 : vector<8x32xf32>, vector<8x32xf32>, vector<8x32xf32>, vector<8x32xf32> -> vector<8x128xf32>
    %c0_25 = arith.constant 0 : index
    %c0_26 = arith.constant 0 : index
    %c0_27 = arith.constant 0 : index
    %75 = vector.load %arg2[%c0_25, %c0_26, %c0_27] : memref<1x8x128xf32, #tpu.memory_space<vmem>>, vector<1x8x128xf32>
    %76 = vector.shape_cast %75 : vector<1x8x128xf32> to vector<8x128xf32>
    %77 = vector.shape_cast %74 : vector<8x128xf32> to vector<1x8x128xf32>
    tpu.vector_store %arg2[%c0_25, %c0_26, %c0_27], %77 {strides = array<i32>} : memref<1x8x128xf32, #tpu.memory_space<vmem>>, vector<1x8x128xf32>,
    return
  }
  func.func @transform_0(%arg0: i32) -> (i32, i32, i32) {
    %c0_i32 = arith.constant 0 : i32
    %c0_i32_0 = arith.constant 0 : i32
    %c0_i32_1 = arith.constant 0 : i32
    return %arg0, %c0_i32, %c0_i32_0 : i32, i32, i32
  }
  func.func @transform_1(%arg0: i32) -> (i32, i32, i32) {
    %c0_i32 = arith.constant 0 : i32
    %c0_i32_0 = arith.constant 0 : i32
    %c0_i32_1 = arith.constant 0 : i32
    return %arg0, %c0_i32, %c0_i32_0 : i32, i32, i32
  }
}

module attributes {stable_mosaic.version = 11 : i64} {
  func.func @_linear_kernel(%arg0: i32, %arg1: memref<8x128xf32, #tpu.memory_space<vmem>>, %arg2: memref<128x384xf32, #tpu.memory_space<vmem>>, %arg3: memref<1x384xf32, #tpu.memory_space<vmem>>, %arg4: memref<8x384xf32, #tpu.memory_space<vmem>>) attributes {dimension_semantics = [#tpu.dimension_semantics<parallel>], iteration_bounds = array<i64: 2>, scalar_prefetch = 0 : i64, scratch_operands = 0 : i64, tpu.core_type = #tpu.core_type<tc>, window_params = [{transform_indices = @transform_0, window_bounds = array<i64: 8, 128>}, {pipeline_mode = #tpu.pipeline_mode<synchronous>, transform_indices = @transform_1, window_bounds = array<i64: 128, 384>}, {pipeline_mode = #tpu.pipeline_mode<synchronous>, transform_indices = @transform_2, window_bounds = array<i64: 1, 384>}, {transform_indices = @transform_3, window_bounds = array<i64: 8, 384>}]} {
    %c0 = arith.constant 0 : index
    %c0_0 = arith.constant 0 : index
    %0 = vector.load %arg1[%c0, %c0_0] : memref<8x128xf32, #tpu.memory_space<vmem>>, vector<8x128xf32>
    %c0_1 = arith.constant 0 : index
    %c0_2 = arith.constant 0 : index
    %1 = vector.load %arg2[%c0_1, %c0_2] : memref<128x384xf32, #tpu.memory_space<vmem>>, vector<128x384xf32>
    %cst = arith.constant dense<0.000000e+00> : vector<8x384xf32>
    %2 = tpu.matmul %0, %1, %cst {dimension_numbers = #tpu.dot_dimension_numbers<[1], [0], [0], [1], [0, 0, 1, 1], [], []>, precision = #tpu.contract_precision<fp32>} : vector<8x128xf32>, vector<128x384xf32>, vector<8x384xf32> -> vector<8x384xf32>
    %c0_3 = arith.constant 0 : index
    %c0_4 = arith.constant 0 : index
    %3 = vector.load %arg3[%c0_3, %c0_4] : memref<1x384xf32, #tpu.memory_space<vmem>>, vector<1x384xf32>
    %4 = vector.broadcast %3 : vector<1x384xf32> to vector<8x384xf32>
    %5 = arith.addf %2, %4 : vector<8x384xf32>
    %c0_5 = arith.constant 0 : index
    %c0_6 = arith.constant 0 : index
    %6 = vector.load %arg4[%c0_5, %c0_6] : memref<8x384xf32, #tpu.memory_space<vmem>>, vector<8x384xf32>
    tpu.vector_store %arg4[%c0_5, %c0_6], %5 {strides = array<i32>} : memref<8x384xf32, #tpu.memory_space<vmem>>, vector<8x384xf32>,
    return
  }
  func.func @transform_0(%arg0: i32) -> (i32, i32) {
    %c0_i32 = arith.constant 0 : i32
    %c0_i32_0 = arith.constant 0 : i32
    return %arg0, %c0_i32 : i32, i32
  }
  func.func @transform_1(%arg0: i32) -> (i32, i32) {
    %c0_i32 = arith.constant 0 : i32
    %c0_i32_0 = arith.constant 0 : i32
    %c0_i32_1 = arith.constant 0 : i32
    return %c0_i32, %c0_i32_0 : i32, i32
  }
  func.func @transform_2(%arg0: i32) -> (i32, i32) {
    %c0_i32 = arith.constant 0 : i32
    %c0_i32_0 = arith.constant 0 : i32
    %c0_i32_1 = arith.constant 0 : i32
    return %c0_i32, %c0_i32_0 : i32, i32
  }
  func.func @transform_3(%arg0: i32) -> (i32, i32) {
    %c0_i32 = arith.constant 0 : i32
    %c0_i32_0 = arith.constant 0 : i32
    return %arg0, %c0_i32 : i32, i32
  }
}

module attributes {stable_mosaic.version = 11 : i64} {
  func.func @_scale_pe_kernel(%arg0: i32, %arg1: i32, %arg2: memref<8x128xf32, #tpu.memory_space<vmem>>, %arg3: memref<8x128xf32, #tpu.memory_space<vmem>>, %arg4: memref<8x128xf32, #tpu.memory_space<vmem>>) attributes {dimension_semantics = [#tpu.dimension_semantics<parallel>, #tpu.dimension_semantics<parallel>], iteration_bounds = array<i64: 2, 1>, scalar_prefetch = 0 : i64, scratch_operands = 0 : i64, tpu.core_type = #tpu.core_type<tc>, window_params = [{transform_indices = @transform_0, window_bounds = array<i64: 8, 128>}, {transform_indices = @transform_1, window_bounds = array<i64: 8, 128>}, {transform_indices = @transform_2, window_bounds = array<i64: 8, 128>}]} {
    %c0 = arith.constant 0 : index
    %c0_0 = arith.constant 0 : index
    %0 = vector.load %arg2[%c0, %c0_0] : memref<8x128xf32, #tpu.memory_space<vmem>>, vector<8x128xf32>
    %cst = arith.constant 11.3137083 : f32
    %1 = vector.broadcast %cst : f32 to vector<8x128xf32>
    %2 = arith.mulf %0, %1 : vector<8x128xf32>
    %c0_1 = arith.constant 0 : index
    %c0_2 = arith.constant 0 : index
    %3 = vector.load %arg3[%c0_1, %c0_2] : memref<8x128xf32, #tpu.memory_space<vmem>>, vector<8x128xf32>
    %4 = arith.addf %2, %3 : vector<8x128xf32>
    %c0_3 = arith.constant 0 : index
    %c0_4 = arith.constant 0 : index
    %5 = vector.load %arg4[%c0_3, %c0_4] : memref<8x128xf32, #tpu.memory_space<vmem>>, vector<8x128xf32>
    tpu.vector_store %arg4[%c0_3, %c0_4], %4 {strides = array<i32>} : memref<8x128xf32, #tpu.memory_space<vmem>>, vector<8x128xf32>,
    return
  }
  func.func @transform_0(%arg0: i32, %arg1: i32) -> (i32, i32) {
    %c1_i32 = arith.constant 1 : i32
    %0 = arith.muli %arg0, %c1_i32 : i32
    %1 = arith.addi %0, %arg1 : i32
    %c0_i32 = arith.constant 0 : i32
    %c0_i32_0 = arith.constant 0 : i32
    return %1, %c0_i32 : i32, i32
  }
  func.func @transform_1(%arg0: i32, %arg1: i32) -> (i32, i32) {
    %c0_i32 = arith.constant 0 : i32
    %c0_i32_0 = arith.constant 0 : i32
    return %arg1, %c0_i32 : i32, i32
  }
  func.func @transform_2(%arg0: i32, %arg1: i32) -> (i32, i32) {
    %c1_i32 = arith.constant 1 : i32
    %0 = arith.muli %arg0, %c1_i32 : i32
    %1 = arith.addi %0, %arg1 : i32
    %c0_i32 = arith.constant 0 : i32
    %c0_i32_0 = arith.constant 0 : i32
    return %1, %c0_i32 : i32, i32
  }
}

module attributes {stable_mosaic.version = 11 : i64} {
  func.func @_proj_add_ln_kernel(%arg0: i32, %arg1: memref<8x128xf32, #tpu.memory_space<vmem>>, %arg2: memref<8x128xf32, #tpu.memory_space<vmem>>, %arg3: memref<128x128xf32, #tpu.memory_space<vmem>>, %arg4: memref<1x128xf32, #tpu.memory_space<vmem>>, %arg5: memref<1x128xf32, #tpu.memory_space<vmem>>, %arg6: memref<1x128xf32, #tpu.memory_space<vmem>>, %arg7: memref<8x128xf32, #tpu.memory_space<vmem>>) attributes {dimension_semantics = [#tpu.dimension_semantics<parallel>], iteration_bounds = array<i64: 2>, scalar_prefetch = 0 : i64, scratch_operands = 0 : i64, tpu.core_type = #tpu.core_type<tc>, window_params = [{transform_indices = @transform_0, window_bounds = array<i64: 8, 128>}, {transform_indices = @transform_1, window_bounds = array<i64: 8, 128>}, {pipeline_mode = #tpu.pipeline_mode<synchronous>, transform_indices = @transform_2, window_bounds = array<i64: 128, 128>}, {pipeline_mode = #tpu.pipeline_mode<synchronous>, transform_indices = @transform_3, window_bounds = array<i64: 1, 128>}, {pipeline_mode = #tpu.pipeline_mode<synchronous>, transform_indices = @transform_4, window_bounds = array<i64: 1, 128>}, {pipeline_mode = #tpu.pipeline_mode<synchronous>, transform_indices = @transform_5, window_bounds = array<i64: 1, 128>}, {transform_indices = @transform_6, window_bounds = array<i64: 8, 128>}]} {
    %c0 = arith.constant 0 : index
    %c0_0 = arith.constant 0 : index
    %0 = vector.load %arg1[%c0, %c0_0] : memref<8x128xf32, #tpu.memory_space<vmem>>, vector<8x128xf32>
    %c0_1 = arith.constant 0 : index
    %c0_2 = arith.constant 0 : index
    %1 = vector.load %arg3[%c0_1, %c0_2] : memref<128x128xf32, #tpu.memory_space<vmem>>, vector<128x128xf32>
    %cst = arith.constant dense<0.000000e+00> : vector<8x128xf32>
    %2 = tpu.matmul %0, %1, %cst {dimension_numbers = #tpu.dot_dimension_numbers<[1], [0], [0], [1], [0, 0, 1, 1], [], []>, precision = #tpu.contract_precision<fp32>} : vector<8x128xf32>, vector<128x128xf32>, vector<8x128xf32> -> vector<8x128xf32>
    %c0_3 = arith.constant 0 : index
    %c0_4 = arith.constant 0 : index
    %3 = vector.load %arg4[%c0_3, %c0_4] : memref<1x128xf32, #tpu.memory_space<vmem>>, vector<1x128xf32>
    %4 = vector.broadcast %3 : vector<1x128xf32> to vector<8x128xf32>
    %5 = arith.addf %2, %4 : vector<8x128xf32>
    %c0_5 = arith.constant 0 : index
    %c0_6 = arith.constant 0 : index
    %6 = vector.load %arg2[%c0_5, %c0_6] : memref<8x128xf32, #tpu.memory_space<vmem>>, vector<8x128xf32>
    %7 = arith.addf %6, %5 : vector<8x128xf32>
    %cst_7 = arith.constant dense<0.000000e+00> : vector<8xf32>
    %8 = vector.multi_reduction <add>, %7, %cst_7 [1] : vector<8x128xf32> to vector<8xf32>
    %9 = vector.shape_cast %8 : vector<8xf32> to vector<8x1xf32>
    %cst_8 = arith.constant 1.280000e+02 : f32
    %10 = vector.broadcast %cst_8 : f32 to vector<8x1xf32>
    %11 = arith.divf %9, %10 : vector<8x1xf32>
    %12 = arith.mulf %7, %7 : vector<8x128xf32>
    %cst_9 = arith.constant dense<0.000000e+00> : vector<8xf32>
    %13 = vector.multi_reduction <add>, %12, %cst_9 [1] : vector<8x128xf32> to vector<8xf32>
    %14 = vector.shape_cast %13 : vector<8xf32> to vector<8x1xf32>
    %cst_10 = arith.constant 1.280000e+02 : f32
    %15 = vector.broadcast %cst_10 : f32 to vector<8x1xf32>
    %16 = arith.divf %14, %15 : vector<8x1xf32>
    %17 = arith.mulf %11, %11 : vector<8x1xf32>
    %18 = arith.subf %16, %17 : vector<8x1xf32>
    %19 = vector.broadcast %11 : vector<8x1xf32> to vector<8x128xf32>
    %20 = arith.subf %7, %19 : vector<8x128xf32>
    %cst_11 = arith.constant 9.99999974E-6 : f32
    %21 = vector.broadcast %cst_11 : f32 to vector<8x1xf32>
    %22 = arith.addf %18, %21 : vector<8x1xf32>
    %23 = math.rsqrt %22 : vector<8x1xf32>
    %24 = vector.broadcast %23 : vector<8x1xf32> to vector<8x128xf32>
    %25 = arith.mulf %20, %24 : vector<8x128xf32>
    %c0_12 = arith.constant 0 : index
    %c0_13 = arith.constant 0 : index
    %26 = vector.load %arg5[%c0_12, %c0_13] : memref<1x128xf32, #tpu.memory_space<vmem>>, vector<1x128xf32>
    %27 = vector.broadcast %26 : vector<1x128xf32> to vector<8x128xf32>
    %28 = arith.mulf %25, %27 : vector<8x128xf32>
    %c0_14 = arith.constant 0 : index
    %c0_15 = arith.constant 0 : index
    %29 = vector.load %arg6[%c0_14, %c0_15] : memref<1x128xf32, #tpu.memory_space<vmem>>, vector<1x128xf32>
    %30 = vector.broadcast %29 : vector<1x128xf32> to vector<8x128xf32>
    %31 = arith.addf %28, %30 : vector<8x128xf32>
    %c0_16 = arith.constant 0 : index
    %c0_17 = arith.constant 0 : index
    %32 = vector.load %arg7[%c0_16, %c0_17] : memref<8x128xf32, #tpu.memory_space<vmem>>, vector<8x128xf32>
    tpu.vector_store %arg7[%c0_16, %c0_17], %31 {strides = array<i32>} : memref<8x128xf32, #tpu.memory_space<vmem>>, vector<8x128xf32>,
    return
  }
  func.func @transform_0(%arg0: i32) -> (i32, i32) {
    %c0_i32 = arith.constant 0 : i32
    %c0_i32_0 = arith.constant 0 : i32
    return %arg0, %c0_i32 : i32, i32
  }
  func.func @transform_1(%arg0: i32) -> (i32, i32) {
    %c0_i32 = arith.constant 0 : i32
    %c0_i32_0 = arith.constant 0 : i32
    return %arg0, %c0_i32 : i32, i32
  }
  func.func @transform_2(%arg0: i32) -> (i32, i32) {
    %c0_i32 = arith.constant 0 : i32
    %c0_i32_0 = arith.constant 0 : i32
    %c0_i32_1 = arith.constant 0 : i32
    return %c0_i32, %c0_i32_0 : i32, i32
  }
  func.func @transform_3(%arg0: i32) -> (i32, i32) {
    %c0_i32 = arith.constant 0 : i32
    %c0_i32_0 = arith.constant 0 : i32
    %c0_i32_1 = arith.constant 0 : i32
    return %c0_i32, %c0_i32_0 : i32, i32
  }
  func.func @transform_4(%arg0: i32) -> (i32, i32) {
    %c0_i32 = arith.constant 0 : i32
    %c0_i32_0 = arith.constant 0 : i32
    %c0_i32_1 = arith.constant 0 : i32
    return %c0_i32, %c0_i32_0 : i32, i32
  }
  func.func @transform_5(%arg0: i32) -> (i32, i32) {
    %c0_i32 = arith.constant 0 : i32
    %c0_i32_0 = arith.constant 0 : i32
    %c0_i32_1 = arith.constant 0 : i32
    return %c0_i32, %c0_i32_0 : i32, i32
  }
  func.func @transform_6(%arg0: i32) -> (i32, i32) {
    %c0_i32 = arith.constant 0 : i32
    %c0_i32_0 = arith.constant 0 : i32
    return %arg0, %c0_i32 : i32, i32
  }
}

module attributes {stable_mosaic.version = 11 : i64} {
  func.func @_ffn_add_ln_kernel(%arg0: i32, %arg1: memref<8x128xf32, #tpu.memory_space<vmem>>, %arg2: memref<128x256xf32, #tpu.memory_space<vmem>>, %arg3: memref<1x256xf32, #tpu.memory_space<vmem>>, %arg4: memref<256x128xf32, #tpu.memory_space<vmem>>, %arg5: memref<1x128xf32, #tpu.memory_space<vmem>>, %arg6: memref<1x128xf32, #tpu.memory_space<vmem>>, %arg7: memref<1x128xf32, #tpu.memory_space<vmem>>, %arg8: memref<8x128xf32, #tpu.memory_space<vmem>>) attributes {dimension_semantics = [#tpu.dimension_semantics<parallel>], iteration_bounds = array<i64: 2>, scalar_prefetch = 0 : i64, scratch_operands = 0 : i64, tpu.core_type = #tpu.core_type<tc>, window_params = [{transform_indices = @transform_0, window_bounds = array<i64: 8, 128>}, {pipeline_mode = #tpu.pipeline_mode<synchronous>, transform_indices = @transform_1, window_bounds = array<i64: 128, 256>}, {pipeline_mode = #tpu.pipeline_mode<synchronous>, transform_indices = @transform_2, window_bounds = array<i64: 1, 256>}, {pipeline_mode = #tpu.pipeline_mode<synchronous>, transform_indices = @transform_3, window_bounds = array<i64: 256, 128>}, {pipeline_mode = #tpu.pipeline_mode<synchronous>, transform_indices = @transform_4, window_bounds = array<i64: 1, 128>}, {pipeline_mode = #tpu.pipeline_mode<synchronous>, transform_indices = @transform_5, window_bounds = array<i64: 1, 128>}, {pipeline_mode = #tpu.pipeline_mode<synchronous>, transform_indices = @transform_6, window_bounds = array<i64: 1, 128>}, {transform_indices = @transform_7, window_bounds = array<i64: 8, 128>}]} {
    %c0 = arith.constant 0 : index
    %c0_0 = arith.constant 0 : index
    %0 = vector.load %arg1[%c0, %c0_0] : memref<8x128xf32, #tpu.memory_space<vmem>>, vector<8x128xf32>
    %c0_1 = arith.constant 0 : index
    %c0_2 = arith.constant 0 : index
    %1 = vector.load %arg2[%c0_1, %c0_2] : memref<128x256xf32, #tpu.memory_space<vmem>>, vector<128x256xf32>
    %cst = arith.constant dense<0.000000e+00> : vector<8x256xf32>
    %2 = tpu.matmul %0, %1, %cst {dimension_numbers = #tpu.dot_dimension_numbers<[1], [0], [0], [1], [0, 0, 1, 1], [], []>, precision = #tpu.contract_precision<fp32>} : vector<8x128xf32>, vector<128x256xf32>, vector<8x256xf32> -> vector<8x256xf32>
    %c0_3 = arith.constant 0 : index
    %c0_4 = arith.constant 0 : index
    %3 = vector.load %arg3[%c0_3, %c0_4] : memref<1x256xf32, #tpu.memory_space<vmem>>, vector<1x256xf32>
    %4 = vector.broadcast %3 : vector<1x256xf32> to vector<8x256xf32>
    %5 = arith.addf %2, %4 : vector<8x256xf32>
    %cst_5 = arith.constant 0.000000e+00 : f32
    %6 = vector.broadcast %cst_5 : f32 to vector<8x256xf32>
    %7 = arith.maximumf %5, %6 : vector<8x256xf32>
    %c0_6 = arith.constant 0 : index
    %c0_7 = arith.constant 0 : index
    %8 = vector.load %arg4[%c0_6, %c0_7] : memref<256x128xf32, #tpu.memory_space<vmem>>, vector<256x128xf32>
    %cst_8 = arith.constant dense<0.000000e+00> : vector<8x128xf32>
    %9 = tpu.matmul %7, %8, %cst_8 {dimension_numbers = #tpu.dot_dimension_numbers<[1], [0], [0], [1], [0, 0, 1, 1], [], []>, precision = #tpu.contract_precision<fp32>} : vector<8x256xf32>, vector<256x128xf32>, vector<8x128xf32> -> vector<8x128xf32>
    %c0_9 = arith.constant 0 : index
    %c0_10 = arith.constant 0 : index
    %10 = vector.load %arg5[%c0_9, %c0_10] : memref<1x128xf32, #tpu.memory_space<vmem>>, vector<1x128xf32>
    %11 = vector.broadcast %10 : vector<1x128xf32> to vector<8x128xf32>
    %12 = arith.addf %9, %11 : vector<8x128xf32>
    %13 = arith.addf %0, %12 : vector<8x128xf32>
    %cst_11 = arith.constant dense<0.000000e+00> : vector<8xf32>
    %14 = vector.multi_reduction <add>, %13, %cst_11 [1] : vector<8x128xf32> to vector<8xf32>
    %15 = vector.shape_cast %14 : vector<8xf32> to vector<8x1xf32>
    %cst_12 = arith.constant 1.280000e+02 : f32
    %16 = vector.broadcast %cst_12 : f32 to vector<8x1xf32>
    %17 = arith.divf %15, %16 : vector<8x1xf32>
    %18 = arith.mulf %13, %13 : vector<8x128xf32>
    %cst_13 = arith.constant dense<0.000000e+00> : vector<8xf32>
    %19 = vector.multi_reduction <add>, %18, %cst_13 [1] : vector<8x128xf32> to vector<8xf32>
    %20 = vector.shape_cast %19 : vector<8xf32> to vector<8x1xf32>
    %cst_14 = arith.constant 1.280000e+02 : f32
    %21 = vector.broadcast %cst_14 : f32 to vector<8x1xf32>
    %22 = arith.divf %20, %21 : vector<8x1xf32>
    %23 = arith.mulf %17, %17 : vector<8x1xf32>
    %24 = arith.subf %22, %23 : vector<8x1xf32>
    %25 = vector.broadcast %17 : vector<8x1xf32> to vector<8x128xf32>
    %26 = arith.subf %13, %25 : vector<8x128xf32>
    %cst_15 = arith.constant 9.99999974E-6 : f32
    %27 = vector.broadcast %cst_15 : f32 to vector<8x1xf32>
    %28 = arith.addf %24, %27 : vector<8x1xf32>
    %29 = math.rsqrt %28 : vector<8x1xf32>
    %30 = vector.broadcast %29 : vector<8x1xf32> to vector<8x128xf32>
    %31 = arith.mulf %26, %30 : vector<8x128xf32>
    %c0_16 = arith.constant 0 : index
    %c0_17 = arith.constant 0 : index
    %32 = vector.load %arg6[%c0_16, %c0_17] : memref<1x128xf32, #tpu.memory_space<vmem>>, vector<1x128xf32>
    %33 = vector.broadcast %32 : vector<1x128xf32> to vector<8x128xf32>
    %34 = arith.mulf %31, %33 : vector<8x128xf32>
    %c0_18 = arith.constant 0 : index
    %c0_19 = arith.constant 0 : index
    %35 = vector.load %arg7[%c0_18, %c0_19] : memref<1x128xf32, #tpu.memory_space<vmem>>, vector<1x128xf32>
    %36 = vector.broadcast %35 : vector<1x128xf32> to vector<8x128xf32>
    %37 = arith.addf %34, %36 : vector<8x128xf32>
    %c0_20 = arith.constant 0 : index
    %c0_21 = arith.constant 0 : index
    %38 = vector.load %arg8[%c0_20, %c0_21] : memref<8x128xf32, #tpu.memory_space<vmem>>, vector<8x128xf32>
    tpu.vector_store %arg8[%c0_20, %c0_21], %37 {strides = array<i32>} : memref<8x128xf32, #tpu.memory_space<vmem>>, vector<8x128xf32>,
    return
  }
  func.func @transform_0(%arg0: i32) -> (i32, i32) {
    %c0_i32 = arith.constant 0 : i32
    %c0_i32_0 = arith.constant 0 : i32
    return %arg0, %c0_i32 : i32, i32
  }
  func.func @transform_1(%arg0: i32) -> (i32, i32) {
    %c0_i32 = arith.constant 0 : i32
    %c0_i32_0 = arith.constant 0 : i32
    %c0_i32_1 = arith.constant 0 : i32
    return %c0_i32, %c0_i32_0 : i32, i32
  }
  func.func @transform_2(%arg0: i32) -> (i32, i32) {
    %c0_i32 = arith.constant 0 : i32
    %c0_i32_0 = arith.constant 0 : i32
    %c0_i32_1 = arith.constant 0 : i32
    return %c0_i32, %c0_i32_0 : i32, i32
  }
  func.func @transform_3(%arg0: i32) -> (i32, i32) {
    %c0_i32 = arith.constant 0 : i32
    %c0_i32_0 = arith.constant 0 : i32
    %c0_i32_1 = arith.constant 0 : i32
    return %c0_i32, %c0_i32_0 : i32, i32
  }
  func.func @transform_4(%arg0: i32) -> (i32, i32) {
    %c0_i32 = arith.constant 0 : i32
    %c0_i32_0 = arith.constant 0 : i32
    %c0_i32_1 = arith.constant 0 : i32
    return %c0_i32, %c0_i32_0 : i32, i32
  }
  func.func @transform_5(%arg0: i32) -> (i32, i32) {
    %c0_i32 = arith.constant 0 : i32
    %c0_i32_0 = arith.constant 0 : i32
    %c0_i32_1 = arith.constant 0 : i32
    return %c0_i32, %c0_i32_0 : i32, i32
  }
  func.func @transform_6(%arg0: i32) -> (i32, i32) {
    %c0_i32 = arith.constant 0 : i32
    %c0_i32_0 = arith.constant 0 : i32
    %c0_i32_1 = arith.constant 0 : i32
    return %c0_i32, %c0_i32_0 : i32, i32
  }
  func.func @transform_7(%arg0: i32) -> (i32, i32) {
    %c0_i32 = arith.constant 0 : i32
    %c0_i32_0 = arith.constant 0 : i32
    return %arg0, %c0_i32 : i32, i32
  }
}

module attributes {stable_mosaic.version = 11 : i64} {
  func.func @_proj_add_ln_kernel(%arg0: i32, %arg1: memref<8x128xf32, #tpu.memory_space<vmem>>, %arg2: memref<8x128xf32, #tpu.memory_space<vmem>>, %arg3: memref<128x128xf32, #tpu.memory_space<vmem>>, %arg4: memref<1x128xf32, #tpu.memory_space<vmem>>, %arg5: memref<1x128xf32, #tpu.memory_space<vmem>>, %arg6: memref<1x128xf32, #tpu.memory_space<vmem>>, %arg7: memref<8x128xf32, #tpu.memory_space<vmem>>) attributes {dimension_semantics = [#tpu.dimension_semantics<parallel>], iteration_bounds = array<i64: 2>, scalar_prefetch = 0 : i64, scratch_operands = 0 : i64, tpu.core_type = #tpu.core_type<tc>, window_params = [{transform_indices = @transform_0, window_bounds = array<i64: 8, 128>}, {transform_indices = @transform_1, window_bounds = array<i64: 8, 128>}, {pipeline_mode = #tpu.pipeline_mode<synchronous>, transform_indices = @transform_2, window_bounds = array<i64: 128, 128>}, {pipeline_mode = #tpu.pipeline_mode<synchronous>, transform_indices = @transform_3, window_bounds = array<i64: 1, 128>}, {pipeline_mode = #tpu.pipeline_mode<synchronous>, transform_indices = @transform_4, window_bounds = array<i64: 1, 128>}, {pipeline_mode = #tpu.pipeline_mode<synchronous>, transform_indices = @transform_5, window_bounds = array<i64: 1, 128>}, {transform_indices = @transform_6, window_bounds = array<i64: 8, 128>}]} {
    %c0 = arith.constant 0 : index
    %c0_0 = arith.constant 0 : index
    %0 = vector.load %arg1[%c0, %c0_0] : memref<8x128xf32, #tpu.memory_space<vmem>>, vector<8x128xf32>
    %c0_1 = arith.constant 0 : index
    %c0_2 = arith.constant 0 : index
    %1 = vector.load %arg3[%c0_1, %c0_2] : memref<128x128xf32, #tpu.memory_space<vmem>>, vector<128x128xf32>
    %cst = arith.constant dense<0.000000e+00> : vector<8x128xf32>
    %2 = tpu.matmul %0, %1, %cst {dimension_numbers = #tpu.dot_dimension_numbers<[1], [0], [0], [1], [0, 0, 1, 1], [], []>, precision = #tpu.contract_precision<fp32>} : vector<8x128xf32>, vector<128x128xf32>, vector<8x128xf32> -> vector<8x128xf32>
    %c0_3 = arith.constant 0 : index
    %c0_4 = arith.constant 0 : index
    %3 = vector.load %arg4[%c0_3, %c0_4] : memref<1x128xf32, #tpu.memory_space<vmem>>, vector<1x128xf32>
    %4 = vector.broadcast %3 : vector<1x128xf32> to vector<8x128xf32>
    %5 = arith.addf %2, %4 : vector<8x128xf32>
    %c0_5 = arith.constant 0 : index
    %c0_6 = arith.constant 0 : index
    %6 = vector.load %arg2[%c0_5, %c0_6] : memref<8x128xf32, #tpu.memory_space<vmem>>, vector<8x128xf32>
    %7 = arith.addf %6, %5 : vector<8x128xf32>
    %cst_7 = arith.constant dense<0.000000e+00> : vector<8xf32>
    %8 = vector.multi_reduction <add>, %7, %cst_7 [1] : vector<8x128xf32> to vector<8xf32>
    %9 = vector.shape_cast %8 : vector<8xf32> to vector<8x1xf32>
    %cst_8 = arith.constant 1.280000e+02 : f32
    %10 = vector.broadcast %cst_8 : f32 to vector<8x1xf32>
    %11 = arith.divf %9, %10 : vector<8x1xf32>
    %12 = arith.mulf %7, %7 : vector<8x128xf32>
    %cst_9 = arith.constant dense<0.000000e+00> : vector<8xf32>
    %13 = vector.multi_reduction <add>, %12, %cst_9 [1] : vector<8x128xf32> to vector<8xf32>
    %14 = vector.shape_cast %13 : vector<8xf32> to vector<8x1xf32>
    %cst_10 = arith.constant 1.280000e+02 : f32
    %15 = vector.broadcast %cst_10 : f32 to vector<8x1xf32>
    %16 = arith.divf %14, %15 : vector<8x1xf32>
    %17 = arith.mulf %11, %11 : vector<8x1xf32>
    %18 = arith.subf %16, %17 : vector<8x1xf32>
    %19 = vector.broadcast %11 : vector<8x1xf32> to vector<8x128xf32>
    %20 = arith.subf %7, %19 : vector<8x128xf32>
    %cst_11 = arith.constant 9.99999974E-6 : f32
    %21 = vector.broadcast %cst_11 : f32 to vector<8x1xf32>
    %22 = arith.addf %18, %21 : vector<8x1xf32>
    %23 = math.rsqrt %22 : vector<8x1xf32>
    %24 = vector.broadcast %23 : vector<8x1xf32> to vector<8x128xf32>
    %25 = arith.mulf %20, %24 : vector<8x128xf32>
    %c0_12 = arith.constant 0 : index
    %c0_13 = arith.constant 0 : index
    %26 = vector.load %arg5[%c0_12, %c0_13] : memref<1x128xf32, #tpu.memory_space<vmem>>, vector<1x128xf32>
    %27 = vector.broadcast %26 : vector<1x128xf32> to vector<8x128xf32>
    %28 = arith.mulf %25, %27 : vector<8x128xf32>
    %c0_14 = arith.constant 0 : index
    %c0_15 = arith.constant 0 : index
    %29 = vector.load %arg6[%c0_14, %c0_15] : memref<1x128xf32, #tpu.memory_space<vmem>>, vector<1x128xf32>
    %30 = vector.broadcast %29 : vector<1x128xf32> to vector<8x128xf32>
    %31 = arith.addf %28, %30 : vector<8x128xf32>
    %c0_16 = arith.constant 0 : index
    %c0_17 = arith.constant 0 : index
    %32 = vector.load %arg7[%c0_16, %c0_17] : memref<8x128xf32, #tpu.memory_space<vmem>>, vector<8x128xf32>
    tpu.vector_store %arg7[%c0_16, %c0_17], %31 {strides = array<i32>} : memref<8x128xf32, #tpu.memory_space<vmem>>, vector<8x128xf32>,
    return
  }
  func.func @transform_0(%arg0: i32) -> (i32, i32) {
    %c0_i32 = arith.constant 0 : i32
    %c0_i32_0 = arith.constant 0 : i32
    return %arg0, %c0_i32 : i32, i32
  }
  func.func @transform_1(%arg0: i32) -> (i32, i32) {
    %c0_i32 = arith.constant 0 : i32
    %c0_i32_0 = arith.constant 0 : i32
    return %arg0, %c0_i32 : i32, i32
  }
  func.func @transform_2(%arg0: i32) -> (i32, i32) {
    %c0_i32 = arith.constant 0 : i32
    %c0_i32_0 = arith.constant 0 : i32
    %c0_i32_1 = arith.constant 0 : i32
    return %c0_i32, %c0_i32_0 : i32, i32
  }
  func.func @transform_3(%arg0: i32) -> (i32, i32) {
    %c0_i32 = arith.constant 0 : i32
    %c0_i32_0 = arith.constant 0 : i32
    %c0_i32_1 = arith.constant 0 : i32
    return %c0_i32, %c0_i32_0 : i32, i32
  }
  func.func @transform_4(%arg0: i32) -> (i32, i32) {
    %c0_i32 = arith.constant 0 : i32
    %c0_i32_0 = arith.constant 0 : i32
    %c0_i32_1 = arith.constant 0 : i32
    return %c0_i32, %c0_i32_0 : i32, i32
  }
  func.func @transform_5(%arg0: i32) -> (i32, i32) {
    %c0_i32 = arith.constant 0 : i32
    %c0_i32_0 = arith.constant 0 : i32
    %c0_i32_1 = arith.constant 0 : i32
    return %c0_i32, %c0_i32_0 : i32, i32
  }
  func.func @transform_6(%arg0: i32) -> (i32, i32) {
    %c0_i32 = arith.constant 0 : i32
    %c0_i32_0 = arith.constant 0 : i32
    return %arg0, %c0_i32 : i32, i32
  }
}

</mosaic_0001>

<llo_original>
// kernel: transformer_model_forward.9
$region0: #{transformer_model_forward.9}
  #allocation0 [shape = 'u32[]', space=smem, size = 0x4, offset = 0x4, fixed_abs, tag = 'smem constant byte address 0x4 - core index']
  #allocation1 [shape = 'u32[72,128]{1,0:T(1,128)}', space=vmem, size = 0x9000, scoped, tag = 'internal scratch']
  %s0 = inlined_call_operand.vmem [shape: f32[16,128], index: 0, kind: input, shape index: {}]
  %s1 = inlined_call_operand.vmem [shape: f32[8,128], index: 1, kind: input, shape index: {}]
  %s2 = inlined_call_operand.vmem [shape: f32[16,128], index: 2, kind: output, shape index: {}]
  %s3 = sld [smem:[#allocation0]]
  $region41: #{transformer_model_forward.9} parent=0
    _
  %s5 = ssub.s32 1, %s3
  %s6 = scalar_select 0, %s5, %s3
  loop: start=0, step=1, limit=4
  $region2: #{transformer_model_forward.9} parent=0 // loop_pre_header
    _
  $region3: #{transformer_model_forward.9} parent=0 // loop_header
    %s8 = sphi 0, %s12
    %p9 = scmp.ge.s32.totalorder %s8, 4
    %s15 = sphi 0, %s27
    %s16 = sphi 0, %s23
    %s17 = sphi 0, %s15
    %s18 = sphi 0, %s16
    %s19 = sphi 0, %s17
    %s20 = sphi 0, %s18
    %s32 = sphi 0, %s34
    %s35 = sphi 0, %s32
    %s36 = sphi 0, %s35
    %s52 = sphi 0, %s36
    %s58 = sphi 0, %s60
    %s61 = sphi 0, %s58
    %s62 = sphi 0, %s61
    %s78 = sphi 0, %s62
    %s86 = sphi 0, %s88
    %s89 = sphi 0, %s86
    %s90 = sphi 0, %s89
    %s106 = sphi 0, %s90
  $region4: #{transformer_model_forward.9} parent=0 // loop_header_branch
    %11 = sbr.rel (%p9) target = $region8
  $region5: #{transformer_model_forward.9} parent=0 // loop_body
    %s13 = ssub.s32 %s8, 1
    %s14 = ssub.s32 %s8, 2
    %s21 = sadd.s32 1, %s16
    %p22 = scmp.ge.s32.totalorder %s21, 1
    %s23 = scalar_select %p22, 0, %s21
    %s24 = sadd.s32 1, %s15
    %s25 = scalar_select %p22, %s24, %s15
    %p26 = scmp.ge.s32.totalorder %s25, 2
    %s27 = scalar_select %p26, 0, %s25
    %s28 = sadd.s32 %s15, %s16
    %s29 = sadd.s32 %s27, %s23
    %s30 = ssub.s32 %s28, %s29
    %p31 = scmp.eq.s32.totalorder %s30, 0
    %s33 = sadd.s32 %s32, 1
    %s34 = scalar_select %p31, %s32, %s33
    %p37 = pneg %p31
    %p38 = scmp.eq.s32.totalorder %s8, 1
    %p39 = por %p37, %p38
    %p40 = scmp.ne.s32.totalorder %s32, %s35
    %p41 = scmp.eq.s32.totalorder %s8, 0
    %p42 = por %p40, %p41
    %p43 = scmp.ne.s32.totalorder %s32, %s35
    %p44 = scmp.eq.s32.totalorder %s13, 1
    %p45 = por %p43, %p44
    %p46 = scmp.ne.s32.totalorder %s35, %s36
    %p47 = scmp.eq.s32.totalorder %s13, 0
    %p48 = por %p46, %p47
    %p49 = scmp.ne.s32.totalorder %s35, %s36
    %p50 = scmp.eq.s32.totalorder %s14, 1
    %p51 = por %p49, %p50
    %p53 = scmp.ne.s32.totalorder %s36, %s52
    %p54 = scmp.eq.s32.totalorder %s14, 0
    %p55 = por %p53, %p54
    %s56 = ssub.s32 %s16, %s23
    %p57 = scmp.eq.s32.totalorder %s56, 0
    %s59 = sadd.s32 %s58, 1
    %s60 = scalar_select %p57, %s58, %s59
    %p63 = pneg %p57
    %p64 = scmp.eq.s32.totalorder %s8, 1
    %p65 = por %p63, %p64
    %p66 = scmp.ne.s32.totalorder %s58, %s61
    %p67 = scmp.eq.s32.totalorder %s8, 0
    %p68 = por %p66, %p67
    %p69 = scmp.ne.s32.totalorder %s58, %s61
    %p70 = scmp.eq.s32.totalorder %s13, 1
    %p71 = por %p69, %p70
    %p72 = scmp.ne.s32.totalorder %s61, %s62
    %p73 = scmp.eq.s32.totalorder %s13, 0
    %p74 = por %p72, %p73
    %p75 = scmp.ne.s32.totalorder %s61, %s62
    %p76 = scmp.eq.s32.totalorder %s14, 1
    %p77 = por %p75, %p76
    %p79 = scmp.ne.s32.totalorder %s62, %s78
    %p80 = scmp.eq.s32.totalorder %s14, 0
    %p81 = por %p79, %p80
    %s82 = sadd.s32 %s15, %s16
    %s83 = sadd.s32 %s27, %s23
    %s84 = ssub.s32 %s82, %s83
    %p85 = scmp.eq.s32.totalorder %s84, 0
    %s87 = sadd.s32 %s86, 1
    %s88 = scalar_select %p85, %s86, %s87
    %p91 = pneg %p85
    %p92 = scmp.eq.s32.totalorder %s8, 1
    %p93 = por %p91, %p92
    %p94 = scmp.ne.s32.totalorder %s86, %s89
    %p95 = scmp.eq.s32.totalorder %s8, 0
    %p96 = por %p94, %p95
    %p97 = scmp.ne.s32.totalorder %s86, %s89
    %p98 = scmp.eq.s32.totalorder %s13, 1
    %p99 = por %p97, %p98
    %p100 = scmp.ne.s32.totalorder %s89, %s90
    %p101 = scmp.eq.s32.totalorder %s13, 0
    %p102 = por %p100, %p101
    %p103 = scmp.ne.s32.totalorder %s89, %s90
    %p104 = scmp.eq.s32.totalorder %s14, 1
    %p105 = por %p103, %p104
    %p107 = scmp.ne.s32.totalorder %s90, %s106
    %p108 = scmp.eq.s32.totalorder %s14, 0
    %p109 = por %p107, %p108
    %p110 = scmp.le.s32.totalorder 1, %s8
    %p111 = scmp.lt.s32.totalorder %s8, 3
    %p112 = pnand %p110, %p111
    %p113 = pneg %p112
    // Predicated region
    $region9: #{transformer_model_forward.9} parent=5 // pred_check
      _
    $region10: #{transformer_model_forward.9} parent=5 // pred_check_branch
      %115 = sbr.rel (%p112) target = $region12
    $region11: #{transformer_model_forward.9} parent=5 // pred_region
      %s116 = ssub.s32 %s8, 1
      // Predicated region
      $region13: #{transformer_model_forward.9} parent=11 // pred_check
        %p117 = pneg %p74
      $region14: #{transformer_model_forward.9} parent=11 // pred_check_branch
        %119 = sbr.rel (%p117) target = $region16
      $region15: #{transformer_model_forward.9} parent=11 // pred_region
        %p120 = scmp.lt.s32.totalorder %s18, 0
        %s121 = scalar_select %p120, %s18, 0
        %s122 = smul.addr %s121, 8
        %s123 = scalar_lea.vmem %s1, %s122
      $region16: #{transformer_model_forward.9} parent=11 // pred_fallthru
        _
    $region12: #{transformer_model_forward.9} parent=5 // pred_fallthru
      _
    %p124 = scmp.lt.s32.totalorder %s8, 2
    // Predicated region
    $region17: #{transformer_model_forward.9} parent=5 // pred_check
      %p125 = pneg %p124
    $region18: #{transformer_model_forward.9} parent=5 // pred_check_branch
      %127 = sbr.rel (%p125) target = $region20
    $region19: #{transformer_model_forward.9} parent=5 // pred_region
      // Predicated region
      $region21: #{transformer_model_forward.9} parent=19 // pred_check
        %p128 = pneg %p42
      $region22: #{transformer_model_forward.9} parent=19 // pred_check_branch
        %130 = sbr.rel (%p128) target = $region24
      $region23: #{transformer_model_forward.9} parent=19 // pred_region
        %s131 = sadd.s32 %s15, %s16
        %p132 = scmp.lt.s32.totalorder %s131, 1
        %s133 = scalar_select %p132, %s131, 1
        %s134 = smul.addr %s133, 8
        %s135 = scalar_lea.vmem %s0, %s134
        %s136 = sadd.s32 %s15, %s16
      $region24: #{transformer_model_forward.9} parent=19 // pred_fallthru
        _
    $region20: #{transformer_model_forward.9} parent=5 // pred_fallthru
      _
    %p137 = scmp.le.s32.totalorder 1, %s8
    %p138 = scmp.lt.s32.totalorder %s8, 3
    %p139 = pnand %p137, %p138
    %p140 = pneg %p139
    // Predicated region
    $region25: #{transformer_model_forward.9} parent=5 // pred_check
      _
    $region26: #{transformer_model_forward.9} parent=5 // pred_check_branch
      %142 = sbr.rel (%p139) target = $region28
    $region27: #{transformer_model_forward.9} parent=5 // pred_region
      %s143 = ssub.s32 %s8, 1
      %s144 = sadd.s32 %s17, %s18
      %p145 = scmp.lt.s32.totalorder %s144, 1
      %s146 = scalar_select %p145, %s144, 1
      %s147 = smul.addr %s146, 8
      %s148 = scalar_lea.vmem %s0, %s147
      %p149 = pneg %p48
      %p150 = pneg %p45
      %p151 = scmp.lt.s32.totalorder %s18, 0
      %s152 = scalar_select %p151, %s18, 0
      %s153 = smul.addr %s152, 8
      %s154 = scalar_lea.vmem %s1, %s153
      %p155 = pneg %p74
      %p156 = pneg %p71
      %p157 = pneg %p102
      %p158 = pneg %p99
      %s159 = sadd.s32 %s17, %s18
      %p160 = scmp.lt.s32.totalorder %s159, 1
      %s161 = scalar_select %p160, %s159, 1
      %s162 = smul.addr %s161, 8
      %s163 = scalar_lea.vmem %s2, %s162
      %s164 = sadd.s32 %s17, %s18
      %p165 = scmp.lt.s32.totalorder %s164, 1
      %s166 = scalar_select %p165, %s164, 1
      %s167 = smul.addr %s166, 8
      %s168 = scalar_lea.vmem %s0, %s167
      %s169 = sadd.s32 %s17, %s18
      %p170 = scmp.lt.s32.totalorder %s18, 0
      %s171 = scalar_select %p170, %s18, 0
      %s172 = smul.addr %s171, 8
      %s173 = scalar_lea.vmem %s1, %s172
      %s174 = sadd.s32 %s17, %s18
      %p175 = scmp.lt.s32.totalorder %s174, 1
      %s176 = scalar_select %p175, %s174, 1
      %s177 = smul.addr %s176, 8
      %s178 = scalar_lea.vmem %s2, %s177
      %s179 = sadd.s32 %s17, %s18
      %v180 = vld [vmem:[%s168] sm:$0xff]
      %v181 = vmul.f32 %v180, 11.313708
      %v182 = vld [vmem:[%s173] sm:$0xff]
      %v183 = vadd.f32 %v181, %v182
      %184 = vst [vmem:[%s178] sm:$0xff] %v183
      %s185 = sadd.s32 %s17, %s18
      %p186 = scmp.lt.s32.totalorder %s185, 1
      %s187 = scalar_select %p186, %s185, 1
      %s188 = smul.addr %s187, 8
      %s189 = scalar_lea.vmem %s2, %s188
      // Predicated region
      $region29: #{transformer_model_forward.9} parent=27 // pred_check
        %p190 = pneg %p99
      $region30: #{transformer_model_forward.9} parent=27 // pred_check_branch
        %192 = sbr.rel (%p190) target = $region32
      $region31: #{transformer_model_forward.9} parent=27 // pred_region
        %s193 = sadd.s32 %s17, %s18
      $region32: #{transformer_model_forward.9} parent=27 // pred_fallthru
        _
    $region28: #{transformer_model_forward.9} parent=5 // pred_fallthru
      _
    %p194 = scmp.le.s32.totalorder 2, %s8
    // Predicated region
    $region33: #{transformer_model_forward.9} parent=5 // pred_check
      %p195 = pneg %p194
    $region34: #{transformer_model_forward.9} parent=5 // pred_check_branch
      %197 = sbr.rel (%p195) target = $region36
    $region35: #{transformer_model_forward.9} parent=5 // pred_region
      %s198 = ssub.s32 %s8, 2
      // Predicated region
      $region37: #{transformer_model_forward.9} parent=35 // pred_check
        %p199 = pneg %p105
      $region38: #{transformer_model_forward.9} parent=35 // pred_check_branch
        %201 = sbr.rel (%p199) target = $region40
      $region39: #{transformer_model_forward.9} parent=35 // pred_region
        %s202 = sadd.s32 %s19, %s20
        %p203 = scmp.lt.s32.totalorder %s202, 1
        %s204 = scalar_select %p203, %s202, 1
        %s205 = smul.addr %s204, 8
        %s206 = scalar_lea.vmem %s2, %s205
      $region40: #{transformer_model_forward.9} parent=35 // pred_fallthru
        _
    $region36: #{transformer_model_forward.9} parent=5 // pred_fallthru
      _
  $region6: #{transformer_model_forward.9} parent=0 // loop_footer
    %s12 = sadd.s32 1, %s8
  $region7: #{transformer_model_forward.9} parent=0 // loop_footer_branch
    %7 = sbr.rel target = $region3
  $region8: #{transformer_model_forward.9} parent=0 // loop_exit
    _

// kernel: transformer_model_forward.10
$region0: #{transformer_model_forward.10}
  #allocation0 [shape = 'u32[]', space=smem, size = 0x4, offset = 0x4, fixed_abs, tag = 'smem constant byte address 0x4 - core index']
  #allocation1 [shape = 'u32[72,128]{1,0:T(1,128)}', space=vmem, size = 0x9000, scoped, tag = 'internal scratch']
  %s0 = inlined_call_operand.vmem [shape: f32[16,128], index: 0, kind: input, shape index: {}]
  %s1 = inlined_call_operand.hbm [shape: f32[128,384], index: 1, kind: input, shape index: {}]
  %s2 = inlined_call_operand.vmem [shape: f32[1,384], index: 2, kind: input, shape index: {}]
  %s3 = inlined_call_operand.vmem [shape: f32[16,384], index: 3, kind: output, shape index: {}]
  %s4 = sld [smem:[#allocation0]]
  $region49: #{transformer_model_forward.10} parent=0
    _
  %s6 = ssub.s32 1, %s4
  %s7 = scalar_select 0, %s6, %s4
  $region1: #{transformer_model_forward.10} parent=0
    #allocation2 [shape = 'u8[196608]{0}', space=vmem, size = 0x30000, scoped, tag = 'input window, operand 1, single buffered']
    #allocation3 [shape = 's32[2]{0}', space=sflag, size = 0x8, scoped, tag = 'scoped memory for transformer_model_forward.10']
    %8 = vsyncpa [#allocation3], 0
    loop: start=0, step=1, limit=4
    $region2: #{transformer_model_forward.10} parent=1 // loop_pre_header
      _
    $region3: #{transformer_model_forward.10} parent=1 // loop_header
      %s10 = sphi 0, %s14
      %p11 = scmp.ge.s32.totalorder %s10, 4
      %s20 = sphi 0, %s22
      %s23 = sphi 0, %s20
      %s24 = sphi 0, %s23
      %s40 = sphi 0, %s24
      %s44 = sphi 0, %s44
      %s46 = sphi 0, %s44
      %s47 = sphi 0, %s46
      %s61 = sphi 0, %s47
      %s65 = sphi 0, %s65
      %s67 = sphi 0, %s65
      %s68 = sphi 0, %s67
      %s82 = sphi 0, %s68
      %s88 = sphi 0, %s90
      %s91 = sphi 0, %s88
      %s92 = sphi 0, %s91
      %s108 = sphi 0, %s92
    $region4: #{transformer_model_forward.10} parent=1 // loop_header_branch
      %13 = sbr.rel (%p11) target = $region8
    $region5: #{transformer_model_forward.10} parent=1 // loop_body
      %s15 = ssub.s32 %s10, 1
      %s16 = ssub.s32 %s10, 2
      %s17 = sadd.s32 %s10, 1
      %s18 = ssub.s32 %s10, %s17
      %p19 = scmp.eq.s32.totalorder %s18, 0
      %s21 = sadd.s32 %s20, 1
      %s22 = scalar_select %p19, %s20, %s21
      %p25 = pneg %p19
      %p26 = scmp.eq.s32.totalorder %s10, 1
      %p27 = por %p25, %p26
      %p28 = scmp.ne.s32.totalorder %s20, %s23
      %p29 = scmp.eq.s32.totalorder %s10, 0
      %p30 = por %p28, %p29
      %p31 = scmp.ne.s32.totalorder %s20, %s23
      %p32 = scmp.eq.s32.totalorder %s15, 1
      %p33 = por %p31, %p32
      %p34 = scmp.ne.s32.totalorder %s23, %s24
      %p35 = scmp.eq.s32.totalorder %s15, 0
      %p36 = por %p34, %p35
      %p37 = scmp.ne.s32.totalorder %s23, %s24
      %p38 = scmp.eq.s32.totalorder %s16, 1
      %p39 = por %p37, %p38
      %p41 = scmp.ne.s32.totalorder %s24, %s40
      %p42 = scmp.eq.s32.totalorder %s16, 0
      %p43 = por %p41, %p42
      %s45 = sadd.s32 %s44, 1
      %p48 = scmp.eq.s32.totalorder %s10, 1
      %p49 = scmp.ne.s32.totalorder %s44, %s46
      %p50 = scmp.eq.s32.totalorder %s10, 0
      %p51 = por %p49, %p50
      %p52 = scmp.ne.s32.totalorder %s44, %s46
      %p53 = scmp.eq.s32.totalorder %s15, 1
      %p54 = por %p52, %p53
      %p55 = scmp.ne.s32.totalorder %s46, %s47
      %p56 = scmp.eq.s32.totalorder %s15, 0
      %p57 = por %p55, %p56
      %p58 = scmp.ne.s32.totalorder %s46, %s47
      %p59 = scmp.eq.s32.totalorder %s16, 1
      %p60 = por %p58, %p59
      %p62 = scmp.ne.s32.totalorder %s47, %s61
      %p63 = scmp.eq.s32.totalorder %s16, 0
      %p64 = por %p62, %p63
      %s66 = sadd.s32 %s65, 1
      %p69 = scmp.eq.s32.totalorder %s10, 1
      %p70 = scmp.ne.s32.totalorder %s65, %s67
      %p71 = scmp.eq.s32.totalorder %s10, 0
      %p72 = por %p70, %p71
      %p73 = scmp.ne.s32.totalorder %s65, %s67
      %p74 = scmp.eq.s32.totalorder %s15, 1
      %p75 = por %p73, %p74
      %p76 = scmp.ne.s32.totalorder %s67, %s68
      %p77 = scmp.eq.s32.totalorder %s15, 0
      %p78 = por %p76, %p77
      %p79 = scmp.ne.s32.totalorder %s67, %s68
      %p80 = scmp.eq.s32.totalorder %s16, 1
      %p81 = por %p79, %p80
      %p83 = scmp.ne.s32.totalorder %s68, %s82
      %p84 = scmp.eq.s32.totalorder %s16, 0
      %p85 = por %p83, %p84
      %s86 = ssub.s32 %s10, %s17
      %p87 = scmp.eq.s32.totalorder %s86, 0
      %s89 = sadd.s32 %s88, 1
      %s90 = scalar_select %p87, %s88, %s89
      %p93 = pneg %p87
      %p94 = scmp.eq.s32.totalorder %s10, 1
      %p95 = por %p93, %p94
      %p96 = scmp.ne.s32.totalorder %s88, %s91
      %p97 = scmp.eq.s32.totalorder %s10, 0
      %p98 = por %p96, %p97
      %p99 = scmp.ne.s32.totalorder %s88, %s91
      %p100 = scmp.eq.s32.totalorder %s15, 1
      %p101 = por %p99, %p100
      %p102 = scmp.ne.s32.totalorder %s91, %s92
      %p103 = scmp.eq.s32.totalorder %s15, 0
      %p104 = por %p102, %p103
      %p105 = scmp.ne.s32.totalorder %s91, %s92
      %p106 = scmp.eq.s32.totalorder %s16, 1
      %p107 = por %p105, %p106
      %p109 = scmp.ne.s32.totalorder %s92, %s108
      %p110 = scmp.eq.s32.totalorder %s16, 0
      %p111 = por %p109, %p110
      %p112 = scmp.le.s32.totalorder 1, %s10
      %p113 = scmp.lt.s32.totalorder %s10, 3
      %p114 = pnand %p112, %p113
      %p115 = pneg %p114
      // Predicated region
      $region9: #{transformer_model_forward.10} parent=5 // pred_check
        _
      $region10: #{transformer_model_forward.10} parent=5 // pred_check_branch
        %117 = sbr.rel (%p114) target = $region12
      $region11: #{transformer_model_forward.10} parent=5 // pred_region
        %s118 = ssub.s32 %s10, 1
        // Predicated region
        $region13: #{transformer_model_forward.10} parent=11 // pred_check
          %p119 = pneg %p57
        $region14: #{transformer_model_forward.10} parent=11 // pred_check_branch
          %121 = sbr.rel (%p119) target = $region16
        $region15: #{transformer_model_forward.10} parent=11 // pred_region
          %123 = vsyncadd [#allocation3], 0
          %s124 = sshll.u32 %s1, 4
          %s125 = int_to_ptr.hbm [resolvable:$true] %s124
          %s126 = sshll.u32 [#allocation2], 4
          %s127 = int_to_ptr.vmem [resolvable:$true] %s126
          %132 = dma.hbm_to_vmem [thread:$0]  %s125, 6144, %s127, [#allocation3], 384, 384, 24
        $region16: #{transformer_model_forward.10} parent=11 // pred_fallthru
          _
        // Predicated region
        $region17: #{transformer_model_forward.10} parent=11 // pred_check
          %p133 = pneg %p78
        $region18: #{transformer_model_forward.10} parent=11 // pred_check_branch
          %135 = sbr.rel (%p133) target = $region20
        $region19: #{transformer_model_forward.10} parent=11 // pred_region
          _
        $region20: #{transformer_model_forward.10} parent=11 // pred_fallthru
          _
      $region12: #{transformer_model_forward.10} parent=5 // pred_fallthru
        _
      %p136 = scmp.lt.s32.totalorder %s10, 2
      // Predicated region
      $region21: #{transformer_model_forward.10} parent=5 // pred_check
        %p137 = pneg %p136
      $region22: #{transformer_model_forward.10} parent=5 // pred_check_branch
        %139 = sbr.rel (%p137) target = $region24
      $region23: #{transformer_model_forward.10} parent=5 // pred_region
        // Predicated region
        $region25: #{transformer_model_forward.10} parent=23 // pred_check
          %p140 = pneg %p30
        $region26: #{transformer_model_forward.10} parent=23 // pred_check_branch
          %142 = sbr.rel (%p140) target = $region28
        $region27: #{transformer_model_forward.10} parent=23 // pred_region
          %p143 = scmp.lt.s32.totalorder %s10, 1
          %s144 = scalar_select %p143, %s10, 1
          %s145 = smul.addr %s144, 8
          %s146 = scalar_lea.vmem %s0, %s145
        $region28: #{transformer_model_forward.10} parent=23 // pred_fallthru
          _
      $region24: #{transformer_model_forward.10} parent=5 // pred_fallthru
        _
      %p147 = scmp.le.s32.totalorder 1, %s10
      %p148 = scmp.lt.s32.totalorder %s10, 3
      %p149 = pnand %p147, %p148
      %p150 = pneg %p149
      // Predicated region
      $region29: #{transformer_model_forward.10} parent=5 // pred_check
        _
      $region30: #{transformer_model_forward.10} parent=5 // pred_check_branch
        %152 = sbr.rel (%p149) target = $region32
      $region31: #{transformer_model_forward.10} parent=5 // pred_region
        %s153 = ssub.s32 %s10, 1
        // Predicated region
        $region33: #{transformer_model_forward.10} parent=31 // pred_check
          %p154 = pneg %p57
        $region34: #{transformer_model_forward.10} parent=31 // pred_check_branch
          %156 = sbr.rel (%p154) target = $region36
        $region35: #{transformer_model_forward.10} parent=31 // pred_region
          %158 = dma.done [#allocation3], 6144
        $region36: #{transformer_model_forward.10} parent=31 // pred_fallthru
          _
        %p159 = scmp.lt.s32.totalorder %s15, 1
        %s160 = scalar_select %p159, %s15, 1
        %s161 = smul.addr %s160, 8
        %s162 = scalar_lea.vmem %s0, %s161
        %p163 = pneg %p36
        %p164 = pneg %p33
        %p165 = pneg %p57
        %p166 = pneg %p54
        %p167 = pneg %p78
        %p168 = pneg %p75
        %p169 = pneg %p104
        %p170 = pneg %p101
        %p171 = scmp.lt.s32.totalorder %s15, 1
        %s172 = scalar_select %p171, %s15, 1
        %s173 = smul.addr %s172, 3
        %s174 = smul.addr %s173, 8
        %s175 = scalar_lea.vmem %s3, %s174
        %p176 = scmp.lt.s32.totalorder %s15, 1
        %s177 = scalar_select %p176, %s15, 1
        %s178 = smul.addr %s177, 8
        %s179 = scalar_lea.vmem %s0, %s178
        %p180 = scmp.lt.s32.totalorder %s15, 1
        %s181 = scalar_select %p180, %s15, 1
        %s182 = smul.addr %s181, 3
        %s183 = smul.addr %s182, 8
        %s184 = scalar_lea.vmem %s3, %s183
        %v185 = vld [vmem:[%s179] sm:$0xff]
        %v186 = vld [vmem:[#allocation2] sm:$0xff]
        %v187 = vld [vmem:[#allocation2 + $0x8] sm:$0xff]
        %v188 = vld [vmem:[#allocation2 + $0x10] sm:$0xff]
        %v189 = vld [vmem:[#allocation2 + $0x18] sm:$0xff]
        %v190 = vld [vmem:[#allocation2 + $0x20] sm:$0xff]
        %v191 = vld [vmem:[#allocation2 + $0x28] sm:$0xff]
        %v192 = vld [vmem:[#allocation2 + $0x30] sm:$0xff]
        %v193 = vld [vmem:[#allocation2 + $0x38] sm:$0xff]
        %v194 = vld [vmem:[#allocation2 + $0x40] sm:$0xff]
        %v195 = vld [vmem:[#allocation2 + $0x48] sm:$0xff]
        %v196 = vld [vmem:[#allocation2 + $0x50] sm:$0xff]
        %v197 = vld [vmem:[#allocation2 + $0x58] sm:$0xff]
        %v198 = vld [vmem:[#allocation2 + $0x60] sm:$0xff]
        %v199 = vld [vmem:[#allocation2 + $0x68] sm:$0xff]
        %v200 = vld [vmem:[#allocation2 + $0x70] sm:$0xff]
        %v201 = vld [vmem:[#allocation2 + $0x78] sm:$0xff]
        %v202 = vld [vmem:[#allocation2 + $0x80] sm:$0xff]
        %v203 = vld [vmem:[#allocation2 + $0x88] sm:$0xff]
        %v204 = vld [vmem:[#allocation2 + $0x90] sm:$0xff]
        %v205 = vld [vmem:[#allocation2 + $0x98] sm:$0xff]
        %v206 = vld [vmem:[#allocation2 + $0xa0] sm:$0xff]
        %v207 = vld [vmem:[#allocation2 + $0xa8] sm:$0xff]
        %v208 = vld [vmem:[#allocation2 + $0xb0] sm:$0xff]
        %v209 = vld [vmem:[#allocation2 + $0xb8] sm:$0xff]
        %v210 = vld [vmem:[#allocation2 + $0xc0] sm:$0xff]
        %v211 = vld [vmem:[#allocation2 + $0xc8] sm:$0xff]
        %v212 = vld [vmem:[#allocation2 + $0xd0] sm:$0xff]
        %v213 = vld [vmem:[#allocation2 + $0xd8] sm:$0xff]
        %v214 = vld [vmem:[#allocation2 + $0xe0] sm:$0xff]
        %v215 = vld [vmem:[#allocation2 + $0xe8] sm:$0xff]
        %v216 = vld [vmem:[#allocation2 + $0xf0] sm:$0xff]
        %v217 = vld [vmem:[#allocation2 + $0xf8] sm:$0xff]
        %v218 = vld [vmem:[#allocation2 + $0x100] sm:$0xff]
        %v219 = vld [vmem:[#allocation2 + $0x108] sm:$0xff]
        %v220 = vld [vmem:[#allocation2 + $0x110] sm:$0xff]
        %v221 = vld [vmem:[#allocation2 + $0x118] sm:$0xff]
        %v222 = vld [vmem:[#allocation2 + $0x120] sm:$0xff]
        %v223 = vld [vmem:[#allocation2 + $0x128] sm:$0xff]
        %v224 = vld [vmem:[#allocation2 + $0x130] sm:$0xff]
        %v225 = vld [vmem:[#allocation2 + $0x138] sm:$0xff]
        %v226 = vld [vmem:[#allocation2 + $0x140] sm:$0xff]
        %v227 = vld [vmem:[#allocation2 + $0x148] sm:$0xff]
        %v228 = vld [vmem:[#allocation2 + $0x150] sm:$0xff]
        %v229 = vld [vmem:[#allocation2 + $0x158] sm:$0xff]
        %v230 = vld [vmem:[#allocation2 + $0x160] sm:$0xff]
        %v231 = vld [vmem:[#allocation2 + $0x168] sm:$0xff]
        %v232 = vld [vmem:[#allocation2 + $0x170] sm:$0xff]
        %v233 = vld [vmem:[#allocation2 + $0x178] sm:$0xff]
        %v234 = vld [vmem:[%s2] sm:$0x7]
        %v236 = vperm.slane %v234, 0
        %v237 = vperm.slane %v234, 1
        %v238 = vperm.slane %v234, 2
        %v242 = vand.u32 %v231, 4294901760
        %243 = vmatpush.msra.mxu0 %v242
        %v244 = vand.u32 %v228, 4294901760
        %245 = vmatpush.msra.mxu0 %v244
        %v246 = vand.u32 %v225, 4294901760
        %247 = vmatpush.msra.mxu0 %v246
        %v248 = vand.u32 %v222, 4294901760
        %249 = vmatpush.msra.mxu0 %v248
        %v250 = vand.u32 %v219, 4294901760
        %251 = vmatpush.msra.mxu0 %v250
        %v252 = vand.u32 %v216, 4294901760
        %253 = vmatpush.msra.mxu0 %v252
        %v254 = vand.u32 %v213, 4294901760
        %255 = vmatpush.msra.mxu0 %v254
        %v256 = vand.u32 %v210, 4294901760
        %257 = vmatpush.msra.mxu0 %v256
        %v258 = vand.u32 %v207, 4294901760
        %259 = vmatpush.msra.mxu0 %v258
        %v260 = vand.u32 %v204, 4294901760
        %261 = vmatpush.msra.mxu0 %v260
        %v262 = vand.u32 %v201, 4294901760
        %263 = vmatpush.msra.mxu0 %v262
        %v264 = vand.u32 %v198, 4294901760
        %265 = vmatpush.msra.mxu0 %v264
        %v266 = vand.u32 %v195, 4294901760
        %267 = vmatpush.msra.mxu0 %v266
        %v268 = vand.u32 %v192, 4294901760
        %269 = vmatpush.msra.mxu0 %v268
        %v270 = vand.u32 %v189, 4294901760
        %271 = vmatpush.msra.mxu0 %v270
        %v272 = vand.u32 %v186, 4294901760
        %273 = vmatpush.msra.mxu0 %v272
        %v274 = vand.u32 %v185, 4294901760
        %v275 = vsub.f32 %v185, %v274
        %v276 = vand.u32 %v275, 4294901760
        %v277 = vsub.f32 %v275, %v276
        %v278 = vand.u32 %v277, 4294901760
        %279 = vmatmul.f32.gmra.mxu0 %v278
        %v280 = vpop.f32.mrf.mxu0
        %v281 = vadd.f32 %v236, %v280
        %282 = vdwg.mxu0
        %v283 = vand.u32 %v231, 4294901760
        %v284 = vsub.f32 %v231, %v283
        %v285 = vand.u32 %v284, 4294901760
        %v286 = vsub.f32 %v284, %v285
        %v287 = vand.u32 %v286, 4294901760
        %288 = vmatpush.msra.mxu0 %v287
        %v289 = vand.u32 %v228, 4294901760
        %v290 = vsub.f32 %v228, %v289
        %v291 = vand.u32 %v290, 4294901760
        %v292 = vsub.f32 %v290, %v291
        %v293 = vand.u32 %v292, 4294901760
        %294 = vmatpush.msra.mxu0 %v293
        %v295 = vand.u32 %v225, 4294901760
        %v296 = vsub.f32 %v225, %v295
        %v297 = vand.u32 %v296, 4294901760
        %v298 = vsub.f32 %v296, %v297
        %v299 = vand.u32 %v298, 4294901760
        %300 = vmatpush.msra.mxu0 %v299
        %v301 = vand.u32 %v222, 4294901760
        %v302 = vsub.f32 %v222, %v301
        %v303 = vand.u32 %v302, 4294901760
        %v304 = vsub.f32 %v302, %v303
        %v305 = vand.u32 %v304, 4294901760
        %306 = vmatpush.msra.mxu0 %v305
        %v307 = vand.u32 %v219, 4294901760
        %v308 = vsub.f32 %v219, %v307
        %v309 = vand.u32 %v308, 4294901760
        %v310 = vsub.f32 %v308, %v309
        %v311 = vand.u32 %v310, 4294901760
        %312 = vmatpush.msra.mxu0 %v311
        %v313 = vand.u32 %v216, 4294901760
        %v314 = vsub.f32 %v216, %v313
        %v315 = vand.u32 %v314, 4294901760
        %v316 = vsub.f32 %v314, %v315
        %v317 = vand.u32 %v316, 4294901760
        %318 = vmatpush.msra.mxu0 %v317
        %v319 = vand.u32 %v213, 4294901760
        %v320 = vsub.f32 %v213, %v319
        %v321 = vand.u32 %v320, 4294901760
        %v322 = vsub.f32 %v320, %v321
        %v323 = vand.u32 %v322, 4294901760
        %324 = vmatpush.msra.mxu0 %v323
        %v325 = vand.u32 %v210, 4294901760
        %v326 = vsub.f32 %v210, %v325
        %v327 = vand.u32 %v326, 4294901760
        %v328 = vsub.f32 %v326, %v327
        %v329 = vand.u32 %v328, 4294901760
        %330 = vmatpush.msra.mxu0 %v329
        %v331 = vand.u32 %v207, 4294901760
        %v332 = vsub.f32 %v207, %v331
        %v333 = vand.u32 %v332, 4294901760
        %v334 = vsub.f32 %v332, %v333
        %v335 = vand.u32 %v334, 4294901760
        %336 = vmatpush.msra.mxu0 %v335
        %v337 = vand.u32 %v204, 4294901760
        %v338 = vsub.f32 %v204, %v337
        %v339 = vand.u32 %v338, 4294901760
        %v340 = vsub.f32 %v338, %v339
        %v341 = vand.u32 %v340, 4294901760
        %342 = vmatpush.msra.mxu0 %v341
        %v343 = vand.u32 %v201, 4294901760
        %v344 = vsub.f32 %v201, %v343
        %v345 = vand.u32 %v344, 4294901760
        %v346 = vsub.f32 %v344, %v345
        %v347 = vand.u32 %v346, 4294901760
        %348 = vmatpush.msra.mxu0 %v347
        %v349 = vand.u32 %v198, 4294901760
        %v350 = vsub.f32 %v198, %v349
        %v351 = vand.u32 %v350, 4294901760
        %v352 = vsub.f32 %v350, %v351
        %v353 = vand.u32 %v352, 4294901760
        %354 = vmatpush.msra.mxu0 %v353
        %v355 = vand.u32 %v195, 4294901760
        %v356 = vsub.f32 %v195, %v355
        %v357 = vand.u32 %v356, 4294901760
        %v358 = vsub.f32 %v356, %v357
        %v359 = vand.u32 %v358, 4294901760
        %360 = vmatpush.msra.mxu0 %v359
        %v361 = vand.u32 %v192, 4294901760
        %v362 = vsub.f32 %v192, %v361
        %v363 = vand.u32 %v362, 4294901760
        %v364 = vsub.f32 %v362, %v363
        %v365 = vand.u32 %v364, 4294901760
        %366 = vmatpush.msra.mxu0 %v365
        %v367 = vand.u32 %v189, 4294901760
        %v368 = vsub.f32 %v189, %v367
        %v369 = vand.u32 %v368, 4294901760
        %v370 = vsub.f32 %v368, %v369
        %v371 = vand.u32 %v370, 4294901760
        %372 = vmatpush.msra.mxu0 %v371
        %v373 = vand.u32 %v186, 4294901760
        %v374 = vsub.f32 %v186, %v373
        %v375 = vand.u32 %v374, 4294901760
        %v376 = vsub.f32 %v374, %v375
        %v377 = vand.u32 %v376, 4294901760
        %378 = vmatpush.msra.mxu0 %v377
        %v379 = vand.u32 %v185, 4294901760
        %380 = vmatmul.f32.gmra.mxu0 %v379
        %v381 = vpop.f32.mrf.mxu0
        %v382 = vadd.f32 %v281, %v381
        %383 = vdwg.mxu0
        %v384 = vand.u32 %v231, 4294901760
        %v385 = vsub.f32 %v231, %v384
        %386 = vmatpush.msra.mxu0 %v385
        %v387 = vand.u32 %v228, 4294901760
        %v388 = vsub.f32 %v228, %v387
        %389 = vmatpush.msra.mxu0 %v388
        %v390 = vand.u32 %v225, 4294901760
        %v391 = vsub.f32 %v225, %v390
        %392 = vmatpush.msra.mxu0 %v391
        %v393 = vand.u32 %v222, 4294901760
        %v394 = vsub.f32 %v222, %v393
        %395 = vmatpush.msra.mxu0 %v394
        %v396 = vand.u32 %v219, 4294901760
        %v397 = vsub.f32 %v219, %v396
        %398 = vmatpush.msra.mxu0 %v397
        %v399 = vand.u32 %v216, 4294901760
        %v400 = vsub.f32 %v216, %v399
        %401 = vmatpush.msra.mxu0 %v400
        %v402 = vand.u32 %v213, 4294901760
        %v403 = vsub.f32 %v213, %v402
        %404 = vmatpush.msra.mxu0 %v403
        %v405 = vand.u32 %v210, 4294901760
        %v406 = vsub.f32 %v210, %v405
        %407 = vmatpush.msra.mxu0 %v406
        %v408 = vand.u32 %v207, 4294901760
        %v409 = vsub.f32 %v207, %v408
        %410 = vmatpush.msra.mxu0 %v409
        %v411 = vand.u32 %v204, 4294901760
        %v412 = vsub.f32 %v204, %v411
        %413 = vmatpush.msra.mxu0 %v412
        %v414 = vand.u32 %v201, 4294901760
        %v415 = vsub.f32 %v201, %v414
        %416 = vmatpush.msra.mxu0 %v415
        %v417 = vand.u32 %v198, 4294901760
        %v418 = vsub.f32 %v198, %v417
        %419 = vmatpush.msra.mxu0 %v418
        %v420 = vand.u32 %v195, 4294901760
        %v421 = vsub.f32 %v195, %v420
        %422 = vmatpush.msra.mxu0 %v421
        %v423 = vand.u32 %v192, 4294901760
        %v424 = vsub.f32 %v192, %v423
        %425 = vmatpush.msra.mxu0 %v424
        %v426 = vand.u32 %v189, 4294901760
        %v427 = vsub.f32 %v189, %v426
        %428 = vmatpush.msra.mxu0 %v427
        %v429 = vand.u32 %v186, 4294901760
        %v430 = vsub.f32 %v186, %v429
        %431 = vmatpush.msra.mxu0 %v430
        %v432 = vand.u32 %v185, 4294901760
        %v433 = vsub.f32 %v185, %v432
        %434 = vmatmul.f32.gmra.mxu0 %v433
        %v435 = vpop.f32.mrf.mxu0
        %v436 = vadd.f32 %v382, %v435
        %437 = vdwg.mxu0
        %v438 = vand.u32 %v231, 4294901760
        %439 = vmatpush.msra.mxu0 %v438
        %v440 = vand.u32 %v228, 4294901760
        %441 = vmatpush.msra.mxu0 %v440
        %v442 = vand.u32 %v225, 4294901760
        %443 = vmatpush.msra.mxu0 %v442
        %v444 = vand.u32 %v222, 4294901760
        %445 = vmatpush.msra.mxu0 %v444
        %v446 = vand.u32 %v219, 4294901760
        %447 = vmatpush.msra.mxu0 %v446
        %v448 = vand.u32 %v216, 4294901760
        %449 = vmatpush.msra.mxu0 %v448
        %v450 = vand.u32 %v213, 4294901760
        %451 = vmatpush.msra.mxu0 %v450
        %v452 = vand.u32 %v210, 4294901760
        %453 = vmatpush.msra.mxu0 %v452
        %v454 = vand.u32 %v207, 4294901760
        %455 = vmatpush.msra.mxu0 %v454
        %v456 = vand.u32 %v204, 4294901760
        %457 = vmatpush.msra.mxu0 %v456
        %v458 = vand.u32 %v201, 4294901760
        %459 = vmatpush.msra.mxu0 %v458
        %v460 = vand.u32 %v198, 4294901760
        %461 = vmatpush.msra.mxu0 %v460
        %v462 = vand.u32 %v195, 4294901760
        %463 = vmatpush.msra.mxu0 %v462
        %v464 = vand.u32 %v192, 4294901760
        %465 = vmatpush.msra.mxu0 %v464
        %v466 = vand.u32 %v189, 4294901760
        %467 = vmatpush.msra.mxu0 %v466
        %v468 = vand.u32 %v186, 4294901760
        %469 = vmatpush.msra.mxu0 %v468
        %v470 = vand.u32 %v185, 4294901760
        %v471 = vsub.f32 %v185, %v470
        %v472 = vand.u32 %v471, 4294901760
        %473 = vmatmul.f32.gmra.mxu0 %v472
        %v474 = vpop.f32.mrf.mxu0
        %v475 = vadd.f32 %v436, %v474
        %476 = vdwg.mxu0
        %v477 = vand.u32 %v231, 4294901760
        %v478 = vsub.f32 %v231, %v477
        %v479 = vand.u32 %v478, 4294901760
        %480 = vmatpush.msra.mxu0 %v479
        %v481 = vand.u32 %v228, 4294901760
        %v482 = vsub.f32 %v228, %v481
        %v483 = vand.u32 %v482, 4294901760
        %484 = vmatpush.msra.mxu0 %v483
        %v485 = vand.u32 %v225, 4294901760
        %v486 = vsub.f32 %v225, %v485
        %v487 = vand.u32 %v486, 4294901760
        %488 = vmatpush.msra.mxu0 %v487
        %v489 = vand.u32 %v222, 4294901760
        %v490 = vsub.f32 %v222, %v489
        %v491 = vand.u32 %v490, 4294901760
        %492 = vmatpush.msra.mxu0 %v491
        %v493 = vand.u32 %v219, 4294901760
        %v494 = vsub.f32 %v219, %v493
        %v495 = vand.u32 %v494, 4294901760
        %496 = vmatpush.msra.mxu0 %v495
        %v497 = vand.u32 %v216, 4294901760
        %v498 = vsub.f32 %v216, %v497
        %v499 = vand.u32 %v498, 4294901760
        %500 = vmatpush.msra.mxu0 %v499
        %v501 = vand.u32 %v213, 4294901760
        %v502 = vsub.f32 %v213, %v501
        %v503 = vand.u32 %v502, 4294901760
        %504 = vmatpush.msra.mxu0 %v503
        %v505 = vand.u32 %v210, 4294901760
        %v506 = vsub.f32 %v210, %v505
        %v507 = vand.u32 %v506, 4294901760
        %508 = vmatpush.msra.mxu0 %v507
        %v509 = vand.u32 %v207, 4294901760
        %v510 = vsub.f32 %v207, %v509
        %v511 = vand.u32 %v510, 4294901760
        %512 = vmatpush.msra.mxu0 %v511
        %v513 = vand.u32 %v204, 4294901760
        %v514 = vsub.f32 %v204, %v513
        %v515 = vand.u32 %v514, 4294901760
        %516 = vmatpush.msra.mxu0 %v515
        %v517 = vand.u32 %v201, 4294901760
        %v518 = vsub.f32 %v201, %v517
        %v519 = vand.u32 %v518, 4294901760
        %520 = vmatpush.msra.mxu0 %v519
        %v521 = vand.u32 %v198, 4294901760
        %v522 = vsub.f32 %v198, %v521
        %v523 = vand.u32 %v522, 4294901760
        %524 = vmatpush.msra.mxu0 %v523
        %v525 = vand.u32 %v195, 4294901760
        %v526 = vsub.f32 %v195, %v525
        %v527 = vand.u32 %v526, 4294901760
        %528 = vmatpush.msra.mxu0 %v527
        %v529 = vand.u32 %v192, 4294901760
        %v530 = vsub.f32 %v192, %v529
        %v531 = vand.u32 %v530, 4294901760
        %532 = vmatpush.msra.mxu0 %v531
        %v533 = vand.u32 %v189, 4294901760
        %v534 = vsub.f32 %v189, %v533
        %v535 = vand.u32 %v534, 4294901760
        %536 = vmatpush.msra.mxu0 %v535
        %v537 = vand.u32 %v186, 4294901760
        %v538 = vsub.f32 %v186, %v537
        %v539 = vand.u32 %v538, 4294901760
        %540 = vmatpush.msra.mxu0 %v539
        %v541 = vand.u32 %v185, 4294901760
        %542 = vmatmul.f32.gmra.mxu0 %v541
        %v543 = vpop.f32.mrf.mxu0
        %v544 = vadd.f32 %v475, %v543
        %545 = vdwg.mxu0
        %v546 = vand.u32 %v231, 4294901760
        %547 = vmatpush.msra.mxu0 %v546
        %v548 = vand.u32 %v228, 4294901760
        %549 = vmatpush.msra.mxu0 %v548
        %v550 = vand.u32 %v225, 4294901760
        %551 = vmatpush.msra.mxu0 %v550
        %v552 = vand.u32 %v222, 4294901760
        %553 = vmatpush.msra.mxu0 %v552
        %v554 = vand.u32 %v219, 4294901760
        %555 = vmatpush.msra.mxu0 %v554
        %v556 = vand.u32 %v216, 4294901760
        %557 = vmatpush.msra.mxu0 %v556
        %v558 = vand.u32 %v213, 4294901760
        %559 = vmatpush.msra.mxu0 %v558
        %v560 = vand.u32 %v210, 4294901760
        %561 = vmatpush.msra.mxu0 %v560
        %v562 = vand.u32 %v207, 4294901760
        %563 = vmatpush.msra.mxu0 %v562
        %v564 = vand.u32 %v204, 4294901760
        %565 = vmatpush.msra.mxu0 %v564
        %v566 = vand.u32 %v201, 4294901760
        %567 = vmatpush.msra.mxu0 %v566
        %v568 = vand.u32 %v198, 4294901760
        %569 = vmatpush.msra.mxu0 %v568
        %v570 = vand.u32 %v195, 4294901760
        %571 = vmatpush.msra.mxu0 %v570
        %v572 = vand.u32 %v192, 4294901760
        %573 = vmatpush.msra.mxu0 %v572
        %v574 = vand.u32 %v189, 4294901760
        %575 = vmatpush.msra.mxu0 %v574
        %v576 = vand.u32 %v186, 4294901760
        %577 = vmatpush.msra.mxu0 %v576
        %v578 = vand.u32 %v185, 4294901760
        %579 = vmatmul.f32.gmra.mxu0 %v578
        %v580 = vpop.f32.mrf.mxu0
        %v581 = vadd.f32 %v544, %v580
        %582 = vdwg.mxu0
        %v583 = vand.u32 %v232, 4294901760
        %584 = vmatpush.msra.mxu0 %v583
        %v585 = vand.u32 %v229, 4294901760
        %586 = vmatpush.msra.mxu0 %v585
        %v587 = vand.u32 %v226, 4294901760
        %588 = vmatpush.msra.mxu0 %v587
        %v589 = vand.u32 %v223, 4294901760
        %590 = vmatpush.msra.mxu0 %v589
        %v591 = vand.u32 %v220, 4294901760
        %592 = vmatpush.msra.mxu0 %v591
        %v593 = vand.u32 %v217, 4294901760
        %594 = vmatpush.msra.mxu0 %v593
        %v595 = vand.u32 %v214, 4294901760
        %596 = vmatpush.msra.mxu0 %v595
        %v597 = vand.u32 %v211, 4294901760
        %598 = vmatpush.msra.mxu0 %v597
        %v599 = vand.u32 %v208, 4294901760
        %600 = vmatpush.msra.mxu0 %v599
        %v601 = vand.u32 %v205, 4294901760
        %602 = vmatpush.msra.mxu0 %v601
        %v603 = vand.u32 %v202, 4294901760
        %604 = vmatpush.msra.mxu0 %v603
        %v605 = vand.u32 %v199, 4294901760
        %606 = vmatpush.msra.mxu0 %v605
        %v607 = vand.u32 %v196, 4294901760
        %608 = vmatpush.msra.mxu0 %v607
        %v609 = vand.u32 %v193, 4294901760
        %610 = vmatpush.msra.mxu0 %v609
        %v611 = vand.u32 %v190, 4294901760
        %612 = vmatpush.msra.mxu0 %v611
        %v613 = vand.u32 %v187, 4294901760
        %614 = vmatpush.msra.mxu0 %v613
        %v615 = vand.u32 %v185, 4294901760
        %v616 = vsub.f32 %v185, %v615
        %v617 = vand.u32 %v616, 4294901760
        %v618 = vsub.f32 %v616, %v617
        %v619 = vand.u32 %v618, 4294901760
        %620 = vmatmul.f32.gmra.mxu0 %v619
        %v621 = vpop.f32.mrf.mxu0
        %v622 = vadd.f32 %v237, %v621
        %623 = vdwg.mxu0
        %v624 = vand.u32 %v232, 4294901760
        %v625 = vsub.f32 %v232, %v624
        %v626 = vand.u32 %v625, 4294901760
        %v627 = vsub.f32 %v625, %v626
        %v628 = vand.u32 %v627, 4294901760
        %629 = vmatpush.msra.mxu0 %v628
        %v630 = vand.u32 %v229, 4294901760
        %v631 = vsub.f32 %v229, %v630
        %v632 = vand.u32 %v631, 4294901760
        %v633 = vsub.f32 %v631, %v632
        %v634 = vand.u32 %v633, 4294901760
        %635 = vmatpush.msra.mxu0 %v634
        %v636 = vand.u32 %v226, 4294901760
        %v637 = vsub.f32 %v226, %v636
        %v638 = vand.u32 %v637, 4294901760
        %v639 = vsub.f32 %v637, %v638
        %v640 = vand.u32 %v639, 4294901760
        %641 = vmatpush.msra.mxu0 %v640
        %v642 = vand.u32 %v223, 4294901760
        %v643 = vsub.f32 %v223, %v642
        %v644 = vand.u32 %v643, 4294901760
        %v645 = vsub.f32 %v643, %v644
        %v646 = vand.u32 %v645, 4294901760
        %647 = vmatpush.msra.mxu0 %v646
        %v648 = vand.u32 %v220, 4294901760
        %v649 = vsub.f32 %v220, %v648
        %v650 = vand.u32 %v649, 4294901760
        %v651 = vsub.f32 %v649, %v650
        %v652 = vand.u32 %v651, 4294901760
        %653 = vmatpush.msra.mxu0 %v652
        %v654 = vand.u32 %v217, 4294901760
        %v655 = vsub.f32 %v217, %v654
        %v656 = vand.u32 %v655, 4294901760
        %v657 = vsub.f32 %v655, %v656
        %v658 = vand.u32 %v657, 4294901760
        %659 = vmatpush.msra.mxu0 %v658
        %v660 = vand.u32 %v214, 4294901760
        %v661 = vsub.f32 %v214, %v660
        %v662 = vand.u32 %v661, 4294901760
        %v663 = vsub.f32 %v661, %v662
        %v664 = vand.u32 %v663, 4294901760
        %665 = vmatpush.msra.mxu0 %v664
        %v666 = vand.u32 %v211, 4294901760
        %v667 = vsub.f32 %v211, %v666
        %v668 = vand.u32 %v667, 4294901760
        %v669 = vsub.f32 %v667, %v668
        %v670 = vand.u32 %v669, 4294901760
        %671 = vmatpush.msra.mxu0 %v670
        %v672 = vand.u32 %v208, 4294901760
        %v673 = vsub.f32 %v208, %v672
        %v674 = vand.u32 %v673, 4294901760
        %v675 = vsub.f32 %v673, %v674
        %v676 = vand.u32 %v675, 4294901760
        %677 = vmatpush.msra.mxu0 %v676
        %v678 = vand.u32 %v205, 4294901760
        %v679 = vsub.f32 %v205, %v678
        %v680 = vand.u32 %v679, 4294901760
        %v681 = vsub.f32 %v679, %v680
        %v682 = vand.u32 %v681, 4294901760
        %683 = vmatpush.msra.mxu0 %v682
        %v684 = vand.u32 %v202, 4294901760
        %v685 = vsub.f32 %v202, %v684
        %v686 = vand.u32 %v685, 4294901760
        %v687 = vsub.f32 %v685, %v686
        %v688 = vand.u32 %v687, 4294901760
        %689 = vmatpush.msra.mxu0 %v688
        %v690 = vand.u32 %v199, 4294901760
        %v691 = vsub.f32 %v199, %v690
        %v692 = vand.u32 %v691, 4294901760
        %v693 = vsub.f32 %v691, %v692
        %v694 = vand.u32 %v693, 4294901760
        %695 = vmatpush.msra.mxu0 %v694
        %v696 = vand.u32 %v196, 4294901760
        %v697 = vsub.f32 %v196, %v696
        %v698 = vand.u32 %v697, 4294901760
        %v699 = vsub.f32 %v697, %v698
        %v700 = vand.u32 %v699, 4294901760
        %701 = vmatpush.msra.mxu0 %v700
        %v702 = vand.u32 %v193, 4294901760
        %v703 = vsub.f32 %v193, %v702
        %v704 = vand.u32 %v703, 4294901760
        %v705 = vsub.f32 %v703, %v704
        %v706 = vand.u32 %v705, 4294901760
        %707 = vmatpush.msra.mxu0 %v706
        %v708 = vand.u32 %v190, 4294901760
        %v709 = vsub.f32 %v190, %v708
        %v710 = vand.u32 %v709, 4294901760
        %v711 = vsub.f32 %v709, %v710
        %v712 = vand.u32 %v711, 4294901760
        %713 = vmatpush.msra.mxu0 %v712
        %v714 = vand.u32 %v187, 4294901760
        %v715 = vsub.f32 %v187, %v714
        %v716 = vand.u32 %v715, 4294901760
        %v717 = vsub.f32 %v715, %v716
        %v718 = vand.u32 %v717, 4294901760
        %719 = vmatpush.msra.mxu0 %v718
        %v720 = vand.u32 %v185, 4294901760
        %721 = vmatmul.f32.gmra.mxu0 %v720
        %v722 = vpop.f32.mrf.mxu0
        %v723 = vadd.f32 %v622, %v722
        %724 = vdwg.mxu0
        %v725 = vand.u32 %v232, 4294901760
        %v726 = vsub.f32 %v232, %v725
        %727 = vmatpush.msra.mxu0 %v726
        %v728 = vand.u32 %v229, 4294901760
        %v729 = vsub.f32 %v229, %v728
        %730 = vmatpush.msra.mxu0 %v729
        %v731 = vand.u32 %v226, 4294901760
        %v732 = vsub.f32 %v226, %v731
        %733 = vmatpush.msra.mxu0 %v732
        %v734 = vand.u32 %v223, 4294901760
        %v735 = vsub.f32 %v223, %v734
        %736 = vmatpush.msra.mxu0 %v735
        %v737 = vand.u32 %v220, 4294901760
        %v738 = vsub.f32 %v220, %v737
        %739 = vmatpush.msra.mxu0 %v738
        %v740 = vand.u32 %v217, 4294901760
        %v741 = vsub.f32 %v217, %v740
        %742 = vmatpush.msra.mxu0 %v741
        %v743 = vand.u32 %v214, 4294901760
        %v744 = vsub.f32 %v214, %v743
        %745 = vmatpush.msra.mxu0 %v744
        %v746 = vand.u32 %v211, 4294901760
        %v747 = vsub.f32 %v211, %v746
        %748 = vmatpush.msra.mxu0 %v747
        %v749 = vand.u32 %v208, 4294901760
        %v750 = vsub.f32 %v208, %v749
        %751 = vmatpush.msra.mxu0 %v750
        %v752 = vand.u32 %v205, 4294901760
        %v753 = vsub.f32 %v205, %v752
        %754 = vmatpush.msra.mxu0 %v753
        %v755 = vand.u32 %v202, 4294901760
        %v756 = vsub.f32 %v202, %v755
        %757 = vmatpush.msra.mxu0 %v756
        %v758 = vand.u32 %v199, 4294901760
        %v759 = vsub.f32 %v199, %v758
        %760 = vmatpush.msra.mxu0 %v759
        %v761 = vand.u32 %v196, 4294901760
        %v762 = vsub.f32 %v196, %v761
        %763 = vmatpush.msra.mxu0 %v762
        %v764 = vand.u32 %v193, 4294901760
        %v765 = vsub.f32 %v193, %v764
        %766 = vmatpush.msra.mxu0 %v765
        %v767 = vand.u32 %v190, 4294901760
        %v768 = vsub.f32 %v190, %v767
        %769 = vmatpush.msra.mxu0 %v768
        %v770 = vand.u32 %v187, 4294901760
        %v771 = vsub.f32 %v187, %v770
        %772 = vmatpush.msra.mxu0 %v771
        %v773 = vand.u32 %v185, 4294901760
        %v774 = vsub.f32 %v185, %v773
        %775 = vmatmul.f32.gmra.mxu0 %v774
        %v776 = vpop.f32.mrf.mxu0
        %v777 = vadd.f32 %v723, %v776
        %778 = vdwg.mxu0
        %v779 = vand.u32 %v232, 4294901760
        %780 = vmatpush.msra.mxu0 %v779
        %v781 = vand.u32 %v229, 4294901760
        %782 = vmatpush.msra.mxu0 %v781
        %v783 = vand.u32 %v226, 4294901760
        %784 = vmatpush.msra.mxu0 %v783
        %v785 = vand.u32 %v223, 4294901760
        %786 = vmatpush.msra.mxu0 %v785
        %v787 = vand.u32 %v220, 4294901760
        %788 = vmatpush.msra.mxu0 %v787
        %v789 = vand.u32 %v217, 4294901760
        %790 = vmatpush.msra.mxu0 %v789
        %v791 = vand.u32 %v214, 4294901760
        %792 = vmatpush.msra.mxu0 %v791
        %v793 = vand.u32 %v211, 4294901760
        %794 = vmatpush.msra.mxu0 %v793
        %v795 = vand.u32 %v208, 4294901760
        %796 = vmatpush.msra.mxu0 %v795
        %v797 = vand.u32 %v205, 4294901760
        %798 = vmatpush.msra.mxu0 %v797
        %v799 = vand.u32 %v202, 4294901760
        %800 = vmatpush.msra.mxu0 %v799
        %v801 = vand.u32 %v199, 4294901760
        %802 = vmatpush.msra.mxu0 %v801
        %v803 = vand.u32 %v196, 4294901760
        %804 = vmatpush.msra.mxu0 %v803
        %v805 = vand.u32 %v193, 4294901760
        %806 = vmatpush.msra.mxu0 %v805
        %v807 = vand.u32 %v190, 4294901760
        %808 = vmatpush.msra.mxu0 %v807
        %v809 = vand.u32 %v187, 4294901760
        %810 = vmatpush.msra.mxu0 %v809
        %v811 = vand.u32 %v185, 4294901760
        %v812 = vsub.f32 %v185, %v811
        %v813 = vand.u32 %v812, 4294901760
        %814 = vmatmul.f32.gmra.mxu0 %v813
        %v815 = vpop.f32.mrf.mxu0
        %v816 = vadd.f32 %v777, %v815
        %817 = vdwg.mxu0
        %v818 = vand.u32 %v232, 4294901760
        %v819 = vsub.f32 %v232, %v818
        %v820 = vand.u32 %v819, 4294901760
        %821 = vmatpush.msra.mxu0 %v820
        %v822 = vand.u32 %v229, 4294901760
        %v823 = vsub.f32 %v229, %v822
        %v824 = vand.u32 %v823, 4294901760
        %825 = vmatpush.msra.mxu0 %v824
        %v826 = vand.u32 %v226, 4294901760
        %v827 = vsub.f32 %v226, %v826
        %v828 = vand.u32 %v827, 4294901760
        %829 = vmatpush.msra.mxu0 %v828
        %v830 = vand.u32 %v223, 4294901760
        %v831 = vsub.f32 %v223, %v830
        %v832 = vand.u32 %v831, 4294901760
        %833 = vmatpush.msra.mxu0 %v832
        %v834 = vand.u32 %v220, 4294901760
        %v835 = vsub.f32 %v220, %v834
        %v836 = vand.u32 %v835, 4294901760
        %837 = vmatpush.msra.mxu0 %v836
        %v838 = vand.u32 %v217, 4294901760
        %v839 = vsub.f32 %v217, %v838
        %v840 = vand.u32 %v839, 4294901760
        %841 = vmatpush.msra.mxu0 %v840
        %v842 = vand.u32 %v214, 4294901760
        %v843 = vsub.f32 %v214, %v842
        %v844 = vand.u32 %v843, 4294901760
        %845 = vmatpush.msra.mxu0 %v844
        %v846 = vand.u32 %v211, 4294901760
        %v847 = vsub.f32 %v211, %v846
        %v848 = vand.u32 %v847, 4294901760
        %849 = vmatpush.msra.mxu0 %v848
        %v850 = vand.u32 %v208, 4294901760
        %v851 = vsub.f32 %v208, %v850
        %v852 = vand.u32 %v851, 4294901760
        %853 = vmatpush.msra.mxu0 %v852
        %v854 = vand.u32 %v205, 4294901760
        %v855 = vsub.f32 %v205, %v854
        %v856 = vand.u32 %v855, 4294901760
        %857 = vmatpush.msra.mxu0 %v856
        %v858 = vand.u32 %v202, 4294901760
        %v859 = vsub.f32 %v202, %v858
        %v860 = vand.u32 %v859, 4294901760
        %861 = vmatpush.msra.mxu0 %v860
        %v862 = vand.u32 %v199, 4294901760
        %v863 = vsub.f32 %v199, %v862
        %v864 = vand.u32 %v863, 4294901760
        %865 = vmatpush.msra.mxu0 %v864
        %v866 = vand.u32 %v196, 4294901760
        %v867 = vsub.f32 %v196, %v866
        %v868 = vand.u32 %v867, 4294901760
        %869 = vmatpush.msra.mxu0 %v868
        %v870 = vand.u32 %v193, 4294901760
        %v871 = vsub.f32 %v193, %v870
        %v872 = vand.u32 %v871, 4294901760
        %873 = vmatpush.msra.mxu0 %v872
        %v874 = vand.u32 %v190, 4294901760
        %v875 = vsub.f32 %v190, %v874
        %v876 = vand.u32 %v875, 4294901760
        %877 = vmatpush.msra.mxu0 %v876
        %v878 = vand.u32 %v187, 4294901760
        %v879 = vsub.f32 %v187, %v878
        %v880 = vand.u32 %v879, 4294901760
        %881 = vmatpush.msra.mxu0 %v880
        %v882 = vand.u32 %v185, 4294901760
        %883 = vmatmul.f32.gmra.mxu0 %v882
        %v884 = vpop.f32.mrf.mxu0
        %v885 = vadd.f32 %v816, %v884
        %886 = vdwg.mxu0
        %v887 = vand.u32 %v232, 4294901760
        %888 = vmatpush.msra.mxu0 %v887
        %v889 = vand.u32 %v229, 4294901760
        %890 = vmatpush.msra.mxu0 %v889
        %v891 = vand.u32 %v226, 4294901760
        %892 = vmatpush.msra.mxu0 %v891
        %v893 = vand.u32 %v223, 4294901760
        %894 = vmatpush.msra.mxu0 %v893
        %v895 = vand.u32 %v220, 4294901760
        %896 = vmatpush.msra.mxu0 %v895
        %v897 = vand.u32 %v217, 4294901760
        %898 = vmatpush.msra.mxu0 %v897
        %v899 = vand.u32 %v214, 4294901760
        %900 = vmatpush.msra.mxu0 %v899
        %v901 = vand.u32 %v211, 4294901760
        %902 = vmatpush.msra.mxu0 %v901
        %v903 = vand.u32 %v208, 4294901760
        %904 = vmatpush.msra.mxu0 %v903
        %v905 = vand.u32 %v205, 4294901760
        %906 = vmatpush.msra.mxu0 %v905
        %v907 = vand.u32 %v202, 4294901760
        %908 = vmatpush.msra.mxu0 %v907
        %v909 = vand.u32 %v199, 4294901760
        %910 = vmatpush.msra.mxu0 %v909
        %v911 = vand.u32 %v196, 4294901760
        %912 = vmatpush.msra.mxu0 %v911
        %v913 = vand.u32 %v193, 4294901760
        %914 = vmatpush.msra.mxu0 %v913
        %v915 = vand.u32 %v190, 4294901760
        %916 = vmatpush.msra.mxu0 %v915
        %v917 = vand.u32 %v187, 4294901760
        %918 = vmatpush.msra.mxu0 %v917
        %v919 = vand.u32 %v185, 4294901760
        %920 = vmatmul.f32.gmra.mxu0 %v919
        %v921 = vpop.f32.mrf.mxu0
        %v922 = vadd.f32 %v885, %v921
        %923 = vdwg.mxu0
        %v924 = vand.u32 %v233, 4294901760
        %925 = vmatpush.msra.mxu0 %v924
        %v926 = vand.u32 %v230, 4294901760
        %927 = vmatpush.msra.mxu0 %v926
        %v928 = vand.u32 %v227, 4294901760
        %929 = vmatpush.msra.mxu0 %v928
        %v930 = vand.u32 %v224, 4294901760
        %931 = vmatpush.msra.mxu0 %v930
        %v932 = vand.u32 %v221, 4294901760
        %933 = vmatpush.msra.mxu0 %v932
        %v934 = vand.u32 %v218, 4294901760
        %935 = vmatpush.msra.mxu0 %v934
        %v936 = vand.u32 %v215, 4294901760
        %937 = vmatpush.msra.mxu0 %v936
        %v938 = vand.u32 %v212, 4294901760
        %939 = vmatpush.msra.mxu0 %v938
        %v940 = vand.u32 %v209, 4294901760
        %941 = vmatpush.msra.mxu0 %v940
        %v942 = vand.u32 %v206, 4294901760
        %943 = vmatpush.msra.mxu0 %v942
        %v944 = vand.u32 %v203, 4294901760
        %945 = vmatpush.msra.mxu0 %v944
        %v946 = vand.u32 %v200, 4294901760
        %947 = vmatpush.msra.mxu0 %v946
        %v948 = vand.u32 %v197, 4294901760
        %949 = vmatpush.msra.mxu0 %v948
        %v950 = vand.u32 %v194, 4294901760
        %951 = vmatpush.msra.mxu0 %v950
        %v952 = vand.u32 %v191, 4294901760
        %953 = vmatpush.msra.mxu0 %v952
        %v954 = vand.u32 %v188, 4294901760
        %955 = vmatpush.msra.mxu0 %v954
        %v956 = vand.u32 %v185, 4294901760
        %v957 = vsub.f32 %v185, %v956
        %v958 = vand.u32 %v957, 4294901760
        %v959 = vsub.f32 %v957, %v958
        %v960 = vand.u32 %v959, 4294901760
        %961 = vmatmul.f32.gmra.mxu0 %v960
        %v962 = vpop.f32.mrf.mxu0
        %v963 = vadd.f32 %v238, %v962
        %964 = vdwg.mxu0
        %v965 = vand.u32 %v233, 4294901760
        %v966 = vsub.f32 %v233, %v965
        %v967 = vand.u32 %v966, 4294901760
        %v968 = vsub.f32 %v966, %v967
        %v969 = vand.u32 %v968, 4294901760
        %970 = vmatpush.msra.mxu0 %v969
        %v971 = vand.u32 %v230, 4294901760
        %v972 = vsub.f32 %v230, %v971
        %v973 = vand.u32 %v972, 4294901760
        %v974 = vsub.f32 %v972, %v973
        %v975 = vand.u32 %v974, 4294901760
        %976 = vmatpush.msra.mxu0 %v975
        %v977 = vand.u32 %v227, 4294901760
        %v978 = vsub.f32 %v227, %v977
        %v979 = vand.u32 %v978, 4294901760
        %v980 = vsub.f32 %v978, %v979
        %v981 = vand.u32 %v980, 4294901760
        %982 = vmatpush.msra.mxu0 %v981
        %v983 = vand.u32 %v224, 4294901760
        %v984 = vsub.f32 %v224, %v983
        %v985 = vand.u32 %v984, 4294901760
        %v986 = vsub.f32 %v984, %v985
        %v987 = vand.u32 %v986, 4294901760
        %988 = vmatpush.msra.mxu0 %v987
        %v989 = vand.u32 %v221, 4294901760
        %v990 = vsub.f32 %v221, %v989
        %v991 = vand.u32 %v990, 4294901760
        %v992 = vsub.f32 %v990, %v991
        %v993 = vand.u32 %v992, 4294901760
        %994 = vmatpush.msra.mxu0 %v993
        %v995 = vand.u32 %v218, 4294901760
        %v996 = vsub.f32 %v218, %v995
        %v997 = vand.u32 %v996, 4294901760
        %v998 = vsub.f32 %v996, %v997
        %v999 = vand.u32 %v998, 4294901760
        %1000 = vmatpush.msra.mxu0 %v999
        %v1001 = vand.u32 %v215, 4294901760
        %v1002 = vsub.f32 %v215, %v1001
        %v1003 = vand.u32 %v1002, 4294901760
        %v1004 = vsub.f32 %v1002, %v1003
        %v1005 = vand.u32 %v1004, 4294901760
        %1006 = vmatpush.msra.mxu0 %v1005
        %v1007 = vand.u32 %v212, 4294901760
        %v1008 = vsub.f32 %v212, %v1007
        %v1009 = vand.u32 %v1008, 4294901760
        %v1010 = vsub.f32 %v1008, %v1009
        %v1011 = vand.u32 %v1010, 4294901760
        %1012 = vmatpush.msra.mxu0 %v1011
        %v1013 = vand.u32 %v209, 4294901760
        %v1014 = vsub.f32 %v209, %v1013
        %v1015 = vand.u32 %v1014, 4294901760
        %v1016 = vsub.f32 %v1014, %v1015
        %v1017 = vand.u32 %v1016, 4294901760
        %1018 = vmatpush.msra.mxu0 %v1017
        %v1019 = vand.u32 %v206, 4294901760
        %v1020 = vsub.f32 %v206, %v1019
        %v1021 = vand.u32 %v1020, 4294901760
        %v1022 = vsub.f32 %v1020, %v1021
        %v1023 = vand.u32 %v1022, 4294901760
        %1024 = vmatpush.msra.mxu0 %v1023
        %v1025 = vand.u32 %v203, 4294901760
        %v1026 = vsub.f32 %v203, %v1025
        %v1027 = vand.u32 %v1026, 4294901760
        %v1028 = vsub.f32 %v1026, %v1027
        %v1029 = vand.u32 %v1028, 4294901760
        %1030 = vmatpush.msra.mxu0 %v1029
        %v1031 = vand.u32 %v200, 4294901760
        %v1032 = vsub.f32 %v200, %v1031
        %v1033 = vand.u32 %v1032, 4294901760
        %v1034 = vsub.f32 %v1032, %v1033
        %v1035 = vand.u32 %v1034, 4294901760
        %1036 = vmatpush.msra.mxu0 %v1035
        %v1037 = vand.u32 %v197, 4294901760
        %v1038 = vsub.f32 %v197, %v1037
        %v1039 = vand.u32 %v1038, 4294901760
        %v1040 = vsub.f32 %v1038, %v1039
        %v1041 = vand.u32 %v1040, 4294901760
        %1042 = vmatpush.msra.mxu0 %v1041
        %v1043 = vand.u32 %v194, 4294901760
        %v1044 = vsub.f32 %v194, %v1043
        %v1045 = vand.u32 %v1044, 4294901760
        %v1046 = vsub.f32 %v1044, %v1045
        %v1047 = vand.u32 %v1046, 4294901760
        %1048 = vmatpush.msra.mxu0 %v1047
        %v1049 = vand.u32 %v191, 4294901760
        %v1050 = vsub.f32 %v191, %v1049
        %v1051 = vand.u32 %v1050, 4294901760
        %v1052 = vsub.f32 %v1050, %v1051
        %v1053 = vand.u32 %v1052, 4294901760
        %1054 = vmatpush.msra.mxu0 %v1053
        %v1055 = vand.u32 %v188, 4294901760
        %v1056 = vsub.f32 %v188, %v1055
        %v1057 = vand.u32 %v1056, 4294901760
        %v1058 = vsub.f32 %v1056, %v1057
        %v1059 = vand.u32 %v1058, 4294901760
        %1060 = vmatpush.msra.mxu0 %v1059
        %v1061 = vand.u32 %v185, 4294901760
        %1062 = vmatmul.f32.gmra.mxu0 %v1061
        %v1063 = vpop.f32.mrf.mxu0
        %v1064 = vadd.f32 %v963, %v1063
        %1065 = vdwg.mxu0
        %v1066 = vand.u32 %v233, 4294901760
        %v1067 = vsub.f32 %v233, %v1066
        %1068 = vmatpush.msra.mxu0 %v1067
        %v1069 = vand.u32 %v230, 4294901760
        %v1070 = vsub.f32 %v230, %v1069
        %1071 = vmatpush.msra.mxu0 %v1070
        %v1072 = vand.u32 %v227, 4294901760
        %v1073 = vsub.f32 %v227, %v1072
        %1074 = vmatpush.msra.mxu0 %v1073
        %v1075 = vand.u32 %v224, 4294901760
        %v1076 = vsub.f32 %v224, %v1075
        %1077 = vmatpush.msra.mxu0 %v1076
        %v1078 = vand.u32 %v221, 4294901760
        %v1079 = vsub.f32 %v221, %v1078
        %1080 = vmatpush.msra.mxu0 %v1079
        %v1081 = vand.u32 %v218, 4294901760
        %v1082 = vsub.f32 %v218, %v1081
        %1083 = vmatpush.msra.mxu0 %v1082
        %v1084 = vand.u32 %v215, 4294901760
        %v1085 = vsub.f32 %v215, %v1084
        %1086 = vmatpush.msra.mxu0 %v1085
        %v1087 = vand.u32 %v212, 4294901760
        %v1088 = vsub.f32 %v212, %v1087
        %1089 = vmatpush.msra.mxu0 %v1088
        %v1090 = vand.u32 %v209, 4294901760
        %v1091 = vsub.f32 %v209, %v1090
        %1092 = vmatpush.msra.mxu0 %v1091
        %v1093 = vand.u32 %v206, 4294901760
        %v1094 = vsub.f32 %v206, %v1093
        %1095 = vmatpush.msra.mxu0 %v1094
        %v1096 = vand.u32 %v203, 4294901760
        %v1097 = vsub.f32 %v203, %v1096
        %1098 = vmatpush.msra.mxu0 %v1097
        %v1099 = vand.u32 %v200, 4294901760
        %v1100 = vsub.f32 %v200, %v1099
        %1101 = vmatpush.msra.mxu0 %v1100
        %v1102 = vand.u32 %v197, 4294901760
        %v1103 = vsub.f32 %v197, %v1102
        %1104 = vmatpush.msra.mxu0 %v1103
        %v1105 = vand.u32 %v194, 4294901760
        %v1106 = vsub.f32 %v194, %v1105
        %1107 = vmatpush.msra.mxu0 %v1106
        %v1108 = vand.u32 %v191, 4294901760
        %v1109 = vsub.f32 %v191, %v1108
        %1110 = vmatpush.msra.mxu0 %v1109
        %v1111 = vand.u32 %v188, 4294901760
        %v1112 = vsub.f32 %v188, %v1111
        %1113 = vmatpush.msra.mxu0 %v1112
        %v1114 = vand.u32 %v185, 4294901760
        %v1115 = vsub.f32 %v185, %v1114
        %1116 = vmatmul.f32.gmra.mxu0 %v1115
        %v1117 = vpop.f32.mrf.mxu0
        %v1118 = vadd.f32 %v1064, %v1117
        %1119 = vdwg.mxu0
        %v1120 = vand.u32 %v233, 4294901760
        %1121 = vmatpush.msra.mxu0 %v1120
        %v1122 = vand.u32 %v230, 4294901760
        %1123 = vmatpush.msra.mxu0 %v1122
        %v1124 = vand.u32 %v227, 4294901760
        %1125 = vmatpush.msra.mxu0 %v1124
        %v1126 = vand.u32 %v224, 4294901760
        %1127 = vmatpush.msra.mxu0 %v1126
        %v1128 = vand.u32 %v221, 4294901760
        %1129 = vmatpush.msra.mxu0 %v1128
        %v1130 = vand.u32 %v218, 4294901760
        %1131 = vmatpush.msra.mxu0 %v1130
        %v1132 = vand.u32 %v215, 4294901760
        %1133 = vmatpush.msra.mxu0 %v1132
        %v1134 = vand.u32 %v212, 4294901760
        %1135 = vmatpush.msra.mxu0 %v1134
        %v1136 = vand.u32 %v209, 4294901760
        %1137 = vmatpush.msra.mxu0 %v1136
        %v1138 = vand.u32 %v206, 4294901760
        %1139 = vmatpush.msra.mxu0 %v1138
        %v1140 = vand.u32 %v203, 4294901760
        %1141 = vmatpush.msra.mxu0 %v1140
        %v1142 = vand.u32 %v200, 4294901760
        %1143 = vmatpush.msra.mxu0 %v1142
        %v1144 = vand.u32 %v197, 4294901760
        %1145 = vmatpush.msra.mxu0 %v1144
        %v1146 = vand.u32 %v194, 4294901760
        %1147 = vmatpush.msra.mxu0 %v1146
        %v1148 = vand.u32 %v191, 4294901760
        %1149 = vmatpush.msra.mxu0 %v1148
        %v1150 = vand.u32 %v188, 4294901760
        %1151 = vmatpush.msra.mxu0 %v1150
        %v1152 = vand.u32 %v185, 4294901760
        %v1153 = vsub.f32 %v185, %v1152
        %v1154 = vand.u32 %v1153, 4294901760
        %1155 = vmatmul.f32.gmra.mxu0 %v1154
        %v1156 = vpop.f32.mrf.mxu0
        %v1157 = vadd.f32 %v1118, %v1156
        %1158 = vdwg.mxu0
        %v1159 = vand.u32 %v233, 4294901760
        %v1160 = vsub.f32 %v233, %v1159
        %v1161 = vand.u32 %v1160, 4294901760
        %1162 = vmatpush.msra.mxu0 %v1161
        %v1163 = vand.u32 %v230, 4294901760
        %v1164 = vsub.f32 %v230, %v1163
        %v1165 = vand.u32 %v1164, 4294901760
        %1166 = vmatpush.msra.mxu0 %v1165
        %v1167 = vand.u32 %v227, 4294901760
        %v1168 = vsub.f32 %v227, %v1167
        %v1169 = vand.u32 %v1168, 4294901760
        %1170 = vmatpush.msra.mxu0 %v1169
        %v1171 = vand.u32 %v224, 4294901760
        %v1172 = vsub.f32 %v224, %v1171
        %v1173 = vand.u32 %v1172, 4294901760
        %1174 = vmatpush.msra.mxu0 %v1173
        %v1175 = vand.u32 %v221, 4294901760
        %v1176 = vsub.f32 %v221, %v1175
        %v1177 = vand.u32 %v1176, 4294901760
        %1178 = vmatpush.msra.mxu0 %v1177
        %v1179 = vand.u32 %v218, 4294901760
        %v1180 = vsub.f32 %v218, %v1179
        %v1181 = vand.u32 %v1180, 4294901760
        %1182 = vmatpush.msra.mxu0 %v1181
        %v1183 = vand.u32 %v215, 4294901760
        %v1184 = vsub.f32 %v215, %v1183
        %v1185 = vand.u32 %v1184, 4294901760
        %1186 = vmatpush.msra.mxu0 %v1185
        %v1187 = vand.u32 %v212, 4294901760
        %v1188 = vsub.f32 %v212, %v1187
        %v1189 = vand.u32 %v1188, 4294901760
        %1190 = vmatpush.msra.mxu0 %v1189
        %v1191 = vand.u32 %v209, 4294901760
        %v1192 = vsub.f32 %v209, %v1191
        %v1193 = vand.u32 %v1192, 4294901760
        %1194 = vmatpush.msra.mxu0 %v1193
        %v1195 = vand.u32 %v206, 4294901760
        %v1196 = vsub.f32 %v206, %v1195
        %v1197 = vand.u32 %v1196, 4294901760
        %1198 = vmatpush.msra.mxu0 %v1197
        %v1199 = vand.u32 %v203, 4294901760
        %v1200 = vsub.f32 %v203, %v1199
        %v1201 = vand.u32 %v1200, 4294901760
        %1202 = vmatpush.msra.mxu0 %v1201
        %v1203 = vand.u32 %v200, 4294901760
        %v1204 = vsub.f32 %v200, %v1203
        %v1205 = vand.u32 %v1204, 4294901760
        %1206 = vmatpush.msra.mxu0 %v1205
        %v1207 = vand.u32 %v197, 4294901760
        %v1208 = vsub.f32 %v197, %v1207
        %v1209 = vand.u32 %v1208, 4294901760
        %1210 = vmatpush.msra.mxu0 %v1209
        %v1211 = vand.u32 %v194, 4294901760
        %v1212 = vsub.f32 %v194, %v1211
        %v1213 = vand.u32 %v1212, 4294901760
        %1214 = vmatpush.msra.mxu0 %v1213
        %v1215 = vand.u32 %v191, 4294901760
        %v1216 = vsub.f32 %v191, %v1215
        %v1217 = vand.u32 %v1216, 4294901760
        %1218 = vmatpush.msra.mxu0 %v1217
        %v1219 = vand.u32 %v188, 4294901760
        %v1220 = vsub.f32 %v188, %v1219
        %v1221 = vand.u32 %v1220, 4294901760
        %1222 = vmatpush.msra.mxu0 %v1221
        %v1223 = vand.u32 %v185, 4294901760
        %1224 = vmatmul.f32.gmra.mxu0 %v1223
        %v1225 = vpop.f32.mrf.mxu0
        %v1226 = vadd.f32 %v1157, %v1225
        %1227 = vdwg.mxu0
        %v1228 = vand.u32 %v233, 4294901760
        %1229 = vmatpush.msra.mxu0 %v1228
        %v1230 = vand.u32 %v230, 4294901760
        %1231 = vmatpush.msra.mxu0 %v1230
        %v1232 = vand.u32 %v227, 4294901760
        %1233 = vmatpush.msra.mxu0 %v1232
        %v1234 = vand.u32 %v224, 4294901760
        %1235 = vmatpush.msra.mxu0 %v1234
        %v1236 = vand.u32 %v221, 4294901760
        %1237 = vmatpush.msra.mxu0 %v1236
        %v1238 = vand.u32 %v218, 4294901760
        %1239 = vmatpush.msra.mxu0 %v1238
        %v1240 = vand.u32 %v215, 4294901760
        %1241 = vmatpush.msra.mxu0 %v1240
        %v1242 = vand.u32 %v212, 4294901760
        %1243 = vmatpush.msra.mxu0 %v1242
        %v1244 = vand.u32 %v209, 4294901760
        %1245 = vmatpush.msra.mxu0 %v1244
        %v1246 = vand.u32 %v206, 4294901760
        %1247 = vmatpush.msra.mxu0 %v1246
        %v1248 = vand.u32 %v203, 4294901760
        %1249 = vmatpush.msra.mxu0 %v1248
        %v1250 = vand.u32 %v200, 4294901760
        %1251 = vmatpush.msra.mxu0 %v1250
        %v1252 = vand.u32 %v197, 4294901760
        %1253 = vmatpush.msra.mxu0 %v1252
        %v1254 = vand.u32 %v194, 4294901760
        %1255 = vmatpush.msra.mxu0 %v1254
        %v1256 = vand.u32 %v191, 4294901760
        %1257 = vmatpush.msra.mxu0 %v1256
        %v1258 = vand.u32 %v188, 4294901760
        %1259 = vmatpush.msra.mxu0 %v1258
        %v1260 = vand.u32 %v185, 4294901760
        %1261 = vmatmul.f32.gmra.mxu0 %v1260
        %v1262 = vpop.f32.mrf.mxu0
        %v1263 = vadd.f32 %v1226, %v1262
        %1264 = vdwg.mxu0
        %1265 = vst [vmem:[%s184] sm:$0xff] %v581
        %1266 = vst [vmem:[%s184 + $0x8] sm:$0xff] %v922
        %1267 = vst [vmem:[%s184 + $0x10] sm:$0xff] %v1263
        %p1268 = scmp.lt.s32.totalorder %s15, 1
        %s1269 = scalar_select %p1268, %s15, 1
        %s1270 = smul.addr %s1269, 3
        %s1271 = smul.addr %s1270, 8
        %s1272 = scalar_lea.vmem %s3, %s1271
        // Predicated region
        $region37: #{transformer_model_forward.10} parent=31 // pred_check
          %p1273 = pneg %p101
        $region38: #{transformer_model_forward.10} parent=31 // pred_check_branch
          %1275 = sbr.rel (%p1273) target = $region40
        $region39: #{transformer_model_forward.10} parent=31 // pred_region
          _
        $region40: #{transformer_model_forward.10} parent=31 // pred_fallthru
          _
      $region32: #{transformer_model_forward.10} parent=5 // pred_fallthru
        _
      %p1276 = scmp.le.s32.totalorder 2, %s10
      // Predicated region
      $region41: #{transformer_model_forward.10} parent=5 // pred_check
        %p1277 = pneg %p1276
      $region42: #{transformer_model_forward.10} parent=5 // pred_check_branch
        %1279 = sbr.rel (%p1277) target = $region44
      $region43: #{transformer_model_forward.10} parent=5 // pred_region
        %s1280 = ssub.s32 %s10, 2
        // Predicated region
        $region45: #{transformer_model_forward.10} parent=43 // pred_check
          %p1281 = pneg %p107
        $region46: #{transformer_model_forward.10} parent=43 // pred_check_branch
          %1283 = sbr.rel (%p1281) target = $region48
        $region47: #{transformer_model_forward.10} parent=43 // pred_region
          %p1284 = scmp.lt.s32.totalorder %s16, 1
          %s1285 = scalar_select %p1284, %s16, 1
          %s1286 = smul.addr %s1285, 3
          %s1287 = smul.addr %s1286, 8
          %s1288 = scalar_lea.vmem %s3, %s1287
        $region48: #{transformer_model_forward.10} parent=43 // pred_fallthru
          _
      $region44: #{transformer_model_forward.10} parent=5 // pred_fallthru
        _
    $region6: #{transformer_model_forward.10} parent=1 // loop_footer
      %s14 = sadd.s32 1, %s10
    $region7: #{transformer_model_forward.10} parent=1 // loop_footer_branch
      %9 = sbr.rel target = $region3
    $region8: #{transformer_model_forward.10} parent=1 // loop_exit
      _
    %1289 = vsyncpa [#allocation3], 1
    %s1290 = scalar_lea.sflag [#allocation3], 1
    %1291 = vsyncpa %s1290, 1

// kernel: transformer_model_forward.12
$region0: #{transformer_model_forward.12}
  #allocation0 [shape = 'u32[]', space=smem, size = 0x4, offset = 0x4, fixed_abs, tag = 'smem constant byte address 0x4 - core index']
  #allocation1 [shape = 'u32[72,128]{1,0:T(1,128)}', space=vmem, size = 0x9000, scoped, tag = 'internal scratch']
  %s0 = inlined_call_operand.vmem [shape: f32[16,128], index: 0, kind: input, shape index: {}]
  %s1 = inlined_call_operand.vmem [shape: f32[16,128], index: 1, kind: input, shape index: {}]
  %s2 = inlined_call_operand.vmem [shape: f32[128,128], index: 2, kind: input, shape index: {}]
  %s3 = inlined_call_operand.vmem [shape: f32[1,128], index: 3, kind: input, shape index: {}]
  %s4 = inlined_call_operand.vmem [shape: f32[1,128], index: 4, kind: input, shape index: {}]
  %s5 = inlined_call_operand.vmem [shape: f32[1,128], index: 5, kind: input, shape index: {}]
  %s6 = inlined_call_operand.vmem [shape: f32[16,128], index: 6, kind: output, shape index: {}]
  %s7 = sld [smem:[#allocation0]]
  $region57: #{transformer_model_forward.12} parent=0
    _
  %s9 = ssub.s32 1, %s7
  %s10 = scalar_select 0, %s9, %s7
  loop: start=0, step=1, limit=4
  $region2: #{transformer_model_forward.12} parent=0 // loop_pre_header
    _
  $region3: #{transformer_model_forward.12} parent=0 // loop_header
    %s12 = sphi 0, %s16
    %p13 = scmp.ge.s32.totalorder %s12, 4
    %s22 = sphi 0, %s24
    %s25 = sphi 0, %s22
    %s26 = sphi 0, %s25
    %s42 = sphi 0, %s26
    %s48 = sphi 0, %s50
    %s51 = sphi 0, %s48
    %s52 = sphi 0, %s51
    %s68 = sphi 0, %s52
    %s72 = sphi 0, %s72
    %s74 = sphi 0, %s72
    %s75 = sphi 0, %s74
    %s89 = sphi 0, %s75
    %s93 = sphi 0, %s93
    %s95 = sphi 0, %s93
    %s96 = sphi 0, %s95
    %s110 = sphi 0, %s96
    %s114 = sphi 0, %s114
    %s116 = sphi 0, %s114
    %s117 = sphi 0, %s116
    %s131 = sphi 0, %s117
    %s135 = sphi 0, %s135
    %s137 = sphi 0, %s135
    %s138 = sphi 0, %s137
    %s152 = sphi 0, %s138
    %s158 = sphi 0, %s160
    %s161 = sphi 0, %s158
    %s162 = sphi 0, %s161
    %s178 = sphi 0, %s162
  $region4: #{transformer_model_forward.12} parent=0 // loop_header_branch
    %15 = sbr.rel (%p13) target = $region8
  $region5: #{transformer_model_forward.12} parent=0 // loop_body
    %s17 = ssub.s32 %s12, 1
    %s18 = ssub.s32 %s12, 2
    %s19 = sadd.s32 %s12, 1
    %s20 = ssub.s32 %s12, %s19
    %p21 = scmp.eq.s32.totalorder %s20, 0
    %s23 = sadd.s32 %s22, 1
    %s24 = scalar_select %p21, %s22, %s23
    %p27 = pneg %p21
    %p28 = scmp.eq.s32.totalorder %s12, 1
    %p29 = por %p27, %p28
    %p30 = scmp.ne.s32.totalorder %s22, %s25
    %p31 = scmp.eq.s32.totalorder %s12, 0
    %p32 = por %p30, %p31
    %p33 = scmp.ne.s32.totalorder %s22, %s25
    %p34 = scmp.eq.s32.totalorder %s17, 1
    %p35 = por %p33, %p34
    %p36 = scmp.ne.s32.totalorder %s25, %s26
    %p37 = scmp.eq.s32.totalorder %s17, 0
    %p38 = por %p36, %p37
    %p39 = scmp.ne.s32.totalorder %s25, %s26
    %p40 = scmp.eq.s32.totalorder %s18, 1
    %p41 = por %p39, %p40
    %p43 = scmp.ne.s32.totalorder %s26, %s42
    %p44 = scmp.eq.s32.totalorder %s18, 0
    %p45 = por %p43, %p44
    %s46 = ssub.s32 %s12, %s19
    %p47 = scmp.eq.s32.totalorder %s46, 0
    %s49 = sadd.s32 %s48, 1
    %s50 = scalar_select %p47, %s48, %s49
    %p53 = pneg %p47
    %p54 = scmp.eq.s32.totalorder %s12, 1
    %p55 = por %p53, %p54
    %p56 = scmp.ne.s32.totalorder %s48, %s51
    %p57 = scmp.eq.s32.totalorder %s12, 0
    %p58 = por %p56, %p57
    %p59 = scmp.ne.s32.totalorder %s48, %s51
    %p60 = scmp.eq.s32.totalorder %s17, 1
    %p61 = por %p59, %p60
    %p62 = scmp.ne.s32.totalorder %s51, %s52
    %p63 = scmp.eq.s32.totalorder %s17, 0
    %p64 = por %p62, %p63
    %p65 = scmp.ne.s32.totalorder %s51, %s52
    %p66 = scmp.eq.s32.totalorder %s18, 1
    %p67 = por %p65, %p66
    %p69 = scmp.ne.s32.totalorder %s52, %s68
    %p70 = scmp.eq.s32.totalorder %s18, 0
    %p71 = por %p69, %p70
    %s73 = sadd.s32 %s72, 1
    %p76 = scmp.eq.s32.totalorder %s12, 1
    %p77 = scmp.ne.s32.totalorder %s72, %s74
    %p78 = scmp.eq.s32.totalorder %s12, 0
    %p79 = por %p77, %p78
    %p80 = scmp.ne.s32.totalorder %s72, %s74
    %p81 = scmp.eq.s32.totalorder %s17, 1
    %p82 = por %p80, %p81
    %p83 = scmp.ne.s32.totalorder %s74, %s75
    %p84 = scmp.eq.s32.totalorder %s17, 0
    %p85 = por %p83, %p84
    %p86 = scmp.ne.s32.totalorder %s74, %s75
    %p87 = scmp.eq.s32.totalorder %s18, 1
    %p88 = por %p86, %p87
    %p90 = scmp.ne.s32.totalorder %s75, %s89
    %p91 = scmp.eq.s32.totalorder %s18, 0
    %p92 = por %p90, %p91
    %s94 = sadd.s32 %s93, 1
    %p97 = scmp.eq.s32.totalorder %s12, 1
    %p98 = scmp.ne.s32.totalorder %s93, %s95
    %p99 = scmp.eq.s32.totalorder %s12, 0
    %p100 = por %p98, %p99
    %p101 = scmp.ne.s32.totalorder %s93, %s95
    %p102 = scmp.eq.s32.totalorder %s17, 1
    %p103 = por %p101, %p102
    %p104 = scmp.ne.s32.totalorder %s95, %s96
    %p105 = scmp.eq.s32.totalorder %s17, 0
    %p106 = por %p104, %p105
    %p107 = scmp.ne.s32.totalorder %s95, %s96
    %p108 = scmp.eq.s32.totalorder %s18, 1
    %p109 = por %p107, %p108
    %p111 = scmp.ne.s32.totalorder %s96, %s110
    %p112 = scmp.eq.s32.totalorder %s18, 0
    %p113 = por %p111, %p112
    %s115 = sadd.s32 %s114, 1
    %p118 = scmp.eq.s32.totalorder %s12, 1
    %p119 = scmp.ne.s32.totalorder %s114, %s116
    %p120 = scmp.eq.s32.totalorder %s12, 0
    %p121 = por %p119, %p120
    %p122 = scmp.ne.s32.totalorder %s114, %s116
    %p123 = scmp.eq.s32.totalorder %s17, 1
    %p124 = por %p122, %p123
    %p125 = scmp.ne.s32.totalorder %s116, %s117
    %p126 = scmp.eq.s32.totalorder %s17, 0
    %p127 = por %p125, %p126
    %p128 = scmp.ne.s32.totalorder %s116, %s117
    %p129 = scmp.eq.s32.totalorder %s18, 1
    %p130 = por %p128, %p129
    %p132 = scmp.ne.s32.totalorder %s117, %s131
    %p133 = scmp.eq.s32.totalorder %s18, 0
    %p134 = por %p132, %p133
    %s136 = sadd.s32 %s135, 1
    %p139 = scmp.eq.s32.totalorder %s12, 1
    %p140 = scmp.ne.s32.totalorder %s135, %s137
    %p141 = scmp.eq.s32.totalorder %s12, 0
    %p142 = por %p140, %p141
    %p143 = scmp.ne.s32.totalorder %s135, %s137
    %p144 = scmp.eq.s32.totalorder %s17, 1
    %p145 = por %p143, %p144
    %p146 = scmp.ne.s32.totalorder %s137, %s138
    %p147 = scmp.eq.s32.totalorder %s17, 0
    %p148 = por %p146, %p147
    %p149 = scmp.ne.s32.totalorder %s137, %s138
    %p150 = scmp.eq.s32.totalorder %s18, 1
    %p151 = por %p149, %p150
    %p153 = scmp.ne.s32.totalorder %s138, %s152
    %p154 = scmp.eq.s32.totalorder %s18, 0
    %p155 = por %p153, %p154
    %s156 = ssub.s32 %s12, %s19
    %p157 = scmp.eq.s32.totalorder %s156, 0
    %s159 = sadd.s32 %s158, 1
    %s160 = scalar_select %p157, %s158, %s159
    %p163 = pneg %p157
    %p164 = scmp.eq.s32.totalorder %s12, 1
    %p165 = por %p163, %p164
    %p166 = scmp.ne.s32.totalorder %s158, %s161
    %p167 = scmp.eq.s32.totalorder %s12, 0
    %p168 = por %p166, %p167
    %p169 = scmp.ne.s32.totalorder %s158, %s161
    %p170 = scmp.eq.s32.totalorder %s17, 1
    %p171 = por %p169, %p170
    %p172 = scmp.ne.s32.totalorder %s161, %s162
    %p173 = scmp.eq.s32.totalorder %s17, 0
    %p174 = por %p172, %p173
    %p175 = scmp.ne.s32.totalorder %s161, %s162
    %p176 = scmp.eq.s32.totalorder %s18, 1
    %p177 = por %p175, %p176
    %p179 = scmp.ne.s32.totalorder %s162, %s178
    %p180 = scmp.eq.s32.totalorder %s18, 0
    %p181 = por %p179, %p180
    %p182 = scmp.le.s32.totalorder 1, %s12
    %p183 = scmp.lt.s32.totalorder %s12, 3
    %p184 = pnand %p182, %p183
    %p185 = pneg %p184
    // Predicated region
    $region9: #{transformer_model_forward.12} parent=5 // pred_check
      _
    $region10: #{transformer_model_forward.12} parent=5 // pred_check_branch
      %187 = sbr.rel (%p184) target = $region12
    $region11: #{transformer_model_forward.12} parent=5 // pred_region
      %s188 = ssub.s32 %s12, 1
      // Predicated region
      $region13: #{transformer_model_forward.12} parent=11 // pred_check
        %p189 = pneg %p85
      $region14: #{transformer_model_forward.12} parent=11 // pred_check_branch
        %191 = sbr.rel (%p189) target = $region16
      $region15: #{transformer_model_forward.12} parent=11 // pred_region
        _
      $region16: #{transformer_model_forward.12} parent=11 // pred_fallthru
        _
      // Predicated region
      $region17: #{transformer_model_forward.12} parent=11 // pred_check
        %p192 = pneg %p106
      $region18: #{transformer_model_forward.12} parent=11 // pred_check_branch
        %194 = sbr.rel (%p192) target = $region20
      $region19: #{transformer_model_forward.12} parent=11 // pred_region
        _
      $region20: #{transformer_model_forward.12} parent=11 // pred_fallthru
        _
      // Predicated region
      $region21: #{transformer_model_forward.12} parent=11 // pred_check
        %p195 = pneg %p127
      $region22: #{transformer_model_forward.12} parent=11 // pred_check_branch
        %197 = sbr.rel (%p195) target = $region24
      $region23: #{transformer_model_forward.12} parent=11 // pred_region
        _
      $region24: #{transformer_model_forward.12} parent=11 // pred_fallthru
        _
      // Predicated region
      $region25: #{transformer_model_forward.12} parent=11 // pred_check
        %p198 = pneg %p148
      $region26: #{transformer_model_forward.12} parent=11 // pred_check_branch
        %200 = sbr.rel (%p198) target = $region28
      $region27: #{transformer_model_forward.12} parent=11 // pred_region
        _
      $region28: #{transformer_model_forward.12} parent=11 // pred_fallthru
        _
    $region12: #{transformer_model_forward.12} parent=5 // pred_fallthru
      _
    %p201 = scmp.lt.s32.totalorder %s12, 2
    // Predicated region
    $region29: #{transformer_model_forward.12} parent=5 // pred_check
      %p202 = pneg %p201
    $region30: #{transformer_model_forward.12} parent=5 // pred_check_branch
      %204 = sbr.rel (%p202) target = $region32
    $region31: #{transformer_model_forward.12} parent=5 // pred_region
      // Predicated region
      $region33: #{transformer_model_forward.12} parent=31 // pred_check
        %p205 = pneg %p32
      $region34: #{transformer_model_forward.12} parent=31 // pred_check_branch
        %207 = sbr.rel (%p205) target = $region36
      $region35: #{transformer_model_forward.12} parent=31 // pred_region
        %p208 = scmp.lt.s32.totalorder %s12, 1
        %s209 = scalar_select %p208, %s12, 1
        %s210 = smul.addr %s209, 8
        %s211 = scalar_lea.vmem %s0, %s210
      $region36: #{transformer_model_forward.12} parent=31 // pred_fallthru
        _
      // Predicated region
      $region37: #{transformer_model_forward.12} parent=31 // pred_check
        %p212 = pneg %p58
      $region38: #{transformer_model_forward.12} parent=31 // pred_check_branch
        %214 = sbr.rel (%p212) target = $region40
      $region39: #{transformer_model_forward.12} parent=31 // pred_region
        %p215 = scmp.lt.s32.totalorder %s12, 1
        %s216 = scalar_select %p215, %s12, 1
        %s217 = smul.addr %s216, 8
        %s218 = scalar_lea.vmem %s1, %s217
      $region40: #{transformer_model_forward.12} parent=31 // pred_fallthru
        _
    $region32: #{transformer_model_forward.12} parent=5 // pred_fallthru
      _
    %p219 = scmp.le.s32.totalorder 1, %s12
    %p220 = scmp.lt.s32.totalorder %s12, 3
    %p221 = pnand %p219, %p220
    %p222 = pneg %p221
    // Predicated region
    $region41: #{transformer_model_forward.12} parent=5 // pred_check
      _
    $region42: #{transformer_model_forward.12} parent=5 // pred_check_branch
      %224 = sbr.rel (%p221) target = $region44
    $region43: #{transformer_model_forward.12} parent=5 // pred_region
      %s225 = ssub.s32 %s12, 1
      %p226 = scmp.lt.s32.totalorder %s17, 1
      %s227 = scalar_select %p226, %s17, 1
      %s228 = smul.addr %s227, 8
      %s229 = scalar_lea.vmem %s0, %s228
      %p230 = pneg %p38
      %p231 = pneg %p35
      %p232 = scmp.lt.s32.totalorder %s17, 1
      %s233 = scalar_select %p232, %s17, 1
      %s234 = smul.addr %s233, 8
      %s235 = scalar_lea.vmem %s1, %s234
      %p236 = pneg %p64
      %p237 = pneg %p61
      %p238 = pneg %p85
      %p239 = pneg %p82
      %p240 = pneg %p106
      %p241 = pneg %p103
      %p242 = pneg %p127
      %p243 = pneg %p124
      %p244 = pneg %p148
      %p245 = pneg %p145
      %p246 = pneg %p174
      %p247 = pneg %p171
      %p248 = scmp.lt.s32.totalorder %s17, 1
      %s249 = scalar_select %p248, %s17, 1
      %s250 = smul.addr %s249, 8
      %s251 = scalar_lea.vmem %s6, %s250
      %p252 = scmp.lt.s32.totalorder %s17, 1
      %s253 = scalar_select %p252, %s17, 1
      %s254 = smul.addr %s253, 8
      %s255 = scalar_lea.vmem %s0, %s254
      %p256 = scmp.lt.s32.totalorder %s17, 1
      %s257 = scalar_select %p256, %s17, 1
      %s258 = smul.addr %s257, 8
      %s259 = scalar_lea.vmem %s1, %s258
      %p260 = scmp.lt.s32.totalorder %s17, 1
      %s261 = scalar_select %p260, %s17, 1
      %s262 = smul.addr %s261, 8
      %s263 = scalar_lea.vmem %s6, %s262
      %v264 = vld [vmem:[%s255] sm:$0xff]
      %v265 = vld [vmem:[%s2] sm:$0xff]
      %v266 = vld [vmem:[%s2 + $0x8] sm:$0xff]
      %v267 = vld [vmem:[%s2 + $0x10] sm:$0xff]
      %v268 = vld [vmem:[%s2 + $0x18] sm:$0xff]
      %v269 = vld [vmem:[%s2 + $0x20] sm:$0xff]
      %v270 = vld [vmem:[%s2 + $0x28] sm:$0xff]
      %v271 = vld [vmem:[%s2 + $0x30] sm:$0xff]
      %v272 = vld [vmem:[%s2 + $0x38] sm:$0xff]
      %v273 = vld [vmem:[%s2 + $0x40] sm:$0xff]
      %v274 = vld [vmem:[%s2 + $0x48] sm:$0xff]
      %v275 = vld [vmem:[%s2 + $0x50] sm:$0xff]
      %v276 = vld [vmem:[%s2 + $0x58] sm:$0xff]
      %v277 = vld [vmem:[%s2 + $0x60] sm:$0xff]
      %v278 = vld [vmem:[%s2 + $0x68] sm:$0xff]
      %v279 = vld [vmem:[%s2 + $0x70] sm:$0xff]
      %v280 = vld [vmem:[%s2 + $0x78] sm:$0xff]
      %v281 = vld [vmem:[%s3] sm:$0x1]
      %v283 = vperm.slane %v281, 0
      %v285 = vand.u32 %v280, 4294901760
      %286 = vmatpush.msra.mxu0 %v285
      %v287 = vand.u32 %v279, 4294901760
      %288 = vmatpush.msra.mxu0 %v287
      %v289 = vand.u32 %v278, 4294901760
      %290 = vmatpush.msra.mxu0 %v289
      %v291 = vand.u32 %v277, 4294901760
      %292 = vmatpush.msra.mxu0 %v291
      %v293 = vand.u32 %v276, 4294901760
      %294 = vmatpush.msra.mxu0 %v293
      %v295 = vand.u32 %v275, 4294901760
      %296 = vmatpush.msra.mxu0 %v295
      %v297 = vand.u32 %v274, 4294901760
      %298 = vmatpush.msra.mxu0 %v297
      %v299 = vand.u32 %v273, 4294901760
      %300 = vmatpush.msra.mxu0 %v299
      %v301 = vand.u32 %v272, 4294901760
      %302 = vmatpush.msra.mxu0 %v301
      %v303 = vand.u32 %v271, 4294901760
      %304 = vmatpush.msra.mxu0 %v303
      %v305 = vand.u32 %v270, 4294901760
      %306 = vmatpush.msra.mxu0 %v305
      %v307 = vand.u32 %v269, 4294901760
      %308 = vmatpush.msra.mxu0 %v307
      %v309 = vand.u32 %v268, 4294901760
      %310 = vmatpush.msra.mxu0 %v309
      %v311 = vand.u32 %v267, 4294901760
      %312 = vmatpush.msra.mxu0 %v311
      %v313 = vand.u32 %v266, 4294901760
      %314 = vmatpush.msra.mxu0 %v313
      %v315 = vand.u32 %v265, 4294901760
      %316 = vmatpush.msra.mxu0 %v315
      %v317 = vand.u32 %v264, 4294901760
      %v318 = vsub.f32 %v264, %v317
      %v319 = vand.u32 %v318, 4294901760
      %v320 = vsub.f32 %v318, %v319
      %v321 = vand.u32 %v320, 4294901760
      %322 = vmatmul.f32.gmra.mxu0 %v321
      %v323 = vpop.f32.mrf.mxu0
      %v324 = vadd.f32 %v283, %v323
      %325 = vdwg.mxu0
      %v326 = vand.u32 %v280, 4294901760
      %v327 = vsub.f32 %v280, %v326
      %v328 = vand.u32 %v327, 4294901760
      %v329 = vsub.f32 %v327, %v328
      %v330 = vand.u32 %v329, 4294901760
      %331 = vmatpush.msra.mxu0 %v330
      %v332 = vand.u32 %v279, 4294901760
      %v333 = vsub.f32 %v279, %v332
      %v334 = vand.u32 %v333, 4294901760
      %v335 = vsub.f32 %v333, %v334
      %v336 = vand.u32 %v335, 4294901760
      %337 = vmatpush.msra.mxu0 %v336
      %v338 = vand.u32 %v278, 4294901760
      %v339 = vsub.f32 %v278, %v338
      %v340 = vand.u32 %v339, 4294901760
      %v341 = vsub.f32 %v339, %v340
      %v342 = vand.u32 %v341, 4294901760
      %343 = vmatpush.msra.mxu0 %v342
      %v344 = vand.u32 %v277, 4294901760
      %v345 = vsub.f32 %v277, %v344
      %v346 = vand.u32 %v345, 4294901760
      %v347 = vsub.f32 %v345, %v346
      %v348 = vand.u32 %v347, 4294901760
      %349 = vmatpush.msra.mxu0 %v348
      %v350 = vand.u32 %v276, 4294901760
      %v351 = vsub.f32 %v276, %v350
      %v352 = vand.u32 %v351, 4294901760
      %v353 = vsub.f32 %v351, %v352
      %v354 = vand.u32 %v353, 4294901760
      %355 = vmatpush.msra.mxu0 %v354
      %v356 = vand.u32 %v275, 4294901760
      %v357 = vsub.f32 %v275, %v356
      %v358 = vand.u32 %v357, 4294901760
      %v359 = vsub.f32 %v357, %v358
      %v360 = vand.u32 %v359, 4294901760
      %361 = vmatpush.msra.mxu0 %v360
      %v362 = vand.u32 %v274, 4294901760
      %v363 = vsub.f32 %v274, %v362
      %v364 = vand.u32 %v363, 4294901760
      %v365 = vsub.f32 %v363, %v364
      %v366 = vand.u32 %v365, 4294901760
      %367 = vmatpush.msra.mxu0 %v366
      %v368 = vand.u32 %v273, 4294901760
      %v369 = vsub.f32 %v273, %v368
      %v370 = vand.u32 %v369, 4294901760
      %v371 = vsub.f32 %v369, %v370
      %v372 = vand.u32 %v371, 4294901760
      %373 = vmatpush.msra.mxu0 %v372
      %v374 = vand.u32 %v272, 4294901760
      %v375 = vsub.f32 %v272, %v374
      %v376 = vand.u32 %v375, 4294901760
      %v377 = vsub.f32 %v375, %v376
      %v378 = vand.u32 %v377, 4294901760
      %379 = vmatpush.msra.mxu0 %v378
      %v380 = vand.u32 %v271, 4294901760
      %v381 = vsub.f32 %v271, %v380
      %v382 = vand.u32 %v381, 4294901760
      %v383 = vsub.f32 %v381, %v382
      %v384 = vand.u32 %v383, 4294901760
      %385 = vmatpush.msra.mxu0 %v384
      %v386 = vand.u32 %v270, 4294901760
      %v387 = vsub.f32 %v270, %v386
      %v388 = vand.u32 %v387, 4294901760
      %v389 = vsub.f32 %v387, %v388
      %v390 = vand.u32 %v389, 4294901760
      %391 = vmatpush.msra.mxu0 %v390
      %v392 = vand.u32 %v269, 4294901760
      %v393 = vsub.f32 %v269, %v392
      %v394 = vand.u32 %v393, 4294901760
      %v395 = vsub.f32 %v393, %v394
      %v396 = vand.u32 %v395, 4294901760
      %397 = vmatpush.msra.mxu0 %v396
      %v398 = vand.u32 %v268, 4294901760
      %v399 = vsub.f32 %v268, %v398
      %v400 = vand.u32 %v399, 4294901760
      %v401 = vsub.f32 %v399, %v400
      %v402 = vand.u32 %v401, 4294901760
      %403 = vmatpush.msra.mxu0 %v402
      %v404 = vand.u32 %v267, 4294901760
      %v405 = vsub.f32 %v267, %v404
      %v406 = vand.u32 %v405, 4294901760
      %v407 = vsub.f32 %v405, %v406
      %v408 = vand.u32 %v407, 4294901760
      %409 = vmatpush.msra.mxu0 %v408
      %v410 = vand.u32 %v266, 4294901760
      %v411 = vsub.f32 %v266, %v410
      %v412 = vand.u32 %v411, 4294901760
      %v413 = vsub.f32 %v411, %v412
      %v414 = vand.u32 %v413, 4294901760
      %415 = vmatpush.msra.mxu0 %v414
      %v416 = vand.u32 %v265, 4294901760
      %v417 = vsub.f32 %v265, %v416
      %v418 = vand.u32 %v417, 4294901760
      %v419 = vsub.f32 %v417, %v418
      %v420 = vand.u32 %v419, 4294901760
      %421 = vmatpush.msra.mxu0 %v420
      %v422 = vand.u32 %v264, 4294901760
      %423 = vmatmul.f32.gmra.mxu0 %v422
      %v424 = vpop.f32.mrf.mxu0
      %v425 = vadd.f32 %v324, %v424
      %426 = vdwg.mxu0
      %v427 = vand.u32 %v280, 4294901760
      %v428 = vsub.f32 %v280, %v427
      %429 = vmatpush.msra.mxu0 %v428
      %v430 = vand.u32 %v279, 4294901760
      %v431 = vsub.f32 %v279, %v430
      %432 = vmatpush.msra.mxu0 %v431
      %v433 = vand.u32 %v278, 4294901760
      %v434 = vsub.f32 %v278, %v433
      %435 = vmatpush.msra.mxu0 %v434
      %v436 = vand.u32 %v277, 4294901760
      %v437 = vsub.f32 %v277, %v436
      %438 = vmatpush.msra.mxu0 %v437
      %v439 = vand.u32 %v276, 4294901760
      %v440 = vsub.f32 %v276, %v439
      %441 = vmatpush.msra.mxu0 %v440
      %v442 = vand.u32 %v275, 4294901760
      %v443 = vsub.f32 %v275, %v442
      %444 = vmatpush.msra.mxu0 %v443
      %v445 = vand.u32 %v274, 4294901760
      %v446 = vsub.f32 %v274, %v445
      %447 = vmatpush.msra.mxu0 %v446
      %v448 = vand.u32 %v273, 4294901760
      %v449 = vsub.f32 %v273, %v448
      %450 = vmatpush.msra.mxu0 %v449
      %v451 = vand.u32 %v272, 4294901760
      %v452 = vsub.f32 %v272, %v451
      %453 = vmatpush.msra.mxu0 %v452
      %v454 = vand.u32 %v271, 4294901760
      %v455 = vsub.f32 %v271, %v454
      %456 = vmatpush.msra.mxu0 %v455
      %v457 = vand.u32 %v270, 4294901760
      %v458 = vsub.f32 %v270, %v457
      %459 = vmatpush.msra.mxu0 %v458
      %v460 = vand.u32 %v269, 4294901760
      %v461 = vsub.f32 %v269, %v460
      %462 = vmatpush.msra.mxu0 %v461
      %v463 = vand.u32 %v268, 4294901760
      %v464 = vsub.f32 %v268, %v463
      %465 = vmatpush.msra.mxu0 %v464
      %v466 = vand.u32 %v267, 4294901760
      %v467 = vsub.f32 %v267, %v466
      %468 = vmatpush.msra.mxu0 %v467
      %v469 = vand.u32 %v266, 4294901760
      %v470 = vsub.f32 %v266, %v469
      %471 = vmatpush.msra.mxu0 %v470
      %v472 = vand.u32 %v265, 4294901760
      %v473 = vsub.f32 %v265, %v472
      %474 = vmatpush.msra.mxu0 %v473
      %v475 = vand.u32 %v264, 4294901760
      %v476 = vsub.f32 %v264, %v475
      %477 = vmatmul.f32.gmra.mxu0 %v476
      %v478 = vpop.f32.mrf.mxu0
      %v479 = vadd.f32 %v425, %v478
      %480 = vdwg.mxu0
      %v481 = vand.u32 %v280, 4294901760
      %482 = vmatpush.msra.mxu0 %v481
      %v483 = vand.u32 %v279, 4294901760
      %484 = vmatpush.msra.mxu0 %v483
      %v485 = vand.u32 %v278, 4294901760
      %486 = vmatpush.msra.mxu0 %v485
      %v487 = vand.u32 %v277, 4294901760
      %488 = vmatpush.msra.mxu0 %v487
      %v489 = vand.u32 %v276, 4294901760
      %490 = vmatpush.msra.mxu0 %v489
      %v491 = vand.u32 %v275, 4294901760
      %492 = vmatpush.msra.mxu0 %v491
      %v493 = vand.u32 %v274, 4294901760
      %494 = vmatpush.msra.mxu0 %v493
      %v495 = vand.u32 %v273, 4294901760
      %496 = vmatpush.msra.mxu0 %v495
      %v497 = vand.u32 %v272, 4294901760
      %498 = vmatpush.msra.mxu0 %v497
      %v499 = vand.u32 %v271, 4294901760
      %500 = vmatpush.msra.mxu0 %v499
      %v501 = vand.u32 %v270, 4294901760
      %502 = vmatpush.msra.mxu0 %v501
      %v503 = vand.u32 %v269, 4294901760
      %504 = vmatpush.msra.mxu0 %v503
      %v505 = vand.u32 %v268, 4294901760
      %506 = vmatpush.msra.mxu0 %v505
      %v507 = vand.u32 %v267, 4294901760
      %508 = vmatpush.msra.mxu0 %v507
      %v509 = vand.u32 %v266, 4294901760
      %510 = vmatpush.msra.mxu0 %v509
      %v511 = vand.u32 %v265, 4294901760
      %512 = vmatpush.msra.mxu0 %v511
      %v513 = vand.u32 %v264, 4294901760
      %v514 = vsub.f32 %v264, %v513
      %v515 = vand.u32 %v514, 4294901760
      %516 = vmatmul.f32.gmra.mxu0 %v515
      %v517 = vpop.f32.mrf.mxu0
      %v518 = vadd.f32 %v479, %v517
      %519 = vdwg.mxu0
      %v520 = vand.u32 %v280, 4294901760
      %v521 = vsub.f32 %v280, %v520
      %v522 = vand.u32 %v521, 4294901760
      %523 = vmatpush.msra.mxu0 %v522
      %v524 = vand.u32 %v279, 4294901760
      %v525 = vsub.f32 %v279, %v524
      %v526 = vand.u32 %v525, 4294901760
      %527 = vmatpush.msra.mxu0 %v526
      %v528 = vand.u32 %v278, 4294901760
      %v529 = vsub.f32 %v278, %v528
      %v530 = vand.u32 %v529, 4294901760
      %531 = vmatpush.msra.mxu0 %v530
      %v532 = vand.u32 %v277, 4294901760
      %v533 = vsub.f32 %v277, %v532
      %v534 = vand.u32 %v533, 4294901760
      %535 = vmatpush.msra.mxu0 %v534
      %v536 = vand.u32 %v276, 4294901760
      %v537 = vsub.f32 %v276, %v536
      %v538 = vand.u32 %v537, 4294901760
      %539 = vmatpush.msra.mxu0 %v538
      %v540 = vand.u32 %v275, 4294901760
      %v541 = vsub.f32 %v275, %v540
      %v542 = vand.u32 %v541, 4294901760
      %543 = vmatpush.msra.mxu0 %v542
      %v544 = vand.u32 %v274, 4294901760
      %v545 = vsub.f32 %v274, %v544
      %v546 = vand.u32 %v545, 4294901760
      %547 = vmatpush.msra.mxu0 %v546
      %v548 = vand.u32 %v273, 4294901760
      %v549 = vsub.f32 %v273, %v548
      %v550 = vand.u32 %v549, 4294901760
      %551 = vmatpush.msra.mxu0 %v550
      %v552 = vand.u32 %v272, 4294901760
      %v553 = vsub.f32 %v272, %v552
      %v554 = vand.u32 %v553, 4294901760
      %555 = vmatpush.msra.mxu0 %v554
      %v556 = vand.u32 %v271, 4294901760
      %v557 = vsub.f32 %v271, %v556
      %v558 = vand.u32 %v557, 4294901760
      %559 = vmatpush.msra.mxu0 %v558
      %v560 = vand.u32 %v270, 4294901760
      %v561 = vsub.f32 %v270, %v560
      %v562 = vand.u32 %v561, 4294901760
      %563 = vmatpush.msra.mxu0 %v562
      %v564 = vand.u32 %v269, 4294901760
      %v565 = vsub.f32 %v269, %v564
      %v566 = vand.u32 %v565, 4294901760
      %567 = vmatpush.msra.mxu0 %v566
      %v568 = vand.u32 %v268, 4294901760
      %v569 = vsub.f32 %v268, %v568
      %v570 = vand.u32 %v569, 4294901760
      %571 = vmatpush.msra.mxu0 %v570
      %v572 = vand.u32 %v267, 4294901760
      %v573 = vsub.f32 %v267, %v572
      %v574 = vand.u32 %v573, 4294901760
      %575 = vmatpush.msra.mxu0 %v574
      %v576 = vand.u32 %v266, 4294901760
      %v577 = vsub.f32 %v266, %v576
      %v578 = vand.u32 %v577, 4294901760
      %579 = vmatpush.msra.mxu0 %v578
      %v580 = vand.u32 %v265, 4294901760
      %v581 = vsub.f32 %v265, %v580
      %v582 = vand.u32 %v581, 4294901760
      %583 = vmatpush.msra.mxu0 %v582
      %v584 = vand.u32 %v264, 4294901760
      %585 = vmatmul.f32.gmra.mxu0 %v584
      %v586 = vpop.f32.mrf.mxu0
      %v587 = vadd.f32 %v518, %v586
      %588 = vdwg.mxu0
      %v589 = vand.u32 %v280, 4294901760
      %590 = vmatpush.msra.mxu0 %v589
      %v591 = vand.u32 %v279, 4294901760
      %592 = vmatpush.msra.mxu0 %v591
      %v593 = vand.u32 %v278, 4294901760
      %594 = vmatpush.msra.mxu0 %v593
      %v595 = vand.u32 %v277, 4294901760
      %596 = vmatpush.msra.mxu0 %v595
      %v597 = vand.u32 %v276, 4294901760
      %598 = vmatpush.msra.mxu0 %v597
      %v599 = vand.u32 %v275, 4294901760
      %600 = vmatpush.msra.mxu0 %v599
      %v601 = vand.u32 %v274, 4294901760
      %602 = vmatpush.msra.mxu0 %v601
      %v603 = vand.u32 %v273, 4294901760
      %604 = vmatpush.msra.mxu0 %v603
      %v605 = vand.u32 %v272, 4294901760
      %606 = vmatpush.msra.mxu0 %v605
      %v607 = vand.u32 %v271, 4294901760
      %608 = vmatpush.msra.mxu0 %v607
      %v609 = vand.u32 %v270, 4294901760
      %610 = vmatpush.msra.mxu0 %v609
      %v611 = vand.u32 %v269, 4294901760
      %612 = vmatpush.msra.mxu0 %v611
      %v613 = vand.u32 %v268, 4294901760
      %614 = vmatpush.msra.mxu0 %v613
      %v615 = vand.u32 %v267, 4294901760
      %616 = vmatpush.msra.mxu0 %v615
      %v617 = vand.u32 %v266, 4294901760
      %618 = vmatpush.msra.mxu0 %v617
      %v619 = vand.u32 %v265, 4294901760
      %620 = vmatpush.msra.mxu0 %v619
      %v621 = vand.u32 %v264, 4294901760
      %622 = vmatmul.f32.gmra.mxu0 %v621
      %v623 = vpop.f32.mrf.mxu0
      %v624 = vadd.f32 %v587, %v623
      %625 = vdwg.mxu0
      %v626 = vld [vmem:[%s259] sm:$0xff]
      %v627 = vadd.f32 %v626, %v624
      %628 = vadd.xlane.f32.xlu0 %v627
      %v629 = vpop.xlane.xlu0 %628
      %v630 = vrcp.pop 128.0
      %v631 = vmul.f32 128.0, %v630
      %v632 = vsub.f32 1.0, %v631
      %v633 = vmul.f32 %v630, %v632
      %v634 = vadd.f32 %v630, %v633
      %vm635 = vweird.f32 %v630
      %v636 = vsel %vm635, %v630, %v634
      %v637 = vmul.f32 %v629, %v636
      %v638 = vmul.f32 %v627, %v627
      %639 = vadd.xlane.f32.xlu0 %v638
      %v640 = vpop.xlane.xlu0 %639
      %v641 = vmul.f32 %v640, %v636
      %v642 = vmul.f32 %v637, %v637
      %v643 = vsub.f32 %v641, %v642
      %v644 = vsub.f32 %v627, %v637
      %v645 = vadd.f32 %v643, 1e-05
      %v646 = vrsqrt.pop %v645
      %v647 = vmul.f32 %v646, %v645
      %v648 = vmul.f32 %v647, %v646
      %v649 = vmul.f32 0.5, %v648
      %v650 = vsub.f32 1.5, %v649
      %v651 = vmul.f32 %v646, %v650
      %vm652 = vweird.f32 %v645
      %vm653 = vweird.f32 %v646
      %vm654 = vmor %vm652, %vm653
      %v655 = vsel %vm654, %v646, %v651
      %v656 = vmul.f32 %v644, %v655
      %v657 = vld [vmem:[%s4] sm:$0x1]
      %v659 = vperm.slane %v657, 0
      %v661 = vmul.f32 %v656, %v659
      %v662 = vld [vmem:[%s5] sm:$0x1]
      %v664 = vperm.slane %v662, 0
      %v666 = vadd.f32 %v661, %v664
      %667 = vst [vmem:[%s263] sm:$0xff] %v666
      %p668 = scmp.lt.s32.totalorder %s17, 1
      %s669 = scalar_select %p668, %s17, 1
      %s670 = smul.addr %s669, 8
      %s671 = scalar_lea.vmem %s6, %s670
      // Predicated region
      $region45: #{transformer_model_forward.12} parent=43 // pred_check
        %p672 = pneg %p171
      $region46: #{transformer_model_forward.12} parent=43 // pred_check_branch
        %674 = sbr.rel (%p672) target = $region48
      $region47: #{transformer_model_forward.12} parent=43 // pred_region
        _
      $region48: #{transformer_model_forward.12} parent=43 // pred_fallthru
        _
    $region44: #{transformer_model_forward.12} parent=5 // pred_fallthru
      _
    %p675 = scmp.le.s32.totalorder 2, %s12
    // Predicated region
    $region49: #{transformer_model_forward.12} parent=5 // pred_check
      %p676 = pneg %p675
    $region50: #{transformer_model_forward.12} parent=5 // pred_check_branch
      %678 = sbr.rel (%p676) target = $region52
    $region51: #{transformer_model_forward.12} parent=5 // pred_region
      %s679 = ssub.s32 %s12, 2
      // Predicated region
      $region53: #{transformer_model_forward.12} parent=51 // pred_check
        %p680 = pneg %p177
      $region54: #{transformer_model_forward.12} parent=51 // pred_check_branch
        %682 = sbr.rel (%p680) target = $region56
      $region55: #{transformer_model_forward.12} parent=51 // pred_region
        %p683 = scmp.lt.s32.totalorder %s18, 1
        %s684 = scalar_select %p683, %s18, 1
        %s685 = smul.addr %s684, 8
        %s686 = scalar_lea.vmem %s6, %s685
      $region56: #{transformer_model_forward.12} parent=51 // pred_fallthru
        _
    $region52: #{transformer_model_forward.12} parent=5 // pred_fallthru
      _
  $region6: #{transformer_model_forward.12} parent=0 // loop_footer
    %s16 = sadd.s32 1, %s12
  $region7: #{transformer_model_forward.12} parent=0 // loop_footer_branch
    %11 = sbr.rel target = $region3
  $region8: #{transformer_model_forward.12} parent=0 // loop_exit
    _

// kernel: transformer_model_forward.11
$region0: #{transformer_model_forward.11}
  #allocation0 [shape = 'u32[]', space=smem, size = 0x4, offset = 0x4, fixed_abs, tag = 'smem constant byte address 0x4 - core index']
  #allocation1 [shape = 'u32[72,128]{1,0:T(1,128)}', space=vmem, size = 0x9000, scoped, tag = 'internal scratch']
  %s0 = inlined_call_operand.vmem [shape: f32[2,8,384], index: 0, kind: input, shape index: {}]
  %s1 = inlined_call_operand.vmem [shape: f32[2,8,128], index: 1, kind: output, shape index: {}]
  %s2 = sld [smem:[#allocation0]]
  $region37: #{transformer_model_forward.11} parent=0
    _
  %s4 = ssub.s32 1, %s2
  %s5 = scalar_select 0, %s4, %s2
  loop: start=0, step=1, limit=4
  $region2: #{transformer_model_forward.11} parent=0 // loop_pre_header
    _
  $region3: #{transformer_model_forward.11} parent=0 // loop_header
    %s7 = sphi 0, %s11
    %p8 = scmp.ge.s32.totalorder %s7, 4
    %s17 = sphi 0, %s19
    %s20 = sphi 0, %s17
    %s21 = sphi 0, %s20
    %s37 = sphi 0, %s21
    %s43 = sphi 0, %s45
    %s46 = sphi 0, %s43
    %s47 = sphi 0, %s46
    %s63 = sphi 0, %s47
  $region4: #{transformer_model_forward.11} parent=0 // loop_header_branch
    %10 = sbr.rel (%p8) target = $region8
  $region5: #{transformer_model_forward.11} parent=0 // loop_body
    %s12 = ssub.s32 %s7, 1
    %s13 = ssub.s32 %s7, 2
    %s14 = sadd.s32 %s7, 1
    %s15 = ssub.s32 %s7, %s14
    %p16 = scmp.eq.s32.totalorder %s15, 0
    %s18 = sadd.s32 %s17, 1
    %s19 = scalar_select %p16, %s17, %s18
    %p22 = pneg %p16
    %p23 = scmp.eq.s32.totalorder %s7, 1
    %p24 = por %p22, %p23
    %p25 = scmp.ne.s32.totalorder %s17, %s20
    %p26 = scmp.eq.s32.totalorder %s7, 0
    %p27 = por %p25, %p26
    %p28 = scmp.ne.s32.totalorder %s17, %s20
    %p29 = scmp.eq.s32.totalorder %s12, 1
    %p30 = por %p28, %p29
    %p31 = scmp.ne.s32.totalorder %s20, %s21
    %p32 = scmp.eq.s32.totalorder %s12, 0
    %p33 = por %p31, %p32
    %p34 = scmp.ne.s32.totalorder %s20, %s21
    %p35 = scmp.eq.s32.totalorder %s13, 1
    %p36 = por %p34, %p35
    %p38 = scmp.ne.s32.totalorder %s21, %s37
    %p39 = scmp.eq.s32.totalorder %s13, 0
    %p40 = por %p38, %p39
    %s41 = ssub.s32 %s7, %s14
    %p42 = scmp.eq.s32.totalorder %s41, 0
    %s44 = sadd.s32 %s43, 1
    %s45 = scalar_select %p42, %s43, %s44
    %p48 = pneg %p42
    %p49 = scmp.eq.s32.totalorder %s7, 1
    %p50 = por %p48, %p49
    %p51 = scmp.ne.s32.totalorder %s43, %s46
    %p52 = scmp.eq.s32.totalorder %s7, 0
    %p53 = por %p51, %p52
    %p54 = scmp.ne.s32.totalorder %s43, %s46
    %p55 = scmp.eq.s32.totalorder %s12, 1
    %p56 = por %p54, %p55
    %p57 = scmp.ne.s32.totalorder %s46, %s47
    %p58 = scmp.eq.s32.totalorder %s12, 0
    %p59 = por %p57, %p58
    %p60 = scmp.ne.s32.totalorder %s46, %s47
    %p61 = scmp.eq.s32.totalorder %s13, 1
    %p62 = por %p60, %p61
    %p64 = scmp.ne.s32.totalorder %s47, %s63
    %p65 = scmp.eq.s32.totalorder %s13, 0
    %p66 = por %p64, %p65
    %p67 = scmp.le.s32.totalorder 1, %s7
    %p68 = scmp.lt.s32.totalorder %s7, 3
    %p69 = pnand %p67, %p68
    %p70 = pneg %p69
    // Predicated region
    $region9: #{transformer_model_forward.11} parent=5 // pred_check
      _
    $region10: #{transformer_model_forward.11} parent=5 // pred_check_branch
      %72 = sbr.rel (%p69) target = $region12
    $region11: #{transformer_model_forward.11} parent=5 // pred_region
      %s73 = ssub.s32 %s7, 1
    $region12: #{transformer_model_forward.11} parent=5 // pred_fallthru
      _
    %p74 = scmp.lt.s32.totalorder %s7, 2
    // Predicated region
    $region13: #{transformer_model_forward.11} parent=5 // pred_check
      %p75 = pneg %p74
    $region14: #{transformer_model_forward.11} parent=5 // pred_check_branch
      %77 = sbr.rel (%p75) target = $region16
    $region15: #{transformer_model_forward.11} parent=5 // pred_region
      // Predicated region
      $region17: #{transformer_model_forward.11} parent=15 // pred_check
        %p78 = pneg %p27
      $region18: #{transformer_model_forward.11} parent=15 // pred_check_branch
        %80 = sbr.rel (%p78) target = $region20
      $region19: #{transformer_model_forward.11} parent=15 // pred_region
        %p81 = scmp.lt.s32.totalorder %s7, 1
        %s82 = scalar_select %p81, %s7, 1
        %s83 = smul.addr %s82, 3
        %s84 = smul.addr %s83, 8
        %s85 = scalar_lea.vmem %s0, %s84
      $region20: #{transformer_model_forward.11} parent=15 // pred_fallthru
        _
    $region16: #{transformer_model_forward.11} parent=5 // pred_fallthru
      _
    %p86 = scmp.le.s32.totalorder 1, %s7
    %p87 = scmp.lt.s32.totalorder %s7, 3
    %p88 = pnand %p86, %p87
    %p89 = pneg %p88
    // Predicated region
    $region21: #{transformer_model_forward.11} parent=5 // pred_check
      _
    $region22: #{transformer_model_forward.11} parent=5 // pred_check_branch
      %91 = sbr.rel (%p88) target = $region24
    $region23: #{transformer_model_forward.11} parent=5 // pred_region
      %s92 = ssub.s32 %s7, 1
      %p93 = scmp.lt.s32.totalorder %s12, 1
      %s94 = scalar_select %p93, %s12, 1
      %s95 = smul.addr %s94, 3
      %s96 = smul.addr %s95, 8
      %s97 = scalar_lea.vmem %s0, %s96
      %p98 = pneg %p33
      %p99 = pneg %p30
      %p100 = pneg %p59
      %p101 = pneg %p56
      %p102 = scmp.lt.s32.totalorder %s12, 1
      %s103 = scalar_select %p102, %s12, 1
      %s104 = smul.addr %s103, 8
      %s105 = scalar_lea.vmem %s1, %s104
      %p106 = scmp.lt.s32.totalorder %s12, 1
      %s107 = scalar_select %p106, %s12, 1
      %s108 = smul.addr %s107, 3
      %s109 = smul.addr %s108, 8
      %s110 = scalar_lea.vmem %s0, %s109
      %p111 = scmp.lt.s32.totalorder %s12, 1
      %s112 = scalar_select %p111, %s12, 1
      %s113 = smul.addr %s112, 8
      %s114 = scalar_lea.vmem %s1, %s113
      %v115 = vld [vmem:[%s110] sm:$0xff]
      %v116 = vld [vmem:[%s110 + $0x8] sm:$0xff]
      %v117 = vld [vmem:[%s110 + $0x10] sm:$0xff]
      %vm118 = vcmask 261120
      %v120 = vsel %vm118, %v115, 0
      %v123 = vsel %vm118, %v116, 0
      %125 = vmatpush.xpose.msra.mxu0 0.0
      %126 = vmatpush.xpose.msra.mxu0 0.0
      %127 = vmatpush.xpose.msra.mxu0 0.0
      %128 = vmatpush.xpose.msra.mxu0 0.0
      %129 = vmatpush.xpose.msra.mxu0 0.0
      %130 = vmatpush.xpose.msra.mxu0 0.0
      %131 = vmatpush.xpose.msra.mxu0 0.0
      %132 = vmatpush.xpose.msra.mxu0 0.0
      %133 = vmatpush.xpose.msra.mxu0 0.0
      %134 = vmatpush.xpose.msra.mxu0 0.0
      %135 = vmatpush.xpose.msra.mxu0 0.0
      %136 = vmatpush.xpose.msra.mxu0 0.0
      %137 = vmatpush.xpose.msra.mxu0 0.0
      %138 = vmatpush.xpose.msra.mxu0 0.0
      %139 = vmatpush.xpose.msra.mxu0 0.0
      %v140 = vand.u32 %v123, 4294901760
      %141 = vmatpush.xpose.msra.mxu0 %v140
      %v142 = vand.u32 %v120, 4294901760
      %v143 = vsub.f32 %v120, %v142
      %v144 = vand.u32 %v143, 4294901760
      %v145 = vsub.f32 %v143, %v144
      %v146 = vand.u32 %v145, 4294901760
      %147 = vmatmul.f32.gmra.mxu0 %v146
      %v148 = vpop.f32.mrf.mxu0
      %v149 = vadd.f32 0.0, %v148
      %150 = vdwg.mxu0
      %151 = vmatpush.xpose.msra.mxu0 0.0
      %152 = vmatpush.xpose.msra.mxu0 0.0
      %153 = vmatpush.xpose.msra.mxu0 0.0
      %154 = vmatpush.xpose.msra.mxu0 0.0
      %155 = vmatpush.xpose.msra.mxu0 0.0
      %156 = vmatpush.xpose.msra.mxu0 0.0
      %157 = vmatpush.xpose.msra.mxu0 0.0
      %158 = vmatpush.xpose.msra.mxu0 0.0
      %159 = vmatpush.xpose.msra.mxu0 0.0
      %160 = vmatpush.xpose.msra.mxu0 0.0
      %161 = vmatpush.xpose.msra.mxu0 0.0
      %162 = vmatpush.xpose.msra.mxu0 0.0
      %163 = vmatpush.xpose.msra.mxu0 0.0
      %164 = vmatpush.xpose.msra.mxu0 0.0
      %165 = vmatpush.xpose.msra.mxu0 0.0
      %v166 = vand.u32 %v123, 4294901760
      %v167 = vsub.f32 %v123, %v166
      %v168 = vand.u32 %v167, 4294901760
      %v169 = vsub.f32 %v167, %v168
      %v170 = vand.u32 %v169, 4294901760
      %171 = vmatpush.xpose.msra.mxu0 %v170
      %v172 = vand.u32 %v120, 4294901760
      %173 = vmatmul.f32.gmra.mxu0 %v172
      %v174 = vpop.f32.mrf.mxu0
      %v175 = vadd.f32 %v149, %v174
      %176 = vdwg.mxu0
      %177 = vmatpush.xpose.msra.mxu0 0.0
      %178 = vmatpush.xpose.msra.mxu0 0.0
      %179 = vmatpush.xpose.msra.mxu0 0.0
      %180 = vmatpush.xpose.msra.mxu0 0.0
      %181 = vmatpush.xpose.msra.mxu0 0.0
      %182 = vmatpush.xpose.msra.mxu0 0.0
      %183 = vmatpush.xpose.msra.mxu0 0.0
      %184 = vmatpush.xpose.msra.mxu0 0.0
      %185 = vmatpush.xpose.msra.mxu0 0.0
      %186 = vmatpush.xpose.msra.mxu0 0.0
      %187 = vmatpush.xpose.msra.mxu0 0.0
      %188 = vmatpush.xpose.msra.mxu0 0.0
      %189 = vmatpush.xpose.msra.mxu0 0.0
      %190 = vmatpush.xpose.msra.mxu0 0.0
      %191 = vmatpush.xpose.msra.mxu0 0.0
      %v192 = vand.u32 %v123, 4294901760
      %v193 = vsub.f32 %v123, %v192
      %194 = vmatpush.xpose.msra.mxu0 %v193
      %v195 = vand.u32 %v120, 4294901760
      %v196 = vsub.f32 %v120, %v195
      %197 = vmatmul.f32.gmra.mxu0 %v196
      %v198 = vpop.f32.mrf.mxu0
      %v199 = vadd.f32 %v175, %v198
      %200 = vdwg.mxu0
      %201 = vmatpush.xpose.msra.mxu0 0.0
      %202 = vmatpush.xpose.msra.mxu0 0.0
      %203 = vmatpush.xpose.msra.mxu0 0.0
      %204 = vmatpush.xpose.msra.mxu0 0.0
      %205 = vmatpush.xpose.msra.mxu0 0.0
      %206 = vmatpush.xpose.msra.mxu0 0.0
      %207 = vmatpush.xpose.msra.mxu0 0.0
      %208 = vmatpush.xpose.msra.mxu0 0.0
      %209 = vmatpush.xpose.msra.mxu0 0.0
      %210 = vmatpush.xpose.msra.mxu0 0.0
      %211 = vmatpush.xpose.msra.mxu0 0.0
      %212 = vmatpush.xpose.msra.mxu0 0.0
      %213 = vmatpush.xpose.msra.mxu0 0.0
      %214 = vmatpush.xpose.msra.mxu0 0.0
      %215 = vmatpush.xpose.msra.mxu0 0.0
      %v216 = vand.u32 %v123, 4294901760
      %217 = vmatpush.xpose.msra.mxu0 %v216
      %v218 = vand.u32 %v120, 4294901760
      %v219 = vsub.f32 %v120, %v218
      %v220 = vand.u32 %v219, 4294901760
      %221 = vmatmul.f32.gmra.mxu0 %v220
      %v222 = vpop.f32.mrf.mxu0
      %v223 = vadd.f32 %v199, %v222
      %224 = vdwg.mxu0
      %225 = vmatpush.xpose.msra.mxu0 0.0
      %226 = vmatpush.xpose.msra.mxu0 0.0
      %227 = vmatpush.xpose.msra.mxu0 0.0
      %228 = vmatpush.xpose.msra.mxu0 0.0
      %229 = vmatpush.xpose.msra.mxu0 0.0
      %230 = vmatpush.xpose.msra.mxu0 0.0
      %231 = vmatpush.xpose.msra.mxu0 0.0
      %232 = vmatpush.xpose.msra.mxu0 0.0
      %233 = vmatpush.xpose.msra.mxu0 0.0
      %234 = vmatpush.xpose.msra.mxu0 0.0
      %235 = vmatpush.xpose.msra.mxu0 0.0
      %236 = vmatpush.xpose.msra.mxu0 0.0
      %237 = vmatpush.xpose.msra.mxu0 0.0
      %238 = vmatpush.xpose.msra.mxu0 0.0
      %239 = vmatpush.xpose.msra.mxu0 0.0
      %v240 = vand.u32 %v123, 4294901760
      %v241 = vsub.f32 %v123, %v240
      %v242 = vand.u32 %v241, 4294901760
      %243 = vmatpush.xpose.msra.mxu0 %v242
      %v244 = vand.u32 %v120, 4294901760
      %245 = vmatmul.f32.gmra.mxu0 %v244
      %v246 = vpop.f32.mrf.mxu0
      %v247 = vadd.f32 %v223, %v246
      %248 = vdwg.mxu0
      %249 = vmatpush.xpose.msra.mxu0 0.0
      %250 = vmatpush.xpose.msra.mxu0 0.0
      %251 = vmatpush.xpose.msra.mxu0 0.0
      %252 = vmatpush.xpose.msra.mxu0 0.0
      %253 = vmatpush.xpose.msra.mxu0 0.0
      %254 = vmatpush.xpose.msra.mxu0 0.0
      %255 = vmatpush.xpose.msra.mxu0 0.0
      %256 = vmatpush.xpose.msra.mxu0 0.0
      %257 = vmatpush.xpose.msra.mxu0 0.0
      %258 = vmatpush.xpose.msra.mxu0 0.0
      %259 = vmatpush.xpose.msra.mxu0 0.0
      %260 = vmatpush.xpose.msra.mxu0 0.0
      %261 = vmatpush.xpose.msra.mxu0 0.0
      %262 = vmatpush.xpose.msra.mxu0 0.0
      %263 = vmatpush.xpose.msra.mxu0 0.0
      %v264 = vand.u32 %v123, 4294901760
      %265 = vmatpush.xpose.msra.mxu0 %v264
      %v266 = vand.u32 %v120, 4294901760
      %267 = vmatmul.f32.gmra.mxu0 %v266
      %v268 = vpop.f32.mrf.mxu0
      %v269 = vadd.f32 %v247, %v268
      %270 = vdwg.mxu0
      %v271 = vmul.f32 %v269, 0.17677669
      %vm272 = vcmask 64512
      %v273 = vsel %vm272, %v271, -inf
      %274 = vmax.xlane.f32.xlu0 %v273
      %v275 = vpop.xlane.xlu0 %274
      %v276 = vsub.f32 %v271, %v275
      %v277 = vmul.f32 %v276, 1.442695
      %v278 = vpow.pop %v277
      %v279 = vsel %vm272, %v278, 0.0
      %280 = vadd.xlane.f32.xlu0 %v279
      %v281 = vpop.xlane.xlu0 %280
      %v282 = vrcp.pop %v281
      %v283 = vmul.f32 %v281, %v282
      %v284 = vsub.f32 1.0, %v283
      %v285 = vmul.f32 %v282, %v284
      %v286 = vadd.f32 %v282, %v285
      %vm287 = vweird.f32 %v281
      %vm288 = vweird.f32 %v282
      %vm289 = vmor %vm287, %vm288
      %v290 = vsel %vm289, %v282, %v286
      %v291 = vand.u32 2147483647, %v281
      %vm292 = vcmp.eq.f32.partialorder %v291, 8.507059e+37
      %v293 = vand.u32 %v281, 2147483648
      %v294 = vor.u32 1.1754944e-38, %v293
      %v295 = vsel %vm292, %v294, %v290
      %v296 = vmul.f32 1.0, %v295
      %v297 = vmul.f32 %v278, %v296
      %v299 = vsel %vm272, %v297, 0
      %301 = vmatpush.msra.mxu0 0.0
      %302 = vmatpush.msra.mxu0 0.0
      %303 = vmatpush.msra.mxu0 0.0
      %304 = vmatpush.msra.mxu0 0.0
      %305 = vmatpush.msra.mxu0 0.0
      %306 = vmatpush.msra.mxu0 0.0
      %307 = vmatpush.msra.mxu0 0.0
      %308 = vmatpush.msra.mxu0 0.0
      %309 = vmatpush.msra.mxu0 0.0
      %310 = vmatpush.msra.mxu0 0.0
      %311 = vmatpush.msra.mxu0 0.0
      %312 = vmatpush.msra.mxu0 0.0
      %313 = vmatpush.msra.mxu0 0.0
      %314 = vmatpush.msra.mxu0 0.0
      %315 = vmatpush.msra.mxu0 0.0
      %v316 = vand.u32 %v117, 4294901760
      %317 = vmatpush.msra.mxu0 %v316
      %v318 = vand.u32 %v299, 4294901760
      %v319 = vsub.f32 %v299, %v318
      %v320 = vand.u32 %v319, 4294901760
      %v321 = vsub.f32 %v319, %v320
      %v322 = vand.u32 %v321, 4294901760
      %323 = vmatmul.f32.gmra.mxu0 %v322
      %v324 = vpop.f32.mrf.mxu0
      %v325 = vadd.f32 0.0, %v324
      %326 = vdwg.mxu0
      %327 = vmatpush.msra.mxu0 0.0
      %328 = vmatpush.msra.mxu0 0.0
      %329 = vmatpush.msra.mxu0 0.0
      %330 = vmatpush.msra.mxu0 0.0
      %331 = vmatpush.msra.mxu0 0.0
      %332 = vmatpush.msra.mxu0 0.0
      %333 = vmatpush.msra.mxu0 0.0
      %334 = vmatpush.msra.mxu0 0.0
      %335 = vmatpush.msra.mxu0 0.0
      %336 = vmatpush.msra.mxu0 0.0
      %337 = vmatpush.msra.mxu0 0.0
      %338 = vmatpush.msra.mxu0 0.0
      %339 = vmatpush.msra.mxu0 0.0
      %340 = vmatpush.msra.mxu0 0.0
      %341 = vmatpush.msra.mxu0 0.0
      %v342 = vand.u32 %v117, 4294901760
      %v343 = vsub.f32 %v117, %v342
      %v344 = vand.u32 %v343, 4294901760
      %v345 = vsub.f32 %v343, %v344
      %v346 = vand.u32 %v345, 4294901760
      %347 = vmatpush.msra.mxu0 %v346
      %v348 = vand.u32 %v299, 4294901760
      %349 = vmatmul.f32.gmra.mxu0 %v348
      %v350 = vpop.f32.mrf.mxu0
      %v351 = vadd.f32 %v325, %v350
      %352 = vdwg.mxu0
      %353 = vmatpush.msra.mxu0 0.0
      %354 = vmatpush.msra.mxu0 0.0
      %355 = vmatpush.msra.mxu0 0.0
      %356 = vmatpush.msra.mxu0 0.0
      %357 = vmatpush.msra.mxu0 0.0
      %358 = vmatpush.msra.mxu0 0.0
      %359 = vmatpush.msra.mxu0 0.0
      %360 = vmatpush.msra.mxu0 0.0
      %361 = vmatpush.msra.mxu0 0.0
      %362 = vmatpush.msra.mxu0 0.0
      %363 = vmatpush.msra.mxu0 0.0
      %364 = vmatpush.msra.mxu0 0.0
      %365 = vmatpush.msra.mxu0 0.0
      %366 = vmatpush.msra.mxu0 0.0
      %367 = vmatpush.msra.mxu0 0.0
      %v368 = vand.u32 %v117, 4294901760
      %v369 = vsub.f32 %v117, %v368
      %370 = vmatpush.msra.mxu0 %v369
      %v371 = vand.u32 %v299, 4294901760
      %v372 = vsub.f32 %v299, %v371
      %373 = vmatmul.f32.gmra.mxu0 %v372
      %v374 = vpop.f32.mrf.mxu0
      %v375 = vadd.f32 %v351, %v374
      %376 = vdwg.mxu0
      %377 = vmatpush.msra.mxu0 0.0
      %378 = vmatpush.msra.mxu0 0.0
      %379 = vmatpush.msra.mxu0 0.0
      %380 = vmatpush.msra.mxu0 0.0
      %381 = vmatpush.msra.mxu0 0.0
      %382 = vmatpush.msra.mxu0 0.0
      %383 = vmatpush.msra.mxu0 0.0
      %384 = vmatpush.msra.mxu0 0.0
      %385 = vmatpush.msra.mxu0 0.0
      %386 = vmatpush.msra.mxu0 0.0
      %387 = vmatpush.msra.mxu0 0.0
      %388 = vmatpush.msra.mxu0 0.0
      %389 = vmatpush.msra.mxu0 0.0
      %390 = vmatpush.msra.mxu0 0.0
      %391 = vmatpush.msra.mxu0 0.0
      %v392 = vand.u32 %v117, 4294901760
      %393 = vmatpush.msra.mxu0 %v392
      %v394 = vand.u32 %v299, 4294901760
      %v395 = vsub.f32 %v299, %v394
      %v396 = vand.u32 %v395, 4294901760
      %397 = vmatmul.f32.gmra.mxu0 %v396
      %v398 = vpop.f32.mrf.mxu0
      %v399 = vadd.f32 %v375, %v398
      %400 = vdwg.mxu0
      %401 = vmatpush.msra.mxu0 0.0
      %402 = vmatpush.msra.mxu0 0.0
      %403 = vmatpush.msra.mxu0 0.0
      %404 = vmatpush.msra.mxu0 0.0
      %405 = vmatpush.msra.mxu0 0.0
      %406 = vmatpush.msra.mxu0 0.0
      %407 = vmatpush.msra.mxu0 0.0
      %408 = vmatpush.msra.mxu0 0.0
      %409 = vmatpush.msra.mxu0 0.0
      %410 = vmatpush.msra.mxu0 0.0
      %411 = vmatpush.msra.mxu0 0.0
      %412 = vmatpush.msra.mxu0 0.0
      %413 = vmatpush.msra.mxu0 0.0
      %414 = vmatpush.msra.mxu0 0.0
      %415 = vmatpush.msra.mxu0 0.0
      %v416 = vand.u32 %v117, 4294901760
      %v417 = vsub.f32 %v117, %v416
      %v418 = vand.u32 %v417, 4294901760
      %419 = vmatpush.msra.mxu0 %v418
      %v420 = vand.u32 %v299, 4294901760
      %421 = vmatmul.f32.gmra.mxu0 %v420
      %v422 = vpop.f32.mrf.mxu0
      %v423 = vadd.f32 %v399, %v422
      %424 = vdwg.mxu0
      %425 = vmatpush.msra.mxu0 0.0
      %426 = vmatpush.msra.mxu0 0.0
      %427 = vmatpush.msra.mxu0 0.0
      %428 = vmatpush.msra.mxu0 0.0
      %429 = vmatpush.msra.mxu0 0.0
      %430 = vmatpush.msra.mxu0 0.0
      %431 = vmatpush.msra.mxu0 0.0
      %432 = vmatpush.msra.mxu0 0.0
      %433 = vmatpush.msra.mxu0 0.0
      %434 = vmatpush.msra.mxu0 0.0
      %435 = vmatpush.msra.mxu0 0.0
      %436 = vmatpush.msra.mxu0 0.0
      %437 = vmatpush.msra.mxu0 0.0
      %438 = vmatpush.msra.mxu0 0.0
      %439 = vmatpush.msra.mxu0 0.0
      %v440 = vand.u32 %v117, 4294901760
      %441 = vmatpush.msra.mxu0 %v440
      %v442 = vand.u32 %v299, 4294901760
      %443 = vmatmul.f32.gmra.mxu0 %v442
      %v444 = vpop.f32.mrf.mxu0
      %v445 = vadd.f32 %v423, %v444
      %446 = vdwg.mxu0
      %447 = vrot.lane.b32.xlu0 %v115, 96
      %v448 = vpop.permute.xlu0 %447
      %449 = vrot.lane.b32.xlu0 %v116, 96
      %v450 = vpop.permute.xlu0 %449
      %v451 = vsel %vm118, %v448, 0
      %v453 = vsel %vm118, %v450, 0
      %455 = vmatpush.xpose.msra.mxu0 0.0
      %456 = vmatpush.xpose.msra.mxu0 0.0
      %457 = vmatpush.xpose.msra.mxu0 0.0
      %458 = vmatpush.xpose.msra.mxu0 0.0
      %459 = vmatpush.xpose.msra.mxu0 0.0
      %460 = vmatpush.xpose.msra.mxu0 0.0
      %461 = vmatpush.xpose.msra.mxu0 0.0
      %462 = vmatpush.xpose.msra.mxu0 0.0
      %463 = vmatpush.xpose.msra.mxu0 0.0
      %464 = vmatpush.xpose.msra.mxu0 0.0
      %465 = vmatpush.xpose.msra.mxu0 0.0
      %466 = vmatpush.xpose.msra.mxu0 0.0
      %467 = vmatpush.xpose.msra.mxu0 0.0
      %468 = vmatpush.xpose.msra.mxu0 0.0
      %469 = vmatpush.xpose.msra.mxu0 0.0
      %v470 = vand.u32 %v453, 4294901760
      %471 = vmatpush.xpose.msra.mxu0 %v470
      %v472 = vand.u32 %v451, 4294901760
      %v473 = vsub.f32 %v451, %v472
      %v474 = vand.u32 %v473, 4294901760
      %v475 = vsub.f32 %v473, %v474
      %v476 = vand.u32 %v475, 4294901760
      %477 = vmatmul.f32.gmra.mxu0 %v476
      %v478 = vpop.f32.mrf.mxu0
      %v479 = vadd.f32 0.0, %v478
      %480 = vdwg.mxu0
      %481 = vmatpush.xpose.msra.mxu0 0.0
      %482 = vmatpush.xpose.msra.mxu0 0.0
      %483 = vmatpush.xpose.msra.mxu0 0.0
      %484 = vmatpush.xpose.msra.mxu0 0.0
      %485 = vmatpush.xpose.msra.mxu0 0.0
      %486 = vmatpush.xpose.msra.mxu0 0.0
      %487 = vmatpush.xpose.msra.mxu0 0.0
      %488 = vmatpush.xpose.msra.mxu0 0.0
      %489 = vmatpush.xpose.msra.mxu0 0.0
      %490 = vmatpush.xpose.msra.mxu0 0.0
      %491 = vmatpush.xpose.msra.mxu0 0.0
      %492 = vmatpush.xpose.msra.mxu0 0.0
      %493 = vmatpush.xpose.msra.mxu0 0.0
      %494 = vmatpush.xpose.msra.mxu0 0.0
      %495 = vmatpush.xpose.msra.mxu0 0.0
      %v496 = vand.u32 %v453, 4294901760
      %v497 = vsub.f32 %v453, %v496
      %v498 = vand.u32 %v497, 4294901760
      %v499 = vsub.f32 %v497, %v498
      %v500 = vand.u32 %v499, 4294901760
      %501 = vmatpush.xpose.msra.mxu0 %v500
      %v502 = vand.u32 %v451, 4294901760
      %503 = vmatmul.f32.gmra.mxu0 %v502
      %v504 = vpop.f32.mrf.mxu0
      %v505 = vadd.f32 %v479, %v504
      %506 = vdwg.mxu0
      %507 = vmatpush.xpose.msra.mxu0 0.0
      %508 = vmatpush.xpose.msra.mxu0 0.0
      %509 = vmatpush.xpose.msra.mxu0 0.0
      %510 = vmatpush.xpose.msra.mxu0 0.0
      %511 = vmatpush.xpose.msra.mxu0 0.0
      %512 = vmatpush.xpose.msra.mxu0 0.0
      %513 = vmatpush.xpose.msra.mxu0 0.0
      %514 = vmatpush.xpose.msra.mxu0 0.0
      %515 = vmatpush.xpose.msra.mxu0 0.0
      %516 = vmatpush.xpose.msra.mxu0 0.0
      %517 = vmatpush.xpose.msra.mxu0 0.0
      %518 = vmatpush.xpose.msra.mxu0 0.0
      %519 = vmatpush.xpose.msra.mxu0 0.0
      %520 = vmatpush.xpose.msra.mxu0 0.0
      %521 = vmatpush.xpose.msra.mxu0 0.0
      %v522 = vand.u32 %v453, 4294901760
      %v523 = vsub.f32 %v453, %v522
      %524 = vmatpush.xpose.msra.mxu0 %v523
      %v525 = vand.u32 %v451, 4294901760
      %v526 = vsub.f32 %v451, %v525
      %527 = vmatmul.f32.gmra.mxu0 %v526
      %v528 = vpop.f32.mrf.mxu0
      %v529 = vadd.f32 %v505, %v528
      %530 = vdwg.mxu0
      %531 = vmatpush.xpose.msra.mxu0 0.0
      %532 = vmatpush.xpose.msra.mxu0 0.0
      %533 = vmatpush.xpose.msra.mxu0 0.0
      %534 = vmatpush.xpose.msra.mxu0 0.0
      %535 = vmatpush.xpose.msra.mxu0 0.0
      %536 = vmatpush.xpose.msra.mxu0 0.0
      %537 = vmatpush.xpose.msra.mxu0 0.0
      %538 = vmatpush.xpose.msra.mxu0 0.0
      %539 = vmatpush.xpose.msra.mxu0 0.0
      %540 = vmatpush.xpose.msra.mxu0 0.0
      %541 = vmatpush.xpose.msra.mxu0 0.0
      %542 = vmatpush.xpose.msra.mxu0 0.0
      %543 = vmatpush.xpose.msra.mxu0 0.0
      %544 = vmatpush.xpose.msra.mxu0 0.0
      %545 = vmatpush.xpose.msra.mxu0 0.0
      %v546 = vand.u32 %v453, 4294901760
      %547 = vmatpush.xpose.msra.mxu0 %v546
      %v548 = vand.u32 %v451, 4294901760
      %v549 = vsub.f32 %v451, %v548
      %v550 = vand.u32 %v549, 4294901760
      %551 = vmatmul.f32.gmra.mxu0 %v550
      %v552 = vpop.f32.mrf.mxu0
      %v553 = vadd.f32 %v529, %v552
      %554 = vdwg.mxu0
      %555 = vmatpush.xpose.msra.mxu0 0.0
      %556 = vmatpush.xpose.msra.mxu0 0.0
      %557 = vmatpush.xpose.msra.mxu0 0.0
      %558 = vmatpush.xpose.msra.mxu0 0.0
      %559 = vmatpush.xpose.msra.mxu0 0.0
      %560 = vmatpush.xpose.msra.mxu0 0.0
      %561 = vmatpush.xpose.msra.mxu0 0.0
      %562 = vmatpush.xpose.msra.mxu0 0.0
      %563 = vmatpush.xpose.msra.mxu0 0.0
      %564 = vmatpush.xpose.msra.mxu0 0.0
      %565 = vmatpush.xpose.msra.mxu0 0.0
      %566 = vmatpush.xpose.msra.mxu0 0.0
      %567 = vmatpush.xpose.msra.mxu0 0.0
      %568 = vmatpush.xpose.msra.mxu0 0.0
      %569 = vmatpush.xpose.msra.mxu0 0.0
      %v570 = vand.u32 %v453, 4294901760
      %v571 = vsub.f32 %v453, %v570
      %v572 = vand.u32 %v571, 4294901760
      %573 = vmatpush.xpose.msra.mxu0 %v572
      %v574 = vand.u32 %v451, 4294901760
      %575 = vmatmul.f32.gmra.mxu0 %v574
      %v576 = vpop.f32.mrf.mxu0
      %v577 = vadd.f32 %v553, %v576
      %578 = vdwg.mxu0
      %579 = vmatpush.xpose.msra.mxu0 0.0
      %580 = vmatpush.xpose.msra.mxu0 0.0
      %581 = vmatpush.xpose.msra.mxu0 0.0
      %582 = vmatpush.xpose.msra.mxu0 0.0
      %583 = vmatpush.xpose.msra.mxu0 0.0
      %584 = vmatpush.xpose.msra.mxu0 0.0
      %585 = vmatpush.xpose.msra.mxu0 0.0
      %586 = vmatpush.xpose.msra.mxu0 0.0
      %587 = vmatpush.xpose.msra.mxu0 0.0
      %588 = vmatpush.xpose.msra.mxu0 0.0
      %589 = vmatpush.xpose.msra.mxu0 0.0
      %590 = vmatpush.xpose.msra.mxu0 0.0
      %591 = vmatpush.xpose.msra.mxu0 0.0
      %592 = vmatpush.xpose.msra.mxu0 0.0
      %593 = vmatpush.xpose.msra.mxu0 0.0
      %v594 = vand.u32 %v453, 4294901760
      %595 = vmatpush.xpose.msra.mxu0 %v594
      %v596 = vand.u32 %v451, 4294901760
      %597 = vmatmul.f32.gmra.mxu0 %v596
      %v598 = vpop.f32.mrf.mxu0
      %v599 = vadd.f32 %v577, %v598
      %600 = vdwg.mxu0
      %v601 = vmul.f32 %v599, 0.17677669
      %v602 = vsel %vm272, %v601, -inf
      %603 = vmax.xlane.f32.xlu0 %v602
      %v604 = vpop.xlane.xlu0 %603
      %v605 = vsub.f32 %v601, %v604
      %v606 = vmul.f32 %v605, 1.442695
      %v607 = vpow.pop %v606
      %v608 = vsel %vm272, %v607, 0.0
      %609 = vadd.xlane.f32.xlu0 %v608
      %v610 = vpop.xlane.xlu0 %609
      %v611 = vrcp.pop %v610
      %v612 = vmul.f32 %v610, %v611
      %v613 = vsub.f32 1.0, %v612
      %v614 = vmul.f32 %v611, %v613
      %v615 = vadd.f32 %v611, %v614
      %vm616 = vweird.f32 %v610
      %vm617 = vweird.f32 %v611
      %vm618 = vmor %vm616, %vm617
      %v619 = vsel %vm618, %v611, %v615
      %v620 = vand.u32 2147483647, %v610
      %vm621 = vcmp.eq.f32.partialorder %v620, 8.507059e+37
      %v622 = vand.u32 %v610, 2147483648
      %v623 = vor.u32 1.1754944e-38, %v622
      %v624 = vsel %vm621, %v623, %v619
      %v625 = vmul.f32 1.0, %v624
      %v626 = vmul.f32 %v607, %v625
      %628 = vrot.lane.b32.xlu0 %v117, 96
      %v629 = vpop.permute.xlu0 %628
      %v632 = vsel %vm272, %v626, 0
      %634 = vmatpush.msra.mxu0 0.0
      %635 = vmatpush.msra.mxu0 0.0
      %636 = vmatpush.msra.mxu0 0.0
      %637 = vmatpush.msra.mxu0 0.0
      %638 = vmatpush.msra.mxu0 0.0
      %639 = vmatpush.msra.mxu0 0.0
      %640 = vmatpush.msra.mxu0 0.0
      %641 = vmatpush.msra.mxu0 0.0
      %642 = vmatpush.msra.mxu0 0.0
      %643 = vmatpush.msra.mxu0 0.0
      %644 = vmatpush.msra.mxu0 0.0
      %645 = vmatpush.msra.mxu0 0.0
      %646 = vmatpush.msra.mxu0 0.0
      %647 = vmatpush.msra.mxu0 0.0
      %648 = vmatpush.msra.mxu0 0.0
      %v649 = vand.u32 %v629, 4294901760
      %650 = vmatpush.msra.mxu0 %v649
      %v651 = vand.u32 %v632, 4294901760
      %v652 = vsub.f32 %v632, %v651
      %v653 = vand.u32 %v652, 4294901760
      %v654 = vsub.f32 %v652, %v653
      %v655 = vand.u32 %v654, 4294901760
      %656 = vmatmul.f32.gmra.mxu0 %v655
      %v657 = vpop.f32.mrf.mxu0
      %v658 = vadd.f32 0.0, %v657
      %659 = vdwg.mxu0
      %660 = vmatpush.msra.mxu0 0.0
      %661 = vmatpush.msra.mxu0 0.0
      %662 = vmatpush.msra.mxu0 0.0
      %663 = vmatpush.msra.mxu0 0.0
      %664 = vmatpush.msra.mxu0 0.0
      %665 = vmatpush.msra.mxu0 0.0
      %666 = vmatpush.msra.mxu0 0.0
      %667 = vmatpush.msra.mxu0 0.0
      %668 = vmatpush.msra.mxu0 0.0
      %669 = vmatpush.msra.mxu0 0.0
      %670 = vmatpush.msra.mxu0 0.0
      %671 = vmatpush.msra.mxu0 0.0
      %672 = vmatpush.msra.mxu0 0.0
      %673 = vmatpush.msra.mxu0 0.0
      %674 = vmatpush.msra.mxu0 0.0
      %v675 = vand.u32 %v629, 4294901760
      %v676 = vsub.f32 %v629, %v675
      %v677 = vand.u32 %v676, 4294901760
      %v678 = vsub.f32 %v676, %v677
      %v679 = vand.u32 %v678, 4294901760
      %680 = vmatpush.msra.mxu0 %v679
      %v681 = vand.u32 %v632, 4294901760
      %682 = vmatmul.f32.gmra.mxu0 %v681
      %v683 = vpop.f32.mrf.mxu0
      %v684 = vadd.f32 %v658, %v683
      %685 = vdwg.mxu0
      %686 = vmatpush.msra.mxu0 0.0
      %687 = vmatpush.msra.mxu0 0.0
      %688 = vmatpush.msra.mxu0 0.0
      %689 = vmatpush.msra.mxu0 0.0
      %690 = vmatpush.msra.mxu0 0.0
      %691 = vmatpush.msra.mxu0 0.0
      %692 = vmatpush.msra.mxu0 0.0
      %693 = vmatpush.msra.mxu0 0.0
      %694 = vmatpush.msra.mxu0 0.0
      %695 = vmatpush.msra.mxu0 0.0
      %696 = vmatpush.msra.mxu0 0.0
      %697 = vmatpush.msra.mxu0 0.0
      %698 = vmatpush.msra.mxu0 0.0
      %699 = vmatpush.msra.mxu0 0.0
      %700 = vmatpush.msra.mxu0 0.0
      %v701 = vand.u32 %v629, 4294901760
      %v702 = vsub.f32 %v629, %v701
      %703 = vmatpush.msra.mxu0 %v702
      %v704 = vand.u32 %v632, 4294901760
      %v705 = vsub.f32 %v632, %v704
      %706 = vmatmul.f32.gmra.mxu0 %v705
      %v707 = vpop.f32.mrf.mxu0
      %v708 = vadd.f32 %v684, %v707
      %709 = vdwg.mxu0
      %710 = vmatpush.msra.mxu0 0.0
      %711 = vmatpush.msra.mxu0 0.0
      %712 = vmatpush.msra.mxu0 0.0
      %713 = vmatpush.msra.mxu0 0.0
      %714 = vmatpush.msra.mxu0 0.0
      %715 = vmatpush.msra.mxu0 0.0
      %716 = vmatpush.msra.mxu0 0.0
      %717 = vmatpush.msra.mxu0 0.0
      %718 = vmatpush.msra.mxu0 0.0
      %719 = vmatpush.msra.mxu0 0.0
      %720 = vmatpush.msra.mxu0 0.0
      %721 = vmatpush.msra.mxu0 0.0
      %722 = vmatpush.msra.mxu0 0.0
      %723 = vmatpush.msra.mxu0 0.0
      %724 = vmatpush.msra.mxu0 0.0
      %v725 = vand.u32 %v629, 4294901760
      %726 = vmatpush.msra.mxu0 %v725
      %v727 = vand.u32 %v632, 4294901760
      %v728 = vsub.f32 %v632, %v727
      %v729 = vand.u32 %v728, 4294901760
      %730 = vmatmul.f32.gmra.mxu0 %v729
      %v731 = vpop.f32.mrf.mxu0
      %v732 = vadd.f32 %v708, %v731
      %733 = vdwg.mxu0
      %734 = vmatpush.msra.mxu0 0.0
      %735 = vmatpush.msra.mxu0 0.0
      %736 = vmatpush.msra.mxu0 0.0
      %737 = vmatpush.msra.mxu0 0.0
      %738 = vmatpush.msra.mxu0 0.0
      %739 = vmatpush.msra.mxu0 0.0
      %740 = vmatpush.msra.mxu0 0.0
      %741 = vmatpush.msra.mxu0 0.0
      %742 = vmatpush.msra.mxu0 0.0
      %743 = vmatpush.msra.mxu0 0.0
      %744 = vmatpush.msra.mxu0 0.0
      %745 = vmatpush.msra.mxu0 0.0
      %746 = vmatpush.msra.mxu0 0.0
      %747 = vmatpush.msra.mxu0 0.0
      %748 = vmatpush.msra.mxu0 0.0
      %v749 = vand.u32 %v629, 4294901760
      %v750 = vsub.f32 %v629, %v749
      %v751 = vand.u32 %v750, 4294901760
      %752 = vmatpush.msra.mxu0 %v751
      %v753 = vand.u32 %v632, 4294901760
      %754 = vmatmul.f32.gmra.mxu0 %v753
      %v755 = vpop.f32.mrf.mxu0
      %v756 = vadd.f32 %v732, %v755
      %757 = vdwg.mxu0
      %758 = vmatpush.msra.mxu0 0.0
      %759 = vmatpush.msra.mxu0 0.0
      %760 = vmatpush.msra.mxu0 0.0
      %761 = vmatpush.msra.mxu0 0.0
      %762 = vmatpush.msra.mxu0 0.0
      %763 = vmatpush.msra.mxu0 0.0
      %764 = vmatpush.msra.mxu0 0.0
      %765 = vmatpush.msra.mxu0 0.0
      %766 = vmatpush.msra.mxu0 0.0
      %767 = vmatpush.msra.mxu0 0.0
      %768 = vmatpush.msra.mxu0 0.0
      %769 = vmatpush.msra.mxu0 0.0
      %770 = vmatpush.msra.mxu0 0.0
      %771 = vmatpush.msra.mxu0 0.0
      %772 = vmatpush.msra.mxu0 0.0
      %v773 = vand.u32 %v629, 4294901760
      %774 = vmatpush.msra.mxu0 %v773
      %v775 = vand.u32 %v632, 4294901760
      %776 = vmatmul.f32.gmra.mxu0 %v775
      %v777 = vpop.f32.mrf.mxu0
      %v778 = vadd.f32 %v756, %v777
      %779 = vdwg.mxu0
      %780 = vrot.lane.b32.xlu0 %v115, 64
      %v781 = vpop.permute.xlu0 %780
      %782 = vrot.lane.b32.xlu0 %v116, 64
      %v783 = vpop.permute.xlu0 %782
      %v784 = vsel %vm118, %v781, 0
      %v786 = vsel %vm118, %v783, 0
      %788 = vmatpush.xpose.msra.mxu0 0.0
      %789 = vmatpush.xpose.msra.mxu0 0.0
      %790 = vmatpush.xpose.msra.mxu0 0.0
      %791 = vmatpush.xpose.msra.mxu0 0.0
      %792 = vmatpush.xpose.msra.mxu0 0.0
      %793 = vmatpush.xpose.msra.mxu0 0.0
      %794 = vmatpush.xpose.msra.mxu0 0.0
      %795 = vmatpush.xpose.msra.mxu0 0.0
      %796 = vmatpush.xpose.msra.mxu0 0.0
      %797 = vmatpush.xpose.msra.mxu0 0.0
      %798 = vmatpush.xpose.msra.mxu0 0.0
      %799 = vmatpush.xpose.msra.mxu0 0.0
      %800 = vmatpush.xpose.msra.mxu0 0.0
      %801 = vmatpush.xpose.msra.mxu0 0.0
      %802 = vmatpush.xpose.msra.mxu0 0.0
      %v803 = vand.u32 %v786, 4294901760
      %804 = vmatpush.xpose.msra.mxu0 %v803
      %v805 = vand.u32 %v784, 4294901760
      %v806 = vsub.f32 %v784, %v805
      %v807 = vand.u32 %v806, 4294901760
      %v808 = vsub.f32 %v806, %v807
      %v809 = vand.u32 %v808, 4294901760
      %810 = vmatmul.f32.gmra.mxu0 %v809
      %v811 = vpop.f32.mrf.mxu0
      %v812 = vadd.f32 0.0, %v811
      %813 = vdwg.mxu0
      %814 = vmatpush.xpose.msra.mxu0 0.0
      %815 = vmatpush.xpose.msra.mxu0 0.0
      %816 = vmatpush.xpose.msra.mxu0 0.0
      %817 = vmatpush.xpose.msra.mxu0 0.0
      %818 = vmatpush.xpose.msra.mxu0 0.0
      %819 = vmatpush.xpose.msra.mxu0 0.0
      %820 = vmatpush.xpose.msra.mxu0 0.0
      %821 = vmatpush.xpose.msra.mxu0 0.0
      %822 = vmatpush.xpose.msra.mxu0 0.0
      %823 = vmatpush.xpose.msra.mxu0 0.0
      %824 = vmatpush.xpose.msra.mxu0 0.0
      %825 = vmatpush.xpose.msra.mxu0 0.0
      %826 = vmatpush.xpose.msra.mxu0 0.0
      %827 = vmatpush.xpose.msra.mxu0 0.0
      %828 = vmatpush.xpose.msra.mxu0 0.0
      %v829 = vand.u32 %v786, 4294901760
      %v830 = vsub.f32 %v786, %v829
      %v831 = vand.u32 %v830, 4294901760
      %v832 = vsub.f32 %v830, %v831
      %v833 = vand.u32 %v832, 4294901760
      %834 = vmatpush.xpose.msra.mxu0 %v833
      %v835 = vand.u32 %v784, 4294901760
      %836 = vmatmul.f32.gmra.mxu0 %v835
      %v837 = vpop.f32.mrf.mxu0
      %v838 = vadd.f32 %v812, %v837
      %839 = vdwg.mxu0
      %840 = vmatpush.xpose.msra.mxu0 0.0
      %841 = vmatpush.xpose.msra.mxu0 0.0
      %842 = vmatpush.xpose.msra.mxu0 0.0
      %843 = vmatpush.xpose.msra.mxu0 0.0
      %844 = vmatpush.xpose.msra.mxu0 0.0
      %845 = vmatpush.xpose.msra.mxu0 0.0
      %846 = vmatpush.xpose.msra.mxu0 0.0
      %847 = vmatpush.xpose.msra.mxu0 0.0
      %848 = vmatpush.xpose.msra.mxu0 0.0
      %849 = vmatpush.xpose.msra.mxu0 0.0
      %850 = vmatpush.xpose.msra.mxu0 0.0
      %851 = vmatpush.xpose.msra.mxu0 0.0
      %852 = vmatpush.xpose.msra.mxu0 0.0
      %853 = vmatpush.xpose.msra.mxu0 0.0
      %854 = vmatpush.xpose.msra.mxu0 0.0
      %v855 = vand.u32 %v786, 4294901760
      %v856 = vsub.f32 %v786, %v855
      %857 = vmatpush.xpose.msra.mxu0 %v856
      %v858 = vand.u32 %v784, 4294901760
      %v859 = vsub.f32 %v784, %v858
      %860 = vmatmul.f32.gmra.mxu0 %v859
      %v861 = vpop.f32.mrf.mxu0
      %v862 = vadd.f32 %v838, %v861
      %863 = vdwg.mxu0
      %864 = vmatpush.xpose.msra.mxu0 0.0
      %865 = vmatpush.xpose.msra.mxu0 0.0
      %866 = vmatpush.xpose.msra.mxu0 0.0
      %867 = vmatpush.xpose.msra.mxu0 0.0
      %868 = vmatpush.xpose.msra.mxu0 0.0
      %869 = vmatpush.xpose.msra.mxu0 0.0
      %870 = vmatpush.xpose.msra.mxu0 0.0
      %871 = vmatpush.xpose.msra.mxu0 0.0
      %872 = vmatpush.xpose.msra.mxu0 0.0
      %873 = vmatpush.xpose.msra.mxu0 0.0
      %874 = vmatpush.xpose.msra.mxu0 0.0
      %875 = vmatpush.xpose.msra.mxu0 0.0
      %876 = vmatpush.xpose.msra.mxu0 0.0
      %877 = vmatpush.xpose.msra.mxu0 0.0
      %878 = vmatpush.xpose.msra.mxu0 0.0
      %v879 = vand.u32 %v786, 4294901760
      %880 = vmatpush.xpose.msra.mxu0 %v879
      %v881 = vand.u32 %v784, 4294901760
      %v882 = vsub.f32 %v784, %v881
      %v883 = vand.u32 %v882, 4294901760
      %884 = vmatmul.f32.gmra.mxu0 %v883
      %v885 = vpop.f32.mrf.mxu0
      %v886 = vadd.f32 %v862, %v885
      %887 = vdwg.mxu0
      %888 = vmatpush.xpose.msra.mxu0 0.0
      %889 = vmatpush.xpose.msra.mxu0 0.0
      %890 = vmatpush.xpose.msra.mxu0 0.0
      %891 = vmatpush.xpose.msra.mxu0 0.0
      %892 = vmatpush.xpose.msra.mxu0 0.0
      %893 = vmatpush.xpose.msra.mxu0 0.0
      %894 = vmatpush.xpose.msra.mxu0 0.0
      %895 = vmatpush.xpose.msra.mxu0 0.0
      %896 = vmatpush.xpose.msra.mxu0 0.0
      %897 = vmatpush.xpose.msra.mxu0 0.0
      %898 = vmatpush.xpose.msra.mxu0 0.0
      %899 = vmatpush.xpose.msra.mxu0 0.0
      %900 = vmatpush.xpose.msra.mxu0 0.0
      %901 = vmatpush.xpose.msra.mxu0 0.0
      %902 = vmatpush.xpose.msra.mxu0 0.0
      %v903 = vand.u32 %v786, 4294901760
      %v904 = vsub.f32 %v786, %v903
      %v905 = vand.u32 %v904, 4294901760
      %906 = vmatpush.xpose.msra.mxu0 %v905
      %v907 = vand.u32 %v784, 4294901760
      %908 = vmatmul.f32.gmra.mxu0 %v907
      %v909 = vpop.f32.mrf.mxu0
      %v910 = vadd.f32 %v886, %v909
      %911 = vdwg.mxu0
      %912 = vmatpush.xpose.msra.mxu0 0.0
      %913 = vmatpush.xpose.msra.mxu0 0.0
      %914 = vmatpush.xpose.msra.mxu0 0.0
      %915 = vmatpush.xpose.msra.mxu0 0.0
      %916 = vmatpush.xpose.msra.mxu0 0.0
      %917 = vmatpush.xpose.msra.mxu0 0.0
      %918 = vmatpush.xpose.msra.mxu0 0.0
      %919 = vmatpush.xpose.msra.mxu0 0.0
      %920 = vmatpush.xpose.msra.mxu0 0.0
      %921 = vmatpush.xpose.msra.mxu0 0.0
      %922 = vmatpush.xpose.msra.mxu0 0.0
      %923 = vmatpush.xpose.msra.mxu0 0.0
      %924 = vmatpush.xpose.msra.mxu0 0.0
      %925 = vmatpush.xpose.msra.mxu0 0.0
      %926 = vmatpush.xpose.msra.mxu0 0.0
      %v927 = vand.u32 %v786, 4294901760
      %928 = vmatpush.xpose.msra.mxu0 %v927
      %v929 = vand.u32 %v784, 4294901760
      %930 = vmatmul.f32.gmra.mxu0 %v929
      %v931 = vpop.f32.mrf.mxu0
      %v932 = vadd.f32 %v910, %v931
      %933 = vdwg.mxu0
      %v934 = vmul.f32 %v932, 0.17677669
      %v935 = vsel %vm272, %v934, -inf
      %936 = vmax.xlane.f32.xlu0 %v935
      %v937 = vpop.xlane.xlu0 %936
      %v938 = vsub.f32 %v934, %v937
      %v939 = vmul.f32 %v938, 1.442695
      %v940 = vpow.pop %v939
      %v941 = vsel %vm272, %v940, 0.0
      %942 = vadd.xlane.f32.xlu0 %v941
      %v943 = vpop.xlane.xlu0 %942
      %v944 = vrcp.pop %v943
      %v945 = vmul.f32 %v943, %v944
      %v946 = vsub.f32 1.0, %v945
      %v947 = vmul.f32 %v944, %v946
      %v948 = vadd.f32 %v944, %v947
      %vm949 = vweird.f32 %v943
      %vm950 = vweird.f32 %v944
      %vm951 = vmor %vm949, %vm950
      %v952 = vsel %vm951, %v944, %v948
      %v953 = vand.u32 2147483647, %v943
      %vm954 = vcmp.eq.f32.partialorder %v953, 8.507059e+37
      %v955 = vand.u32 %v943, 2147483648
      %v956 = vor.u32 1.1754944e-38, %v955
      %v957 = vsel %vm954, %v956, %v952
      %v958 = vmul.f32 1.0, %v957
      %v959 = vmul.f32 %v940, %v958
      %960 = vrot.lane.b32.xlu0 %v117, 64
      %v961 = vpop.permute.xlu0 %960
      %v964 = vsel %vm272, %v959, 0
      %966 = vmatpush.msra.mxu0 0.0
      %967 = vmatpush.msra.mxu0 0.0
      %968 = vmatpush.msra.mxu0 0.0
      %969 = vmatpush.msra.mxu0 0.0
      %970 = vmatpush.msra.mxu0 0.0
      %971 = vmatpush.msra.mxu0 0.0
      %972 = vmatpush.msra.mxu0 0.0
      %973 = vmatpush.msra.mxu0 0.0
      %974 = vmatpush.msra.mxu0 0.0
      %975 = vmatpush.msra.mxu0 0.0
      %976 = vmatpush.msra.mxu0 0.0
      %977 = vmatpush.msra.mxu0 0.0
      %978 = vmatpush.msra.mxu0 0.0
      %979 = vmatpush.msra.mxu0 0.0
      %980 = vmatpush.msra.mxu0 0.0
      %v981 = vand.u32 %v961, 4294901760
      %982 = vmatpush.msra.mxu0 %v981
      %v983 = vand.u32 %v964, 4294901760
      %v984 = vsub.f32 %v964, %v983
      %v985 = vand.u32 %v984, 4294901760
      %v986 = vsub.f32 %v984, %v985
      %v987 = vand.u32 %v986, 4294901760
      %988 = vmatmul.f32.gmra.mxu0 %v987
      %v989 = vpop.f32.mrf.mxu0
      %v990 = vadd.f32 0.0, %v989
      %991 = vdwg.mxu0
      %992 = vmatpush.msra.mxu0 0.0
      %993 = vmatpush.msra.mxu0 0.0
      %994 = vmatpush.msra.mxu0 0.0
      %995 = vmatpush.msra.mxu0 0.0
      %996 = vmatpush.msra.mxu0 0.0
      %997 = vmatpush.msra.mxu0 0.0
      %998 = vmatpush.msra.mxu0 0.0
      %999 = vmatpush.msra.mxu0 0.0
      %1000 = vmatpush.msra.mxu0 0.0
      %1001 = vmatpush.msra.mxu0 0.0
      %1002 = vmatpush.msra.mxu0 0.0
      %1003 = vmatpush.msra.mxu0 0.0
      %1004 = vmatpush.msra.mxu0 0.0
      %1005 = vmatpush.msra.mxu0 0.0
      %1006 = vmatpush.msra.mxu0 0.0
      %v1007 = vand.u32 %v961, 4294901760
      %v1008 = vsub.f32 %v961, %v1007
      %v1009 = vand.u32 %v1008, 4294901760
      %v1010 = vsub.f32 %v1008, %v1009
      %v1011 = vand.u32 %v1010, 4294901760
      %1012 = vmatpush.msra.mxu0 %v1011
      %v1013 = vand.u32 %v964, 4294901760
      %1014 = vmatmul.f32.gmra.mxu0 %v1013
      %v1015 = vpop.f32.mrf.mxu0
      %v1016 = vadd.f32 %v990, %v1015
      %1017 = vdwg.mxu0
      %1018 = vmatpush.msra.mxu0 0.0
      %1019 = vmatpush.msra.mxu0 0.0
      %1020 = vmatpush.msra.mxu0 0.0
      %1021 = vmatpush.msra.mxu0 0.0
      %1022 = vmatpush.msra.mxu0 0.0
      %1023 = vmatpush.msra.mxu0 0.0
      %1024 = vmatpush.msra.mxu0 0.0
      %1025 = vmatpush.msra.mxu0 0.0
      %1026 = vmatpush.msra.mxu0 0.0
      %1027 = vmatpush.msra.mxu0 0.0
      %1028 = vmatpush.msra.mxu0 0.0
      %1029 = vmatpush.msra.mxu0 0.0
      %1030 = vmatpush.msra.mxu0 0.0
      %1031 = vmatpush.msra.mxu0 0.0
      %1032 = vmatpush.msra.mxu0 0.0
      %v1033 = vand.u32 %v961, 4294901760
      %v1034 = vsub.f32 %v961, %v1033
      %1035 = vmatpush.msra.mxu0 %v1034
      %v1036 = vand.u32 %v964, 4294901760
      %v1037 = vsub.f32 %v964, %v1036
      %1038 = vmatmul.f32.gmra.mxu0 %v1037
      %v1039 = vpop.f32.mrf.mxu0
      %v1040 = vadd.f32 %v1016, %v1039
      %1041 = vdwg.mxu0
      %1042 = vmatpush.msra.mxu0 0.0
      %1043 = vmatpush.msra.mxu0 0.0
      %1044 = vmatpush.msra.mxu0 0.0
      %1045 = vmatpush.msra.mxu0 0.0
      %1046 = vmatpush.msra.mxu0 0.0
      %1047 = vmatpush.msra.mxu0 0.0
      %1048 = vmatpush.msra.mxu0 0.0
      %1049 = vmatpush.msra.mxu0 0.0
      %1050 = vmatpush.msra.mxu0 0.0
      %1051 = vmatpush.msra.mxu0 0.0
      %1052 = vmatpush.msra.mxu0 0.0
      %1053 = vmatpush.msra.mxu0 0.0
      %1054 = vmatpush.msra.mxu0 0.0
      %1055 = vmatpush.msra.mxu0 0.0
      %1056 = vmatpush.msra.mxu0 0.0
      %v1057 = vand.u32 %v961, 4294901760
      %1058 = vmatpush.msra.mxu0 %v1057
      %v1059 = vand.u32 %v964, 4294901760
      %v1060 = vsub.f32 %v964, %v1059
      %v1061 = vand.u32 %v1060, 4294901760
      %1062 = vmatmul.f32.gmra.mxu0 %v1061
      %v1063 = vpop.f32.mrf.mxu0
      %v1064 = vadd.f32 %v1040, %v1063
      %1065 = vdwg.mxu0
      %1066 = vmatpush.msra.mxu0 0.0
      %1067 = vmatpush.msra.mxu0 0.0
      %1068 = vmatpush.msra.mxu0 0.0
      %1069 = vmatpush.msra.mxu0 0.0
      %1070 = vmatpush.msra.mxu0 0.0
      %1071 = vmatpush.msra.mxu0 0.0
      %1072 = vmatpush.msra.mxu0 0.0
      %1073 = vmatpush.msra.mxu0 0.0
      %1074 = vmatpush.msra.mxu0 0.0
      %1075 = vmatpush.msra.mxu0 0.0
      %1076 = vmatpush.msra.mxu0 0.0
      %1077 = vmatpush.msra.mxu0 0.0
      %1078 = vmatpush.msra.mxu0 0.0
      %1079 = vmatpush.msra.mxu0 0.0
      %1080 = vmatpush.msra.mxu0 0.0
      %v1081 = vand.u32 %v961, 4294901760
      %v1082 = vsub.f32 %v961, %v1081
      %v1083 = vand.u32 %v1082, 4294901760
      %1084 = vmatpush.msra.mxu0 %v1083
      %v1085 = vand.u32 %v964, 4294901760
      %1086 = vmatmul.f32.gmra.mxu0 %v1085
      %v1087 = vpop.f32.mrf.mxu0
      %v1088 = vadd.f32 %v1064, %v1087
      %1089 = vdwg.mxu0
      %1090 = vmatpush.msra.mxu0 0.0
      %1091 = vmatpush.msra.mxu0 0.0
      %1092 = vmatpush.msra.mxu0 0.0
      %1093 = vmatpush.msra.mxu0 0.0
      %1094 = vmatpush.msra.mxu0 0.0
      %1095 = vmatpush.msra.mxu0 0.0
      %1096 = vmatpush.msra.mxu0 0.0
      %1097 = vmatpush.msra.mxu0 0.0
      %1098 = vmatpush.msra.mxu0 0.0
      %1099 = vmatpush.msra.mxu0 0.0
      %1100 = vmatpush.msra.mxu0 0.0
      %1101 = vmatpush.msra.mxu0 0.0
      %1102 = vmatpush.msra.mxu0 0.0
      %1103 = vmatpush.msra.mxu0 0.0
      %1104 = vmatpush.msra.mxu0 0.0
      %v1105 = vand.u32 %v961, 4294901760
      %1106 = vmatpush.msra.mxu0 %v1105
      %v1107 = vand.u32 %v964, 4294901760
      %1108 = vmatmul.f32.gmra.mxu0 %v1107
      %v1109 = vpop.f32.mrf.mxu0
      %v1110 = vadd.f32 %v1088, %v1109
      %1111 = vdwg.mxu0
      %1112 = vrot.lane.b32.xlu0 %v115, 32
      %v1113 = vpop.permute.xlu0 %1112
      %1114 = vrot.lane.b32.xlu0 %v116, 32
      %v1115 = vpop.permute.xlu0 %1114
      %v1116 = vsel %vm118, %v1113, 0
      %v1118 = vsel %vm118, %v1115, 0
      %1120 = vmatpush.xpose.msra.mxu0 0.0
      %1121 = vmatpush.xpose.msra.mxu0 0.0
      %1122 = vmatpush.xpose.msra.mxu0 0.0
      %1123 = vmatpush.xpose.msra.mxu0 0.0
      %1124 = vmatpush.xpose.msra.mxu0 0.0
      %1125 = vmatpush.xpose.msra.mxu0 0.0
      %1126 = vmatpush.xpose.msra.mxu0 0.0
      %1127 = vmatpush.xpose.msra.mxu0 0.0
      %1128 = vmatpush.xpose.msra.mxu0 0.0
      %1129 = vmatpush.xpose.msra.mxu0 0.0
      %1130 = vmatpush.xpose.msra.mxu0 0.0
      %1131 = vmatpush.xpose.msra.mxu0 0.0
      %1132 = vmatpush.xpose.msra.mxu0 0.0
      %1133 = vmatpush.xpose.msra.mxu0 0.0
      %1134 = vmatpush.xpose.msra.mxu0 0.0
      %v1135 = vand.u32 %v1118, 4294901760
      %1136 = vmatpush.xpose.msra.mxu0 %v1135
      %v1137 = vand.u32 %v1116, 4294901760
      %v1138 = vsub.f32 %v1116, %v1137
      %v1139 = vand.u32 %v1138, 4294901760
      %v1140 = vsub.f32 %v1138, %v1139
      %v1141 = vand.u32 %v1140, 4294901760
      %1142 = vmatmul.f32.gmra.mxu0 %v1141
      %v1143 = vpop.f32.mrf.mxu0
      %v1144 = vadd.f32 0.0, %v1143
      %1145 = vdwg.mxu0
      %1146 = vmatpush.xpose.msra.mxu0 0.0
      %1147 = vmatpush.xpose.msra.mxu0 0.0
      %1148 = vmatpush.xpose.msra.mxu0 0.0
      %1149 = vmatpush.xpose.msra.mxu0 0.0
      %1150 = vmatpush.xpose.msra.mxu0 0.0
      %1151 = vmatpush.xpose.msra.mxu0 0.0
      %1152 = vmatpush.xpose.msra.mxu0 0.0
      %1153 = vmatpush.xpose.msra.mxu0 0.0
      %1154 = vmatpush.xpose.msra.mxu0 0.0
      %1155 = vmatpush.xpose.msra.mxu0 0.0
      %1156 = vmatpush.xpose.msra.mxu0 0.0
      %1157 = vmatpush.xpose.msra.mxu0 0.0
      %1158 = vmatpush.xpose.msra.mxu0 0.0
      %1159 = vmatpush.xpose.msra.mxu0 0.0
      %1160 = vmatpush.xpose.msra.mxu0 0.0
      %v1161 = vand.u32 %v1118, 4294901760
      %v1162 = vsub.f32 %v1118, %v1161
      %v1163 = vand.u32 %v1162, 4294901760
      %v1164 = vsub.f32 %v1162, %v1163
      %v1165 = vand.u32 %v1164, 4294901760
      %1166 = vmatpush.xpose.msra.mxu0 %v1165
      %v1167 = vand.u32 %v1116, 4294901760
      %1168 = vmatmul.f32.gmra.mxu0 %v1167
      %v1169 = vpop.f32.mrf.mxu0
      %v1170 = vadd.f32 %v1144, %v1169
      %1171 = vdwg.mxu0
      %1172 = vmatpush.xpose.msra.mxu0 0.0
      %1173 = vmatpush.xpose.msra.mxu0 0.0
      %1174 = vmatpush.xpose.msra.mxu0 0.0
      %1175 = vmatpush.xpose.msra.mxu0 0.0
      %1176 = vmatpush.xpose.msra.mxu0 0.0
      %1177 = vmatpush.xpose.msra.mxu0 0.0
      %1178 = vmatpush.xpose.msra.mxu0 0.0
      %1179 = vmatpush.xpose.msra.mxu0 0.0
      %1180 = vmatpush.xpose.msra.mxu0 0.0
      %1181 = vmatpush.xpose.msra.mxu0 0.0
      %1182 = vmatpush.xpose.msra.mxu0 0.0
      %1183 = vmatpush.xpose.msra.mxu0 0.0
      %1184 = vmatpush.xpose.msra.mxu0 0.0
      %1185 = vmatpush.xpose.msra.mxu0 0.0
      %1186 = vmatpush.xpose.msra.mxu0 0.0
      %v1187 = vand.u32 %v1118, 4294901760
      %v1188 = vsub.f32 %v1118, %v1187
      %1189 = vmatpush.xpose.msra.mxu0 %v1188
      %v1190 = vand.u32 %v1116, 4294901760
      %v1191 = vsub.f32 %v1116, %v1190
      %1192 = vmatmul.f32.gmra.mxu0 %v1191
      %v1193 = vpop.f32.mrf.mxu0
      %v1194 = vadd.f32 %v1170, %v1193
      %1195 = vdwg.mxu0
      %1196 = vmatpush.xpose.msra.mxu0 0.0
      %1197 = vmatpush.xpose.msra.mxu0 0.0
      %1198 = vmatpush.xpose.msra.mxu0 0.0
      %1199 = vmatpush.xpose.msra.mxu0 0.0
      %1200 = vmatpush.xpose.msra.mxu0 0.0
      %1201 = vmatpush.xpose.msra.mxu0 0.0
      %1202 = vmatpush.xpose.msra.mxu0 0.0
      %1203 = vmatpush.xpose.msra.mxu0 0.0
      %1204 = vmatpush.xpose.msra.mxu0 0.0
      %1205 = vmatpush.xpose.msra.mxu0 0.0
      %1206 = vmatpush.xpose.msra.mxu0 0.0
      %1207 = vmatpush.xpose.msra.mxu0 0.0
      %1208 = vmatpush.xpose.msra.mxu0 0.0
      %1209 = vmatpush.xpose.msra.mxu0 0.0
      %1210 = vmatpush.xpose.msra.mxu0 0.0
      %v1211 = vand.u32 %v1118, 4294901760
      %1212 = vmatpush.xpose.msra.mxu0 %v1211
      %v1213 = vand.u32 %v1116, 4294901760
      %v1214 = vsub.f32 %v1116, %v1213
      %v1215 = vand.u32 %v1214, 4294901760
      %1216 = vmatmul.f32.gmra.mxu0 %v1215
      %v1217 = vpop.f32.mrf.mxu0
      %v1218 = vadd.f32 %v1194, %v1217
      %1219 = vdwg.mxu0
      %1220 = vmatpush.xpose.msra.mxu0 0.0
      %1221 = vmatpush.xpose.msra.mxu0 0.0
      %1222 = vmatpush.xpose.msra.mxu0 0.0
      %1223 = vmatpush.xpose.msra.mxu0 0.0
      %1224 = vmatpush.xpose.msra.mxu0 0.0
      %1225 = vmatpush.xpose.msra.mxu0 0.0
      %1226 = vmatpush.xpose.msra.mxu0 0.0
      %1227 = vmatpush.xpose.msra.mxu0 0.0
      %1228 = vmatpush.xpose.msra.mxu0 0.0
      %1229 = vmatpush.xpose.msra.mxu0 0.0
      %1230 = vmatpush.xpose.msra.mxu0 0.0
      %1231 = vmatpush.xpose.msra.mxu0 0.0
      %1232 = vmatpush.xpose.msra.mxu0 0.0
      %1233 = vmatpush.xpose.msra.mxu0 0.0
      %1234 = vmatpush.xpose.msra.mxu0 0.0
      %v1235 = vand.u32 %v1118, 4294901760
      %v1236 = vsub.f32 %v1118, %v1235
      %v1237 = vand.u32 %v1236, 4294901760
      %1238 = vmatpush.xpose.msra.mxu0 %v1237
      %v1239 = vand.u32 %v1116, 4294901760
      %1240 = vmatmul.f32.gmra.mxu0 %v1239
      %v1241 = vpop.f32.mrf.mxu0
      %v1242 = vadd.f32 %v1218, %v1241
      %1243 = vdwg.mxu0
      %1244 = vmatpush.xpose.msra.mxu0 0.0
      %1245 = vmatpush.xpose.msra.mxu0 0.0
      %1246 = vmatpush.xpose.msra.mxu0 0.0
      %1247 = vmatpush.xpose.msra.mxu0 0.0
      %1248 = vmatpush.xpose.msra.mxu0 0.0
      %1249 = vmatpush.xpose.msra.mxu0 0.0
      %1250 = vmatpush.xpose.msra.mxu0 0.0
      %1251 = vmatpush.xpose.msra.mxu0 0.0
      %1252 = vmatpush.xpose.msra.mxu0 0.0
      %1253 = vmatpush.xpose.msra.mxu0 0.0
      %1254 = vmatpush.xpose.msra.mxu0 0.0
      %1255 = vmatpush.xpose.msra.mxu0 0.0
      %1256 = vmatpush.xpose.msra.mxu0 0.0
      %1257 = vmatpush.xpose.msra.mxu0 0.0
      %1258 = vmatpush.xpose.msra.mxu0 0.0
      %v1259 = vand.u32 %v1118, 4294901760
      %1260 = vmatpush.xpose.msra.mxu0 %v1259
      %v1261 = vand.u32 %v1116, 4294901760
      %1262 = vmatmul.f32.gmra.mxu0 %v1261
      %v1263 = vpop.f32.mrf.mxu0
      %v1264 = vadd.f32 %v1242, %v1263
      %1265 = vdwg.mxu0
      %v1266 = vmul.f32 %v1264, 0.17677669
      %v1267 = vsel %vm272, %v1266, -inf
      %1268 = vmax.xlane.f32.xlu0 %v1267
      %v1269 = vpop.xlane.xlu0 %1268
      %v1270 = vsub.f32 %v1266, %v1269
      %v1271 = vmul.f32 %v1270, 1.442695
      %v1272 = vpow.pop %v1271
      %v1273 = vsel %vm272, %v1272, 0.0
      %1274 = vadd.xlane.f32.xlu0 %v1273
      %v1275 = vpop.xlane.xlu0 %1274
      %v1276 = vrcp.pop %v1275
      %v1277 = vmul.f32 %v1275, %v1276
      %v1278 = vsub.f32 1.0, %v1277
      %v1279 = vmul.f32 %v1276, %v1278
      %v1280 = vadd.f32 %v1276, %v1279
      %vm1281 = vweird.f32 %v1275
      %vm1282 = vweird.f32 %v1276
      %vm1283 = vmor %vm1281, %vm1282
      %v1284 = vsel %vm1283, %v1276, %v1280
      %v1285 = vand.u32 2147483647, %v1275
      %vm1286 = vcmp.eq.f32.partialorder %v1285, 8.507059e+37
      %v1287 = vand.u32 %v1275, 2147483648
      %v1288 = vor.u32 1.1754944e-38, %v1287
      %v1289 = vsel %vm1286, %v1288, %v1284
      %v1290 = vmul.f32 1.0, %v1289
      %v1291 = vmul.f32 %v1272, %v1290
      %1292 = vrot.lane.b32.xlu0 %v117, 32
      %v1293 = vpop.permute.xlu0 %1292
      %v1296 = vsel %vm272, %v1291, 0
      %1298 = vmatpush.msra.mxu0 0.0
      %1299 = vmatpush.msra.mxu0 0.0
      %1300 = vmatpush.msra.mxu0 0.0
      %1301 = vmatpush.msra.mxu0 0.0
      %1302 = vmatpush.msra.mxu0 0.0
      %1303 = vmatpush.msra.mxu0 0.0
      %1304 = vmatpush.msra.mxu0 0.0
      %1305 = vmatpush.msra.mxu0 0.0
      %1306 = vmatpush.msra.mxu0 0.0
      %1307 = vmatpush.msra.mxu0 0.0
      %1308 = vmatpush.msra.mxu0 0.0
      %1309 = vmatpush.msra.mxu0 0.0
      %1310 = vmatpush.msra.mxu0 0.0
      %1311 = vmatpush.msra.mxu0 0.0
      %1312 = vmatpush.msra.mxu0 0.0
      %v1313 = vand.u32 %v1293, 4294901760
      %1314 = vmatpush.msra.mxu0 %v1313
      %v1315 = vand.u32 %v1296, 4294901760
      %v1316 = vsub.f32 %v1296, %v1315
      %v1317 = vand.u32 %v1316, 4294901760
      %v1318 = vsub.f32 %v1316, %v1317
      %v1319 = vand.u32 %v1318, 4294901760
      %1320 = vmatmul.f32.gmra.mxu0 %v1319
      %v1321 = vpop.f32.mrf.mxu0
      %v1322 = vadd.f32 0.0, %v1321
      %1323 = vdwg.mxu0
      %1324 = vmatpush.msra.mxu0 0.0
      %1325 = vmatpush.msra.mxu0 0.0
      %1326 = vmatpush.msra.mxu0 0.0
      %1327 = vmatpush.msra.mxu0 0.0
      %1328 = vmatpush.msra.mxu0 0.0
      %1329 = vmatpush.msra.mxu0 0.0
      %1330 = vmatpush.msra.mxu0 0.0
      %1331 = vmatpush.msra.mxu0 0.0
      %1332 = vmatpush.msra.mxu0 0.0
      %1333 = vmatpush.msra.mxu0 0.0
      %1334 = vmatpush.msra.mxu0 0.0
      %1335 = vmatpush.msra.mxu0 0.0
      %1336 = vmatpush.msra.mxu0 0.0
      %1337 = vmatpush.msra.mxu0 0.0
      %1338 = vmatpush.msra.mxu0 0.0
      %v1339 = vand.u32 %v1293, 4294901760
      %v1340 = vsub.f32 %v1293, %v1339
      %v1341 = vand.u32 %v1340, 4294901760
      %v1342 = vsub.f32 %v1340, %v1341
      %v1343 = vand.u32 %v1342, 4294901760
      %1344 = vmatpush.msra.mxu0 %v1343
      %v1345 = vand.u32 %v1296, 4294901760
      %1346 = vmatmul.f32.gmra.mxu0 %v1345
      %v1347 = vpop.f32.mrf.mxu0
      %v1348 = vadd.f32 %v1322, %v1347
      %1349 = vdwg.mxu0
      %1350 = vmatpush.msra.mxu0 0.0
      %1351 = vmatpush.msra.mxu0 0.0
      %1352 = vmatpush.msra.mxu0 0.0
      %1353 = vmatpush.msra.mxu0 0.0
      %1354 = vmatpush.msra.mxu0 0.0
      %1355 = vmatpush.msra.mxu0 0.0
      %1356 = vmatpush.msra.mxu0 0.0
      %1357 = vmatpush.msra.mxu0 0.0
      %1358 = vmatpush.msra.mxu0 0.0
      %1359 = vmatpush.msra.mxu0 0.0
      %1360 = vmatpush.msra.mxu0 0.0
      %1361 = vmatpush.msra.mxu0 0.0
      %1362 = vmatpush.msra.mxu0 0.0
      %1363 = vmatpush.msra.mxu0 0.0
      %1364 = vmatpush.msra.mxu0 0.0
      %v1365 = vand.u32 %v1293, 4294901760
      %v1366 = vsub.f32 %v1293, %v1365
      %1367 = vmatpush.msra.mxu0 %v1366
      %v1368 = vand.u32 %v1296, 4294901760
      %v1369 = vsub.f32 %v1296, %v1368
      %1370 = vmatmul.f32.gmra.mxu0 %v1369
      %v1371 = vpop.f32.mrf.mxu0
      %v1372 = vadd.f32 %v1348, %v1371
      %1373 = vdwg.mxu0
      %1374 = vmatpush.msra.mxu0 0.0
      %1375 = vmatpush.msra.mxu0 0.0
      %1376 = vmatpush.msra.mxu0 0.0
      %1377 = vmatpush.msra.mxu0 0.0
      %1378 = vmatpush.msra.mxu0 0.0
      %1379 = vmatpush.msra.mxu0 0.0
      %1380 = vmatpush.msra.mxu0 0.0
      %1381 = vmatpush.msra.mxu0 0.0
      %1382 = vmatpush.msra.mxu0 0.0
      %1383 = vmatpush.msra.mxu0 0.0
      %1384 = vmatpush.msra.mxu0 0.0
      %1385 = vmatpush.msra.mxu0 0.0
      %1386 = vmatpush.msra.mxu0 0.0
      %1387 = vmatpush.msra.mxu0 0.0
      %1388 = vmatpush.msra.mxu0 0.0
      %v1389 = vand.u32 %v1293, 4294901760
      %1390 = vmatpush.msra.mxu0 %v1389
      %v1391 = vand.u32 %v1296, 4294901760
      %v1392 = vsub.f32 %v1296, %v1391
      %v1393 = vand.u32 %v1392, 4294901760
      %1394 = vmatmul.f32.gmra.mxu0 %v1393
      %v1395 = vpop.f32.mrf.mxu0
      %v1396 = vadd.f32 %v1372, %v1395
      %1397 = vdwg.mxu0
      %1398 = vmatpush.msra.mxu0 0.0
      %1399 = vmatpush.msra.mxu0 0.0
      %1400 = vmatpush.msra.mxu0 0.0
      %1401 = vmatpush.msra.mxu0 0.0
      %1402 = vmatpush.msra.mxu0 0.0
      %1403 = vmatpush.msra.mxu0 0.0
      %1404 = vmatpush.msra.mxu0 0.0
      %1405 = vmatpush.msra.mxu0 0.0
      %1406 = vmatpush.msra.mxu0 0.0
      %1407 = vmatpush.msra.mxu0 0.0
      %1408 = vmatpush.msra.mxu0 0.0
      %1409 = vmatpush.msra.mxu0 0.0
      %1410 = vmatpush.msra.mxu0 0.0
      %1411 = vmatpush.msra.mxu0 0.0
      %1412 = vmatpush.msra.mxu0 0.0
      %v1413 = vand.u32 %v1293, 4294901760
      %v1414 = vsub.f32 %v1293, %v1413
      %v1415 = vand.u32 %v1414, 4294901760
      %1416 = vmatpush.msra.mxu0 %v1415
      %v1417 = vand.u32 %v1296, 4294901760
      %1418 = vmatmul.f32.gmra.mxu0 %v1417
      %v1419 = vpop.f32.mrf.mxu0
      %v1420 = vadd.f32 %v1396, %v1419
      %1421 = vdwg.mxu0
      %1422 = vmatpush.msra.mxu0 0.0
      %1423 = vmatpush.msra.mxu0 0.0
      %1424 = vmatpush.msra.mxu0 0.0
      %1425 = vmatpush.msra.mxu0 0.0
      %1426 = vmatpush.msra.mxu0 0.0
      %1427 = vmatpush.msra.mxu0 0.0
      %1428 = vmatpush.msra.mxu0 0.0
      %1429 = vmatpush.msra.mxu0 0.0
      %1430 = vmatpush.msra.mxu0 0.0
      %1431 = vmatpush.msra.mxu0 0.0
      %1432 = vmatpush.msra.mxu0 0.0
      %1433 = vmatpush.msra.mxu0 0.0
      %1434 = vmatpush.msra.mxu0 0.0
      %1435 = vmatpush.msra.mxu0 0.0
      %1436 = vmatpush.msra.mxu0 0.0
      %v1437 = vand.u32 %v1293, 4294901760
      %1438 = vmatpush.msra.mxu0 %v1437
      %v1439 = vand.u32 %v1296, 4294901760
      %1440 = vmatmul.f32.gmra.mxu0 %v1439
      %v1441 = vpop.f32.mrf.mxu0
      %v1442 = vadd.f32 %v1420, %v1441
      %1443 = vdwg.mxu0
      %1445 = vrot.lane.b32.xlu0 %v778, 32
      %v1446 = vpop.permute.xlu0 %1445
      %1449 = vrot.lane.b32.xlu0 %v1110, 64
      %v1450 = vpop.permute.xlu0 %1449
      %1453 = vrot.lane.b32.xlu0 %v1442, 96
      %v1454 = vpop.permute.xlu0 %1453
      %v1456 = vsel %vm118, %v445, %v1446
      %vm1457 = vcmask 523264
      %v1458 = vsel %vm1457, %v1456, %v1450
      %vm1459 = vcmask 785408
      %v1460 = vsel %vm1459, %v1458, %v1454
      %1461 = vst [vmem:[%s114] sm:$0xff] %v1460
      %p1462 = scmp.lt.s32.totalorder %s12, 1
      %s1463 = scalar_select %p1462, %s12, 1
      %s1464 = smul.addr %s1463, 8
      %s1465 = scalar_lea.vmem %s1, %s1464
      // Predicated region
      $region25: #{transformer_model_forward.11} parent=23 // pred_check
        %p1466 = pneg %p56
      $region26: #{transformer_model_forward.11} parent=23 // pred_check_branch
        %1468 = sbr.rel (%p1466) target = $region28
      $region27: #{transformer_model_forward.11} parent=23 // pred_region
        _
      $region28: #{transformer_model_forward.11} parent=23 // pred_fallthru
        _
    $region24: #{transformer_model_forward.11} parent=5 // pred_fallthru
      _
    %p1469 = scmp.le.s32.totalorder 2, %s7
    // Predicated region
    $region29: #{transformer_model_forward.11} parent=5 // pred_check
      %p1470 = pneg %p1469
    $region30: #{transformer_model_forward.11} parent=5 // pred_check_branch
      %1472 = sbr.rel (%p1470) target = $region32
    $region31: #{transformer_model_forward.11} parent=5 // pred_region
      %s1473 = ssub.s32 %s7, 2
      // Predicated region
      $region33: #{transformer_model_forward.11} parent=31 // pred_check
        %p1474 = pneg %p62
      $region34: #{transformer_model_forward.11} parent=31 // pred_check_branch
        %1476 = sbr.rel (%p1474) target = $region36
      $region35: #{transformer_model_forward.11} parent=31 // pred_region
        %p1477 = scmp.lt.s32.totalorder %s13, 1
        %s1478 = scalar_select %p1477, %s13, 1
        %s1479 = smul.addr %s1478, 8
        %s1480 = scalar_lea.vmem %s1, %s1479
      $region36: #{transformer_model_forward.11} parent=31 // pred_fallthru
        _
    $region32: #{transformer_model_forward.11} parent=5 // pred_fallthru
      _
  $region6: #{transformer_model_forward.11} parent=0 // loop_footer
    %s11 = sadd.s32 1, %s7
  $region7: #{transformer_model_forward.11} parent=0 // loop_footer_branch
    %6 = sbr.rel target = $region3
  $region8: #{transformer_model_forward.11} parent=0 // loop_exit
    _

// kernel: transformer_model_forward.13
$region0: #{transformer_model_forward.13}
  #allocation0 [shape = 'u32[]', space=smem, size = 0x4, offset = 0x4, fixed_abs, tag = 'smem constant byte address 0x4 - core index']
  #allocation1 [shape = 'u32[72,128]{1,0:T(1,128)}', space=vmem, size = 0x9000, scoped, tag = 'internal scratch']
  %s0 = inlined_call_operand.vmem [shape: f32[16,128], index: 0, kind: input, shape index: {}]
  %s1 = inlined_call_operand.hbm [shape: f32[128,256], index: 1, kind: input, shape index: {}]
  %s2 = inlined_call_operand.vmem [shape: f32[1,256], index: 2, kind: input, shape index: {}]
  %s3 = inlined_call_operand.hbm [shape: f32[256,128], index: 3, kind: input, shape index: {}]
  %s4 = inlined_call_operand.vmem [shape: f32[1,128], index: 4, kind: input, shape index: {}]
  %s5 = inlined_call_operand.vmem [shape: f32[1,128], index: 5, kind: input, shape index: {}]
  %s6 = inlined_call_operand.vmem [shape: f32[1,128], index: 6, kind: input, shape index: {}]
  %s7 = inlined_call_operand.vmem [shape: f32[16,128], index: 7, kind: output, shape index: {}]
  %s8 = sld [smem:[#allocation0]]
  $region69: #{transformer_model_forward.13} parent=0
    _
  %s10 = ssub.s32 1, %s8
  %s11 = scalar_select 0, %s10, %s8
  $region1: #{transformer_model_forward.13} parent=0
    #allocation2 [shape = 'u8[131072]{0}', space=vmem, size = 0x20000, scoped, tag = 'input window, operand 1, single buffered']
    #allocation3 [shape = 's32[2]{0}', space=sflag, size = 0x8, scoped, tag = 'scoped memory for transformer_model_forward.13']
    #allocation4 [shape = 'u8[131072]{0}', space=vmem, size = 0x20000, scoped, tag = 'input window, operand 3, single buffered']
    #allocation5 [shape = 's32[1]{0}', space=sflag, size = 0x4, scoped, tag = 'scoped memory for transformer_model_forward.13']
    %12 = vsyncpa [#allocation3], 0
    %13 = vsyncpa [#allocation5], 0
    loop: start=0, step=1, limit=4
    $region2: #{transformer_model_forward.13} parent=1 // loop_pre_header
      _
    $region3: #{transformer_model_forward.13} parent=1 // loop_header
      %s15 = sphi 0, %s19
      %p16 = scmp.ge.s32.totalorder %s15, 4
      %s25 = sphi 0, %s27
      %s28 = sphi 0, %s25
      %s29 = sphi 0, %s28
      %s45 = sphi 0, %s29
      %s49 = sphi 0, %s49
      %s51 = sphi 0, %s49
      %s52 = sphi 0, %s51
      %s66 = sphi 0, %s52
      %s70 = sphi 0, %s70
      %s72 = sphi 0, %s70
      %s73 = sphi 0, %s72
      %s87 = sphi 0, %s73
      %s91 = sphi 0, %s91
      %s93 = sphi 0, %s91
      %s94 = sphi 0, %s93
      %s108 = sphi 0, %s94
      %s112 = sphi 0, %s112
      %s114 = sphi 0, %s112
      %s115 = sphi 0, %s114
      %s129 = sphi 0, %s115
      %s133 = sphi 0, %s133
      %s135 = sphi 0, %s133
      %s136 = sphi 0, %s135
      %s150 = sphi 0, %s136
      %s154 = sphi 0, %s154
      %s156 = sphi 0, %s154
      %s157 = sphi 0, %s156
      %s171 = sphi 0, %s157
      %s177 = sphi 0, %s179
      %s180 = sphi 0, %s177
      %s181 = sphi 0, %s180
      %s197 = sphi 0, %s181
    $region4: #{transformer_model_forward.13} parent=1 // loop_header_branch
      %18 = sbr.rel (%p16) target = $region8
    $region5: #{transformer_model_forward.13} parent=1 // loop_body
      %s20 = ssub.s32 %s15, 1
      %s21 = ssub.s32 %s15, 2
      %s22 = sadd.s32 %s15, 1
      %s23 = ssub.s32 %s15, %s22
      %p24 = scmp.eq.s32.totalorder %s23, 0
      %s26 = sadd.s32 %s25, 1
      %s27 = scalar_select %p24, %s25, %s26
      %p30 = pneg %p24
      %p31 = scmp.eq.s32.totalorder %s15, 1
      %p32 = por %p30, %p31
      %p33 = scmp.ne.s32.totalorder %s25, %s28
      %p34 = scmp.eq.s32.totalorder %s15, 0
      %p35 = por %p33, %p34
      %p36 = scmp.ne.s32.totalorder %s25, %s28
      %p37 = scmp.eq.s32.totalorder %s20, 1
      %p38 = por %p36, %p37
      %p39 = scmp.ne.s32.totalorder %s28, %s29
      %p40 = scmp.eq.s32.totalorder %s20, 0
      %p41 = por %p39, %p40
      %p42 = scmp.ne.s32.totalorder %s28, %s29
      %p43 = scmp.eq.s32.totalorder %s21, 1
      %p44 = por %p42, %p43
      %p46 = scmp.ne.s32.totalorder %s29, %s45
      %p47 = scmp.eq.s32.totalorder %s21, 0
      %p48 = por %p46, %p47
      %s50 = sadd.s32 %s49, 1
      %p53 = scmp.eq.s32.totalorder %s15, 1
      %p54 = scmp.ne.s32.totalorder %s49, %s51
      %p55 = scmp.eq.s32.totalorder %s15, 0
      %p56 = por %p54, %p55
      %p57 = scmp.ne.s32.totalorder %s49, %s51
      %p58 = scmp.eq.s32.totalorder %s20, 1
      %p59 = por %p57, %p58
      %p60 = scmp.ne.s32.totalorder %s51, %s52
      %p61 = scmp.eq.s32.totalorder %s20, 0
      %p62 = por %p60, %p61
      %p63 = scmp.ne.s32.totalorder %s51, %s52
      %p64 = scmp.eq.s32.totalorder %s21, 1
      %p65 = por %p63, %p64
      %p67 = scmp.ne.s32.totalorder %s52, %s66
      %p68 = scmp.eq.s32.totalorder %s21, 0
      %p69 = por %p67, %p68
      %s71 = sadd.s32 %s70, 1
      %p74 = scmp.eq.s32.totalorder %s15, 1
      %p75 = scmp.ne.s32.totalorder %s70, %s72
      %p76 = scmp.eq.s32.totalorder %s15, 0
      %p77 = por %p75, %p76
      %p78 = scmp.ne.s32.totalorder %s70, %s72
      %p79 = scmp.eq.s32.totalorder %s20, 1
      %p80 = por %p78, %p79
      %p81 = scmp.ne.s32.totalorder %s72, %s73
      %p82 = scmp.eq.s32.totalorder %s20, 0
      %p83 = por %p81, %p82
      %p84 = scmp.ne.s32.totalorder %s72, %s73
      %p85 = scmp.eq.s32.totalorder %s21, 1
      %p86 = por %p84, %p85
      %p88 = scmp.ne.s32.totalorder %s73, %s87
      %p89 = scmp.eq.s32.totalorder %s21, 0
      %p90 = por %p88, %p89
      %s92 = sadd.s32 %s91, 1
      %p95 = scmp.eq.s32.totalorder %s15, 1
      %p96 = scmp.ne.s32.totalorder %s91, %s93
      %p97 = scmp.eq.s32.totalorder %s15, 0
      %p98 = por %p96, %p97
      %p99 = scmp.ne.s32.totalorder %s91, %s93
      %p100 = scmp.eq.s32.totalorder %s20, 1
      %p101 = por %p99, %p100
      %p102 = scmp.ne.s32.totalorder %s93, %s94
      %p103 = scmp.eq.s32.totalorder %s20, 0
      %p104 = por %p102, %p103
      %p105 = scmp.ne.s32.totalorder %s93, %s94
      %p106 = scmp.eq.s32.totalorder %s21, 1
      %p107 = por %p105, %p106
      %p109 = scmp.ne.s32.totalorder %s94, %s108
      %p110 = scmp.eq.s32.totalorder %s21, 0
      %p111 = por %p109, %p110
      %s113 = sadd.s32 %s112, 1
      %p116 = scmp.eq.s32.totalorder %s15, 1
      %p117 = scmp.ne.s32.totalorder %s112, %s114
      %p118 = scmp.eq.s32.totalorder %s15, 0
      %p119 = por %p117, %p118
      %p120 = scmp.ne.s32.totalorder %s112, %s114
      %p121 = scmp.eq.s32.totalorder %s20, 1
      %p122 = por %p120, %p121
      %p123 = scmp.ne.s32.totalorder %s114, %s115
      %p124 = scmp.eq.s32.totalorder %s20, 0
      %p125 = por %p123, %p124
      %p126 = scmp.ne.s32.totalorder %s114, %s115
      %p127 = scmp.eq.s32.totalorder %s21, 1
      %p128 = por %p126, %p127
      %p130 = scmp.ne.s32.totalorder %s115, %s129
      %p131 = scmp.eq.s32.totalorder %s21, 0
      %p132 = por %p130, %p131
      %s134 = sadd.s32 %s133, 1
      %p137 = scmp.eq.s32.totalorder %s15, 1
      %p138 = scmp.ne.s32.totalorder %s133, %s135
      %p139 = scmp.eq.s32.totalorder %s15, 0
      %p140 = por %p138, %p139
      %p141 = scmp.ne.s32.totalorder %s133, %s135
      %p142 = scmp.eq.s32.totalorder %s20, 1
      %p143 = por %p141, %p142
      %p144 = scmp.ne.s32.totalorder %s135, %s136
      %p145 = scmp.eq.s32.totalorder %s20, 0
      %p146 = por %p144, %p145
      %p147 = scmp.ne.s32.totalorder %s135, %s136
      %p148 = scmp.eq.s32.totalorder %s21, 1
      %p149 = por %p147, %p148
      %p151 = scmp.ne.s32.totalorder %s136, %s150
      %p152 = scmp.eq.s32.totalorder %s21, 0
      %p153 = por %p151, %p152
      %s155 = sadd.s32 %s154, 1
      %p158 = scmp.eq.s32.totalorder %s15, 1
      %p159 = scmp.ne.s32.totalorder %s154, %s156
      %p160 = scmp.eq.s32.totalorder %s15, 0
      %p161 = por %p159, %p160
      %p162 = scmp.ne.s32.totalorder %s154, %s156
      %p163 = scmp.eq.s32.totalorder %s20, 1
      %p164 = por %p162, %p163
      %p165 = scmp.ne.s32.totalorder %s156, %s157
      %p166 = scmp.eq.s32.totalorder %s20, 0
      %p167 = por %p165, %p166
      %p168 = scmp.ne.s32.totalorder %s156, %s157
      %p169 = scmp.eq.s32.totalorder %s21, 1
      %p170 = por %p168, %p169
      %p172 = scmp.ne.s32.totalorder %s157, %s171
      %p173 = scmp.eq.s32.totalorder %s21, 0
      %p174 = por %p172, %p173
      %s175 = ssub.s32 %s15, %s22
      %p176 = scmp.eq.s32.totalorder %s175, 0
      %s178 = sadd.s32 %s177, 1
      %s179 = scalar_select %p176, %s177, %s178
      %p182 = pneg %p176
      %p183 = scmp.eq.s32.totalorder %s15, 1
      %p184 = por %p182, %p183
      %p185 = scmp.ne.s32.totalorder %s177, %s180
      %p186 = scmp.eq.s32.totalorder %s15, 0
      %p187 = por %p185, %p186
      %p188 = scmp.ne.s32.totalorder %s177, %s180
      %p189 = scmp.eq.s32.totalorder %s20, 1
      %p190 = por %p188, %p189
      %p191 = scmp.ne.s32.totalorder %s180, %s181
      %p192 = scmp.eq.s32.totalorder %s20, 0
      %p193 = por %p191, %p192
      %p194 = scmp.ne.s32.totalorder %s180, %s181
      %p195 = scmp.eq.s32.totalorder %s21, 1
      %p196 = por %p194, %p195
      %p198 = scmp.ne.s32.totalorder %s181, %s197
      %p199 = scmp.eq.s32.totalorder %s21, 0
      %p200 = por %p198, %p199
      %p201 = scmp.le.s32.totalorder 1, %s15
      %p202 = scmp.lt.s32.totalorder %s15, 3
      %p203 = pnand %p201, %p202
      %p204 = pneg %p203
      // Predicated region
      $region9: #{transformer_model_forward.13} parent=5 // pred_check
        _
      $region10: #{transformer_model_forward.13} parent=5 // pred_check_branch
        %206 = sbr.rel (%p203) target = $region12
      $region11: #{transformer_model_forward.13} parent=5 // pred_region
        %s207 = ssub.s32 %s15, 1
        // Predicated region
        $region13: #{transformer_model_forward.13} parent=11 // pred_check
          %p208 = pneg %p62
        $region14: #{transformer_model_forward.13} parent=11 // pred_check_branch
          %210 = sbr.rel (%p208) target = $region16
        $region15: #{transformer_model_forward.13} parent=11 // pred_region
          %212 = vsyncadd [#allocation3], 0
          %s213 = sshll.u32 %s1, 4
          %s214 = int_to_ptr.hbm [resolvable:$true] %s213
          %s215 = sshll.u32 [#allocation2], 4
          %s216 = int_to_ptr.vmem [resolvable:$true] %s215
          %221 = dma.hbm_to_vmem [thread:$0]  %s214, 4096, %s216, [#allocation3], 256, 256, 16
        $region16: #{transformer_model_forward.13} parent=11 // pred_fallthru
          _
        // Predicated region
        $region17: #{transformer_model_forward.13} parent=11 // pred_check
          %p222 = pneg %p83
        $region18: #{transformer_model_forward.13} parent=11 // pred_check_branch
          %224 = sbr.rel (%p222) target = $region20
        $region19: #{transformer_model_forward.13} parent=11 // pred_region
          _
        $region20: #{transformer_model_forward.13} parent=11 // pred_fallthru
          _
        // Predicated region
        $region21: #{transformer_model_forward.13} parent=11 // pred_check
          %p225 = pneg %p104
        $region22: #{transformer_model_forward.13} parent=11 // pred_check_branch
          %227 = sbr.rel (%p225) target = $region24
        $region23: #{transformer_model_forward.13} parent=11 // pred_region
          %229 = vsyncadd [#allocation5], 0
          %s230 = sshll.u32 %s3, 4
          %s231 = int_to_ptr.hbm [resolvable:$true] %s230
          %s232 = sshll.u32 [#allocation4], 4
          %s233 = int_to_ptr.vmem [resolvable:$true] %s232
          %238 = dma.hbm_to_vmem [thread:$0]  %s231, 4096, %s233, [#allocation5], 128, 128, 8
        $region24: #{transformer_model_forward.13} parent=11 // pred_fallthru
          _
        // Predicated region
        $region25: #{transformer_model_forward.13} parent=11 // pred_check
          %p239 = pneg %p125
        $region26: #{transformer_model_forward.13} parent=11 // pred_check_branch
          %241 = sbr.rel (%p239) target = $region28
        $region27: #{transformer_model_forward.13} parent=11 // pred_region
          _
        $region28: #{transformer_model_forward.13} parent=11 // pred_fallthru
          _
        // Predicated region
        $region29: #{transformer_model_forward.13} parent=11 // pred_check
          %p242 = pneg %p146
        $region30: #{transformer_model_forward.13} parent=11 // pred_check_branch
          %244 = sbr.rel (%p242) target = $region32
        $region31: #{transformer_model_forward.13} parent=11 // pred_region
          _
        $region32: #{transformer_model_forward.13} parent=11 // pred_fallthru
          _
        // Predicated region
        $region33: #{transformer_model_forward.13} parent=11 // pred_check
          %p245 = pneg %p167
        $region34: #{transformer_model_forward.13} parent=11 // pred_check_branch
          %247 = sbr.rel (%p245) target = $region36
        $region35: #{transformer_model_forward.13} parent=11 // pred_region
          _
        $region36: #{transformer_model_forward.13} parent=11 // pred_fallthru
          _
      $region12: #{transformer_model_forward.13} parent=5 // pred_fallthru
        _
      %p248 = scmp.lt.s32.totalorder %s15, 2
      // Predicated region
      $region37: #{transformer_model_forward.13} parent=5 // pred_check
        %p249 = pneg %p248
      $region38: #{transformer_model_forward.13} parent=5 // pred_check_branch
        %251 = sbr.rel (%p249) target = $region40
      $region39: #{transformer_model_forward.13} parent=5 // pred_region
        // Predicated region
        $region41: #{transformer_model_forward.13} parent=39 // pred_check
          %p252 = pneg %p35
        $region42: #{transformer_model_forward.13} parent=39 // pred_check_branch
          %254 = sbr.rel (%p252) target = $region44
        $region43: #{transformer_model_forward.13} parent=39 // pred_region
          %p255 = scmp.lt.s32.totalorder %s15, 1
          %s256 = scalar_select %p255, %s15, 1
          %s257 = smul.addr %s256, 8
          %s258 = scalar_lea.vmem %s0, %s257
        $region44: #{transformer_model_forward.13} parent=39 // pred_fallthru
          _
      $region40: #{transformer_model_forward.13} parent=5 // pred_fallthru
        _
      %p259 = scmp.le.s32.totalorder 1, %s15
      %p260 = scmp.lt.s32.totalorder %s15, 3
      %p261 = pnand %p259, %p260
      %p262 = pneg %p261
      // Predicated region
      $region45: #{transformer_model_forward.13} parent=5 // pred_check
        _
      $region46: #{transformer_model_forward.13} parent=5 // pred_check_branch
        %264 = sbr.rel (%p261) target = $region48
      $region47: #{transformer_model_forward.13} parent=5 // pred_region
        %s265 = ssub.s32 %s15, 1
        // Predicated region
        $region49: #{transformer_model_forward.13} parent=47 // pred_check
          %p266 = pneg %p62
        $region50: #{transformer_model_forward.13} parent=47 // pred_check_branch
          %268 = sbr.rel (%p266) target = $region52
        $region51: #{transformer_model_forward.13} parent=47 // pred_region
          %270 = dma.done [#allocation3], 4096
        $region52: #{transformer_model_forward.13} parent=47 // pred_fallthru
          _
        // Predicated region
        $region53: #{transformer_model_forward.13} parent=47 // pred_check
          %p271 = pneg %p104
        $region54: #{transformer_model_forward.13} parent=47 // pred_check_branch
          %273 = sbr.rel (%p271) target = $region56
        $region55: #{transformer_model_forward.13} parent=47 // pred_region
          %275 = dma.done [#allocation5], 4096
        $region56: #{transformer_model_forward.13} parent=47 // pred_fallthru
          _
        %p276 = scmp.lt.s32.totalorder %s20, 1
        %s277 = scalar_select %p276, %s20, 1
        %s278 = smul.addr %s277, 8
        %s279 = scalar_lea.vmem %s0, %s278
        %p280 = pneg %p41
        %p281 = pneg %p38
        %p282 = pneg %p62
        %p283 = pneg %p59
        %p284 = pneg %p83
        %p285 = pneg %p80
        %p286 = pneg %p104
        %p287 = pneg %p101
        %p288 = pneg %p125
        %p289 = pneg %p122
        %p290 = pneg %p146
        %p291 = pneg %p143
        %p292 = pneg %p167
        %p293 = pneg %p164
        %p294 = pneg %p193
        %p295 = pneg %p190
        %p296 = scmp.lt.s32.totalorder %s20, 1
        %s297 = scalar_select %p296, %s20, 1
        %s298 = smul.addr %s297, 8
        %s299 = scalar_lea.vmem %s7, %s298
        %p300 = scmp.lt.s32.totalorder %s20, 1
        %s301 = scalar_select %p300, %s20, 1
        %s302 = smul.addr %s301, 8
        %s303 = scalar_lea.vmem %s0, %s302
        %p304 = scmp.lt.s32.totalorder %s20, 1
        %s305 = scalar_select %p304, %s20, 1
        %s306 = smul.addr %s305, 8
        %s307 = scalar_lea.vmem %s7, %s306
        %v308 = vld [vmem:[%s303] sm:$0xff]
        %v309 = vld [vmem:[#allocation2] sm:$0xff]
        %v310 = vld [vmem:[#allocation2 + $0x8] sm:$0xff]
        %v311 = vld [vmem:[#allocation2 + $0x10] sm:$0xff]
        %v312 = vld [vmem:[#allocation2 + $0x18] sm:$0xff]
        %v313 = vld [vmem:[#allocation2 + $0x20] sm:$0xff]
        %v314 = vld [vmem:[#allocation2 + $0x28] sm:$0xff]
        %v315 = vld [vmem:[#allocation2 + $0x30] sm:$0xff]
        %v316 = vld [vmem:[#allocation2 + $0x38] sm:$0xff]
        %v317 = vld [vmem:[#allocation2 + $0x40] sm:$0xff]
        %v318 = vld [vmem:[#allocation2 + $0x48] sm:$0xff]
        %v319 = vld [vmem:[#allocation2 + $0x50] sm:$0xff]
        %v320 = vld [vmem:[#allocation2 + $0x58] sm:$0xff]
        %v321 = vld [vmem:[#allocation2 + $0x60] sm:$0xff]
        %v322 = vld [vmem:[#allocation2 + $0x68] sm:$0xff]
        %v323 = vld [vmem:[#allocation2 + $0x70] sm:$0xff]
        %v324 = vld [vmem:[#allocation2 + $0x78] sm:$0xff]
        %v325 = vld [vmem:[#allocation2 + $0x80] sm:$0xff]
        %v326 = vld [vmem:[#allocation2 + $0x88] sm:$0xff]
        %v327 = vld [vmem:[#allocation2 + $0x90] sm:$0xff]
        %v328 = vld [vmem:[#allocation2 + $0x98] sm:$0xff]
        %v329 = vld [vmem:[#allocation2 + $0xa0] sm:$0xff]
        %v330 = vld [vmem:[#allocation2 + $0xa8] sm:$0xff]
        %v331 = vld [vmem:[#allocation2 + $0xb0] sm:$0xff]
        %v332 = vld [vmem:[#allocation2 + $0xb8] sm:$0xff]
        %v333 = vld [vmem:[#allocation2 + $0xc0] sm:$0xff]
        %v334 = vld [vmem:[#allocation2 + $0xc8] sm:$0xff]
        %v335 = vld [vmem:[#allocation2 + $0xd0] sm:$0xff]
        %v336 = vld [vmem:[#allocation2 + $0xd8] sm:$0xff]
        %v337 = vld [vmem:[#allocation2 + $0xe0] sm:$0xff]
        %v338 = vld [vmem:[#allocation2 + $0xe8] sm:$0xff]
        %v339 = vld [vmem:[#allocation2 + $0xf0] sm:$0xff]
        %v340 = vld [vmem:[#allocation2 + $0xf8] sm:$0xff]
        %v341 = vld [vmem:[%s2] sm:$0x3]
        %v343 = vperm.slane %v341, 0
        %v344 = vperm.slane %v341, 1
        %v347 = vand.u32 %v339, 4294901760
        %348 = vmatpush.msra.mxu0 %v347
        %v349 = vand.u32 %v337, 4294901760
        %350 = vmatpush.msra.mxu0 %v349
        %v351 = vand.u32 %v335, 4294901760
        %352 = vmatpush.msra.mxu0 %v351
        %v353 = vand.u32 %v333, 4294901760
        %354 = vmatpush.msra.mxu0 %v353
        %v355 = vand.u32 %v331, 4294901760
        %356 = vmatpush.msra.mxu0 %v355
        %v357 = vand.u32 %v329, 4294901760
        %358 = vmatpush.msra.mxu0 %v357
        %v359 = vand.u32 %v327, 4294901760
        %360 = vmatpush.msra.mxu0 %v359
        %v361 = vand.u32 %v325, 4294901760
        %362 = vmatpush.msra.mxu0 %v361
        %v363 = vand.u32 %v323, 4294901760
        %364 = vmatpush.msra.mxu0 %v363
        %v365 = vand.u32 %v321, 4294901760
        %366 = vmatpush.msra.mxu0 %v365
        %v367 = vand.u32 %v319, 4294901760
        %368 = vmatpush.msra.mxu0 %v367
        %v369 = vand.u32 %v317, 4294901760
        %370 = vmatpush.msra.mxu0 %v369
        %v371 = vand.u32 %v315, 4294901760
        %372 = vmatpush.msra.mxu0 %v371
        %v373 = vand.u32 %v313, 4294901760
        %374 = vmatpush.msra.mxu0 %v373
        %v375 = vand.u32 %v311, 4294901760
        %376 = vmatpush.msra.mxu0 %v375
        %v377 = vand.u32 %v309, 4294901760
        %378 = vmatpush.msra.mxu0 %v377
        %v379 = vand.u32 %v308, 4294901760
        %v380 = vsub.f32 %v308, %v379
        %v381 = vand.u32 %v380, 4294901760
        %v382 = vsub.f32 %v380, %v381
        %v383 = vand.u32 %v382, 4294901760
        %384 = vmatmul.f32.gmra.mxu0 %v383
        %v385 = vpop.f32.mrf.mxu0
        %v386 = vadd.f32 %v343, %v385
        %387 = vdwg.mxu0
        %v388 = vand.u32 %v339, 4294901760
        %v389 = vsub.f32 %v339, %v388
        %v390 = vand.u32 %v389, 4294901760
        %v391 = vsub.f32 %v389, %v390
        %v392 = vand.u32 %v391, 4294901760
        %393 = vmatpush.msra.mxu0 %v392
        %v394 = vand.u32 %v337, 4294901760
        %v395 = vsub.f32 %v337, %v394
        %v396 = vand.u32 %v395, 4294901760
        %v397 = vsub.f32 %v395, %v396
        %v398 = vand.u32 %v397, 4294901760
        %399 = vmatpush.msra.mxu0 %v398
        %v400 = vand.u32 %v335, 4294901760
        %v401 = vsub.f32 %v335, %v400
        %v402 = vand.u32 %v401, 4294901760
        %v403 = vsub.f32 %v401, %v402
        %v404 = vand.u32 %v403, 4294901760
        %405 = vmatpush.msra.mxu0 %v404
        %v406 = vand.u32 %v333, 4294901760
        %v407 = vsub.f32 %v333, %v406
        %v408 = vand.u32 %v407, 4294901760
        %v409 = vsub.f32 %v407, %v408
        %v410 = vand.u32 %v409, 4294901760
        %411 = vmatpush.msra.mxu0 %v410
        %v412 = vand.u32 %v331, 4294901760
        %v413 = vsub.f32 %v331, %v412
        %v414 = vand.u32 %v413, 4294901760
        %v415 = vsub.f32 %v413, %v414
        %v416 = vand.u32 %v415, 4294901760
        %417 = vmatpush.msra.mxu0 %v416
        %v418 = vand.u32 %v329, 4294901760
        %v419 = vsub.f32 %v329, %v418
        %v420 = vand.u32 %v419, 4294901760
        %v421 = vsub.f32 %v419, %v420
        %v422 = vand.u32 %v421, 4294901760
        %423 = vmatpush.msra.mxu0 %v422
        %v424 = vand.u32 %v327, 4294901760
        %v425 = vsub.f32 %v327, %v424
        %v426 = vand.u32 %v425, 4294901760
        %v427 = vsub.f32 %v425, %v426
        %v428 = vand.u32 %v427, 4294901760
        %429 = vmatpush.msra.mxu0 %v428
        %v430 = vand.u32 %v325, 4294901760
        %v431 = vsub.f32 %v325, %v430
        %v432 = vand.u32 %v431, 4294901760
        %v433 = vsub.f32 %v431, %v432
        %v434 = vand.u32 %v433, 4294901760
        %435 = vmatpush.msra.mxu0 %v434
        %v436 = vand.u32 %v323, 4294901760
        %v437 = vsub.f32 %v323, %v436
        %v438 = vand.u32 %v437, 4294901760
        %v439 = vsub.f32 %v437, %v438
        %v440 = vand.u32 %v439, 4294901760
        %441 = vmatpush.msra.mxu0 %v440
        %v442 = vand.u32 %v321, 4294901760
        %v443 = vsub.f32 %v321, %v442
        %v444 = vand.u32 %v443, 4294901760
        %v445 = vsub.f32 %v443, %v444
        %v446 = vand.u32 %v445, 4294901760
        %447 = vmatpush.msra.mxu0 %v446
        %v448 = vand.u32 %v319, 4294901760
        %v449 = vsub.f32 %v319, %v448
        %v450 = vand.u32 %v449, 4294901760
        %v451 = vsub.f32 %v449, %v450
        %v452 = vand.u32 %v451, 4294901760
        %453 = vmatpush.msra.mxu0 %v452
        %v454 = vand.u32 %v317, 4294901760
        %v455 = vsub.f32 %v317, %v454
        %v456 = vand.u32 %v455, 4294901760
        %v457 = vsub.f32 %v455, %v456
        %v458 = vand.u32 %v457, 4294901760
        %459 = vmatpush.msra.mxu0 %v458
        %v460 = vand.u32 %v315, 4294901760
        %v461 = vsub.f32 %v315, %v460
        %v462 = vand.u32 %v461, 4294901760
        %v463 = vsub.f32 %v461, %v462
        %v464 = vand.u32 %v463, 4294901760
        %465 = vmatpush.msra.mxu0 %v464
        %v466 = vand.u32 %v313, 4294901760
        %v467 = vsub.f32 %v313, %v466
        %v468 = vand.u32 %v467, 4294901760
        %v469 = vsub.f32 %v467, %v468
        %v470 = vand.u32 %v469, 4294901760
        %471 = vmatpush.msra.mxu0 %v470
        %v472 = vand.u32 %v311, 4294901760
        %v473 = vsub.f32 %v311, %v472
        %v474 = vand.u32 %v473, 4294901760
        %v475 = vsub.f32 %v473, %v474
        %v476 = vand.u32 %v475, 4294901760
        %477 = vmatpush.msra.mxu0 %v476
        %v478 = vand.u32 %v309, 4294901760
        %v479 = vsub.f32 %v309, %v478
        %v480 = vand.u32 %v479, 4294901760
        %v481 = vsub.f32 %v479, %v480
        %v482 = vand.u32 %v481, 4294901760
        %483 = vmatpush.msra.mxu0 %v482
        %v484 = vand.u32 %v308, 4294901760
        %485 = vmatmul.f32.gmra.mxu0 %v484
        %v486 = vpop.f32.mrf.mxu0
        %v487 = vadd.f32 %v386, %v486
        %488 = vdwg.mxu0
        %v489 = vand.u32 %v339, 4294901760
        %v490 = vsub.f32 %v339, %v489
        %491 = vmatpush.msra.mxu0 %v490
        %v492 = vand.u32 %v337, 4294901760
        %v493 = vsub.f32 %v337, %v492
        %494 = vmatpush.msra.mxu0 %v493
        %v495 = vand.u32 %v335, 4294901760
        %v496 = vsub.f32 %v335, %v495
        %497 = vmatpush.msra.mxu0 %v496
        %v498 = vand.u32 %v333, 4294901760
        %v499 = vsub.f32 %v333, %v498
        %500 = vmatpush.msra.mxu0 %v499
        %v501 = vand.u32 %v331, 4294901760
        %v502 = vsub.f32 %v331, %v501
        %503 = vmatpush.msra.mxu0 %v502
        %v504 = vand.u32 %v329, 4294901760
        %v505 = vsub.f32 %v329, %v504
        %506 = vmatpush.msra.mxu0 %v505
        %v507 = vand.u32 %v327, 4294901760
        %v508 = vsub.f32 %v327, %v507
        %509 = vmatpush.msra.mxu0 %v508
        %v510 = vand.u32 %v325, 4294901760
        %v511 = vsub.f32 %v325, %v510
        %512 = vmatpush.msra.mxu0 %v511
        %v513 = vand.u32 %v323, 4294901760
        %v514 = vsub.f32 %v323, %v513
        %515 = vmatpush.msra.mxu0 %v514
        %v516 = vand.u32 %v321, 4294901760
        %v517 = vsub.f32 %v321, %v516
        %518 = vmatpush.msra.mxu0 %v517
        %v519 = vand.u32 %v319, 4294901760
        %v520 = vsub.f32 %v319, %v519
        %521 = vmatpush.msra.mxu0 %v520
        %v522 = vand.u32 %v317, 4294901760
        %v523 = vsub.f32 %v317, %v522
        %524 = vmatpush.msra.mxu0 %v523
        %v525 = vand.u32 %v315, 4294901760
        %v526 = vsub.f32 %v315, %v525
        %527 = vmatpush.msra.mxu0 %v526
        %v528 = vand.u32 %v313, 4294901760
        %v529 = vsub.f32 %v313, %v528
        %530 = vmatpush.msra.mxu0 %v529
        %v531 = vand.u32 %v311, 4294901760
        %v532 = vsub.f32 %v311, %v531
        %533 = vmatpush.msra.mxu0 %v532
        %v534 = vand.u32 %v309, 4294901760
        %v535 = vsub.f32 %v309, %v534
        %536 = vmatpush.msra.mxu0 %v535
        %v537 = vand.u32 %v308, 4294901760
        %v538 = vsub.f32 %v308, %v537
        %539 = vmatmul.f32.gmra.mxu0 %v538
        %v540 = vpop.f32.mrf.mxu0
        %v541 = vadd.f32 %v487, %v540
        %542 = vdwg.mxu0
        %v543 = vand.u32 %v339, 4294901760
        %544 = vmatpush.msra.mxu0 %v543
        %v545 = vand.u32 %v337, 4294901760
        %546 = vmatpush.msra.mxu0 %v545
        %v547 = vand.u32 %v335, 4294901760
        %548 = vmatpush.msra.mxu0 %v547
        %v549 = vand.u32 %v333, 4294901760
        %550 = vmatpush.msra.mxu0 %v549
        %v551 = vand.u32 %v331, 4294901760
        %552 = vmatpush.msra.mxu0 %v551
        %v553 = vand.u32 %v329, 4294901760
        %554 = vmatpush.msra.mxu0 %v553
        %v555 = vand.u32 %v327, 4294901760
        %556 = vmatpush.msra.mxu0 %v555
        %v557 = vand.u32 %v325, 4294901760
        %558 = vmatpush.msra.mxu0 %v557
        %v559 = vand.u32 %v323, 4294901760
        %560 = vmatpush.msra.mxu0 %v559
        %v561 = vand.u32 %v321, 4294901760
        %562 = vmatpush.msra.mxu0 %v561
        %v563 = vand.u32 %v319, 4294901760
        %564 = vmatpush.msra.mxu0 %v563
        %v565 = vand.u32 %v317, 4294901760
        %566 = vmatpush.msra.mxu0 %v565
        %v567 = vand.u32 %v315, 4294901760
        %568 = vmatpush.msra.mxu0 %v567
        %v569 = vand.u32 %v313, 4294901760
        %570 = vmatpush.msra.mxu0 %v569
        %v571 = vand.u32 %v311, 4294901760
        %572 = vmatpush.msra.mxu0 %v571
        %v573 = vand.u32 %v309, 4294901760
        %574 = vmatpush.msra.mxu0 %v573
        %v575 = vand.u32 %v308, 4294901760
        %v576 = vsub.f32 %v308, %v575
        %v577 = vand.u32 %v576, 4294901760
        %578 = vmatmul.f32.gmra.mxu0 %v577
        %v579 = vpop.f32.mrf.mxu0
        %v580 = vadd.f32 %v541, %v579
        %581 = vdwg.mxu0
        %v582 = vand.u32 %v339, 4294901760
        %v583 = vsub.f32 %v339, %v582
        %v584 = vand.u32 %v583, 4294901760
        %585 = vmatpush.msra.mxu0 %v584
        %v586 = vand.u32 %v337, 4294901760
        %v587 = vsub.f32 %v337, %v586
        %v588 = vand.u32 %v587, 4294901760
        %589 = vmatpush.msra.mxu0 %v588
        %v590 = vand.u32 %v335, 4294901760
        %v591 = vsub.f32 %v335, %v590
        %v592 = vand.u32 %v591, 4294901760
        %593 = vmatpush.msra.mxu0 %v592
        %v594 = vand.u32 %v333, 4294901760
        %v595 = vsub.f32 %v333, %v594
        %v596 = vand.u32 %v595, 4294901760
        %597 = vmatpush.msra.mxu0 %v596
        %v598 = vand.u32 %v331, 4294901760
        %v599 = vsub.f32 %v331, %v598
        %v600 = vand.u32 %v599, 4294901760
        %601 = vmatpush.msra.mxu0 %v600
        %v602 = vand.u32 %v329, 4294901760
        %v603 = vsub.f32 %v329, %v602
        %v604 = vand.u32 %v603, 4294901760
        %605 = vmatpush.msra.mxu0 %v604
        %v606 = vand.u32 %v327, 4294901760
        %v607 = vsub.f32 %v327, %v606
        %v608 = vand.u32 %v607, 4294901760
        %609 = vmatpush.msra.mxu0 %v608
        %v610 = vand.u32 %v325, 4294901760
        %v611 = vsub.f32 %v325, %v610
        %v612 = vand.u32 %v611, 4294901760
        %613 = vmatpush.msra.mxu0 %v612
        %v614 = vand.u32 %v323, 4294901760
        %v615 = vsub.f32 %v323, %v614
        %v616 = vand.u32 %v615, 4294901760
        %617 = vmatpush.msra.mxu0 %v616
        %v618 = vand.u32 %v321, 4294901760
        %v619 = vsub.f32 %v321, %v618
        %v620 = vand.u32 %v619, 4294901760
        %621 = vmatpush.msra.mxu0 %v620
        %v622 = vand.u32 %v319, 4294901760
        %v623 = vsub.f32 %v319, %v622
        %v624 = vand.u32 %v623, 4294901760
        %625 = vmatpush.msra.mxu0 %v624
        %v626 = vand.u32 %v317, 4294901760
        %v627 = vsub.f32 %v317, %v626
        %v628 = vand.u32 %v627, 4294901760
        %629 = vmatpush.msra.mxu0 %v628
        %v630 = vand.u32 %v315, 4294901760
        %v631 = vsub.f32 %v315, %v630
        %v632 = vand.u32 %v631, 4294901760
        %633 = vmatpush.msra.mxu0 %v632
        %v634 = vand.u32 %v313, 4294901760
        %v635 = vsub.f32 %v313, %v634
        %v636 = vand.u32 %v635, 4294901760
        %637 = vmatpush.msra.mxu0 %v636
        %v638 = vand.u32 %v311, 4294901760
        %v639 = vsub.f32 %v311, %v638
        %v640 = vand.u32 %v639, 4294901760
        %641 = vmatpush.msra.mxu0 %v640
        %v642 = vand.u32 %v309, 4294901760
        %v643 = vsub.f32 %v309, %v642
        %v644 = vand.u32 %v643, 4294901760
        %645 = vmatpush.msra.mxu0 %v644
        %v646 = vand.u32 %v308, 4294901760
        %647 = vmatmul.f32.gmra.mxu0 %v646
        %v648 = vpop.f32.mrf.mxu0
        %v649 = vadd.f32 %v580, %v648
        %650 = vdwg.mxu0
        %v651 = vand.u32 %v339, 4294901760
        %652 = vmatpush.msra.mxu0 %v651
        %v653 = vand.u32 %v337, 4294901760
        %654 = vmatpush.msra.mxu0 %v653
        %v655 = vand.u32 %v335, 4294901760
        %656 = vmatpush.msra.mxu0 %v655
        %v657 = vand.u32 %v333, 4294901760
        %658 = vmatpush.msra.mxu0 %v657
        %v659 = vand.u32 %v331, 4294901760
        %660 = vmatpush.msra.mxu0 %v659
        %v661 = vand.u32 %v329, 4294901760
        %662 = vmatpush.msra.mxu0 %v661
        %v663 = vand.u32 %v327, 4294901760
        %664 = vmatpush.msra.mxu0 %v663
        %v665 = vand.u32 %v325, 4294901760
        %666 = vmatpush.msra.mxu0 %v665
        %v667 = vand.u32 %v323, 4294901760
        %668 = vmatpush.msra.mxu0 %v667
        %v669 = vand.u32 %v321, 4294901760
        %670 = vmatpush.msra.mxu0 %v669
        %v671 = vand.u32 %v319, 4294901760
        %672 = vmatpush.msra.mxu0 %v671
        %v673 = vand.u32 %v317, 4294901760
        %674 = vmatpush.msra.mxu0 %v673
        %v675 = vand.u32 %v315, 4294901760
        %676 = vmatpush.msra.mxu0 %v675
        %v677 = vand.u32 %v313, 4294901760
        %678 = vmatpush.msra.mxu0 %v677
        %v679 = vand.u32 %v311, 4294901760
        %680 = vmatpush.msra.mxu0 %v679
        %v681 = vand.u32 %v309, 4294901760
        %682 = vmatpush.msra.mxu0 %v681
        %v683 = vand.u32 %v308, 4294901760
        %684 = vmatmul.f32.gmra.mxu0 %v683
        %v685 = vpop.f32.mrf.mxu0
        %v686 = vadd.f32 %v649, %v685
        %687 = vdwg.mxu0
        %v688 = vand.u32 %v340, 4294901760
        %689 = vmatpush.msra.mxu0 %v688
        %v690 = vand.u32 %v338, 4294901760
        %691 = vmatpush.msra.mxu0 %v690
        %v692 = vand.u32 %v336, 4294901760
        %693 = vmatpush.msra.mxu0 %v692
        %v694 = vand.u32 %v334, 4294901760
        %695 = vmatpush.msra.mxu0 %v694
        %v696 = vand.u32 %v332, 4294901760
        %697 = vmatpush.msra.mxu0 %v696
        %v698 = vand.u32 %v330, 4294901760
        %699 = vmatpush.msra.mxu0 %v698
        %v700 = vand.u32 %v328, 4294901760
        %701 = vmatpush.msra.mxu0 %v700
        %v702 = vand.u32 %v326, 4294901760
        %703 = vmatpush.msra.mxu0 %v702
        %v704 = vand.u32 %v324, 4294901760
        %705 = vmatpush.msra.mxu0 %v704
        %v706 = vand.u32 %v322, 4294901760
        %707 = vmatpush.msra.mxu0 %v706
        %v708 = vand.u32 %v320, 4294901760
        %709 = vmatpush.msra.mxu0 %v708
        %v710 = vand.u32 %v318, 4294901760
        %711 = vmatpush.msra.mxu0 %v710
        %v712 = vand.u32 %v316, 4294901760
        %713 = vmatpush.msra.mxu0 %v712
        %v714 = vand.u32 %v314, 4294901760
        %715 = vmatpush.msra.mxu0 %v714
        %v716 = vand.u32 %v312, 4294901760
        %717 = vmatpush.msra.mxu0 %v716
        %v718 = vand.u32 %v310, 4294901760
        %719 = vmatpush.msra.mxu0 %v718
        %v720 = vand.u32 %v308, 4294901760
        %v721 = vsub.f32 %v308, %v720
        %v722 = vand.u32 %v721, 4294901760
        %v723 = vsub.f32 %v721, %v722
        %v724 = vand.u32 %v723, 4294901760
        %725 = vmatmul.f32.gmra.mxu0 %v724
        %v726 = vpop.f32.mrf.mxu0
        %v727 = vadd.f32 %v344, %v726
        %728 = vdwg.mxu0
        %v729 = vand.u32 %v340, 4294901760
        %v730 = vsub.f32 %v340, %v729
        %v731 = vand.u32 %v730, 4294901760
        %v732 = vsub.f32 %v730, %v731
        %v733 = vand.u32 %v732, 4294901760
        %734 = vmatpush.msra.mxu0 %v733
        %v735 = vand.u32 %v338, 4294901760
        %v736 = vsub.f32 %v338, %v735
        %v737 = vand.u32 %v736, 4294901760
        %v738 = vsub.f32 %v736, %v737
        %v739 = vand.u32 %v738, 4294901760
        %740 = vmatpush.msra.mxu0 %v739
        %v741 = vand.u32 %v336, 4294901760
        %v742 = vsub.f32 %v336, %v741
        %v743 = vand.u32 %v742, 4294901760
        %v744 = vsub.f32 %v742, %v743
        %v745 = vand.u32 %v744, 4294901760
        %746 = vmatpush.msra.mxu0 %v745
        %v747 = vand.u32 %v334, 4294901760
        %v748 = vsub.f32 %v334, %v747
        %v749 = vand.u32 %v748, 4294901760
        %v750 = vsub.f32 %v748, %v749
        %v751 = vand.u32 %v750, 4294901760
        %752 = vmatpush.msra.mxu0 %v751
        %v753 = vand.u32 %v332, 4294901760
        %v754 = vsub.f32 %v332, %v753
        %v755 = vand.u32 %v754, 4294901760
        %v756 = vsub.f32 %v754, %v755
        %v757 = vand.u32 %v756, 4294901760
        %758 = vmatpush.msra.mxu0 %v757
        %v759 = vand.u32 %v330, 4294901760
        %v760 = vsub.f32 %v330, %v759
        %v761 = vand.u32 %v760, 4294901760
        %v762 = vsub.f32 %v760, %v761
        %v763 = vand.u32 %v762, 4294901760
        %764 = vmatpush.msra.mxu0 %v763
        %v765 = vand.u32 %v328, 4294901760
        %v766 = vsub.f32 %v328, %v765
        %v767 = vand.u32 %v766, 4294901760
        %v768 = vsub.f32 %v766, %v767
        %v769 = vand.u32 %v768, 4294901760
        %770 = vmatpush.msra.mxu0 %v769
        %v771 = vand.u32 %v326, 4294901760
        %v772 = vsub.f32 %v326, %v771
        %v773 = vand.u32 %v772, 4294901760
        %v774 = vsub.f32 %v772, %v773
        %v775 = vand.u32 %v774, 4294901760
        %776 = vmatpush.msra.mxu0 %v775
        %v777 = vand.u32 %v324, 4294901760
        %v778 = vsub.f32 %v324, %v777
        %v779 = vand.u32 %v778, 4294901760
        %v780 = vsub.f32 %v778, %v779
        %v781 = vand.u32 %v780, 4294901760
        %782 = vmatpush.msra.mxu0 %v781
        %v783 = vand.u32 %v322, 4294901760
        %v784 = vsub.f32 %v322, %v783
        %v785 = vand.u32 %v784, 4294901760
        %v786 = vsub.f32 %v784, %v785
        %v787 = vand.u32 %v786, 4294901760
        %788 = vmatpush.msra.mxu0 %v787
        %v789 = vand.u32 %v320, 4294901760
        %v790 = vsub.f32 %v320, %v789
        %v791 = vand.u32 %v790, 4294901760
        %v792 = vsub.f32 %v790, %v791
        %v793 = vand.u32 %v792, 4294901760
        %794 = vmatpush.msra.mxu0 %v793
        %v795 = vand.u32 %v318, 4294901760
        %v796 = vsub.f32 %v318, %v795
        %v797 = vand.u32 %v796, 4294901760
        %v798 = vsub.f32 %v796, %v797
        %v799 = vand.u32 %v798, 4294901760
        %800 = vmatpush.msra.mxu0 %v799
        %v801 = vand.u32 %v316, 4294901760
        %v802 = vsub.f32 %v316, %v801
        %v803 = vand.u32 %v802, 4294901760
        %v804 = vsub.f32 %v802, %v803
        %v805 = vand.u32 %v804, 4294901760
        %806 = vmatpush.msra.mxu0 %v805
        %v807 = vand.u32 %v314, 4294901760
        %v808 = vsub.f32 %v314, %v807
        %v809 = vand.u32 %v808, 4294901760
        %v810 = vsub.f32 %v808, %v809
        %v811 = vand.u32 %v810, 4294901760
        %812 = vmatpush.msra.mxu0 %v811
        %v813 = vand.u32 %v312, 4294901760
        %v814 = vsub.f32 %v312, %v813
        %v815 = vand.u32 %v814, 4294901760
        %v816 = vsub.f32 %v814, %v815
        %v817 = vand.u32 %v816, 4294901760
        %818 = vmatpush.msra.mxu0 %v817
        %v819 = vand.u32 %v310, 4294901760
        %v820 = vsub.f32 %v310, %v819
        %v821 = vand.u32 %v820, 4294901760
        %v822 = vsub.f32 %v820, %v821
        %v823 = vand.u32 %v822, 4294901760
        %824 = vmatpush.msra.mxu0 %v823
        %v825 = vand.u32 %v308, 4294901760
        %826 = vmatmul.f32.gmra.mxu0 %v825
        %v827 = vpop.f32.mrf.mxu0
        %v828 = vadd.f32 %v727, %v827
        %829 = vdwg.mxu0
        %v830 = vand.u32 %v340, 4294901760
        %v831 = vsub.f32 %v340, %v830
        %832 = vmatpush.msra.mxu0 %v831
        %v833 = vand.u32 %v338, 4294901760
        %v834 = vsub.f32 %v338, %v833
        %835 = vmatpush.msra.mxu0 %v834
        %v836 = vand.u32 %v336, 4294901760
        %v837 = vsub.f32 %v336, %v836
        %838 = vmatpush.msra.mxu0 %v837
        %v839 = vand.u32 %v334, 4294901760
        %v840 = vsub.f32 %v334, %v839
        %841 = vmatpush.msra.mxu0 %v840
        %v842 = vand.u32 %v332, 4294901760
        %v843 = vsub.f32 %v332, %v842
        %844 = vmatpush.msra.mxu0 %v843
        %v845 = vand.u32 %v330, 4294901760
        %v846 = vsub.f32 %v330, %v845
        %847 = vmatpush.msra.mxu0 %v846
        %v848 = vand.u32 %v328, 4294901760
        %v849 = vsub.f32 %v328, %v848
        %850 = vmatpush.msra.mxu0 %v849
        %v851 = vand.u32 %v326, 4294901760
        %v852 = vsub.f32 %v326, %v851
        %853 = vmatpush.msra.mxu0 %v852
        %v854 = vand.u32 %v324, 4294901760
        %v855 = vsub.f32 %v324, %v854
        %856 = vmatpush.msra.mxu0 %v855
        %v857 = vand.u32 %v322, 4294901760
        %v858 = vsub.f32 %v322, %v857
        %859 = vmatpush.msra.mxu0 %v858
        %v860 = vand.u32 %v320, 4294901760
        %v861 = vsub.f32 %v320, %v860
        %862 = vmatpush.msra.mxu0 %v861
        %v863 = vand.u32 %v318, 4294901760
        %v864 = vsub.f32 %v318, %v863
        %865 = vmatpush.msra.mxu0 %v864
        %v866 = vand.u32 %v316, 4294901760
        %v867 = vsub.f32 %v316, %v866
        %868 = vmatpush.msra.mxu0 %v867
        %v869 = vand.u32 %v314, 4294901760
        %v870 = vsub.f32 %v314, %v869
        %871 = vmatpush.msra.mxu0 %v870
        %v872 = vand.u32 %v312, 4294901760
        %v873 = vsub.f32 %v312, %v872
        %874 = vmatpush.msra.mxu0 %v873
        %v875 = vand.u32 %v310, 4294901760
        %v876 = vsub.f32 %v310, %v875
        %877 = vmatpush.msra.mxu0 %v876
        %v878 = vand.u32 %v308, 4294901760
        %v879 = vsub.f32 %v308, %v878
        %880 = vmatmul.f32.gmra.mxu0 %v879
        %v881 = vpop.f32.mrf.mxu0
        %v882 = vadd.f32 %v828, %v881
        %883 = vdwg.mxu0
        %v884 = vand.u32 %v340, 4294901760
        %885 = vmatpush.msra.mxu0 %v884
        %v886 = vand.u32 %v338, 4294901760
        %887 = vmatpush.msra.mxu0 %v886
        %v888 = vand.u32 %v336, 4294901760
        %889 = vmatpush.msra.mxu0 %v888
        %v890 = vand.u32 %v334, 4294901760
        %891 = vmatpush.msra.mxu0 %v890
        %v892 = vand.u32 %v332, 4294901760
        %893 = vmatpush.msra.mxu0 %v892
        %v894 = vand.u32 %v330, 4294901760
        %895 = vmatpush.msra.mxu0 %v894
        %v896 = vand.u32 %v328, 4294901760
        %897 = vmatpush.msra.mxu0 %v896
        %v898 = vand.u32 %v326, 4294901760
        %899 = vmatpush.msra.mxu0 %v898
        %v900 = vand.u32 %v324, 4294901760
        %901 = vmatpush.msra.mxu0 %v900
        %v902 = vand.u32 %v322, 4294901760
        %903 = vmatpush.msra.mxu0 %v902
        %v904 = vand.u32 %v320, 4294901760
        %905 = vmatpush.msra.mxu0 %v904
        %v906 = vand.u32 %v318, 4294901760
        %907 = vmatpush.msra.mxu0 %v906
        %v908 = vand.u32 %v316, 4294901760
        %909 = vmatpush.msra.mxu0 %v908
        %v910 = vand.u32 %v314, 4294901760
        %911 = vmatpush.msra.mxu0 %v910
        %v912 = vand.u32 %v312, 4294901760
        %913 = vmatpush.msra.mxu0 %v912
        %v914 = vand.u32 %v310, 4294901760
        %915 = vmatpush.msra.mxu0 %v914
        %v916 = vand.u32 %v308, 4294901760
        %v917 = vsub.f32 %v308, %v916
        %v918 = vand.u32 %v917, 4294901760
        %919 = vmatmul.f32.gmra.mxu0 %v918
        %v920 = vpop.f32.mrf.mxu0
        %v921 = vadd.f32 %v882, %v920
        %922 = vdwg.mxu0
        %v923 = vand.u32 %v340, 4294901760
        %v924 = vsub.f32 %v340, %v923
        %v925 = vand.u32 %v924, 4294901760
        %926 = vmatpush.msra.mxu0 %v925
        %v927 = vand.u32 %v338, 4294901760
        %v928 = vsub.f32 %v338, %v927
        %v929 = vand.u32 %v928, 4294901760
        %930 = vmatpush.msra.mxu0 %v929
        %v931 = vand.u32 %v336, 4294901760
        %v932 = vsub.f32 %v336, %v931
        %v933 = vand.u32 %v932, 4294901760
        %934 = vmatpush.msra.mxu0 %v933
        %v935 = vand.u32 %v334, 4294901760
        %v936 = vsub.f32 %v334, %v935
        %v937 = vand.u32 %v936, 4294901760
        %938 = vmatpush.msra.mxu0 %v937
        %v939 = vand.u32 %v332, 4294901760
        %v940 = vsub.f32 %v332, %v939
        %v941 = vand.u32 %v940, 4294901760
        %942 = vmatpush.msra.mxu0 %v941
        %v943 = vand.u32 %v330, 4294901760
        %v944 = vsub.f32 %v330, %v943
        %v945 = vand.u32 %v944, 4294901760
        %946 = vmatpush.msra.mxu0 %v945
        %v947 = vand.u32 %v328, 4294901760
        %v948 = vsub.f32 %v328, %v947
        %v949 = vand.u32 %v948, 4294901760
        %950 = vmatpush.msra.mxu0 %v949
        %v951 = vand.u32 %v326, 4294901760
        %v952 = vsub.f32 %v326, %v951
        %v953 = vand.u32 %v952, 4294901760
        %954 = vmatpush.msra.mxu0 %v953
        %v955 = vand.u32 %v324, 4294901760
        %v956 = vsub.f32 %v324, %v955
        %v957 = vand.u32 %v956, 4294901760
        %958 = vmatpush.msra.mxu0 %v957
        %v959 = vand.u32 %v322, 4294901760
        %v960 = vsub.f32 %v322, %v959
        %v961 = vand.u32 %v960, 4294901760
        %962 = vmatpush.msra.mxu0 %v961
        %v963 = vand.u32 %v320, 4294901760
        %v964 = vsub.f32 %v320, %v963
        %v965 = vand.u32 %v964, 4294901760
        %966 = vmatpush.msra.mxu0 %v965
        %v967 = vand.u32 %v318, 4294901760
        %v968 = vsub.f32 %v318, %v967
        %v969 = vand.u32 %v968, 4294901760
        %970 = vmatpush.msra.mxu0 %v969
        %v971 = vand.u32 %v316, 4294901760
        %v972 = vsub.f32 %v316, %v971
        %v973 = vand.u32 %v972, 4294901760
        %974 = vmatpush.msra.mxu0 %v973
        %v975 = vand.u32 %v314, 4294901760
        %v976 = vsub.f32 %v314, %v975
        %v977 = vand.u32 %v976, 4294901760
        %978 = vmatpush.msra.mxu0 %v977
        %v979 = vand.u32 %v312, 4294901760
        %v980 = vsub.f32 %v312, %v979
        %v981 = vand.u32 %v980, 4294901760
        %982 = vmatpush.msra.mxu0 %v981
        %v983 = vand.u32 %v310, 4294901760
        %v984 = vsub.f32 %v310, %v983
        %v985 = vand.u32 %v984, 4294901760
        %986 = vmatpush.msra.mxu0 %v985
        %v987 = vand.u32 %v308, 4294901760
        %988 = vmatmul.f32.gmra.mxu0 %v987
        %v989 = vpop.f32.mrf.mxu0
        %v990 = vadd.f32 %v921, %v989
        %991 = vdwg.mxu0
        %v992 = vand.u32 %v340, 4294901760
        %993 = vmatpush.msra.mxu0 %v992
        %v994 = vand.u32 %v338, 4294901760
        %995 = vmatpush.msra.mxu0 %v994
        %v996 = vand.u32 %v336, 4294901760
        %997 = vmatpush.msra.mxu0 %v996
        %v998 = vand.u32 %v334, 4294901760
        %999 = vmatpush.msra.mxu0 %v998
        %v1000 = vand.u32 %v332, 4294901760
        %1001 = vmatpush.msra.mxu0 %v1000
        %v1002 = vand.u32 %v330, 4294901760
        %1003 = vmatpush.msra.mxu0 %v1002
        %v1004 = vand.u32 %v328, 4294901760
        %1005 = vmatpush.msra.mxu0 %v1004
        %v1006 = vand.u32 %v326, 4294901760
        %1007 = vmatpush.msra.mxu0 %v1006
        %v1008 = vand.u32 %v324, 4294901760
        %1009 = vmatpush.msra.mxu0 %v1008
        %v1010 = vand.u32 %v322, 4294901760
        %1011 = vmatpush.msra.mxu0 %v1010
        %v1012 = vand.u32 %v320, 4294901760
        %1013 = vmatpush.msra.mxu0 %v1012
        %v1014 = vand.u32 %v318, 4294901760
        %1015 = vmatpush.msra.mxu0 %v1014
        %v1016 = vand.u32 %v316, 4294901760
        %1017 = vmatpush.msra.mxu0 %v1016
        %v1018 = vand.u32 %v314, 4294901760
        %1019 = vmatpush.msra.mxu0 %v1018
        %v1020 = vand.u32 %v312, 4294901760
        %1021 = vmatpush.msra.mxu0 %v1020
        %v1022 = vand.u32 %v310, 4294901760
        %1023 = vmatpush.msra.mxu0 %v1022
        %v1024 = vand.u32 %v308, 4294901760
        %1025 = vmatmul.f32.gmra.mxu0 %v1024
        %v1026 = vpop.f32.mrf.mxu0
        %v1027 = vadd.f32 %v990, %v1026
        %1028 = vdwg.mxu0
        %v1029 = vmax.f32 %v686, 0.0
        %v1030 = vmax.f32 %v1027, 0.0
        %v1031 = vld [vmem:[#allocation4] sm:$0xff]
        %v1032 = vld [vmem:[#allocation4 + $0x8] sm:$0xff]
        %v1033 = vld [vmem:[#allocation4 + $0x10] sm:$0xff]
        %v1034 = vld [vmem:[#allocation4 + $0x18] sm:$0xff]
        %v1035 = vld [vmem:[#allocation4 + $0x20] sm:$0xff]
        %v1036 = vld [vmem:[#allocation4 + $0x28] sm:$0xff]
        %v1037 = vld [vmem:[#allocation4 + $0x30] sm:$0xff]
        %v1038 = vld [vmem:[#allocation4 + $0x38] sm:$0xff]
        %v1039 = vld [vmem:[#allocation4 + $0x40] sm:$0xff]
        %v1040 = vld [vmem:[#allocation4 + $0x48] sm:$0xff]
        %v1041 = vld [vmem:[#allocation4 + $0x50] sm:$0xff]
        %v1042 = vld [vmem:[#allocation4 + $0x58] sm:$0xff]
        %v1043 = vld [vmem:[#allocation4 + $0x60] sm:$0xff]
        %v1044 = vld [vmem:[#allocation4 + $0x68] sm:$0xff]
        %v1045 = vld [vmem:[#allocation4 + $0x70] sm:$0xff]
        %v1046 = vld [vmem:[#allocation4 + $0x78] sm:$0xff]
        %v1047 = vld [vmem:[#allocation4 + $0x80] sm:$0xff]
        %v1048 = vld [vmem:[#allocation4 + $0x88] sm:$0xff]
        %v1049 = vld [vmem:[#allocation4 + $0x90] sm:$0xff]
        %v1050 = vld [vmem:[#allocation4 + $0x98] sm:$0xff]
        %v1051 = vld [vmem:[#allocation4 + $0xa0] sm:$0xff]
        %v1052 = vld [vmem:[#allocation4 + $0xa8] sm:$0xff]
        %v1053 = vld [vmem:[#allocation4 + $0xb0] sm:$0xff]
        %v1054 = vld [vmem:[#allocation4 + $0xb8] sm:$0xff]
        %v1055 = vld [vmem:[#allocation4 + $0xc0] sm:$0xff]
        %v1056 = vld [vmem:[#allocation4 + $0xc8] sm:$0xff]
        %v1057 = vld [vmem:[#allocation4 + $0xd0] sm:$0xff]
        %v1058 = vld [vmem:[#allocation4 + $0xd8] sm:$0xff]
        %v1059 = vld [vmem:[#allocation4 + $0xe0] sm:$0xff]
        %v1060 = vld [vmem:[#allocation4 + $0xe8] sm:$0xff]
        %v1061 = vld [vmem:[#allocation4 + $0xf0] sm:$0xff]
        %v1062 = vld [vmem:[#allocation4 + $0xf8] sm:$0xff]
        %v1063 = vld [vmem:[%s4] sm:$0x1]
        %v1065 = vperm.slane %v1063, 0
        %v1067 = vand.u32 %v1046, 4294901760
        %1068 = vmatpush.msra.mxu0 %v1067
        %v1069 = vand.u32 %v1045, 4294901760
        %1070 = vmatpush.msra.mxu0 %v1069
        %v1071 = vand.u32 %v1044, 4294901760
        %1072 = vmatpush.msra.mxu0 %v1071
        %v1073 = vand.u32 %v1043, 4294901760
        %1074 = vmatpush.msra.mxu0 %v1073
        %v1075 = vand.u32 %v1042, 4294901760
        %1076 = vmatpush.msra.mxu0 %v1075
        %v1077 = vand.u32 %v1041, 4294901760
        %1078 = vmatpush.msra.mxu0 %v1077
        %v1079 = vand.u32 %v1040, 4294901760
        %1080 = vmatpush.msra.mxu0 %v1079
        %v1081 = vand.u32 %v1039, 4294901760
        %1082 = vmatpush.msra.mxu0 %v1081
        %v1083 = vand.u32 %v1038, 4294901760
        %1084 = vmatpush.msra.mxu0 %v1083
        %v1085 = vand.u32 %v1037, 4294901760
        %1086 = vmatpush.msra.mxu0 %v1085
        %v1087 = vand.u32 %v1036, 4294901760
        %1088 = vmatpush.msra.mxu0 %v1087
        %v1089 = vand.u32 %v1035, 4294901760
        %1090 = vmatpush.msra.mxu0 %v1089
        %v1091 = vand.u32 %v1034, 4294901760
        %1092 = vmatpush.msra.mxu0 %v1091
        %v1093 = vand.u32 %v1033, 4294901760
        %1094 = vmatpush.msra.mxu0 %v1093
        %v1095 = vand.u32 %v1032, 4294901760
        %1096 = vmatpush.msra.mxu0 %v1095
        %v1097 = vand.u32 %v1031, 4294901760
        %1098 = vmatpush.msra.mxu0 %v1097
        %v1099 = vand.u32 %v1029, 4294901760
        %v1100 = vsub.f32 %v1029, %v1099
        %v1101 = vand.u32 %v1100, 4294901760
        %v1102 = vsub.f32 %v1100, %v1101
        %v1103 = vand.u32 %v1102, 4294901760
        %1104 = vmatmul.f32.gmra.mxu0 %v1103
        %v1105 = vpop.f32.mrf.mxu0
        %v1106 = vadd.f32 %v1065, %v1105
        %1107 = vdwg.mxu0
        %v1108 = vand.u32 %v1046, 4294901760
        %v1109 = vsub.f32 %v1046, %v1108
        %v1110 = vand.u32 %v1109, 4294901760
        %v1111 = vsub.f32 %v1109, %v1110
        %v1112 = vand.u32 %v1111, 4294901760
        %1113 = vmatpush.msra.mxu0 %v1112
        %v1114 = vand.u32 %v1045, 4294901760
        %v1115 = vsub.f32 %v1045, %v1114
        %v1116 = vand.u32 %v1115, 4294901760
        %v1117 = vsub.f32 %v1115, %v1116
        %v1118 = vand.u32 %v1117, 4294901760
        %1119 = vmatpush.msra.mxu0 %v1118
        %v1120 = vand.u32 %v1044, 4294901760
        %v1121 = vsub.f32 %v1044, %v1120
        %v1122 = vand.u32 %v1121, 4294901760
        %v1123 = vsub.f32 %v1121, %v1122
        %v1124 = vand.u32 %v1123, 4294901760
        %1125 = vmatpush.msra.mxu0 %v1124
        %v1126 = vand.u32 %v1043, 4294901760
        %v1127 = vsub.f32 %v1043, %v1126
        %v1128 = vand.u32 %v1127, 4294901760
        %v1129 = vsub.f32 %v1127, %v1128
        %v1130 = vand.u32 %v1129, 4294901760
        %1131 = vmatpush.msra.mxu0 %v1130
        %v1132 = vand.u32 %v1042, 4294901760
        %v1133 = vsub.f32 %v1042, %v1132
        %v1134 = vand.u32 %v1133, 4294901760
        %v1135 = vsub.f32 %v1133, %v1134
        %v1136 = vand.u32 %v1135, 4294901760
        %1137 = vmatpush.msra.mxu0 %v1136
        %v1138 = vand.u32 %v1041, 4294901760
        %v1139 = vsub.f32 %v1041, %v1138
        %v1140 = vand.u32 %v1139, 4294901760
        %v1141 = vsub.f32 %v1139, %v1140
        %v1142 = vand.u32 %v1141, 4294901760
        %1143 = vmatpush.msra.mxu0 %v1142
        %v1144 = vand.u32 %v1040, 4294901760
        %v1145 = vsub.f32 %v1040, %v1144
        %v1146 = vand.u32 %v1145, 4294901760
        %v1147 = vsub.f32 %v1145, %v1146
        %v1148 = vand.u32 %v1147, 4294901760
        %1149 = vmatpush.msra.mxu0 %v1148
        %v1150 = vand.u32 %v1039, 4294901760
        %v1151 = vsub.f32 %v1039, %v1150
        %v1152 = vand.u32 %v1151, 4294901760
        %v1153 = vsub.f32 %v1151, %v1152
        %v1154 = vand.u32 %v1153, 4294901760
        %1155 = vmatpush.msra.mxu0 %v1154
        %v1156 = vand.u32 %v1038, 4294901760
        %v1157 = vsub.f32 %v1038, %v1156
        %v1158 = vand.u32 %v1157, 4294901760
        %v1159 = vsub.f32 %v1157, %v1158
        %v1160 = vand.u32 %v1159, 4294901760
        %1161 = vmatpush.msra.mxu0 %v1160
        %v1162 = vand.u32 %v1037, 4294901760
        %v1163 = vsub.f32 %v1037, %v1162
        %v1164 = vand.u32 %v1163, 4294901760
        %v1165 = vsub.f32 %v1163, %v1164
        %v1166 = vand.u32 %v1165, 4294901760
        %1167 = vmatpush.msra.mxu0 %v1166
        %v1168 = vand.u32 %v1036, 4294901760
        %v1169 = vsub.f32 %v1036, %v1168
        %v1170 = vand.u32 %v1169, 4294901760
        %v1171 = vsub.f32 %v1169, %v1170
        %v1172 = vand.u32 %v1171, 4294901760
        %1173 = vmatpush.msra.mxu0 %v1172
        %v1174 = vand.u32 %v1035, 4294901760
        %v1175 = vsub.f32 %v1035, %v1174
        %v1176 = vand.u32 %v1175, 4294901760
        %v1177 = vsub.f32 %v1175, %v1176
        %v1178 = vand.u32 %v1177, 4294901760
        %1179 = vmatpush.msra.mxu0 %v1178
        %v1180 = vand.u32 %v1034, 4294901760
        %v1181 = vsub.f32 %v1034, %v1180
        %v1182 = vand.u32 %v1181, 4294901760
        %v1183 = vsub.f32 %v1181, %v1182
        %v1184 = vand.u32 %v1183, 4294901760
        %1185 = vmatpush.msra.mxu0 %v1184
        %v1186 = vand.u32 %v1033, 4294901760
        %v1187 = vsub.f32 %v1033, %v1186
        %v1188 = vand.u32 %v1187, 4294901760
        %v1189 = vsub.f32 %v1187, %v1188
        %v1190 = vand.u32 %v1189, 4294901760
        %1191 = vmatpush.msra.mxu0 %v1190
        %v1192 = vand.u32 %v1032, 4294901760
        %v1193 = vsub.f32 %v1032, %v1192
        %v1194 = vand.u32 %v1193, 4294901760
        %v1195 = vsub.f32 %v1193, %v1194
        %v1196 = vand.u32 %v1195, 4294901760
        %1197 = vmatpush.msra.mxu0 %v1196
        %v1198 = vand.u32 %v1031, 4294901760
        %v1199 = vsub.f32 %v1031, %v1198
        %v1200 = vand.u32 %v1199, 4294901760
        %v1201 = vsub.f32 %v1199, %v1200
        %v1202 = vand.u32 %v1201, 4294901760
        %1203 = vmatpush.msra.mxu0 %v1202
        %v1204 = vand.u32 %v1029, 4294901760
        %1205 = vmatmul.f32.gmra.mxu0 %v1204
        %v1206 = vpop.f32.mrf.mxu0
        %v1207 = vadd.f32 %v1106, %v1206
        %1208 = vdwg.mxu0
        %v1209 = vand.u32 %v1046, 4294901760
        %v1210 = vsub.f32 %v1046, %v1209
        %1211 = vmatpush.msra.mxu0 %v1210
        %v1212 = vand.u32 %v1045, 4294901760
        %v1213 = vsub.f32 %v1045, %v1212
        %1214 = vmatpush.msra.mxu0 %v1213
        %v1215 = vand.u32 %v1044, 4294901760
        %v1216 = vsub.f32 %v1044, %v1215
        %1217 = vmatpush.msra.mxu0 %v1216
        %v1218 = vand.u32 %v1043, 4294901760
        %v1219 = vsub.f32 %v1043, %v1218
        %1220 = vmatpush.msra.mxu0 %v1219
        %v1221 = vand.u32 %v1042, 4294901760
        %v1222 = vsub.f32 %v1042, %v1221
        %1223 = vmatpush.msra.mxu0 %v1222
        %v1224 = vand.u32 %v1041, 4294901760
        %v1225 = vsub.f32 %v1041, %v1224
        %1226 = vmatpush.msra.mxu0 %v1225
        %v1227 = vand.u32 %v1040, 4294901760
        %v1228 = vsub.f32 %v1040, %v1227
        %1229 = vmatpush.msra.mxu0 %v1228
        %v1230 = vand.u32 %v1039, 4294901760
        %v1231 = vsub.f32 %v1039, %v1230
        %1232 = vmatpush.msra.mxu0 %v1231
        %v1233 = vand.u32 %v1038, 4294901760
        %v1234 = vsub.f32 %v1038, %v1233
        %1235 = vmatpush.msra.mxu0 %v1234
        %v1236 = vand.u32 %v1037, 4294901760
        %v1237 = vsub.f32 %v1037, %v1236
        %1238 = vmatpush.msra.mxu0 %v1237
        %v1239 = vand.u32 %v1036, 4294901760
        %v1240 = vsub.f32 %v1036, %v1239
        %1241 = vmatpush.msra.mxu0 %v1240
        %v1242 = vand.u32 %v1035, 4294901760
        %v1243 = vsub.f32 %v1035, %v1242
        %1244 = vmatpush.msra.mxu0 %v1243
        %v1245 = vand.u32 %v1034, 4294901760
        %v1246 = vsub.f32 %v1034, %v1245
        %1247 = vmatpush.msra.mxu0 %v1246
        %v1248 = vand.u32 %v1033, 4294901760
        %v1249 = vsub.f32 %v1033, %v1248
        %1250 = vmatpush.msra.mxu0 %v1249
        %v1251 = vand.u32 %v1032, 4294901760
        %v1252 = vsub.f32 %v1032, %v1251
        %1253 = vmatpush.msra.mxu0 %v1252
        %v1254 = vand.u32 %v1031, 4294901760
        %v1255 = vsub.f32 %v1031, %v1254
        %1256 = vmatpush.msra.mxu0 %v1255
        %v1257 = vand.u32 %v1029, 4294901760
        %v1258 = vsub.f32 %v1029, %v1257
        %1259 = vmatmul.f32.gmra.mxu0 %v1258
        %v1260 = vpop.f32.mrf.mxu0
        %v1261 = vadd.f32 %v1207, %v1260
        %1262 = vdwg.mxu0
        %v1263 = vand.u32 %v1046, 4294901760
        %1264 = vmatpush.msra.mxu0 %v1263
        %v1265 = vand.u32 %v1045, 4294901760
        %1266 = vmatpush.msra.mxu0 %v1265
        %v1267 = vand.u32 %v1044, 4294901760
        %1268 = vmatpush.msra.mxu0 %v1267
        %v1269 = vand.u32 %v1043, 4294901760
        %1270 = vmatpush.msra.mxu0 %v1269
        %v1271 = vand.u32 %v1042, 4294901760
        %1272 = vmatpush.msra.mxu0 %v1271
        %v1273 = vand.u32 %v1041, 4294901760
        %1274 = vmatpush.msra.mxu0 %v1273
        %v1275 = vand.u32 %v1040, 4294901760
        %1276 = vmatpush.msra.mxu0 %v1275
        %v1277 = vand.u32 %v1039, 4294901760
        %1278 = vmatpush.msra.mxu0 %v1277
        %v1279 = vand.u32 %v1038, 4294901760
        %1280 = vmatpush.msra.mxu0 %v1279
        %v1281 = vand.u32 %v1037, 4294901760
        %1282 = vmatpush.msra.mxu0 %v1281
        %v1283 = vand.u32 %v1036, 4294901760
        %1284 = vmatpush.msra.mxu0 %v1283
        %v1285 = vand.u32 %v1035, 4294901760
        %1286 = vmatpush.msra.mxu0 %v1285
        %v1287 = vand.u32 %v1034, 4294901760
        %1288 = vmatpush.msra.mxu0 %v1287
        %v1289 = vand.u32 %v1033, 4294901760
        %1290 = vmatpush.msra.mxu0 %v1289
        %v1291 = vand.u32 %v1032, 4294901760
        %1292 = vmatpush.msra.mxu0 %v1291
        %v1293 = vand.u32 %v1031, 4294901760
        %1294 = vmatpush.msra.mxu0 %v1293
        %v1295 = vand.u32 %v1029, 4294901760
        %v1296 = vsub.f32 %v1029, %v1295
        %v1297 = vand.u32 %v1296, 4294901760
        %1298 = vmatmul.f32.gmra.mxu0 %v1297
        %v1299 = vpop.f32.mrf.mxu0
        %v1300 = vadd.f32 %v1261, %v1299
        %1301 = vdwg.mxu0
        %v1302 = vand.u32 %v1046, 4294901760
        %v1303 = vsub.f32 %v1046, %v1302
        %v1304 = vand.u32 %v1303, 4294901760
        %1305 = vmatpush.msra.mxu0 %v1304
        %v1306 = vand.u32 %v1045, 4294901760
        %v1307 = vsub.f32 %v1045, %v1306
        %v1308 = vand.u32 %v1307, 4294901760
        %1309 = vmatpush.msra.mxu0 %v1308
        %v1310 = vand.u32 %v1044, 4294901760
        %v1311 = vsub.f32 %v1044, %v1310
        %v1312 = vand.u32 %v1311, 4294901760
        %1313 = vmatpush.msra.mxu0 %v1312
        %v1314 = vand.u32 %v1043, 4294901760
        %v1315 = vsub.f32 %v1043, %v1314
        %v1316 = vand.u32 %v1315, 4294901760
        %1317 = vmatpush.msra.mxu0 %v1316
        %v1318 = vand.u32 %v1042, 4294901760
        %v1319 = vsub.f32 %v1042, %v1318
        %v1320 = vand.u32 %v1319, 4294901760
        %1321 = vmatpush.msra.mxu0 %v1320
        %v1322 = vand.u32 %v1041, 4294901760
        %v1323 = vsub.f32 %v1041, %v1322
        %v1324 = vand.u32 %v1323, 4294901760
        %1325 = vmatpush.msra.mxu0 %v1324
        %v1326 = vand.u32 %v1040, 4294901760
        %v1327 = vsub.f32 %v1040, %v1326
        %v1328 = vand.u32 %v1327, 4294901760
        %1329 = vmatpush.msra.mxu0 %v1328
        %v1330 = vand.u32 %v1039, 4294901760
        %v1331 = vsub.f32 %v1039, %v1330
        %v1332 = vand.u32 %v1331, 4294901760
        %1333 = vmatpush.msra.mxu0 %v1332
        %v1334 = vand.u32 %v1038, 4294901760
        %v1335 = vsub.f32 %v1038, %v1334
        %v1336 = vand.u32 %v1335, 4294901760
        %1337 = vmatpush.msra.mxu0 %v1336
        %v1338 = vand.u32 %v1037, 4294901760
        %v1339 = vsub.f32 %v1037, %v1338
        %v1340 = vand.u32 %v1339, 4294901760
        %1341 = vmatpush.msra.mxu0 %v1340
        %v1342 = vand.u32 %v1036, 4294901760
        %v1343 = vsub.f32 %v1036, %v1342
        %v1344 = vand.u32 %v1343, 4294901760
        %1345 = vmatpush.msra.mxu0 %v1344
        %v1346 = vand.u32 %v1035, 4294901760
        %v1347 = vsub.f32 %v1035, %v1346
        %v1348 = vand.u32 %v1347, 4294901760
        %1349 = vmatpush.msra.mxu0 %v1348
        %v1350 = vand.u32 %v1034, 4294901760
        %v1351 = vsub.f32 %v1034, %v1350
        %v1352 = vand.u32 %v1351, 4294901760
        %1353 = vmatpush.msra.mxu0 %v1352
        %v1354 = vand.u32 %v1033, 4294901760
        %v1355 = vsub.f32 %v1033, %v1354
        %v1356 = vand.u32 %v1355, 4294901760
        %1357 = vmatpush.msra.mxu0 %v1356
        %v1358 = vand.u32 %v1032, 4294901760
        %v1359 = vsub.f32 %v1032, %v1358
        %v1360 = vand.u32 %v1359, 4294901760
        %1361 = vmatpush.msra.mxu0 %v1360
        %v1362 = vand.u32 %v1031, 4294901760
        %v1363 = vsub.f32 %v1031, %v1362
        %v1364 = vand.u32 %v1363, 4294901760
        %1365 = vmatpush.msra.mxu0 %v1364
        %v1366 = vand.u32 %v1029, 4294901760
        %1367 = vmatmul.f32.gmra.mxu0 %v1366
        %v1368 = vpop.f32.mrf.mxu0
        %v1369 = vadd.f32 %v1300, %v1368
        %1370 = vdwg.mxu0
        %v1371 = vand.u32 %v1046, 4294901760
        %1372 = vmatpush.msra.mxu0 %v1371
        %v1373 = vand.u32 %v1045, 4294901760
        %1374 = vmatpush.msra.mxu0 %v1373
        %v1375 = vand.u32 %v1044, 4294901760
        %1376 = vmatpush.msra.mxu0 %v1375
        %v1377 = vand.u32 %v1043, 4294901760
        %1378 = vmatpush.msra.mxu0 %v1377
        %v1379 = vand.u32 %v1042, 4294901760
        %1380 = vmatpush.msra.mxu0 %v1379
        %v1381 = vand.u32 %v1041, 4294901760
        %1382 = vmatpush.msra.mxu0 %v1381
        %v1383 = vand.u32 %v1040, 4294901760
        %1384 = vmatpush.msra.mxu0 %v1383
        %v1385 = vand.u32 %v1039, 4294901760
        %1386 = vmatpush.msra.mxu0 %v1385
        %v1387 = vand.u32 %v1038, 4294901760
        %1388 = vmatpush.msra.mxu0 %v1387
        %v1389 = vand.u32 %v1037, 4294901760
        %1390 = vmatpush.msra.mxu0 %v1389
        %v1391 = vand.u32 %v1036, 4294901760
        %1392 = vmatpush.msra.mxu0 %v1391
        %v1393 = vand.u32 %v1035, 4294901760
        %1394 = vmatpush.msra.mxu0 %v1393
        %v1395 = vand.u32 %v1034, 4294901760
        %1396 = vmatpush.msra.mxu0 %v1395
        %v1397 = vand.u32 %v1033, 4294901760
        %1398 = vmatpush.msra.mxu0 %v1397
        %v1399 = vand.u32 %v1032, 4294901760
        %1400 = vmatpush.msra.mxu0 %v1399
        %v1401 = vand.u32 %v1031, 4294901760
        %1402 = vmatpush.msra.mxu0 %v1401
        %v1403 = vand.u32 %v1029, 4294901760
        %1404 = vmatmul.f32.gmra.mxu0 %v1403
        %v1405 = vpop.f32.mrf.mxu0
        %v1406 = vadd.f32 %v1369, %v1405
        %1407 = vdwg.mxu0
        %v1408 = vand.u32 %v1062, 4294901760
        %1409 = vmatpush.msra.mxu0 %v1408
        %v1410 = vand.u32 %v1061, 4294901760
        %1411 = vmatpush.msra.mxu0 %v1410
        %v1412 = vand.u32 %v1060, 4294901760
        %1413 = vmatpush.msra.mxu0 %v1412
        %v1414 = vand.u32 %v1059, 4294901760
        %1415 = vmatpush.msra.mxu0 %v1414
        %v1416 = vand.u32 %v1058, 4294901760
        %1417 = vmatpush.msra.mxu0 %v1416
        %v1418 = vand.u32 %v1057, 4294901760
        %1419 = vmatpush.msra.mxu0 %v1418
        %v1420 = vand.u32 %v1056, 4294901760
        %1421 = vmatpush.msra.mxu0 %v1420
        %v1422 = vand.u32 %v1055, 4294901760
        %1423 = vmatpush.msra.mxu0 %v1422
        %v1424 = vand.u32 %v1054, 4294901760
        %1425 = vmatpush.msra.mxu0 %v1424
        %v1426 = vand.u32 %v1053, 4294901760
        %1427 = vmatpush.msra.mxu0 %v1426
        %v1428 = vand.u32 %v1052, 4294901760
        %1429 = vmatpush.msra.mxu0 %v1428
        %v1430 = vand.u32 %v1051, 4294901760
        %1431 = vmatpush.msra.mxu0 %v1430
        %v1432 = vand.u32 %v1050, 4294901760
        %1433 = vmatpush.msra.mxu0 %v1432
        %v1434 = vand.u32 %v1049, 4294901760
        %1435 = vmatpush.msra.mxu0 %v1434
        %v1436 = vand.u32 %v1048, 4294901760
        %1437 = vmatpush.msra.mxu0 %v1436
        %v1438 = vand.u32 %v1047, 4294901760
        %1439 = vmatpush.msra.mxu0 %v1438
        %v1440 = vand.u32 %v1030, 4294901760
        %v1441 = vsub.f32 %v1030, %v1440
        %v1442 = vand.u32 %v1441, 4294901760
        %v1443 = vsub.f32 %v1441, %v1442
        %v1444 = vand.u32 %v1443, 4294901760
        %1445 = vmatmul.f32.gmra.mxu0 %v1444
        %v1446 = vpop.f32.mrf.mxu0
        %v1447 = vadd.f32 %v1406, %v1446
        %1448 = vdwg.mxu0
        %v1449 = vand.u32 %v1062, 4294901760
        %v1450 = vsub.f32 %v1062, %v1449
        %v1451 = vand.u32 %v1450, 4294901760
        %v1452 = vsub.f32 %v1450, %v1451
        %v1453 = vand.u32 %v1452, 4294901760
        %1454 = vmatpush.msra.mxu0 %v1453
        %v1455 = vand.u32 %v1061, 4294901760
        %v1456 = vsub.f32 %v1061, %v1455
        %v1457 = vand.u32 %v1456, 4294901760
        %v1458 = vsub.f32 %v1456, %v1457
        %v1459 = vand.u32 %v1458, 4294901760
        %1460 = vmatpush.msra.mxu0 %v1459
        %v1461 = vand.u32 %v1060, 4294901760
        %v1462 = vsub.f32 %v1060, %v1461
        %v1463 = vand.u32 %v1462, 4294901760
        %v1464 = vsub.f32 %v1462, %v1463
        %v1465 = vand.u32 %v1464, 4294901760
        %1466 = vmatpush.msra.mxu0 %v1465
        %v1467 = vand.u32 %v1059, 4294901760
        %v1468 = vsub.f32 %v1059, %v1467
        %v1469 = vand.u32 %v1468, 4294901760
        %v1470 = vsub.f32 %v1468, %v1469
        %v1471 = vand.u32 %v1470, 4294901760
        %1472 = vmatpush.msra.mxu0 %v1471
        %v1473 = vand.u32 %v1058, 4294901760
        %v1474 = vsub.f32 %v1058, %v1473
        %v1475 = vand.u32 %v1474, 4294901760
        %v1476 = vsub.f32 %v1474, %v1475
        %v1477 = vand.u32 %v1476, 4294901760
        %1478 = vmatpush.msra.mxu0 %v1477
        %v1479 = vand.u32 %v1057, 4294901760
        %v1480 = vsub.f32 %v1057, %v1479
        %v1481 = vand.u32 %v1480, 4294901760
        %v1482 = vsub.f32 %v1480, %v1481
        %v1483 = vand.u32 %v1482, 4294901760
        %1484 = vmatpush.msra.mxu0 %v1483
        %v1485 = vand.u32 %v1056, 4294901760
        %v1486 = vsub.f32 %v1056, %v1485
        %v1487 = vand.u32 %v1486, 4294901760
        %v1488 = vsub.f32 %v1486, %v1487
        %v1489 = vand.u32 %v1488, 4294901760
        %1490 = vmatpush.msra.mxu0 %v1489
        %v1491 = vand.u32 %v1055, 4294901760
        %v1492 = vsub.f32 %v1055, %v1491
        %v1493 = vand.u32 %v1492, 4294901760
        %v1494 = vsub.f32 %v1492, %v1493
        %v1495 = vand.u32 %v1494, 4294901760
        %1496 = vmatpush.msra.mxu0 %v1495
        %v1497 = vand.u32 %v1054, 4294901760
        %v1498 = vsub.f32 %v1054, %v1497
        %v1499 = vand.u32 %v1498, 4294901760
        %v1500 = vsub.f32 %v1498, %v1499
        %v1501 = vand.u32 %v1500, 4294901760
        %1502 = vmatpush.msra.mxu0 %v1501
        %v1503 = vand.u32 %v1053, 4294901760
        %v1504 = vsub.f32 %v1053, %v1503
        %v1505 = vand.u32 %v1504, 4294901760
        %v1506 = vsub.f32 %v1504, %v1505
        %v1507 = vand.u32 %v1506, 4294901760
        %1508 = vmatpush.msra.mxu0 %v1507
        %v1509 = vand.u32 %v1052, 4294901760
        %v1510 = vsub.f32 %v1052, %v1509
        %v1511 = vand.u32 %v1510, 4294901760
        %v1512 = vsub.f32 %v1510, %v1511
        %v1513 = vand.u32 %v1512, 4294901760
        %1514 = vmatpush.msra.mxu0 %v1513
        %v1515 = vand.u32 %v1051, 4294901760
        %v1516 = vsub.f32 %v1051, %v1515
        %v1517 = vand.u32 %v1516, 4294901760
        %v1518 = vsub.f32 %v1516, %v1517
        %v1519 = vand.u32 %v1518, 4294901760
        %1520 = vmatpush.msra.mxu0 %v1519
        %v1521 = vand.u32 %v1050, 4294901760
        %v1522 = vsub.f32 %v1050, %v1521
        %v1523 = vand.u32 %v1522, 4294901760
        %v1524 = vsub.f32 %v1522, %v1523
        %v1525 = vand.u32 %v1524, 4294901760
        %1526 = vmatpush.msra.mxu0 %v1525
        %v1527 = vand.u32 %v1049, 4294901760
        %v1528 = vsub.f32 %v1049, %v1527
        %v1529 = vand.u32 %v1528, 4294901760
        %v1530 = vsub.f32 %v1528, %v1529
        %v1531 = vand.u32 %v1530, 4294901760
        %1532 = vmatpush.msra.mxu0 %v1531
        %v1533 = vand.u32 %v1048, 4294901760
        %v1534 = vsub.f32 %v1048, %v1533
        %v1535 = vand.u32 %v1534, 4294901760
        %v1536 = vsub.f32 %v1534, %v1535
        %v1537 = vand.u32 %v1536, 4294901760
        %1538 = vmatpush.msra.mxu0 %v1537
        %v1539 = vand.u32 %v1047, 4294901760
        %v1540 = vsub.f32 %v1047, %v1539
        %v1541 = vand.u32 %v1540, 4294901760
        %v1542 = vsub.f32 %v1540, %v1541
        %v1543 = vand.u32 %v1542, 4294901760
        %1544 = vmatpush.msra.mxu0 %v1543
        %v1545 = vand.u32 %v1030, 4294901760
        %1546 = vmatmul.f32.gmra.mxu0 %v1545
        %v1547 = vpop.f32.mrf.mxu0
        %v1548 = vadd.f32 %v1447, %v1547
        %1549 = vdwg.mxu0
        %v1550 = vand.u32 %v1062, 4294901760
        %v1551 = vsub.f32 %v1062, %v1550
        %1552 = vmatpush.msra.mxu0 %v1551
        %v1553 = vand.u32 %v1061, 4294901760
        %v1554 = vsub.f32 %v1061, %v1553
        %1555 = vmatpush.msra.mxu0 %v1554
        %v1556 = vand.u32 %v1060, 4294901760
        %v1557 = vsub.f32 %v1060, %v1556
        %1558 = vmatpush.msra.mxu0 %v1557
        %v1559 = vand.u32 %v1059, 4294901760
        %v1560 = vsub.f32 %v1059, %v1559
        %1561 = vmatpush.msra.mxu0 %v1560
        %v1562 = vand.u32 %v1058, 4294901760
        %v1563 = vsub.f32 %v1058, %v1562
        %1564 = vmatpush.msra.mxu0 %v1563
        %v1565 = vand.u32 %v1057, 4294901760
        %v1566 = vsub.f32 %v1057, %v1565
        %1567 = vmatpush.msra.mxu0 %v1566
        %v1568 = vand.u32 %v1056, 4294901760
        %v1569 = vsub.f32 %v1056, %v1568
        %1570 = vmatpush.msra.mxu0 %v1569
        %v1571 = vand.u32 %v1055, 4294901760
        %v1572 = vsub.f32 %v1055, %v1571
        %1573 = vmatpush.msra.mxu0 %v1572
        %v1574 = vand.u32 %v1054, 4294901760
        %v1575 = vsub.f32 %v1054, %v1574
        %1576 = vmatpush.msra.mxu0 %v1575
        %v1577 = vand.u32 %v1053, 4294901760
        %v1578 = vsub.f32 %v1053, %v1577
        %1579 = vmatpush.msra.mxu0 %v1578
        %v1580 = vand.u32 %v1052, 4294901760
        %v1581 = vsub.f32 %v1052, %v1580
        %1582 = vmatpush.msra.mxu0 %v1581
        %v1583 = vand.u32 %v1051, 4294901760
        %v1584 = vsub.f32 %v1051, %v1583
        %1585 = vmatpush.msra.mxu0 %v1584
        %v1586 = vand.u32 %v1050, 4294901760
        %v1587 = vsub.f32 %v1050, %v1586
        %1588 = vmatpush.msra.mxu0 %v1587
        %v1589 = vand.u32 %v1049, 4294901760
        %v1590 = vsub.f32 %v1049, %v1589
        %1591 = vmatpush.msra.mxu0 %v1590
        %v1592 = vand.u32 %v1048, 4294901760
        %v1593 = vsub.f32 %v1048, %v1592
        %1594 = vmatpush.msra.mxu0 %v1593
        %v1595 = vand.u32 %v1047, 4294901760
        %v1596 = vsub.f32 %v1047, %v1595
        %1597 = vmatpush.msra.mxu0 %v1596
        %v1598 = vand.u32 %v1030, 4294901760
        %v1599 = vsub.f32 %v1030, %v1598
        %1600 = vmatmul.f32.gmra.mxu0 %v1599
        %v1601 = vpop.f32.mrf.mxu0
        %v1602 = vadd.f32 %v1548, %v1601
        %1603 = vdwg.mxu0
        %v1604 = vand.u32 %v1062, 4294901760
        %1605 = vmatpush.msra.mxu0 %v1604
        %v1606 = vand.u32 %v1061, 4294901760
        %1607 = vmatpush.msra.mxu0 %v1606
        %v1608 = vand.u32 %v1060, 4294901760
        %1609 = vmatpush.msra.mxu0 %v1608
        %v1610 = vand.u32 %v1059, 4294901760
        %1611 = vmatpush.msra.mxu0 %v1610
        %v1612 = vand.u32 %v1058, 4294901760
        %1613 = vmatpush.msra.mxu0 %v1612
        %v1614 = vand.u32 %v1057, 4294901760
        %1615 = vmatpush.msra.mxu0 %v1614
        %v1616 = vand.u32 %v1056, 4294901760
        %1617 = vmatpush.msra.mxu0 %v1616
        %v1618 = vand.u32 %v1055, 4294901760
        %1619 = vmatpush.msra.mxu0 %v1618
        %v1620 = vand.u32 %v1054, 4294901760
        %1621 = vmatpush.msra.mxu0 %v1620
        %v1622 = vand.u32 %v1053, 4294901760
        %1623 = vmatpush.msra.mxu0 %v1622
        %v1624 = vand.u32 %v1052, 4294901760
        %1625 = vmatpush.msra.mxu0 %v1624
        %v1626 = vand.u32 %v1051, 4294901760
        %1627 = vmatpush.msra.mxu0 %v1626
        %v1628 = vand.u32 %v1050, 4294901760
        %1629 = vmatpush.msra.mxu0 %v1628
        %v1630 = vand.u32 %v1049, 4294901760
        %1631 = vmatpush.msra.mxu0 %v1630
        %v1632 = vand.u32 %v1048, 4294901760
        %1633 = vmatpush.msra.mxu0 %v1632
        %v1634 = vand.u32 %v1047, 4294901760
        %1635 = vmatpush.msra.mxu0 %v1634
        %v1636 = vand.u32 %v1030, 4294901760
        %v1637 = vsub.f32 %v1030, %v1636
        %v1638 = vand.u32 %v1637, 4294901760
        %1639 = vmatmul.f32.gmra.mxu0 %v1638
        %v1640 = vpop.f32.mrf.mxu0
        %v1641 = vadd.f32 %v1602, %v1640
        %1642 = vdwg.mxu0
        %v1643 = vand.u32 %v1062, 4294901760
        %v1644 = vsub.f32 %v1062, %v1643
        %v1645 = vand.u32 %v1644, 4294901760
        %1646 = vmatpush.msra.mxu0 %v1645
        %v1647 = vand.u32 %v1061, 4294901760
        %v1648 = vsub.f32 %v1061, %v1647
        %v1649 = vand.u32 %v1648, 4294901760
        %1650 = vmatpush.msra.mxu0 %v1649
        %v1651 = vand.u32 %v1060, 4294901760
        %v1652 = vsub.f32 %v1060, %v1651
        %v1653 = vand.u32 %v1652, 4294901760
        %1654 = vmatpush.msra.mxu0 %v1653
        %v1655 = vand.u32 %v1059, 4294901760
        %v1656 = vsub.f32 %v1059, %v1655
        %v1657 = vand.u32 %v1656, 4294901760
        %1658 = vmatpush.msra.mxu0 %v1657
        %v1659 = vand.u32 %v1058, 4294901760
        %v1660 = vsub.f32 %v1058, %v1659
        %v1661 = vand.u32 %v1660, 4294901760
        %1662 = vmatpush.msra.mxu0 %v1661
        %v1663 = vand.u32 %v1057, 4294901760
        %v1664 = vsub.f32 %v1057, %v1663
        %v1665 = vand.u32 %v1664, 4294901760
        %1666 = vmatpush.msra.mxu0 %v1665
        %v1667 = vand.u32 %v1056, 4294901760
        %v1668 = vsub.f32 %v1056, %v1667
        %v1669 = vand.u32 %v1668, 4294901760
        %1670 = vmatpush.msra.mxu0 %v1669
        %v1671 = vand.u32 %v1055, 4294901760
        %v1672 = vsub.f32 %v1055, %v1671
        %v1673 = vand.u32 %v1672, 4294901760
        %1674 = vmatpush.msra.mxu0 %v1673
        %v1675 = vand.u32 %v1054, 4294901760
        %v1676 = vsub.f32 %v1054, %v1675
        %v1677 = vand.u32 %v1676, 4294901760
        %1678 = vmatpush.msra.mxu0 %v1677
        %v1679 = vand.u32 %v1053, 4294901760
        %v1680 = vsub.f32 %v1053, %v1679
        %v1681 = vand.u32 %v1680, 4294901760
        %1682 = vmatpush.msra.mxu0 %v1681
        %v1683 = vand.u32 %v1052, 4294901760
        %v1684 = vsub.f32 %v1052, %v1683
        %v1685 = vand.u32 %v1684, 4294901760
        %1686 = vmatpush.msra.mxu0 %v1685
        %v1687 = vand.u32 %v1051, 4294901760
        %v1688 = vsub.f32 %v1051, %v1687
        %v1689 = vand.u32 %v1688, 4294901760
        %1690 = vmatpush.msra.mxu0 %v1689
        %v1691 = vand.u32 %v1050, 4294901760
        %v1692 = vsub.f32 %v1050, %v1691
        %v1693 = vand.u32 %v1692, 4294901760
        %1694 = vmatpush.msra.mxu0 %v1693
        %v1695 = vand.u32 %v1049, 4294901760
        %v1696 = vsub.f32 %v1049, %v1695
        %v1697 = vand.u32 %v1696, 4294901760
        %1698 = vmatpush.msra.mxu0 %v1697
        %v1699 = vand.u32 %v1048, 4294901760
        %v1700 = vsub.f32 %v1048, %v1699
        %v1701 = vand.u32 %v1700, 4294901760
        %1702 = vmatpush.msra.mxu0 %v1701
        %v1703 = vand.u32 %v1047, 4294901760
        %v1704 = vsub.f32 %v1047, %v1703
        %v1705 = vand.u32 %v1704, 4294901760
        %1706 = vmatpush.msra.mxu0 %v1705
        %v1707 = vand.u32 %v1030, 4294901760
        %1708 = vmatmul.f32.gmra.mxu0 %v1707
        %v1709 = vpop.f32.mrf.mxu0
        %v1710 = vadd.f32 %v1641, %v1709
        %1711 = vdwg.mxu0
        %v1712 = vand.u32 %v1062, 4294901760
        %1713 = vmatpush.msra.mxu0 %v1712
        %v1714 = vand.u32 %v1061, 4294901760
        %1715 = vmatpush.msra.mxu0 %v1714
        %v1716 = vand.u32 %v1060, 4294901760
        %1717 = vmatpush.msra.mxu0 %v1716
        %v1718 = vand.u32 %v1059, 4294901760
        %1719 = vmatpush.msra.mxu0 %v1718
        %v1720 = vand.u32 %v1058, 4294901760
        %1721 = vmatpush.msra.mxu0 %v1720
        %v1722 = vand.u32 %v1057, 4294901760
        %1723 = vmatpush.msra.mxu0 %v1722
        %v1724 = vand.u32 %v1056, 4294901760
        %1725 = vmatpush.msra.mxu0 %v1724
        %v1726 = vand.u32 %v1055, 4294901760
        %1727 = vmatpush.msra.mxu0 %v1726
        %v1728 = vand.u32 %v1054, 4294901760
        %1729 = vmatpush.msra.mxu0 %v1728
        %v1730 = vand.u32 %v1053, 4294901760
        %1731 = vmatpush.msra.mxu0 %v1730
        %v1732 = vand.u32 %v1052, 4294901760
        %1733 = vmatpush.msra.mxu0 %v1732
        %v1734 = vand.u32 %v1051, 4294901760
        %1735 = vmatpush.msra.mxu0 %v1734
        %v1736 = vand.u32 %v1050, 4294901760
        %1737 = vmatpush.msra.mxu0 %v1736
        %v1738 = vand.u32 %v1049, 4294901760
        %1739 = vmatpush.msra.mxu0 %v1738
        %v1740 = vand.u32 %v1048, 4294901760
        %1741 = vmatpush.msra.mxu0 %v1740
        %v1742 = vand.u32 %v1047, 4294901760
        %1743 = vmatpush.msra.mxu0 %v1742
        %v1744 = vand.u32 %v1030, 4294901760
        %1745 = vmatmul.f32.gmra.mxu0 %v1744
        %v1746 = vpop.f32.mrf.mxu0
        %v1747 = vadd.f32 %v1710, %v1746
        %1748 = vdwg.mxu0
        %v1749 = vadd.f32 %v308, %v1747
        %1750 = vadd.xlane.f32.xlu0 %v1749
        %v1751 = vpop.xlane.xlu0 %1750
        %v1752 = vrcp.pop 128.0
        %v1753 = vmul.f32 128.0, %v1752
        %v1754 = vsub.f32 1.0, %v1753
        %v1755 = vmul.f32 %v1752, %v1754
        %v1756 = vadd.f32 %v1752, %v1755
        %vm1757 = vweird.f32 %v1752
        %v1758 = vsel %vm1757, %v1752, %v1756
        %v1759 = vmul.f32 %v1751, %v1758
        %v1760 = vmul.f32 %v1749, %v1749
        %1761 = vadd.xlane.f32.xlu0 %v1760
        %v1762 = vpop.xlane.xlu0 %1761
        %v1763 = vmul.f32 %v1762, %v1758
        %v1764 = vmul.f32 %v1759, %v1759
        %v1765 = vsub.f32 %v1763, %v1764
        %v1766 = vsub.f32 %v1749, %v1759
        %v1767 = vadd.f32 %v1765, 1e-05
        %v1768 = vrsqrt.pop %v1767
        %v1769 = vmul.f32 %v1768, %v1767
        %v1770 = vmul.f32 %v1769, %v1768
        %v1771 = vmul.f32 0.5, %v1770
        %v1772 = vsub.f32 1.5, %v1771
        %v1773 = vmul.f32 %v1768, %v1772
        %vm1774 = vweird.f32 %v1767
        %vm1775 = vweird.f32 %v1768
        %vm1776 = vmor %vm1774, %vm1775
        %v1777 = vsel %vm1776, %v1768, %v1773
        %v1778 = vmul.f32 %v1766, %v1777
        %v1779 = vld [vmem:[%s5] sm:$0x1]
        %v1781 = vperm.slane %v1779, 0
        %v1783 = vmul.f32 %v1778, %v1781
        %v1784 = vld [vmem:[%s6] sm:$0x1]
        %v1786 = vperm.slane %v1784, 0
        %v1788 = vadd.f32 %v1783, %v1786
        %1789 = vst [vmem:[%s307] sm:$0xff] %v1788
        %p1790 = scmp.lt.s32.totalorder %s20, 1
        %s1791 = scalar_select %p1790, %s20, 1
        %s1792 = smul.addr %s1791, 8
        %s1793 = scalar_lea.vmem %s7, %s1792
        // Predicated region
        $region57: #{transformer_model_forward.13} parent=47 // pred_check
          %p1794 = pneg %p190
        $region58: #{transformer_model_forward.13} parent=47 // pred_check_branch
          %1796 = sbr.rel (%p1794) target = $region60
        $region59: #{transformer_model_forward.13} parent=47 // pred_region
          _
        $region60: #{transformer_model_forward.13} parent=47 // pred_fallthru
          _
      $region48: #{transformer_model_forward.13} parent=5 // pred_fallthru
        _
      %p1797 = scmp.le.s32.totalorder 2, %s15
      // Predicated region
      $region61: #{transformer_model_forward.13} parent=5 // pred_check
        %p1798 = pneg %p1797
      $region62: #{transformer_model_forward.13} parent=5 // pred_check_branch
        %1800 = sbr.rel (%p1798) target = $region64
      $region63: #{transformer_model_forward.13} parent=5 // pred_region
        %s1801 = ssub.s32 %s15, 2
        // Predicated region
        $region65: #{transformer_model_forward.13} parent=63 // pred_check
          %p1802 = pneg %p196
        $region66: #{transformer_model_forward.13} parent=63 // pred_check_branch
          %1804 = sbr.rel (%p1802) target = $region68
        $region67: #{transformer_model_forward.13} parent=63 // pred_region
          %p1805 = scmp.lt.s32.totalorder %s21, 1
          %s1806 = scalar_select %p1805, %s21, 1
          %s1807 = smul.addr %s1806, 8
          %s1808 = scalar_lea.vmem %s7, %s1807
        $region68: #{transformer_model_forward.13} parent=63 // pred_fallthru
          _
      $region64: #{transformer_model_forward.13} parent=5 // pred_fallthru
        _
    $region6: #{transformer_model_forward.13} parent=1 // loop_footer
      %s19 = sadd.s32 1, %s15
    $region7: #{transformer_model_forward.13} parent=1 // loop_footer_branch
      %14 = sbr.rel target = $region3
    $region8: #{transformer_model_forward.13} parent=1 // loop_exit
      _
    %1809 = vsyncpa [#allocation3], 1
    %s1810 = scalar_lea.sflag [#allocation3], 1
    %1811 = vsyncpa %s1810, 1
    %1812 = vsyncpa [#allocation5], 1

// kernel: transformer_model_forward.16
$region0: #{transformer_model_forward.16}
  #allocation0 [shape = 'u32[]', space=smem, size = 0x4, offset = 0x4, fixed_abs, tag = 'smem constant byte address 0x4 - core index']
  #allocation1 [shape = 'u32[72,128]{1,0:T(1,128)}', space=vmem, size = 0x9000, scoped, tag = 'internal scratch']
  %s0 = inlined_call_operand.vmem [shape: f32[16,128], index: 0, kind: input, shape index: {}]
  %s1 = inlined_call_operand.vmem [shape: f32[16,128], index: 1, kind: input, shape index: {}]
  %s2 = inlined_call_operand.hbm [shape: f32[128,128], index: 2, kind: input, shape index: {}]
  %s3 = inlined_call_operand.vmem [shape: f32[1,128], index: 3, kind: input, shape index: {}]
  %s4 = inlined_call_operand.vmem [shape: f32[1,128], index: 4, kind: input, shape index: {}]
  %s5 = inlined_call_operand.vmem [shape: f32[1,128], index: 5, kind: input, shape index: {}]
  %s6 = inlined_call_operand.vmem [shape: f32[16,128], index: 6, kind: output, shape index: {}]
  %s7 = sld [smem:[#allocation0]]
  $region61: #{transformer_model_forward.16} parent=0
    _
  %s9 = ssub.s32 1, %s7
  %s10 = scalar_select 0, %s9, %s7
  $region1: #{transformer_model_forward.16} parent=0
    #allocation2 [shape = 'u8[65536]{0}', space=vmem, size = 0x10000, scoped, tag = 'input window, operand 2, single buffered']
    #allocation3 [shape = 's32[2]{0}', space=sflag, size = 0x8, scoped, tag = 'scoped memory for transformer_model_forward.16']
    %11 = vsyncpa [#allocation3], 0
    loop: start=0, step=1, limit=4
    $region2: #{transformer_model_forward.16} parent=1 // loop_pre_header
      _
    $region3: #{transformer_model_forward.16} parent=1 // loop_header
      %s13 = sphi 0, %s17
      %p14 = scmp.ge.s32.totalorder %s13, 4
      %s23 = sphi 0, %s25
      %s26 = sphi 0, %s23
      %s27 = sphi 0, %s26
      %s43 = sphi 0, %s27
      %s49 = sphi 0, %s51
      %s52 = sphi 0, %s49
      %s53 = sphi 0, %s52
      %s69 = sphi 0, %s53
      %s73 = sphi 0, %s73
      %s75 = sphi 0, %s73
      %s76 = sphi 0, %s75
      %s90 = sphi 0, %s76
      %s94 = sphi 0, %s94
      %s96 = sphi 0, %s94
      %s97 = sphi 0, %s96
      %s111 = sphi 0, %s97
      %s115 = sphi 0, %s115
      %s117 = sphi 0, %s115
      %s118 = sphi 0, %s117
      %s132 = sphi 0, %s118
      %s136 = sphi 0, %s136
      %s138 = sphi 0, %s136
      %s139 = sphi 0, %s138
      %s153 = sphi 0, %s139
      %s159 = sphi 0, %s161
      %s162 = sphi 0, %s159
      %s163 = sphi 0, %s162
      %s179 = sphi 0, %s163
    $region4: #{transformer_model_forward.16} parent=1 // loop_header_branch
      %16 = sbr.rel (%p14) target = $region8
    $region5: #{transformer_model_forward.16} parent=1 // loop_body
      %s18 = ssub.s32 %s13, 1
      %s19 = ssub.s32 %s13, 2
      %s20 = sadd.s32 %s13, 1
      %s21 = ssub.s32 %s13, %s20
      %p22 = scmp.eq.s32.totalorder %s21, 0
      %s24 = sadd.s32 %s23, 1
      %s25 = scalar_select %p22, %s23, %s24
      %p28 = pneg %p22
      %p29 = scmp.eq.s32.totalorder %s13, 1
      %p30 = por %p28, %p29
      %p31 = scmp.ne.s32.totalorder %s23, %s26
      %p32 = scmp.eq.s32.totalorder %s13, 0
      %p33 = por %p31, %p32
      %p34 = scmp.ne.s32.totalorder %s23, %s26
      %p35 = scmp.eq.s32.totalorder %s18, 1
      %p36 = por %p34, %p35
      %p37 = scmp.ne.s32.totalorder %s26, %s27
      %p38 = scmp.eq.s32.totalorder %s18, 0
      %p39 = por %p37, %p38
      %p40 = scmp.ne.s32.totalorder %s26, %s27
      %p41 = scmp.eq.s32.totalorder %s19, 1
      %p42 = por %p40, %p41
      %p44 = scmp.ne.s32.totalorder %s27, %s43
      %p45 = scmp.eq.s32.totalorder %s19, 0
      %p46 = por %p44, %p45
      %s47 = ssub.s32 %s13, %s20
      %p48 = scmp.eq.s32.totalorder %s47, 0
      %s50 = sadd.s32 %s49, 1
      %s51 = scalar_select %p48, %s49, %s50
      %p54 = pneg %p48
      %p55 = scmp.eq.s32.totalorder %s13, 1
      %p56 = por %p54, %p55
      %p57 = scmp.ne.s32.totalorder %s49, %s52
      %p58 = scmp.eq.s32.totalorder %s13, 0
      %p59 = por %p57, %p58
      %p60 = scmp.ne.s32.totalorder %s49, %s52
      %p61 = scmp.eq.s32.totalorder %s18, 1
      %p62 = por %p60, %p61
      %p63 = scmp.ne.s32.totalorder %s52, %s53
      %p64 = scmp.eq.s32.totalorder %s18, 0
      %p65 = por %p63, %p64
      %p66 = scmp.ne.s32.totalorder %s52, %s53
      %p67 = scmp.eq.s32.totalorder %s19, 1
      %p68 = por %p66, %p67
      %p70 = scmp.ne.s32.totalorder %s53, %s69
      %p71 = scmp.eq.s32.totalorder %s19, 0
      %p72 = por %p70, %p71
      %s74 = sadd.s32 %s73, 1
      %p77 = scmp.eq.s32.totalorder %s13, 1
      %p78 = scmp.ne.s32.totalorder %s73, %s75
      %p79 = scmp.eq.s32.totalorder %s13, 0
      %p80 = por %p78, %p79
      %p81 = scmp.ne.s32.totalorder %s73, %s75
      %p82 = scmp.eq.s32.totalorder %s18, 1
      %p83 = por %p81, %p82
      %p84 = scmp.ne.s32.totalorder %s75, %s76
      %p85 = scmp.eq.s32.totalorder %s18, 0
      %p86 = por %p84, %p85
      %p87 = scmp.ne.s32.totalorder %s75, %s76
      %p88 = scmp.eq.s32.totalorder %s19, 1
      %p89 = por %p87, %p88
      %p91 = scmp.ne.s32.totalorder %s76, %s90
      %p92 = scmp.eq.s32.totalorder %s19, 0
      %p93 = por %p91, %p92
      %s95 = sadd.s32 %s94, 1
      %p98 = scmp.eq.s32.totalorder %s13, 1
      %p99 = scmp.ne.s32.totalorder %s94, %s96
      %p100 = scmp.eq.s32.totalorder %s13, 0
      %p101 = por %p99, %p100
      %p102 = scmp.ne.s32.totalorder %s94, %s96
      %p103 = scmp.eq.s32.totalorder %s18, 1
      %p104 = por %p102, %p103
      %p105 = scmp.ne.s32.totalorder %s96, %s97
      %p106 = scmp.eq.s32.totalorder %s18, 0
      %p107 = por %p105, %p106
      %p108 = scmp.ne.s32.totalorder %s96, %s97
      %p109 = scmp.eq.s32.totalorder %s19, 1
      %p110 = por %p108, %p109
      %p112 = scmp.ne.s32.totalorder %s97, %s111
      %p113 = scmp.eq.s32.totalorder %s19, 0
      %p114 = por %p112, %p113
      %s116 = sadd.s32 %s115, 1
      %p119 = scmp.eq.s32.totalorder %s13, 1
      %p120 = scmp.ne.s32.totalorder %s115, %s117
      %p121 = scmp.eq.s32.totalorder %s13, 0
      %p122 = por %p120, %p121
      %p123 = scmp.ne.s32.totalorder %s115, %s117
      %p124 = scmp.eq.s32.totalorder %s18, 1
      %p125 = por %p123, %p124
      %p126 = scmp.ne.s32.totalorder %s117, %s118
      %p127 = scmp.eq.s32.totalorder %s18, 0
      %p128 = por %p126, %p127
      %p129 = scmp.ne.s32.totalorder %s117, %s118
      %p130 = scmp.eq.s32.totalorder %s19, 1
      %p131 = por %p129, %p130
      %p133 = scmp.ne.s32.totalorder %s118, %s132
      %p134 = scmp.eq.s32.totalorder %s19, 0
      %p135 = por %p133, %p134
      %s137 = sadd.s32 %s136, 1
      %p140 = scmp.eq.s32.totalorder %s13, 1
      %p141 = scmp.ne.s32.totalorder %s136, %s138
      %p142 = scmp.eq.s32.totalorder %s13, 0
      %p143 = por %p141, %p142
      %p144 = scmp.ne.s32.totalorder %s136, %s138
      %p145 = scmp.eq.s32.totalorder %s18, 1
      %p146 = por %p144, %p145
      %p147 = scmp.ne.s32.totalorder %s138, %s139
      %p148 = scmp.eq.s32.totalorder %s18, 0
      %p149 = por %p147, %p148
      %p150 = scmp.ne.s32.totalorder %s138, %s139
      %p151 = scmp.eq.s32.totalorder %s19, 1
      %p152 = por %p150, %p151
      %p154 = scmp.ne.s32.totalorder %s139, %s153
      %p155 = scmp.eq.s32.totalorder %s19, 0
      %p156 = por %p154, %p155
      %s157 = ssub.s32 %s13, %s20
      %p158 = scmp.eq.s32.totalorder %s157, 0
      %s160 = sadd.s32 %s159, 1
      %s161 = scalar_select %p158, %s159, %s160
      %p164 = pneg %p158
      %p165 = scmp.eq.s32.totalorder %s13, 1
      %p166 = por %p164, %p165
      %p167 = scmp.ne.s32.totalorder %s159, %s162
      %p168 = scmp.eq.s32.totalorder %s13, 0
      %p169 = por %p167, %p168
      %p170 = scmp.ne.s32.totalorder %s159, %s162
      %p171 = scmp.eq.s32.totalorder %s18, 1
      %p172 = por %p170, %p171
      %p173 = scmp.ne.s32.totalorder %s162, %s163
      %p174 = scmp.eq.s32.totalorder %s18, 0
      %p175 = por %p173, %p174
      %p176 = scmp.ne.s32.totalorder %s162, %s163
      %p177 = scmp.eq.s32.totalorder %s19, 1
      %p178 = por %p176, %p177
      %p180 = scmp.ne.s32.totalorder %s163, %s179
      %p181 = scmp.eq.s32.totalorder %s19, 0
      %p182 = por %p180, %p181
      %p183 = scmp.le.s32.totalorder 1, %s13
      %p184 = scmp.lt.s32.totalorder %s13, 3
      %p185 = pnand %p183, %p184
      %p186 = pneg %p185
      // Predicated region
      $region9: #{transformer_model_forward.16} parent=5 // pred_check
        _
      $region10: #{transformer_model_forward.16} parent=5 // pred_check_branch
        %188 = sbr.rel (%p185) target = $region12
      $region11: #{transformer_model_forward.16} parent=5 // pred_region
        %s189 = ssub.s32 %s13, 1
        // Predicated region
        $region13: #{transformer_model_forward.16} parent=11 // pred_check
          %p190 = pneg %p86
        $region14: #{transformer_model_forward.16} parent=11 // pred_check_branch
          %192 = sbr.rel (%p190) target = $region16
        $region15: #{transformer_model_forward.16} parent=11 // pred_region
          %194 = vsyncadd [#allocation3], 0
          %s195 = sshll.u32 %s2, 4
          %s196 = int_to_ptr.hbm [resolvable:$true] %s195
          %s197 = sshll.u32 [#allocation2], 4
          %s198 = int_to_ptr.vmem [resolvable:$true] %s197
          %203 = dma.hbm_to_vmem [thread:$0]  %s196, 2048, %s198, [#allocation3], 128, 128, 8
        $region16: #{transformer_model_forward.16} parent=11 // pred_fallthru
          _
        // Predicated region
        $region17: #{transformer_model_forward.16} parent=11 // pred_check
          %p204 = pneg %p107
        $region18: #{transformer_model_forward.16} parent=11 // pred_check_branch
          %206 = sbr.rel (%p204) target = $region20
        $region19: #{transformer_model_forward.16} parent=11 // pred_region
          _
        $region20: #{transformer_model_forward.16} parent=11 // pred_fallthru
          _
        // Predicated region
        $region21: #{transformer_model_forward.16} parent=11 // pred_check
          %p207 = pneg %p128
        $region22: #{transformer_model_forward.16} parent=11 // pred_check_branch
          %209 = sbr.rel (%p207) target = $region24
        $region23: #{transformer_model_forward.16} parent=11 // pred_region
          _
        $region24: #{transformer_model_forward.16} parent=11 // pred_fallthru
          _
        // Predicated region
        $region25: #{transformer_model_forward.16} parent=11 // pred_check
          %p210 = pneg %p149
        $region26: #{transformer_model_forward.16} parent=11 // pred_check_branch
          %212 = sbr.rel (%p210) target = $region28
        $region27: #{transformer_model_forward.16} parent=11 // pred_region
          _
        $region28: #{transformer_model_forward.16} parent=11 // pred_fallthru
          _
      $region12: #{transformer_model_forward.16} parent=5 // pred_fallthru
        _
      %p213 = scmp.lt.s32.totalorder %s13, 2
      // Predicated region
      $region29: #{transformer_model_forward.16} parent=5 // pred_check
        %p214 = pneg %p213
      $region30: #{transformer_model_forward.16} parent=5 // pred_check_branch
        %216 = sbr.rel (%p214) target = $region32
      $region31: #{transformer_model_forward.16} parent=5 // pred_region
        // Predicated region
        $region33: #{transformer_model_forward.16} parent=31 // pred_check
          %p217 = pneg %p33
        $region34: #{transformer_model_forward.16} parent=31 // pred_check_branch
          %219 = sbr.rel (%p217) target = $region36
        $region35: #{transformer_model_forward.16} parent=31 // pred_region
          %p220 = scmp.lt.s32.totalorder %s13, 1
          %s221 = scalar_select %p220, %s13, 1
          %s222 = smul.addr %s221, 8
          %s223 = scalar_lea.vmem %s0, %s222
        $region36: #{transformer_model_forward.16} parent=31 // pred_fallthru
          _
        // Predicated region
        $region37: #{transformer_model_forward.16} parent=31 // pred_check
          %p224 = pneg %p59
        $region38: #{transformer_model_forward.16} parent=31 // pred_check_branch
          %226 = sbr.rel (%p224) target = $region40
        $region39: #{transformer_model_forward.16} parent=31 // pred_region
          %p227 = scmp.lt.s32.totalorder %s13, 1
          %s228 = scalar_select %p227, %s13, 1
          %s229 = smul.addr %s228, 8
          %s230 = scalar_lea.vmem %s1, %s229
        $region40: #{transformer_model_forward.16} parent=31 // pred_fallthru
          _
      $region32: #{transformer_model_forward.16} parent=5 // pred_fallthru
        _
      %p231 = scmp.le.s32.totalorder 1, %s13
      %p232 = scmp.lt.s32.totalorder %s13, 3
      %p233 = pnand %p231, %p232
      %p234 = pneg %p233
      // Predicated region
      $region41: #{transformer_model_forward.16} parent=5 // pred_check
        _
      $region42: #{transformer_model_forward.16} parent=5 // pred_check_branch
        %236 = sbr.rel (%p233) target = $region44
      $region43: #{transformer_model_forward.16} parent=5 // pred_region
        %s237 = ssub.s32 %s13, 1
        // Predicated region
        $region45: #{transformer_model_forward.16} parent=43 // pred_check
          %p238 = pneg %p86
        $region46: #{transformer_model_forward.16} parent=43 // pred_check_branch
          %240 = sbr.rel (%p238) target = $region48
        $region47: #{transformer_model_forward.16} parent=43 // pred_region
          %242 = dma.done [#allocation3], 2048
        $region48: #{transformer_model_forward.16} parent=43 // pred_fallthru
          _
        %p243 = scmp.lt.s32.totalorder %s18, 1
        %s244 = scalar_select %p243, %s18, 1
        %s245 = smul.addr %s244, 8
        %s246 = scalar_lea.vmem %s0, %s245
        %p247 = pneg %p39
        %p248 = pneg %p36
        %p249 = scmp.lt.s32.totalorder %s18, 1
        %s250 = scalar_select %p249, %s18, 1
        %s251 = smul.addr %s250, 8
        %s252 = scalar_lea.vmem %s1, %s251
        %p253 = pneg %p65
        %p254 = pneg %p62
        %p255 = pneg %p86
        %p256 = pneg %p83
        %p257 = pneg %p107
        %p258 = pneg %p104
        %p259 = pneg %p128
        %p260 = pneg %p125
        %p261 = pneg %p149
        %p262 = pneg %p146
        %p263 = pneg %p175
        %p264 = pneg %p172
        %p265 = scmp.lt.s32.totalorder %s18, 1
        %s266 = scalar_select %p265, %s18, 1
        %s267 = smul.addr %s266, 8
        %s268 = scalar_lea.vmem %s6, %s267
        %p269 = scmp.lt.s32.totalorder %s18, 1
        %s270 = scalar_select %p269, %s18, 1
        %s271 = smul.addr %s270, 8
        %s272 = scalar_lea.vmem %s0, %s271
        %p273 = scmp.lt.s32.totalorder %s18, 1
        %s274 = scalar_select %p273, %s18, 1
        %s275 = smul.addr %s274, 8
        %s276 = scalar_lea.vmem %s1, %s275
        %p277 = scmp.lt.s32.totalorder %s18, 1
        %s278 = scalar_select %p277, %s18, 1
        %s279 = smul.addr %s278, 8
        %s280 = scalar_lea.vmem %s6, %s279
        %v281 = vld [vmem:[%s272] sm:$0xff]
        %v282 = vld [vmem:[#allocation2] sm:$0xff]
        %v283 = vld [vmem:[#allocation2 + $0x8] sm:$0xff]
        %v284 = vld [vmem:[#allocation2 + $0x10] sm:$0xff]
        %v285 = vld [vmem:[#allocation2 + $0x18] sm:$0xff]
        %v286 = vld [vmem:[#allocation2 + $0x20] sm:$0xff]
        %v287 = vld [vmem:[#allocation2 + $0x28] sm:$0xff]
        %v288 = vld [vmem:[#allocation2 + $0x30] sm:$0xff]
        %v289 = vld [vmem:[#allocation2 + $0x38] sm:$0xff]
        %v290 = vld [vmem:[#allocation2 + $0x40] sm:$0xff]
        %v291 = vld [vmem:[#allocation2 + $0x48] sm:$0xff]
        %v292 = vld [vmem:[#allocation2 + $0x50] sm:$0xff]
        %v293 = vld [vmem:[#allocation2 + $0x58] sm:$0xff]
        %v294 = vld [vmem:[#allocation2 + $0x60] sm:$0xff]
        %v295 = vld [vmem:[#allocation2 + $0x68] sm:$0xff]
        %v296 = vld [vmem:[#allocation2 + $0x70] sm:$0xff]
        %v297 = vld [vmem:[#allocation2 + $0x78] sm:$0xff]
        %v298 = vld [vmem:[%s3] sm:$0x1]
        %v300 = vperm.slane %v298, 0
        %v302 = vand.u32 %v297, 4294901760
        %303 = vmatpush.msra.mxu0 %v302
        %v304 = vand.u32 %v296, 4294901760
        %305 = vmatpush.msra.mxu0 %v304
        %v306 = vand.u32 %v295, 4294901760
        %307 = vmatpush.msra.mxu0 %v306
        %v308 = vand.u32 %v294, 4294901760
        %309 = vmatpush.msra.mxu0 %v308
        %v310 = vand.u32 %v293, 4294901760
        %311 = vmatpush.msra.mxu0 %v310
        %v312 = vand.u32 %v292, 4294901760
        %313 = vmatpush.msra.mxu0 %v312
        %v314 = vand.u32 %v291, 4294901760
        %315 = vmatpush.msra.mxu0 %v314
        %v316 = vand.u32 %v290, 4294901760
        %317 = vmatpush.msra.mxu0 %v316
        %v318 = vand.u32 %v289, 4294901760
        %319 = vmatpush.msra.mxu0 %v318
        %v320 = vand.u32 %v288, 4294901760
        %321 = vmatpush.msra.mxu0 %v320
        %v322 = vand.u32 %v287, 4294901760
        %323 = vmatpush.msra.mxu0 %v322
        %v324 = vand.u32 %v286, 4294901760
        %325 = vmatpush.msra.mxu0 %v324
        %v326 = vand.u32 %v285, 4294901760
        %327 = vmatpush.msra.mxu0 %v326
        %v328 = vand.u32 %v284, 4294901760
        %329 = vmatpush.msra.mxu0 %v328
        %v330 = vand.u32 %v283, 4294901760
        %331 = vmatpush.msra.mxu0 %v330
        %v332 = vand.u32 %v282, 4294901760
        %333 = vmatpush.msra.mxu0 %v332
        %v334 = vand.u32 %v281, 4294901760
        %v335 = vsub.f32 %v281, %v334
        %v336 = vand.u32 %v335, 4294901760
        %v337 = vsub.f32 %v335, %v336
        %v338 = vand.u32 %v337, 4294901760
        %339 = vmatmul.f32.gmra.mxu0 %v338
        %v340 = vpop.f32.mrf.mxu0
        %v341 = vadd.f32 %v300, %v340
        %342 = vdwg.mxu0
        %v343 = vand.u32 %v297, 4294901760
        %v344 = vsub.f32 %v297, %v343
        %v345 = vand.u32 %v344, 4294901760
        %v346 = vsub.f32 %v344, %v345
        %v347 = vand.u32 %v346, 4294901760
        %348 = vmatpush.msra.mxu0 %v347
        %v349 = vand.u32 %v296, 4294901760
        %v350 = vsub.f32 %v296, %v349
        %v351 = vand.u32 %v350, 4294901760
        %v352 = vsub.f32 %v350, %v351
        %v353 = vand.u32 %v352, 4294901760
        %354 = vmatpush.msra.mxu0 %v353
        %v355 = vand.u32 %v295, 4294901760
        %v356 = vsub.f32 %v295, %v355
        %v357 = vand.u32 %v356, 4294901760
        %v358 = vsub.f32 %v356, %v357
        %v359 = vand.u32 %v358, 4294901760
        %360 = vmatpush.msra.mxu0 %v359
        %v361 = vand.u32 %v294, 4294901760
        %v362 = vsub.f32 %v294, %v361
        %v363 = vand.u32 %v362, 4294901760
        %v364 = vsub.f32 %v362, %v363
        %v365 = vand.u32 %v364, 4294901760
        %366 = vmatpush.msra.mxu0 %v365
        %v367 = vand.u32 %v293, 4294901760
        %v368 = vsub.f32 %v293, %v367
        %v369 = vand.u32 %v368, 4294901760
        %v370 = vsub.f32 %v368, %v369
        %v371 = vand.u32 %v370, 4294901760
        %372 = vmatpush.msra.mxu0 %v371
        %v373 = vand.u32 %v292, 4294901760
        %v374 = vsub.f32 %v292, %v373
        %v375 = vand.u32 %v374, 4294901760
        %v376 = vsub.f32 %v374, %v375
        %v377 = vand.u32 %v376, 4294901760
        %378 = vmatpush.msra.mxu0 %v377
        %v379 = vand.u32 %v291, 4294901760
        %v380 = vsub.f32 %v291, %v379
        %v381 = vand.u32 %v380, 4294901760
        %v382 = vsub.f32 %v380, %v381
        %v383 = vand.u32 %v382, 4294901760
        %384 = vmatpush.msra.mxu0 %v383
        %v385 = vand.u32 %v290, 4294901760
        %v386 = vsub.f32 %v290, %v385
        %v387 = vand.u32 %v386, 4294901760
        %v388 = vsub.f32 %v386, %v387
        %v389 = vand.u32 %v388, 4294901760
        %390 = vmatpush.msra.mxu0 %v389
        %v391 = vand.u32 %v289, 4294901760
        %v392 = vsub.f32 %v289, %v391
        %v393 = vand.u32 %v392, 4294901760
        %v394 = vsub.f32 %v392, %v393
        %v395 = vand.u32 %v394, 4294901760
        %396 = vmatpush.msra.mxu0 %v395
        %v397 = vand.u32 %v288, 4294901760
        %v398 = vsub.f32 %v288, %v397
        %v399 = vand.u32 %v398, 4294901760
        %v400 = vsub.f32 %v398, %v399
        %v401 = vand.u32 %v400, 4294901760
        %402 = vmatpush.msra.mxu0 %v401
        %v403 = vand.u32 %v287, 4294901760
        %v404 = vsub.f32 %v287, %v403
        %v405 = vand.u32 %v404, 4294901760
        %v406 = vsub.f32 %v404, %v405
        %v407 = vand.u32 %v406, 4294901760
        %408 = vmatpush.msra.mxu0 %v407
        %v409 = vand.u32 %v286, 4294901760
        %v410 = vsub.f32 %v286, %v409
        %v411 = vand.u32 %v410, 4294901760
        %v412 = vsub.f32 %v410, %v411
        %v413 = vand.u32 %v412, 4294901760
        %414 = vmatpush.msra.mxu0 %v413
        %v415 = vand.u32 %v285, 4294901760
        %v416 = vsub.f32 %v285, %v415
        %v417 = vand.u32 %v416, 4294901760
        %v418 = vsub.f32 %v416, %v417
        %v419 = vand.u32 %v418, 4294901760
        %420 = vmatpush.msra.mxu0 %v419
        %v421 = vand.u32 %v284, 4294901760
        %v422 = vsub.f32 %v284, %v421
        %v423 = vand.u32 %v422, 4294901760
        %v424 = vsub.f32 %v422, %v423
        %v425 = vand.u32 %v424, 4294901760
        %426 = vmatpush.msra.mxu0 %v425
        %v427 = vand.u32 %v283, 4294901760
        %v428 = vsub.f32 %v283, %v427
        %v429 = vand.u32 %v428, 4294901760
        %v430 = vsub.f32 %v428, %v429
        %v431 = vand.u32 %v430, 4294901760
        %432 = vmatpush.msra.mxu0 %v431
        %v433 = vand.u32 %v282, 4294901760
        %v434 = vsub.f32 %v282, %v433
        %v435 = vand.u32 %v434, 4294901760
        %v436 = vsub.f32 %v434, %v435
        %v437 = vand.u32 %v436, 4294901760
        %438 = vmatpush.msra.mxu0 %v437
        %v439 = vand.u32 %v281, 4294901760
        %440 = vmatmul.f32.gmra.mxu0 %v439
        %v441 = vpop.f32.mrf.mxu0
        %v442 = vadd.f32 %v341, %v441
        %443 = vdwg.mxu0
        %v444 = vand.u32 %v297, 4294901760
        %v445 = vsub.f32 %v297, %v444
        %446 = vmatpush.msra.mxu0 %v445
        %v447 = vand.u32 %v296, 4294901760
        %v448 = vsub.f32 %v296, %v447
        %449 = vmatpush.msra.mxu0 %v448
        %v450 = vand.u32 %v295, 4294901760
        %v451 = vsub.f32 %v295, %v450
        %452 = vmatpush.msra.mxu0 %v451
        %v453 = vand.u32 %v294, 4294901760
        %v454 = vsub.f32 %v294, %v453
        %455 = vmatpush.msra.mxu0 %v454
        %v456 = vand.u32 %v293, 4294901760
        %v457 = vsub.f32 %v293, %v456
        %458 = vmatpush.msra.mxu0 %v457
        %v459 = vand.u32 %v292, 4294901760
        %v460 = vsub.f32 %v292, %v459
        %461 = vmatpush.msra.mxu0 %v460
        %v462 = vand.u32 %v291, 4294901760
        %v463 = vsub.f32 %v291, %v462
        %464 = vmatpush.msra.mxu0 %v463
        %v465 = vand.u32 %v290, 4294901760
        %v466 = vsub.f32 %v290, %v465
        %467 = vmatpush.msra.mxu0 %v466
        %v468 = vand.u32 %v289, 4294901760
        %v469 = vsub.f32 %v289, %v468
        %470 = vmatpush.msra.mxu0 %v469
        %v471 = vand.u32 %v288, 4294901760
        %v472 = vsub.f32 %v288, %v471
        %473 = vmatpush.msra.mxu0 %v472
        %v474 = vand.u32 %v287, 4294901760
        %v475 = vsub.f32 %v287, %v474
        %476 = vmatpush.msra.mxu0 %v475
        %v477 = vand.u32 %v286, 4294901760
        %v478 = vsub.f32 %v286, %v477
        %479 = vmatpush.msra.mxu0 %v478
        %v480 = vand.u32 %v285, 4294901760
        %v481 = vsub.f32 %v285, %v480
        %482 = vmatpush.msra.mxu0 %v481
        %v483 = vand.u32 %v284, 4294901760
        %v484 = vsub.f32 %v284, %v483
        %485 = vmatpush.msra.mxu0 %v484
        %v486 = vand.u32 %v283, 4294901760
        %v487 = vsub.f32 %v283, %v486
        %488 = vmatpush.msra.mxu0 %v487
        %v489 = vand.u32 %v282, 4294901760
        %v490 = vsub.f32 %v282, %v489
        %491 = vmatpush.msra.mxu0 %v490
        %v492 = vand.u32 %v281, 4294901760
        %v493 = vsub.f32 %v281, %v492
        %494 = vmatmul.f32.gmra.mxu0 %v493
        %v495 = vpop.f32.mrf.mxu0
        %v496 = vadd.f32 %v442, %v495
        %497 = vdwg.mxu0
        %v498 = vand.u32 %v297, 4294901760
        %499 = vmatpush.msra.mxu0 %v498
        %v500 = vand.u32 %v296, 4294901760
        %501 = vmatpush.msra.mxu0 %v500
        %v502 = vand.u32 %v295, 4294901760
        %503 = vmatpush.msra.mxu0 %v502
        %v504 = vand.u32 %v294, 4294901760
        %505 = vmatpush.msra.mxu0 %v504
        %v506 = vand.u32 %v293, 4294901760
        %507 = vmatpush.msra.mxu0 %v506
        %v508 = vand.u32 %v292, 4294901760
        %509 = vmatpush.msra.mxu0 %v508
        %v510 = vand.u32 %v291, 4294901760
        %511 = vmatpush.msra.mxu0 %v510
        %v512 = vand.u32 %v290, 4294901760
        %513 = vmatpush.msra.mxu0 %v512
        %v514 = vand.u32 %v289, 4294901760
        %515 = vmatpush.msra.mxu0 %v514
        %v516 = vand.u32 %v288, 4294901760
        %517 = vmatpush.msra.mxu0 %v516
        %v518 = vand.u32 %v287, 4294901760
        %519 = vmatpush.msra.mxu0 %v518
        %v520 = vand.u32 %v286, 4294901760
        %521 = vmatpush.msra.mxu0 %v520
        %v522 = vand.u32 %v285, 4294901760
        %523 = vmatpush.msra.mxu0 %v522
        %v524 = vand.u32 %v284, 4294901760
        %525 = vmatpush.msra.mxu0 %v524
        %v526 = vand.u32 %v283, 4294901760
        %527 = vmatpush.msra.mxu0 %v526
        %v528 = vand.u32 %v282, 4294901760
        %529 = vmatpush.msra.mxu0 %v528
        %v530 = vand.u32 %v281, 4294901760
        %v531 = vsub.f32 %v281, %v530
        %v532 = vand.u32 %v531, 4294901760
        %533 = vmatmul.f32.gmra.mxu0 %v532
        %v534 = vpop.f32.mrf.mxu0
        %v535 = vadd.f32 %v496, %v534
        %536 = vdwg.mxu0
        %v537 = vand.u32 %v297, 4294901760
        %v538 = vsub.f32 %v297, %v537
        %v539 = vand.u32 %v538, 4294901760
        %540 = vmatpush.msra.mxu0 %v539
        %v541 = vand.u32 %v296, 4294901760
        %v542 = vsub.f32 %v296, %v541
        %v543 = vand.u32 %v542, 4294901760
        %544 = vmatpush.msra.mxu0 %v543
        %v545 = vand.u32 %v295, 4294901760
        %v546 = vsub.f32 %v295, %v545
        %v547 = vand.u32 %v546, 4294901760
        %548 = vmatpush.msra.mxu0 %v547
        %v549 = vand.u32 %v294, 4294901760
        %v550 = vsub.f32 %v294, %v549
        %v551 = vand.u32 %v550, 4294901760
        %552 = vmatpush.msra.mxu0 %v551
        %v553 = vand.u32 %v293, 4294901760
        %v554 = vsub.f32 %v293, %v553
        %v555 = vand.u32 %v554, 4294901760
        %556 = vmatpush.msra.mxu0 %v555
        %v557 = vand.u32 %v292, 4294901760
        %v558 = vsub.f32 %v292, %v557
        %v559 = vand.u32 %v558, 4294901760
        %560 = vmatpush.msra.mxu0 %v559
        %v561 = vand.u32 %v291, 4294901760
        %v562 = vsub.f32 %v291, %v561
        %v563 = vand.u32 %v562, 4294901760
        %564 = vmatpush.msra.mxu0 %v563
        %v565 = vand.u32 %v290, 4294901760
        %v566 = vsub.f32 %v290, %v565
        %v567 = vand.u32 %v566, 4294901760
        %568 = vmatpush.msra.mxu0 %v567
        %v569 = vand.u32 %v289, 4294901760
        %v570 = vsub.f32 %v289, %v569
        %v571 = vand.u32 %v570, 4294901760
        %572 = vmatpush.msra.mxu0 %v571
        %v573 = vand.u32 %v288, 4294901760
        %v574 = vsub.f32 %v288, %v573
        %v575 = vand.u32 %v574, 4294901760
        %576 = vmatpush.msra.mxu0 %v575
        %v577 = vand.u32 %v287, 4294901760
        %v578 = vsub.f32 %v287, %v577
        %v579 = vand.u32 %v578, 4294901760
        %580 = vmatpush.msra.mxu0 %v579
        %v581 = vand.u32 %v286, 4294901760
        %v582 = vsub.f32 %v286, %v581
        %v583 = vand.u32 %v582, 4294901760
        %584 = vmatpush.msra.mxu0 %v583
        %v585 = vand.u32 %v285, 4294901760
        %v586 = vsub.f32 %v285, %v585
        %v587 = vand.u32 %v586, 4294901760
        %588 = vmatpush.msra.mxu0 %v587
        %v589 = vand.u32 %v284, 4294901760
        %v590 = vsub.f32 %v284, %v589
        %v591 = vand.u32 %v590, 4294901760
        %592 = vmatpush.msra.mxu0 %v591
        %v593 = vand.u32 %v283, 4294901760
        %v594 = vsub.f32 %v283, %v593
        %v595 = vand.u32 %v594, 4294901760
        %596 = vmatpush.msra.mxu0 %v595
        %v597 = vand.u32 %v282, 4294901760
        %v598 = vsub.f32 %v282, %v597
        %v599 = vand.u32 %v598, 4294901760
        %600 = vmatpush.msra.mxu0 %v599
        %v601 = vand.u32 %v281, 4294901760
        %602 = vmatmul.f32.gmra.mxu0 %v601
        %v603 = vpop.f32.mrf.mxu0
        %v604 = vadd.f32 %v535, %v603
        %605 = vdwg.mxu0
        %v606 = vand.u32 %v297, 4294901760
        %607 = vmatpush.msra.mxu0 %v606
        %v608 = vand.u32 %v296, 4294901760
        %609 = vmatpush.msra.mxu0 %v608
        %v610 = vand.u32 %v295, 4294901760
        %611 = vmatpush.msra.mxu0 %v610
        %v612 = vand.u32 %v294, 4294901760
        %613 = vmatpush.msra.mxu0 %v612
        %v614 = vand.u32 %v293, 4294901760
        %615 = vmatpush.msra.mxu0 %v614
        %v616 = vand.u32 %v292, 4294901760
        %617 = vmatpush.msra.mxu0 %v616
        %v618 = vand.u32 %v291, 4294901760
        %619 = vmatpush.msra.mxu0 %v618
        %v620 = vand.u32 %v290, 4294901760
        %621 = vmatpush.msra.mxu0 %v620
        %v622 = vand.u32 %v289, 4294901760
        %623 = vmatpush.msra.mxu0 %v622
        %v624 = vand.u32 %v288, 4294901760
        %625 = vmatpush.msra.mxu0 %v624
        %v626 = vand.u32 %v287, 4294901760
        %627 = vmatpush.msra.mxu0 %v626
        %v628 = vand.u32 %v286, 4294901760
        %629 = vmatpush.msra.mxu0 %v628
        %v630 = vand.u32 %v285, 4294901760
        %631 = vmatpush.msra.mxu0 %v630
        %v632 = vand.u32 %v284, 4294901760
        %633 = vmatpush.msra.mxu0 %v632
        %v634 = vand.u32 %v283, 4294901760
        %635 = vmatpush.msra.mxu0 %v634
        %v636 = vand.u32 %v282, 4294901760
        %637 = vmatpush.msra.mxu0 %v636
        %v638 = vand.u32 %v281, 4294901760
        %639 = vmatmul.f32.gmra.mxu0 %v638
        %v640 = vpop.f32.mrf.mxu0
        %v641 = vadd.f32 %v604, %v640
        %642 = vdwg.mxu0
        %v643 = vld [vmem:[%s276] sm:$0xff]
        %v644 = vadd.f32 %v643, %v641
        %645 = vadd.xlane.f32.xlu0 %v644
        %v646 = vpop.xlane.xlu0 %645
        %v647 = vrcp.pop 128.0
        %v648 = vmul.f32 128.0, %v647
        %v649 = vsub.f32 1.0, %v648
        %v650 = vmul.f32 %v647, %v649
        %v651 = vadd.f32 %v647, %v650
        %vm652 = vweird.f32 %v647
        %v653 = vsel %vm652, %v647, %v651
        %v654 = vmul.f32 %v646, %v653
        %v655 = vmul.f32 %v644, %v644
        %656 = vadd.xlane.f32.xlu0 %v655
        %v657 = vpop.xlane.xlu0 %656
        %v658 = vmul.f32 %v657, %v653
        %v659 = vmul.f32 %v654, %v654
        %v660 = vsub.f32 %v658, %v659
        %v661 = vsub.f32 %v644, %v654
        %v662 = vadd.f32 %v660, 1e-05
        %v663 = vrsqrt.pop %v662
        %v664 = vmul.f32 %v663, %v662
        %v665 = vmul.f32 %v664, %v663
        %v666 = vmul.f32 0.5, %v665
        %v667 = vsub.f32 1.5, %v666
        %v668 = vmul.f32 %v663, %v667
        %vm669 = vweird.f32 %v662
        %vm670 = vweird.f32 %v663
        %vm671 = vmor %vm669, %vm670
        %v672 = vsel %vm671, %v663, %v668
        %v673 = vmul.f32 %v661, %v672
        %v674 = vld [vmem:[%s4] sm:$0x1]
        %v676 = vperm.slane %v674, 0
        %v678 = vmul.f32 %v673, %v676
        %v679 = vld [vmem:[%s5] sm:$0x1]
        %v681 = vperm.slane %v679, 0
        %v683 = vadd.f32 %v678, %v681
        %684 = vst [vmem:[%s280] sm:$0xff] %v683
        %p685 = scmp.lt.s32.totalorder %s18, 1
        %s686 = scalar_select %p685, %s18, 1
        %s687 = smul.addr %s686, 8
        %s688 = scalar_lea.vmem %s6, %s687
        // Predicated region
        $region49: #{transformer_model_forward.16} parent=43 // pred_check
          %p689 = pneg %p172
        $region50: #{transformer_model_forward.16} parent=43 // pred_check_branch
          %691 = sbr.rel (%p689) target = $region52
        $region51: #{transformer_model_forward.16} parent=43 // pred_region
          _
        $region52: #{transformer_model_forward.16} parent=43 // pred_fallthru
          _
      $region44: #{transformer_model_forward.16} parent=5 // pred_fallthru
        _
      %p692 = scmp.le.s32.totalorder 2, %s13
      // Predicated region
      $region53: #{transformer_model_forward.16} parent=5 // pred_check
        %p693 = pneg %p692
      $region54: #{transformer_model_forward.16} parent=5 // pred_check_branch
        %695 = sbr.rel (%p693) target = $region56
      $region55: #{transformer_model_forward.16} parent=5 // pred_region
        %s696 = ssub.s32 %s13, 2
        // Predicated region
        $region57: #{transformer_model_forward.16} parent=55 // pred_check
          %p697 = pneg %p178
        $region58: #{transformer_model_forward.16} parent=55 // pred_check_branch
          %699 = sbr.rel (%p697) target = $region60
        $region59: #{transformer_model_forward.16} parent=55 // pred_region
          %p700 = scmp.lt.s32.totalorder %s19, 1
          %s701 = scalar_select %p700, %s19, 1
          %s702 = smul.addr %s701, 8
          %s703 = scalar_lea.vmem %s6, %s702
        $region60: #{transformer_model_forward.16} parent=55 // pred_fallthru
          _
      $region56: #{transformer_model_forward.16} parent=5 // pred_fallthru
        _
    $region6: #{transformer_model_forward.16} parent=1 // loop_footer
      %s17 = sadd.s32 1, %s13
    $region7: #{transformer_model_forward.16} parent=1 // loop_footer_branch
      %12 = sbr.rel target = $region3
    $region8: #{transformer_model_forward.16} parent=1 // loop_exit
      _
    %704 = vsyncpa [#allocation3], 1
    %s705 = scalar_lea.sflag [#allocation3], 1
    %706 = vsyncpa %s705, 1

</llo_original>
